<compile_context>
chip_gen: v5e
topology: v5e:2x2
jax: 0.10.0
libtpu: 0.0.40
codegen_flags: <defaults>
</compile_context>

<pallas_src>
import functools
import math

import numpy as np

import jax
import jax.numpy as jnp
from jax.experimental import pallas as pl
from jax.experimental.pallas import tpu as pltpu


_BN_EVAL_SCALE = 1.0 / math.sqrt(1.0 + 1e-5)   # BatchNorm2d(affine=False), eval
_INV_SQRT2 = 1.0 / math.sqrt(2.0)


# ----------------------------- in-kernel math ------------------------------

def _erf(z):
    # Abramowitz & Stegun 7.1.26 rational approximation (~1.5e-7 abs err).
    a1, a2, a3, a4, a5 = 0.254829592, -0.284496736, 1.421413741, -1.453152027, 1.061405429
    p = 0.3275911
    s = jnp.where(z >= 0.0, 1.0, -1.0)
    za = jnp.abs(z)
    # approx reciprocal -> EUP slot instead of a VALU divide (review).
    t = pl.reciprocal(1.0 + p * za, approx=True)
    poly = ((((a5 * t + a4) * t + a3) * t + a2) * t + a1) * t
    return s * (1.0 - poly * jnp.exp(-za * za))


def _gelu(v):
    # exact (erf-based) GELU, matching torch.nn.functional.gelu default
    return 0.5 * v * (1.0 + _erf(v * _INV_SQRT2))


def _gelu_pair(v):
    # (gelu(v), gelu(-v)) sharing one erf evaluation (erf is odd).
    e = _erf(v * _INV_SQRT2)
    return 0.5 * v * (1.0 + e), -0.5 * v * (1.0 - e)


# ---------------- kernels: global ReLUSplitNorm statistics -----------------

def _sum_kernel(x_ref, out_ref, acc_ref):
    n = pl.program_id(0)

    @pl.when(n == 0)
    def _():
        acc_ref[0] = 0.0

    acc_ref[0] = acc_ref[0] + jnp.sum(x_ref[...])

    @pl.when(n == pl.num_programs(0) - 1)
    def _():
        out_ref[...] = jnp.full((1, 128), acc_ref[0], jnp.float32)


def total_sum(x):
    """Global sum(x).  Only needed for the very first layer — later layers get
    it for free from the previous block kernel's fused epilogue."""
    N, C, HW = x.shape
    out = pl.pallas_call(
        _sum_kernel,
        out_shape=jax.ShapeDtypeStruct((1, 128), jnp.float32),
        grid=(N,),
        in_specs=[pl.BlockSpec((1, C, HW), lambda n: (n, 0, 0))],
        out_specs=pl.BlockSpec((1, 128), lambda n: (0, 0)),
        scratch_shapes=[pltpu.SMEM((1,), jnp.float32)],
        # SMEM accumulator carried across the batch grid -> must stay serial.
        compiler_params=pltpu.CompilerParams(dimension_semantics=("arbitrary",)),
    )(x)
    return out[0, :1]                                   # shape (1,)


def _thresh_kernel(sum_ref, x_ref, out_ref, acc_ref, *, numel):
    n = pl.program_id(0)

    @pl.when(n == 0)
    def _():
        acc_ref[0] = 0.0
        acc_ref[1] = 0.0

    avg1 = sum_ref[0] * (1.0 / numel)
    x = x_ref[...]
    up = (x > avg1).astype(jnp.float32)
    acc_ref[0] = acc_ref[0] + jnp.sum(up * x)
    acc_ref[1] = acc_ref[1] + jnp.sum(up)

    @pl.when(n == pl.num_programs(0) - 1)
    def _():
        out_ref[...] = jnp.concatenate(
            [jnp.full((1, 128), sum_ref[0], jnp.float32),
             jnp.full((1, 128), acc_ref[0], jnp.float32),
             jnp.full((1, 128), acc_ref[1], jnp.float32)], axis=0)


def split_stats(x, sum_x):
    """ReLUSplitNorm globals: (3,) = [sum(x), sum(x*(x>mean)), count(x>mean)].
    sum(x) is supplied externally so only ONE pass over the activations runs."""
    N, C, HW = x.shape
    out = pl.pallas_call(
        functools.partial(_thresh_kernel, numel=float(N * C * HW)),
        out_shape=jax.ShapeDtypeStruct((3, 128), jnp.float32),
        grid=(N,),
        in_specs=[pl.BlockSpec(memory_space=pltpu.MemorySpace.SMEM),   # sum(x), (1,)
                  pl.BlockSpec((1, C, HW), lambda n: (n, 0, 0))],
        out_specs=pl.BlockSpec((3, 128), lambda n: (0, 0)),
        scratch_shapes=[pltpu.SMEM((2,), jnp.float32)],
        # SMEM accumulator carried across the batch grid -> must stay serial.
        compiler_params=pltpu.CompilerParams(dimension_semantics=("arbitrary",)),
    )(sum_x, x)
    return out[:, 0]


# ------------------ kernel: fused MetaResConv2d block ----------------------

def _block_kernel(*refs, H, W, Cin, Co, ksz, numel, k_norms, cross_m0,
                  conv_momentum, norm_scale, res_m0, same_ch, pool_after):
    idx = 0
    stats_ref = refs[idx]; idx += 1
    x_ref = refs[idx]; idx += 1
    wT_ref = refs[idx]; idx += 1
    bias_ref = refs[idx]; idx += 1
    mask_ref = refs[idx]; idx += 1
    wres_ref = None
    if not same_ch:
        wres_ref = refs[idx]; idx += 1
    pool_ref = None
    if pool_after:
        pool_ref = refs[idx]; idx += 1
    out_ref = refs[idx]; idx += 1
    bsum_ref = refs[idx]; idx += 1
    slab_ref = refs[idx]; idx += 1

    pad = ksz // 2
    HW = H * W
    C8 = 8 * Cin
    half = 8 * Co
    S = pad * W + pad                              # flat-index halo on each side

    # ---- global ReLUSplitNorm statistics ------------------------------------
    sum_x = stats_ref[0]
    sum_up = stats_ref[1]
    n_up = stats_ref[2]
    avg1 = sum_x * (1.0 / numel)
    # 0/0 guard (deliberate, documented divergence from PyTorch's NaN).
    avg2 = sum_up / jnp.maximum(n_up, 1.0)
    avg0 = (sum_x - sum_up) / jnp.maximum(numel - n_up, 1.0)

    xc = x_ref[0]                                  # (Cin, HW), lane-dense

    # ---- ReLUSplitNorm splits + folded eval-BatchNorm + cross terms ----------
    g2p, g2n = _gelu_pair(xc - avg2)               # gelu(x-avg2), gelu(avg2-x)
    x1 = g2p
    x2 = _gelu((avg2 - avg1) - g2n)
    x3 = _gelu((avg1 - avg0) - _gelu(avg1 - xc))
    x4 = -_gelu(avg0 - xc)

    n1 = k_norms[0] * x1
    n2 = k_norms[1] * x2
    n3 = k_norms[2] * x3
    n4 = k_norms[3] * x4
    z = n1 + n2 + n3 + n4
    cmul = cross_m0 * (1.0 / 3.0)
    splits = jnp.concatenate(
        [n1, n2, n3, n4,
         cmul * (z - n1), cmul * (z - n2), cmul * (z - n3), cmul * (z - n4)],
        axis=0)                                    # (8*Cin, HW)

    # ---- im2col slab (K, HW) in VMEM: shifted flat windows + boundary masks --
    zpad = jnp.zeros((C8, S), jnp.float32)
    padded = jnp.concatenate([zpad, splits, zpad], axis=1)   # (C8, HW + 2S)
    for a in range(ksz):
        for b in range(ksz):
            t = a * ksz + b
            d0 = (a - pad) * W + (b - pad) + S
            blk = padded[:, d0:d0 + HW] * mask_ref[t:t + 1, :]
            slab_ref[t * C8:(t + 1) * C8, :] = blk.astype(jnp.bfloat16)

    # ---- all 16 convolutions: ONE big-K bf16 MXU dot, f32 accumulation -------
    acc = jnp.dot(wT_ref[...], slab_ref[...],
                  preferred_element_type=jnp.float32)        # (2*half, HW)
    acc = acc + bias_ref[...]

    # ---- per-split conv1*conv2 / conv3*conv4 products (aligned halves) -------
    prod = acc[:half, :] * acc[half:, :]                     # (8*Co, HW)

    # ---- res_layer_norm: batched statistics (one lane-reduce pass) -----------
    rs = jnp.sum(prod, axis=1, keepdims=True)                # (8*Co, 1)
    rsq = jnp.sum(prod * prod, axis=1, keepdims=True)        # (8*Co, 1)
    inv_m = 1.0 / float(Co * HW)

    y = jnp.zeros((Co, HW), jnp.float32)
    for g in range(8):
        tblk = prod[g * Co:(g + 1) * Co, :]
        mu = jnp.sum(rs[g * Co:(g + 1) * Co, :]) * inv_m
        var = jnp.maximum(jnp.sum(rsq[g * Co:(g + 1) * Co, :]) * inv_m - mu * mu, 0.0)
        y = y + conv_momentum * tblk + \
            (norm_scale * jax.lax.rsqrt(var + 1e-5)) * (tblk - mu)

    # ---- residual path (1x1 matmul only when Cin != Cout) --------------------
    if same_ch:
        res = res_m0 * xc
    else:
        res = jnp.dot(wres_ref[...], xc.astype(jnp.bfloat16),
                      preferred_element_type=jnp.float32)
    out = res + y                                            # (Co, HW)

    # ---- fused AvgPool2d(2) epilogue ------------------------------------------
    # TODO(synk): at large H*W replace the dense (HW, HWo) pooling matrix with
    # separable / strided pooling -- it is quadratic in HW (fine at demo sizes).
    if pool_after:
        out = jnp.dot(out.astype(jnp.bfloat16), pool_ref[...],
                      preferred_element_type=jnp.float32)    # (Co, HWo)

    out_ref[0] = out
    # fused epilogue: per-sample sum feeding the NEXT layer's global mean
    bsum_ref[...] = jnp.full((1, 1, 128), jnp.sum(out), jnp.float32)


# ------------------------- host-side constant helpers ----------------------

def _tap_masks(H, W, ksz):
    """(ksz*ksz, H*W) validity masks for the flat-index shifted conv taps."""
    pad = ksz // 2
    hh, ww = np.meshgrid(np.arange(H), np.arange(W), indexing="ij")
    hh = hh.reshape(-1)
    ww = ww.reshape(-1)
    m = np.zeros((ksz * ksz, H * W), np.float32)
    for a in range(ksz):
        for b in range(ksz):
            da, db = a - pad, b - pad
            valid = ((hh + da >= 0) & (hh + da < H) &
                     (ww + db >= 0) & (ww + db < W))
            m[a * ksz + b] = valid.astype(np.float32)
    return jnp.asarray(m)


def _pool_matrix(H, W, dtype):
    """(H*W, (H//2)*(W//2)) matrix: channel-major x @ M == AvgPool2d(2)."""
    Ho, Wo = H // 2, W // 2
    m = np.zeros((H * W, Ho * Wo), np.float32)
    for oh in range(Ho):
        for ow in range(Wo):
            for dh in range(2):
                for dw in range(2):
                    m[(2 * oh + dh) * W + (2 * ow + dw), oh * Wo + ow] = 0.25
    return jnp.asarray(m, dtype=dtype)


def _pack_conv_weights(w1, w2, w3, w4, cin, cout, ksz):
    """Pack the 16 conv banks into a (16*cout, ksz*ksz*8*cin) bf16 slab.
    Columns (the contraction dim) follow the im2col slab row order
    [tap-major][norm_0..3 | cross_0..3][cin].  Output rows are split into a
    'left' half (conv1_i, conv3_i) and a 'right' half (conv2_i, conv4_i) so the
    per-split products are a single aligned elementwise multiply of halves."""
    C8 = 8 * cin
    K = ksz * ksz * C8
    half = 8 * cout
    pk = np.zeros((2 * half, K), np.float32)
    banks = [np.asarray(w) for w in (w1, w2, w3, w4)]   # each (4, cout, cin, k, k)
    for i in range(4):
        for j in range(4):                              # j = conv1..conv4
            w = banks[j][i]                             # (cout, cin, ksz, ksz)
            hfix = 0 if j in (0, 2) else half           # conv1/3 left, conv2/4 right
            slot = 0 if j in (0, 1) else 1
            rb_out = hfix + (2 * i + slot) * cout
            rb_in = (i if j < 3 else 4 + i) * cin       # conv4 reads the cross rows
            for a in range(ksz):
                for b in range(ksz):
                    t = a * ksz + b
                    pk[rb_out:rb_out + cout,
                       t * C8 + rb_in: t * C8 + rb_in + cin] = w[:, :, a, b]
    return jnp.asarray(pk, dtype=jnp.bfloat16)


def _pack_bias(b2, cout):
    """(16*cout, 1) column: only the conv2 slots carry a (ones-initialized) bias."""
    half = 8 * cout
    col = np.zeros((2 * half, 1), np.float32)
    b2 = np.asarray(b2)
    for i in range(4):
        rb = half + 2 * i * cout                        # conv2_i slot (right half)
        col[rb:rb + cout, 0] = b2[i]
    return jnp.asarray(col)


# ------------------------------ block wrapper ------------------------------

def block_forward(x, stats, p, H, W):
    """One MetaResConv2d block (optionally with fused trailing AvgPool2d(2)).
    x: (N, Cin, H*W) channel-major f32.  Returns ((N, Cout, H'*W'), per-sample sums)."""
    N, Cin, HW = x.shape
    Co, ksz = p["cout"], p["ksz"]
    pool_after = p["pool_after"]
    same_ch = p["wres"] is None
    HWo = (H // 2) * (W // 2) if pool_after else HW
    ncol = 16 * Co
    K = ksz * ksz * 8 * Cin

    k_norms = tuple(float(m) + p["norm_scale"] * _BN_EVAL_SCALE
                    for m in p["norm_momenta"])
    masks = _tap_masks(H, W, ksz)

    in_specs = [
        pl.BlockSpec(memory_space=pltpu.MemorySpace.SMEM),            # stats (3,)
        pl.BlockSpec((1, Cin, HW), lambda n: (n, 0, 0)),              # x[n]
        pl.BlockSpec((ncol, K), lambda n: (0, 0)),                    # packed conv W (bf16)
        pl.BlockSpec((ncol, 1), lambda n: (0, 0)),                    # packed conv2 bias
        pl.BlockSpec((ksz * ksz, HW), lambda n: (0, 0)),              # tap masks
    ]
    args = [stats, x, p["wpack"], p["bias"], masks]
    if not same_ch:
        in_specs.append(pl.BlockSpec((Co, Cin), lambda n: (0, 0)))    # 1x1 res_conv
        args.append(p["wres"])
    if pool_after:
        in_specs.append(pl.BlockSpec((HW, HWo), lambda n: (0, 0)))    # pooling matmul
        args.append(_pool_matrix(H, W, jnp.bfloat16))

    kernel = functools.partial(
        _block_kernel, H=H, W=W, Cin=Cin, Co=Co, ksz=ksz,
        numel=float(N * Cin * HW), k_norms=k_norms,
        cross_m0=float(p["cross_m0"]), conv_momentum=float(p["conv_momentum"]),
        norm_scale=float(p["norm_scale"]), res_m0=float(p["res_m0"]),
        same_ch=same_ch, pool_after=pool_after)

    # explicit VMEM budget (review: v5e scoped default is only 16 MiB)
    work_bytes = (2 * Cin * HW * 4 + ncol * K * 2 + ncol * 4
                  + ksz * ksz * HW * 4 + (HW * HWo * 2 if pool_after else 0)
                  + 2 * Co * HWo * 4 + 2 * 128 * 4
                  + K * HW * 2 + ncol * HW * 4
                  + 12 * 8 * Cin * HW * 4)                    # split/GELU temporaries
    vmem_limit = int(min(64 * 1024 * 1024, max(16 * 1024 * 1024, 2 * work_bytes)))

    flops = 2 * N * ncol * K * HW + (2 * N * Co * HW * HWo if pool_after else 0)
    bytes_accessed = (4 * (x.size + N * Co * HWo + N * 128) + 2 * ncol * K
                      + 4 * (ncol + ksz * ksz * HW)
                      + (2 * HW * HWo if pool_after else 0))

    # TODO(synk): for realistic Cin/Co (>=128) add an ncol / HW tile grid axis so
    # the packed weight slab is column-tiled instead of fully VMEM-resident
    # (needed to fit v7x's 64 MiB VMEM); unnecessary at these demo sizes.
    out, bsum = pl.pallas_call(
        kernel,
        out_shape=(jax.ShapeDtypeStruct((N, Co, HWo), jnp.float32),
                   jax.ShapeDtypeStruct((N, 1, 128), jnp.float32)),
        grid=(N,),
        in_specs=in_specs,
        out_specs=(pl.BlockSpec((1, Co, HWo), lambda n: (n, 0, 0)),
                   pl.BlockSpec((1, 1, 128), lambda n: (n, 0, 0))),
        scratch_shapes=[pltpu.VMEM((K, HW), jnp.bfloat16)],
        compiler_params=pltpu.CompilerParams(
            dimension_semantics=("parallel",),            # batch axis -> v7x 2 TCs
            vmem_limit_bytes=vmem_limit),
        cost_estimate=pl.CostEstimate(flops=int(flops),
                                      transcendentals=int(10 * N * Cin * HW),
                                      bytes_accessed=int(bytes_accessed)),
    )(*args)
    return out, bsum


# --------------- standalone AvgPool2d(2) (only used if un-fused) ------------

def _pool_kernel(x_ref, pm_ref, out_ref):
    out_ref[0] = jnp.dot(x_ref[0], pm_ref[...], preferred_element_type=jnp.float32)


def avgpool2x2(x, H, W):
    N, C, HW = x.shape
    HWo = (H // 2) * (W // 2)
    return pl.pallas_call(
        _pool_kernel,
        out_shape=jax.ShapeDtypeStruct((N, C, HWo), jnp.float32),
        grid=(N,),
        in_specs=[pl.BlockSpec((1, C, HW), lambda n: (n, 0, 0)),
                  pl.BlockSpec((HW, HWo), lambda n: (0, 0))],
        out_specs=pl.BlockSpec((1, C, HWo), lambda n: (n, 0, 0)),
        compiler_params=pltpu.CompilerParams(dimension_semantics=("parallel",)),
    )(x, _pool_matrix(H, W, jnp.float32))


# --------------------------- parameter construction ------------------------

def init_block_params(key, cin, cout, ksz, norm_scale, pool_after):
    keys = jax.random.split(key, 5)
    bound = 1.0 / math.sqrt(cin * ksz * ksz)             # PyTorch conv default init

    def u(k, shape, bnd):
        return jax.random.uniform(k, shape, jnp.float32, -bnd, bnd)

    # PyTorch-layout weights: (split, cout, cin, kh, kw)
    w1 = u(keys[0], (4, cout, cin, ksz, ksz), bound)
    w2 = u(keys[1], (4, cout, cin, ksz, ksz), bound)
    w3 = u(keys[2], (4, cout, cin, ksz, ksz), bound)
    w4 = u(keys[3], (4, cout, cin, ksz, ksz), bound)
    b2 = jnp.ones((4, cout), jnp.float32)                # nn.init.ones_ on conv2 bias

    wpack = _pack_conv_weights(w1, w2, w3, w4, cin, cout, ksz)
    bias = _pack_bias(b2, cout)

    if cin != cout:
        wres = u(keys[4], (cout, cin), 1.0 / math.sqrt(cin)).astype(jnp.bfloat16)
    else:
        wres = None                                      # residual = res_momentum[0]*x

    return dict(type="block", cin=cin, cout=cout, ksz=ksz,
                wpack=wpack, bias=bias, wres=wres,
                norm_momenta=(0.0, 0.0, 0.0, 0.0),       # norm_momentum1..4 init 0.0
                conv_momentum=1.0, cross_m0=1.0, res_m0=1.0,
                norm_scale=float(norm_scale), pool_after=pool_after)


def build_metaresnet(key, num_layers, init_channels, kernel_size, norm_scale,
                     dropout=True):
    """Mirror MetaResNet.__init__; AvgPool2d(2) is fused into the preceding
    block's epilogue (pool_after=True)."""
    raw = [("block", init_channels, num_layers[0][0])]
    k = -1
    for (i, j) in num_layers:
        if k > 0 and k != i:
            raw.append(("block", k, i))
        for _ in range(j):
            raw.append(("block", i, i))
        raw.append(("pool",))
        if dropout:
            raw.append(("dropout",))
        k = i

    ops, idx = [], 0
    while idx < len(raw):
        kind = raw[idx][0]
        if kind == "block":
            pool_after = idx + 1 < len(raw) and raw[idx + 1][0] == "pool"
            key, sub = jax.random.split(key)
            ops.append(init_block_params(sub, raw[idx][1], raw[idx][2],
                                         kernel_size, norm_scale, pool_after))
            if pool_after:
                idx += 1                                  # pool consumed by block
        elif kind == "pool":
            ops.append({"type": "pool"})                  # rare un-fused pool
        else:
            ops.append({"type": "dropout"})
        idx += 1
    return ops


# ----------------------------------- forward --------------------------------

def metaresnet_forward(x_nchw, ops):
    N, C, H, W = x_nchw.shape
    x = x_nchw.reshape(N, C, H * W).astype(jnp.float32)   # channel-major, lane-dense
    sum_x = None                                          # fused global-sum carry
    for op in ops:
        if op["type"] == "block":
            if sum_x is None:
                sum_x = total_sum(x)                      # layer 0 only
            stats = split_stats(x, sum_x)                 # one-pass threshold stats
            x, bsum = block_forward(x, stats, op, H, W)
            sum_x = jnp.sum(bsum[:, 0, 0]).reshape(1)     # next layer's sum(x), fused
            if op["pool_after"]:
                H //= 2
                W //= 2
        elif op["type"] == "pool":
            x = avgpool2x2(x, H, W)
            H //= 2
            W //= 2
            sum_x = None                                  # invalidate fused sum
        elif op["type"] == "dropout":
            # TODO(synk): train-mode nn.Dropout is stochastic; eval-mode identity here.
            pass
    return x.reshape(N, x.shape[1], H, W)                 # back to NCHW


# ----------------------------------- main -----------------------------------

if __name__ == "__main__":
    key = jax.random.PRNGKey(0)
    N, C, H, W = 2, 4, 16, 16
    num_layers = [(4, 1)]            # blocks: (4->4), (4->4), AvgPool2d(2), Dropout
    kernel_size = 3
    norm_scale = 0.1773

    key, xkey, pkey = jax.random.split(key, 3)
    x = jax.random.normal(xkey, (N, C, H, W), dtype=jnp.float32)

    ops = build_metaresnet(pkey, num_layers, init_channels=C,
                           kernel_size=kernel_size, norm_scale=norm_scale)

    fwd = jax.jit(lambda inp: metaresnet_forward(inp, ops))
    y = jax.block_until_ready(fwd(x))
    assert y.shape == (N, num_layers[-1][0], H // 2, W // 2), y.shape
    assert bool(jnp.all(jnp.isfinite(y))), "non-finite output"
    print("KERNEL_OK")
</pallas_src>

<mosaic_0001>
module attributes {stable_mosaic.version = 11 : i64} {
  func.func @_sum_kernel(%arg0: i32, %arg1: memref<1x4x256xf32, #tpu.memory_space<vmem>>, %arg2: memref<1x128xf32, #tpu.memory_space<vmem>>, %arg3: memref<1xf32, #tpu.memory_space<smem>>) attributes {dimension_semantics = [#tpu.dimension_semantics<arbitrary>], iteration_bounds = array<i64: 2>, scalar_prefetch = 0 : i64, scratch_operands = 1 : i64, tpu.core_type = #tpu.core_type<tc>, window_params = [{transform_indices = @transform_0, window_bounds = array<i64: 1, 4, 256>}, {pipeline_mode = #tpu.pipeline_mode<synchronous>, transform_indices = @transform_1, window_bounds = array<i64: 1, 128>}]} {
    %c0_i32 = arith.constant 0 : i32
    %0 = arith.cmpi eq, %arg0, %c0_i32 : i32
    %1 = arith.extui %0 : i1 to i32
    %c0_i32_0 = arith.constant 0 : i32
    %2 = arith.cmpi ne, %1, %c0_i32_0 : i32
    scf.if %2 {
      %cst_6 = arith.constant 0.000000e+00 : f32
      %c0_7 = arith.constant 0 : index
      %14 = memref.load %arg3[%c0_7] : memref<1xf32, #tpu.memory_space<smem>>
      memref.store %cst_6, %arg3[%c0_7] : memref<1xf32, #tpu.memory_space<smem>>
    } else {
    }
    %c0 = arith.constant 0 : index
    %3 = memref.load %arg3[%c0] : memref<1xf32, #tpu.memory_space<smem>>
    %c0_1 = arith.constant 0 : index
    %c0_2 = arith.constant 0 : index
    %c0_3 = arith.constant 0 : index
    %4 = vector.load %arg1[%c0_1, %c0_2, %c0_3] : memref<1x4x256xf32, #tpu.memory_space<vmem>>, vector<1x4x256xf32>
    %5 = vector.shape_cast %4 : vector<1x4x256xf32> to vector<1x1x4x256xf32>
    %cst = arith.constant dense<0.000000e+00> : vector<1xf32>
    %6 = vector.multi_reduction <add>, %5, %cst [1, 2, 3] : vector<1x1x4x256xf32> to vector<1xf32>
    %7 = vector.shape_cast %6 : vector<1xf32> to vector<1x1x1x1xf32>
    %8 = vector.extract %7[0, 0, 0, 0] : f32 from vector<1x1x1x1xf32>
    %9 = arith.addf %3, %8 : f32
    %c0_4 = arith.constant 0 : index
    %10 = memref.load %arg3[%c0_4] : memref<1xf32, #tpu.memory_space<smem>>
    memref.store %9, %arg3[%c0_4] : memref<1xf32, #tpu.memory_space<smem>>
    %c1_i32 = arith.constant 1 : i32
    %11 = arith.cmpi eq, %arg0, %c1_i32 : i32
    %12 = arith.extui %11 : i1 to i32
    %c0_i32_5 = arith.constant 0 : i32
    %13 = arith.cmpi ne, %12, %c0_i32_5 : i32
    scf.if %13 {
      %c0_6 = arith.constant 0 : index
      %14 = memref.load %arg3[%c0_6] : memref<1xf32, #tpu.memory_space<smem>>
      %15 = vector.broadcast %14 : f32 to vector<1x128xf32>
      %c0_7 = arith.constant 0 : index
      %c0_8 = arith.constant 0 : index
      %16 = vector.load %arg2[%c0_7, %c0_8] : memref<1x128xf32, #tpu.memory_space<vmem>>, vector<1x128xf32>
      tpu.vector_store %arg2[%c0_7, %c0_8], %15 {strides = array<i32>} : memref<1x128xf32, #tpu.memory_space<vmem>>, vector<1x128xf32>,
    } else {
    }
    return
  }
  func.func @transform_0(%arg0: i32) -> (i32, i32, i32) {
    %c0_i32 = arith.constant 0 : i32
    %c0_i32_0 = arith.constant 0 : i32
    %c0_i32_1 = arith.constant 0 : i32
    return %arg0, %c0_i32, %c0_i32_0 : i32, i32, i32
  }
  func.func @transform_1(%arg0: i32) -> (i32, i32) {
    %c0_i32 = arith.constant 0 : i32
    %c0_i32_0 = arith.constant 0 : i32
    %c0_i32_1 = arith.constant 0 : i32
    return %c0_i32, %c0_i32_0 : i32, i32
  }
}

module attributes {stable_mosaic.version = 11 : i64} {
  func.func @_thresh_kernel(%arg0: i32, %arg1: memref<1xf32, #tpu.memory_space<smem>>, %arg2: memref<1x4x256xf32, #tpu.memory_space<vmem>>, %arg3: memref<3x128xf32, #tpu.memory_space<vmem>>, %arg4: memref<2xf32, #tpu.memory_space<smem>>) attributes {dimension_semantics = [#tpu.dimension_semantics<arbitrary>], iteration_bounds = array<i64: 2>, scalar_prefetch = 0 : i64, scratch_operands = 1 : i64, tpu.core_type = #tpu.core_type<tc>, window_params = [{transform_indices = @transform_0, window_bounds = array<i64: 1>}, {transform_indices = @transform_1, window_bounds = array<i64: 1, 4, 256>}, {pipeline_mode = #tpu.pipeline_mode<synchronous>, transform_indices = @transform_2, window_bounds = array<i64: 3, 128>}]} {
    %c0_i32 = arith.constant 0 : i32
    %0 = arith.cmpi eq, %arg0, %c0_i32 : i32
    %1 = arith.extui %0 : i1 to i32
    %c0_i32_0 = arith.constant 0 : i32
    %2 = arith.cmpi ne, %1, %c0_i32_0 : i32
    scf.if %2 {
      %cst_10 = arith.constant 0.000000e+00 : f32
      %c0_11 = arith.constant 0 : index
      %28 = memref.load %arg4[%c0_11] : memref<2xf32, #tpu.memory_space<smem>>
      memref.store %cst_10, %arg4[%c0_11] : memref<2xf32, #tpu.memory_space<smem>>
      %cst_12 = arith.constant 0.000000e+00 : f32
      %c1_13 = arith.constant 1 : index
      %29 = memref.load %arg4[%c1_13] : memref<2xf32, #tpu.memory_space<smem>>
      memref.store %cst_12, %arg4[%c1_13] : memref<2xf32, #tpu.memory_space<smem>>
    } else {
    }
    %c0 = arith.constant 0 : index
    %3 = memref.load %arg1[%c0] : memref<1xf32, #tpu.memory_space<smem>>
    %cst = arith.constant 4.8828125E-4 : f32
    %4 = arith.mulf %3, %cst : f32
    %c0_1 = arith.constant 0 : index
    %c0_2 = arith.constant 0 : index
    %c0_3 = arith.constant 0 : index
    %5 = vector.load %arg2[%c0_1, %c0_2, %c0_3] : memref<1x4x256xf32, #tpu.memory_space<vmem>>, vector<1x4x256xf32>
    %6 = vector.broadcast %4 : f32 to vector<1x4x256xf32>
    %7 = arith.cmpf ogt, %5, %6 : vector<1x4x256xf32>
    %8 = arith.extui %7 : vector<1x4x256xi1> to vector<1x4x256xi32>
    %9 = arith.sitofp %8 : vector<1x4x256xi32> to vector<1x4x256xf32>
    %c0_4 = arith.constant 0 : index
    %10 = memref.load %arg4[%c0_4] : memref<2xf32, #tpu.memory_space<smem>>
    %11 = arith.mulf %9, %5 : vector<1x4x256xf32>
    %12 = vector.shape_cast %11 : vector<1x4x256xf32> to vector<1x1x4x256xf32>
    %cst_5 = arith.constant dense<0.000000e+00> : vector<1xf32>
    %13 = vector.multi_reduction <add>, %12, %cst_5 [1, 2, 3] : vector<1x1x4x256xf32> to vector<1xf32>
    %14 = vector.shape_cast %13 : vector<1xf32> to vector<1x1x1x1xf32>
    %15 = vector.extract %14[0, 0, 0, 0] : f32 from vector<1x1x1x1xf32>
    %16 = arith.addf %10, %15 : f32
    %c0_6 = arith.constant 0 : index
    %17 = memref.load %arg4[%c0_6] : memref<2xf32, #tpu.memory_space<smem>>
    memref.store %16, %arg4[%c0_6] : memref<2xf32, #tpu.memory_space<smem>>
    %c1 = arith.constant 1 : index
    %18 = memref.load %arg4[%c1] : memref<2xf32, #tpu.memory_space<smem>>
    %19 = vector.shape_cast %9 : vector<1x4x256xf32> to vector<1x1x4x256xf32>
    %cst_7 = arith.constant dense<0.000000e+00> : vector<1xf32>
    %20 = vector.multi_reduction <add>, %19, %cst_7 [1, 2, 3] : vector<1x1x4x256xf32> to vector<1xf32>
    %21 = vector.shape_cast %20 : vector<1xf32> to vector<1x1x1x1xf32>
    %22 = vector.extract %21[0, 0, 0, 0] : f32 from vector<1x1x1x1xf32>
    %23 = arith.addf %18, %22 : f32
    %c1_8 = arith.constant 1 : index
    %24 = memref.load %arg4[%c1_8] : memref<2xf32, #tpu.memory_space<smem>>
    memref.store %23, %arg4[%c1_8] : memref<2xf32, #tpu.memory_space<smem>>
    %c1_i32 = arith.constant 1 : i32
    %25 = arith.cmpi eq, %arg0, %c1_i32 : i32
    %26 = arith.extui %25 : i1 to i32
    %c0_i32_9 = arith.constant 0 : i32
    %27 = arith.cmpi ne, %26, %c0_i32_9 : i32
    scf.if %27 {
      %c0_10 = arith.constant 0 : index
      %28 = memref.load %arg1[%c0_10] : memref<1xf32, #tpu.memory_space<smem>>
      %29 = vector.broadcast %28 : f32 to vector<1x128xf32>
      %c0_11 = arith.constant 0 : index
      %30 = memref.load %arg4[%c0_11] : memref<2xf32, #tpu.memory_space<smem>>
      %31 = vector.broadcast %30 : f32 to vector<1x128xf32>
      %c1_12 = arith.constant 1 : index
      %32 = memref.load %arg4[%c1_12] : memref<2xf32, #tpu.memory_space<smem>>
      %33 = vector.broadcast %32 : f32 to vector<1x128xf32>
      %34 = tpu.concatenate %29, %31, %33 in 0 : vector<1x128xf32>, vector<1x128xf32>, vector<1x128xf32> -> vector<3x128xf32>
      %c0_13 = arith.constant 0 : index
      %c0_14 = arith.constant 0 : index
      %35 = vector.load %arg3[%c0_13, %c0_14] : memref<3x128xf32, #tpu.memory_space<vmem>>, vector<3x128xf32>
      tpu.vector_store %arg3[%c0_13, %c0_14], %34 {strides = array<i32>} : memref<3x128xf32, #tpu.memory_space<vmem>>, vector<3x128xf32>,
    } else {
    }
    return
  }
  func.func @transform_0(%arg0: i32) -> i32 {
    %c0_i32 = arith.constant 0 : i32
    %c0_i32_0 = arith.constant 0 : i32
    return %c0_i32 : i32
  }
  func.func @transform_1(%arg0: i32) -> (i32, i32, i32) {
    %c0_i32 = arith.constant 0 : i32
    %c0_i32_0 = arith.constant 0 : i32
    %c0_i32_1 = arith.constant 0 : i32
    return %arg0, %c0_i32, %c0_i32_0 : i32, i32, i32
  }
  func.func @transform_2(%arg0: i32) -> (i32, i32) {
    %c0_i32 = arith.constant 0 : i32
    %c0_i32_0 = arith.constant 0 : i32
    %c0_i32_1 = arith.constant 0 : i32
    return %c0_i32, %c0_i32_0 : i32, i32
  }
}

module attributes {stable_mosaic.version = 11 : i64} {
  func.func @_thresh_kernel(%arg0: i32, %arg1: memref<1xf32, #tpu.memory_space<smem>>, %arg2: memref<1x4x256xf32, #tpu.memory_space<vmem>>, %arg3: memref<3x128xf32, #tpu.memory_space<vmem>>, %arg4: memref<2xf32, #tpu.memory_space<smem>>) attributes {dimension_semantics = [#tpu.dimension_semantics<arbitrary>], iteration_bounds = array<i64: 2>, scalar_prefetch = 0 : i64, scratch_operands = 1 : i64, tpu.core_type = #tpu.core_type<tc>, window_params = [{transform_indices = @transform_0, window_bounds = array<i64: 1>}, {transform_indices = @transform_1, window_bounds = array<i64: 1, 4, 256>}, {pipeline_mode = #tpu.pipeline_mode<synchronous>, transform_indices = @transform_2, window_bounds = array<i64: 3, 128>}]} {
    %c0_i32 = arith.constant 0 : i32
    %0 = arith.cmpi eq, %arg0, %c0_i32 : i32
    %1 = arith.extui %0 : i1 to i32
    %c0_i32_0 = arith.constant 0 : i32
    %2 = arith.cmpi ne, %1, %c0_i32_0 : i32
    scf.if %2 {
      %cst_10 = arith.constant 0.000000e+00 : f32
      %c0_11 = arith.constant 0 : index
      %28 = memref.load %arg4[%c0_11] : memref<2xf32, #tpu.memory_space<smem>>
      memref.store %cst_10, %arg4[%c0_11] : memref<2xf32, #tpu.memory_space<smem>>
      %cst_12 = arith.constant 0.000000e+00 : f32
      %c1_13 = arith.constant 1 : index
      %29 = memref.load %arg4[%c1_13] : memref<2xf32, #tpu.memory_space<smem>>
      memref.store %cst_12, %arg4[%c1_13] : memref<2xf32, #tpu.memory_space<smem>>
    } else {
    }
    %c0 = arith.constant 0 : index
    %3 = memref.load %arg1[%c0] : memref<1xf32, #tpu.memory_space<smem>>
    %cst = arith.constant 4.8828125E-4 : f32
    %4 = arith.mulf %3, %cst : f32
    %c0_1 = arith.constant 0 : index
    %c0_2 = arith.constant 0 : index
    %c0_3 = arith.constant 0 : index
    %5 = vector.load %arg2[%c0_1, %c0_2, %c0_3] : memref<1x4x256xf32, #tpu.memory_space<vmem>>, vector<1x4x256xf32>
    %6 = vector.broadcast %4 : f32 to vector<1x4x256xf32>
    %7 = arith.cmpf ogt, %5, %6 : vector<1x4x256xf32>
    %8 = arith.extui %7 : vector<1x4x256xi1> to vector<1x4x256xi32>
    %9 = arith.sitofp %8 : vector<1x4x256xi32> to vector<1x4x256xf32>
    %c0_4 = arith.constant 0 : index
    %10 = memref.load %arg4[%c0_4] : memref<2xf32, #tpu.memory_space<smem>>
    %11 = arith.mulf %9, %5 : vector<1x4x256xf32>
    %12 = vector.shape_cast %11 : vector<1x4x256xf32> to vector<1x1x4x256xf32>
    %cst_5 = arith.constant dense<0.000000e+00> : vector<1xf32>
    %13 = vector.multi_reduction <add>, %12, %cst_5 [1, 2, 3] : vector<1x1x4x256xf32> to vector<1xf32>
    %14 = vector.shape_cast %13 : vector<1xf32> to vector<1x1x1x1xf32>
    %15 = vector.extract %14[0, 0, 0, 0] : f32 from vector<1x1x1x1xf32>
    %16 = arith.addf %10, %15 : f32
    %c0_6 = arith.constant 0 : index
    %17 = memref.load %arg4[%c0_6] : memref<2xf32, #tpu.memory_space<smem>>
    memref.store %16, %arg4[%c0_6] : memref<2xf32, #tpu.memory_space<smem>>
    %c1 = arith.constant 1 : index
    %18 = memref.load %arg4[%c1] : memref<2xf32, #tpu.memory_space<smem>>
    %19 = vector.shape_cast %9 : vector<1x4x256xf32> to vector<1x1x4x256xf32>
    %cst_7 = arith.constant dense<0.000000e+00> : vector<1xf32>
    %20 = vector.multi_reduction <add>, %19, %cst_7 [1, 2, 3] : vector<1x1x4x256xf32> to vector<1xf32>
    %21 = vector.shape_cast %20 : vector<1xf32> to vector<1x1x1x1xf32>
    %22 = vector.extract %21[0, 0, 0, 0] : f32 from vector<1x1x1x1xf32>
    %23 = arith.addf %18, %22 : f32
    %c1_8 = arith.constant 1 : index
    %24 = memref.load %arg4[%c1_8] : memref<2xf32, #tpu.memory_space<smem>>
    memref.store %23, %arg4[%c1_8] : memref<2xf32, #tpu.memory_space<smem>>
    %c1_i32 = arith.constant 1 : i32
    %25 = arith.cmpi eq, %arg0, %c1_i32 : i32
    %26 = arith.extui %25 : i1 to i32
    %c0_i32_9 = arith.constant 0 : i32
    %27 = arith.cmpi ne, %26, %c0_i32_9 : i32
    scf.if %27 {
      %c0_10 = arith.constant 0 : index
      %28 = memref.load %arg1[%c0_10] : memref<1xf32, #tpu.memory_space<smem>>
      %29 = vector.broadcast %28 : f32 to vector<1x128xf32>
      %c0_11 = arith.constant 0 : index
      %30 = memref.load %arg4[%c0_11] : memref<2xf32, #tpu.memory_space<smem>>
      %31 = vector.broadcast %30 : f32 to vector<1x128xf32>
      %c1_12 = arith.constant 1 : index
      %32 = memref.load %arg4[%c1_12] : memref<2xf32, #tpu.memory_space<smem>>
      %33 = vector.broadcast %32 : f32 to vector<1x128xf32>
      %34 = tpu.concatenate %29, %31, %33 in 0 : vector<1x128xf32>, vector<1x128xf32>, vector<1x128xf32> -> vector<3x128xf32>
      %c0_13 = arith.constant 0 : index
      %c0_14 = arith.constant 0 : index
      %35 = vector.load %arg3[%c0_13, %c0_14] : memref<3x128xf32, #tpu.memory_space<vmem>>, vector<3x128xf32>
      tpu.vector_store %arg3[%c0_13, %c0_14], %34 {strides = array<i32>} : memref<3x128xf32, #tpu.memory_space<vmem>>, vector<3x128xf32>,
    } else {
    }
    return
  }
  func.func @transform_0(%arg0: i32) -> i32 {
    %c0_i32 = arith.constant 0 : i32
    %c0_i32_0 = arith.constant 0 : i32
    return %c0_i32 : i32
  }
  func.func @transform_1(%arg0: i32) -> (i32, i32, i32) {
    %c0_i32 = arith.constant 0 : i32
    %c0_i32_0 = arith.constant 0 : i32
    %c0_i32_1 = arith.constant 0 : i32
    return %arg0, %c0_i32, %c0_i32_0 : i32, i32, i32
  }
  func.func @transform_2(%arg0: i32) -> (i32, i32) {
    %c0_i32 = arith.constant 0 : i32
    %c0_i32_0 = arith.constant 0 : i32
    %c0_i32_1 = arith.constant 0 : i32
    return %c0_i32, %c0_i32_0 : i32, i32
  }
}

module attributes {stable_mosaic.version = 11 : i64} {
  func.func @_block_kernel(%arg0: i32, %arg1: memref<3xf32, #tpu.memory_space<smem>>, %arg2: memref<1x4x256xf32, #tpu.memory_space<vmem>>, %arg3: memref<64x288xbf16, #tpu.memory_space<vmem>>, %arg4: memref<64x1xf32, #tpu.memory_space<vmem>>, %arg5: memref<9x256xf32, #tpu.memory_space<vmem>>, %arg6: memref<1x4x256xf32, #tpu.memory_space<vmem>>, %arg7: memref<1x1x128xf32, #tpu.memory_space<vmem>>, %arg8: memref<288x256xbf16, #tpu.memory_space<vmem>>) attributes {dimension_semantics = [#tpu.dimension_semantics<parallel>], iteration_bounds = array<i64: 2>, scalar_prefetch = 0 : i64, scratch_operands = 1 : i64, tpu.core_type = #tpu.core_type<tc>, window_params = [{transform_indices = @transform_0, window_bounds = array<i64: 3>}, {transform_indices = @transform_1, window_bounds = array<i64: 1, 4, 256>}, {pipeline_mode = #tpu.pipeline_mode<synchronous>, transform_indices = @transform_2, window_bounds = array<i64: 64, 288>}, {pipeline_mode = #tpu.pipeline_mode<synchronous>, transform_indices = @transform_3, window_bounds = array<i64: 64, 1>}, {pipeline_mode = #tpu.pipeline_mode<synchronous>, transform_indices = @transform_4, window_bounds = array<i64: 9, 256>}, {transform_indices = @transform_5, window_bounds = array<i64: 1, 4, 256>}, {transform_indices = @transform_6, window_bounds = array<i64: 1, 1, 128>}]} {
    %c0 = arith.constant 0 : index
    %0 = memref.load %arg1[%c0] : memref<3xf32, #tpu.memory_space<smem>>
    %c1 = arith.constant 1 : index
    %1 = memref.load %arg1[%c1] : memref<3xf32, #tpu.memory_space<smem>>
    %c2 = arith.constant 2 : index
    %2 = memref.load %arg1[%c2] : memref<3xf32, #tpu.memory_space<smem>>
    %cst = arith.constant 4.8828125E-4 : f32
    %3 = arith.mulf %0, %cst : f32
    %cst_0 = arith.constant 1.000000e+00 : f32
    %4 = arith.maximumf %2, %cst_0 : f32
    %5 = arith.divf %1, %4 : f32
    %6 = arith.subf %0, %1 : f32
    %cst_1 = arith.constant 2.048000e+03 : f32
    %7 = arith.subf %cst_1, %2 : f32
    %cst_2 = arith.constant 1.000000e+00 : f32
    %8 = arith.maximumf %7, %cst_2 : f32
    %9 = arith.divf %6, %8 : f32
    %c0_3 = arith.constant 0 : index
    %c0_4 = arith.constant 0 : index
    %c0_5 = arith.constant 0 : index
    %10 = vector.load %arg2[%c0_3, %c0_4, %c0_5] : memref<1x4x256xf32, #tpu.memory_space<vmem>>, vector<1x4x256xf32>
    %11 = vector.shape_cast %10 : vector<1x4x256xf32> to vector<4x256xf32>
    %12 = vector.broadcast %5 : f32 to vector<4x256xf32>
    %13 = arith.subf %11, %12 : vector<4x256xf32>
    %cst_6 = arith.constant 0.707106769 : f32
    %14 = vector.broadcast %cst_6 : f32 to vector<4x256xf32>
    %15 = arith.mulf %13, %14 : vector<4x256xf32>
    %cst_7 = arith.constant 0.000000e+00 : f32
    %16 = vector.broadcast %cst_7 : f32 to vector<4x256xf32>
    %17 = arith.cmpf oge, %15, %16 : vector<4x256xf32>
    %cst_8 = arith.constant 1.000000e+00 : f32
    %cst_9 = arith.constant -1.000000e+00 : f32
    %18 = vector.broadcast %cst_8 : f32 to vector<4x256xf32>
    %19 = vector.broadcast %cst_9 : f32 to vector<4x256xf32>
    %20 = arith.select %17, %18, %19 : vector<4x256xi1>, vector<4x256xf32>
    %21 = math.absf %15 : vector<4x256xf32>
    %cst_10 = arith.constant 0.327591091 : f32
    %22 = vector.broadcast %cst_10 : f32 to vector<4x256xf32>
    %23 = arith.mulf %22, %21 : vector<4x256xf32>
    %cst_11 = arith.constant 1.000000e+00 : f32
    %24 = vector.broadcast %cst_11 : f32 to vector<4x256xf32>
    %25 = arith.addf %24, %23 : vector<4x256xf32>
    %26 = tpu.reciprocal %25 {approx = true} : vector<4x256xf32> -> vector<4x256xf32>
    %cst_12 = arith.constant 1.06140542 : f32
    %27 = vector.broadcast %cst_12 : f32 to vector<4x256xf32>
    %28 = arith.mulf %27, %26 : vector<4x256xf32>
    %cst_13 = arith.constant -1.45315206 : f32
    %29 = vector.broadcast %cst_13 : f32 to vector<4x256xf32>
    %30 = arith.addf %28, %29 : vector<4x256xf32>
    %31 = arith.mulf %30, %26 : vector<4x256xf32>
    %cst_14 = arith.constant 1.42141378 : f32
    %32 = vector.broadcast %cst_14 : f32 to vector<4x256xf32>
    %33 = arith.addf %31, %32 : vector<4x256xf32>
    %34 = arith.mulf %33, %26 : vector<4x256xf32>
    %cst_15 = arith.constant -0.284496725 : f32
    %35 = vector.broadcast %cst_15 : f32 to vector<4x256xf32>
    %36 = arith.addf %34, %35 : vector<4x256xf32>
    %37 = arith.mulf %36, %26 : vector<4x256xf32>
    %cst_16 = arith.constant 0.254829586 : f32
    %38 = vector.broadcast %cst_16 : f32 to vector<4x256xf32>
    %39 = arith.addf %37, %38 : vector<4x256xf32>
    %40 = arith.mulf %39, %26 : vector<4x256xf32>
    %cst_17 = arith.constant 0.000000e+00 : f32
    %41 = vector.broadcast %cst_17 : f32 to vector<4x256xf32>
    %42 = arith.subf %41, %21 : vector<4x256xf32>
    %43 = arith.mulf %42, %21 : vector<4x256xf32>
    %44 = math.exp %43 : vector<4x256xf32>
    %45 = arith.mulf %40, %44 : vector<4x256xf32>
    %cst_18 = arith.constant 1.000000e+00 : f32
    %46 = vector.broadcast %cst_18 : f32 to vector<4x256xf32>
    %47 = arith.subf %46, %45 : vector<4x256xf32>
    %48 = arith.mulf %20, %47 : vector<4x256xf32>
    %cst_19 = arith.constant 5.000000e-01 : f32
    %49 = vector.broadcast %cst_19 : f32 to vector<4x256xf32>
    %50 = arith.mulf %49, %13 : vector<4x256xf32>
    %cst_20 = arith.constant 1.000000e+00 : f32
    %51 = vector.broadcast %cst_20 : f32 to vector<4x256xf32>
    %52 = arith.addf %51, %48 : vector<4x256xf32>
    %53 = arith.mulf %50, %52 : vector<4x256xf32>
    %cst_21 = arith.constant -5.000000e-01 : f32
    %54 = vector.broadcast %cst_21 : f32 to vector<4x256xf32>
    %55 = arith.mulf %54, %13 : vector<4x256xf32>
    %cst_22 = arith.constant 1.000000e+00 : f32
    %56 = vector.broadcast %cst_22 : f32 to vector<4x256xf32>
    %57 = arith.subf %56, %48 : vector<4x256xf32>
    %58 = arith.mulf %55, %57 : vector<4x256xf32>
    %59 = arith.subf %5, %3 : f32
    %60 = vector.broadcast %59 : f32 to vector<4x256xf32>
    %61 = arith.subf %60, %58 : vector<4x256xf32>
    %cst_23 = arith.constant 5.000000e-01 : f32
    %62 = vector.broadcast %cst_23 : f32 to vector<4x256xf32>
    %63 = arith.mulf %62, %61 : vector<4x256xf32>
    %cst_24 = arith.constant 0.707106769 : f32
    %64 = vector.broadcast %cst_24 : f32 to vector<4x256xf32>
    %65 = arith.mulf %61, %64 : vector<4x256xf32>
    %cst_25 = arith.constant 0.000000e+00 : f32
    %66 = vector.broadcast %cst_25 : f32 to vector<4x256xf32>
    %67 = arith.cmpf oge, %65, %66 : vector<4x256xf32>
    %cst_26 = arith.constant 1.000000e+00 : f32
    %cst_27 = arith.constant -1.000000e+00 : f32
    %68 = vector.broadcast %cst_26 : f32 to vector<4x256xf32>
    %69 = vector.broadcast %cst_27 : f32 to vector<4x256xf32>
    %70 = arith.select %67, %68, %69 : vector<4x256xi1>, vector<4x256xf32>
    %71 = math.absf %65 : vector<4x256xf32>
    %cst_28 = arith.constant 0.327591091 : f32
    %72 = vector.broadcast %cst_28 : f32 to vector<4x256xf32>
    %73 = arith.mulf %72, %71 : vector<4x256xf32>
    %cst_29 = arith.constant 1.000000e+00 : f32
    %74 = vector.broadcast %cst_29 : f32 to vector<4x256xf32>
    %75 = arith.addf %74, %73 : vector<4x256xf32>
    %76 = tpu.reciprocal %75 {approx = true} : vector<4x256xf32> -> vector<4x256xf32>
    %cst_30 = arith.constant 1.06140542 : f32
    %77 = vector.broadcast %cst_30 : f32 to vector<4x256xf32>
    %78 = arith.mulf %77, %76 : vector<4x256xf32>
    %cst_31 = arith.constant -1.45315206 : f32
    %79 = vector.broadcast %cst_31 : f32 to vector<4x256xf32>
    %80 = arith.addf %78, %79 : vector<4x256xf32>
    %81 = arith.mulf %80, %76 : vector<4x256xf32>
    %cst_32 = arith.constant 1.42141378 : f32
    %82 = vector.broadcast %cst_32 : f32 to vector<4x256xf32>
    %83 = arith.addf %81, %82 : vector<4x256xf32>
    %84 = arith.mulf %83, %76 : vector<4x256xf32>
    %cst_33 = arith.constant -0.284496725 : f32
    %85 = vector.broadcast %cst_33 : f32 to vector<4x256xf32>
    %86 = arith.addf %84, %85 : vector<4x256xf32>
    %87 = arith.mulf %86, %76 : vector<4x256xf32>
    %cst_34 = arith.constant 0.254829586 : f32
    %88 = vector.broadcast %cst_34 : f32 to vector<4x256xf32>
    %89 = arith.addf %87, %88 : vector<4x256xf32>
    %90 = arith.mulf %89, %76 : vector<4x256xf32>
    %cst_35 = arith.constant 0.000000e+00 : f32
    %91 = vector.broadcast %cst_35 : f32 to vector<4x256xf32>
    %92 = arith.subf %91, %71 : vector<4x256xf32>
    %93 = arith.mulf %92, %71 : vector<4x256xf32>
    %94 = math.exp %93 : vector<4x256xf32>
    %95 = arith.mulf %90, %94 : vector<4x256xf32>
    %cst_36 = arith.constant 1.000000e+00 : f32
    %96 = vector.broadcast %cst_36 : f32 to vector<4x256xf32>
    %97 = arith.subf %96, %95 : vector<4x256xf32>
    %98 = arith.mulf %70, %97 : vector<4x256xf32>
    %cst_37 = arith.constant 1.000000e+00 : f32
    %99 = vector.broadcast %cst_37 : f32 to vector<4x256xf32>
    %100 = arith.addf %99, %98 : vector<4x256xf32>
    %101 = arith.mulf %63, %100 : vector<4x256xf32>
    %102 = arith.subf %3, %9 : f32
    %103 = vector.broadcast %3 : f32 to vector<4x256xf32>
    %104 = arith.subf %103, %11 : vector<4x256xf32>
    %cst_38 = arith.constant 5.000000e-01 : f32
    %105 = vector.broadcast %cst_38 : f32 to vector<4x256xf32>
    %106 = arith.mulf %105, %104 : vector<4x256xf32>
    %cst_39 = arith.constant 0.707106769 : f32
    %107 = vector.broadcast %cst_39 : f32 to vector<4x256xf32>
    %108 = arith.mulf %104, %107 : vector<4x256xf32>
    %cst_40 = arith.constant 0.000000e+00 : f32
    %109 = vector.broadcast %cst_40 : f32 to vector<4x256xf32>
    %110 = arith.cmpf oge, %108, %109 : vector<4x256xf32>
    %cst_41 = arith.constant 1.000000e+00 : f32
    %cst_42 = arith.constant -1.000000e+00 : f32
    %111 = vector.broadcast %cst_41 : f32 to vector<4x256xf32>
    %112 = vector.broadcast %cst_42 : f32 to vector<4x256xf32>
    %113 = arith.select %110, %111, %112 : vector<4x256xi1>, vector<4x256xf32>
    %114 = math.absf %108 : vector<4x256xf32>
    %cst_43 = arith.constant 0.327591091 : f32
    %115 = vector.broadcast %cst_43 : f32 to vector<4x256xf32>
    %116 = arith.mulf %115, %114 : vector<4x256xf32>
    %cst_44 = arith.constant 1.000000e+00 : f32
    %117 = vector.broadcast %cst_44 : f32 to vector<4x256xf32>
    %118 = arith.addf %117, %116 : vector<4x256xf32>
    %119 = tpu.reciprocal %118 {approx = true} : vector<4x256xf32> -> vector<4x256xf32>
    %cst_45 = arith.constant 1.06140542 : f32
    %120 = vector.broadcast %cst_45 : f32 to vector<4x256xf32>
    %121 = arith.mulf %120, %119 : vector<4x256xf32>
    %cst_46 = arith.constant -1.45315206 : f32
    %122 = vector.broadcast %cst_46 : f32 to vector<4x256xf32>
    %123 = arith.addf %121, %122 : vector<4x256xf32>
    %124 = arith.mulf %123, %119 : vector<4x256xf32>
    %cst_47 = arith.constant 1.42141378 : f32
    %125 = vector.broadcast %cst_47 : f32 to vector<4x256xf32>
    %126 = arith.addf %124, %125 : vector<4x256xf32>
    %127 = arith.mulf %126, %119 : vector<4x256xf32>
    %cst_48 = arith.constant -0.284496725 : f32
    %128 = vector.broadcast %cst_48 : f32 to vector<4x256xf32>
    %129 = arith.addf %127, %128 : vector<4x256xf32>
    %130 = arith.mulf %129, %119 : vector<4x256xf32>
    %cst_49 = arith.constant 0.254829586 : f32
    %131 = vector.broadcast %cst_49 : f32 to vector<4x256xf32>
    %132 = arith.addf %130, %131 : vector<4x256xf32>
    %133 = arith.mulf %132, %119 : vector<4x256xf32>
    %cst_50 = arith.constant 0.000000e+00 : f32
    %134 = vector.broadcast %cst_50 : f32 to vector<4x256xf32>
    %135 = arith.subf %134, %114 : vector<4x256xf32>
    %136 = arith.mulf %135, %114 : vector<4x256xf32>
    %137 = math.exp %136 : vector<4x256xf32>
    %138 = arith.mulf %133, %137 : vector<4x256xf32>
    %cst_51 = arith.constant 1.000000e+00 : f32
    %139 = vector.broadcast %cst_51 : f32 to vector<4x256xf32>
    %140 = arith.subf %139, %138 : vector<4x256xf32>
    %141 = arith.mulf %113, %140 : vector<4x256xf32>
    %cst_52 = arith.constant 1.000000e+00 : f32
    %142 = vector.broadcast %cst_52 : f32 to vector<4x256xf32>
    %143 = arith.addf %142, %141 : vector<4x256xf32>
    %144 = arith.mulf %106, %143 : vector<4x256xf32>
    %145 = vector.broadcast %102 : f32 to vector<4x256xf32>
    %146 = arith.subf %145, %144 : vector<4x256xf32>
    %cst_53 = arith.constant 5.000000e-01 : f32
    %147 = vector.broadcast %cst_53 : f32 to vector<4x256xf32>
    %148 = arith.mulf %147, %146 : vector<4x256xf32>
    %cst_54 = arith.constant 0.707106769 : f32
    %149 = vector.broadcast %cst_54 : f32 to vector<4x256xf32>
    %150 = arith.mulf %146, %149 : vector<4x256xf32>
    %cst_55 = arith.constant 0.000000e+00 : f32
    %151 = vector.broadcast %cst_55 : f32 to vector<4x256xf32>
    %152 = arith.cmpf oge, %150, %151 : vector<4x256xf32>
    %cst_56 = arith.constant 1.000000e+00 : f32
    %cst_57 = arith.constant -1.000000e+00 : f32
    %153 = vector.broadcast %cst_56 : f32 to vector<4x256xf32>
    %154 = vector.broadcast %cst_57 : f32 to vector<4x256xf32>
    %155 = arith.select %152, %153, %154 : vector<4x256xi1>, vector<4x256xf32>
    %156 = math.absf %150 : vector<4x256xf32>
    %cst_58 = arith.constant 0.327591091 : f32
    %157 = vector.broadcast %cst_58 : f32 to vector<4x256xf32>
    %158 = arith.mulf %157, %156 : vector<4x256xf32>
    %cst_59 = arith.constant 1.000000e+00 : f32
    %159 = vector.broadcast %cst_59 : f32 to vector<4x256xf32>
    %160 = arith.addf %159, %158 : vector<4x256xf32>
    %161 = tpu.reciprocal %160 {approx = true} : vector<4x256xf32> -> vector<4x256xf32>
    %cst_60 = arith.constant 1.06140542 : f32
    %162 = vector.broadcast %cst_60 : f32 to vector<4x256xf32>
    %163 = arith.mulf %162, %161 : vector<4x256xf32>
    %cst_61 = arith.constant -1.45315206 : f32
    %164 = vector.broadcast %cst_61 : f32 to vector<4x256xf32>
    %165 = arith.addf %163, %164 : vector<4x256xf32>
    %166 = arith.mulf %165, %161 : vector<4x256xf32>
    %cst_62 = arith.constant 1.42141378 : f32
    %167 = vector.broadcast %cst_62 : f32 to vector<4x256xf32>
    %168 = arith.addf %166, %167 : vector<4x256xf32>
    %169 = arith.mulf %168, %161 : vector<4x256xf32>
    %cst_63 = arith.constant -0.284496725 : f32
    %170 = vector.broadcast %cst_63 : f32 to vector<4x256xf32>
    %171 = arith.addf %169, %170 : vector<4x256xf32>
    %172 = arith.mulf %171, %161 : vector<4x256xf32>
    %cst_64 = arith.constant 0.254829586 : f32
    %173 = vector.broadcast %cst_64 : f32 to vector<4x256xf32>
    %174 = arith.addf %172, %173 : vector<4x256xf32>
    %175 = arith.mulf %174, %161 : vector<4x256xf32>
    %cst_65 = arith.constant 0.000000e+00 : f32
    %176 = vector.broadcast %cst_65 : f32 to vector<4x256xf32>
    %177 = arith.subf %176, %156 : vector<4x256xf32>
    %178 = arith.mulf %177, %156 : vector<4x256xf32>
    %179 = math.exp %178 : vector<4x256xf32>
    %180 = arith.mulf %175, %179 : vector<4x256xf32>
    %cst_66 = arith.constant 1.000000e+00 : f32
    %181 = vector.broadcast %cst_66 : f32 to vector<4x256xf32>
    %182 = arith.subf %181, %180 : vector<4x256xf32>
    %183 = arith.mulf %155, %182 : vector<4x256xf32>
    %cst_67 = arith.constant 1.000000e+00 : f32
    %184 = vector.broadcast %cst_67 : f32 to vector<4x256xf32>
    %185 = arith.addf %184, %183 : vector<4x256xf32>
    %186 = arith.mulf %148, %185 : vector<4x256xf32>
    %187 = vector.broadcast %9 : f32 to vector<4x256xf32>
    %188 = arith.subf %187, %11 : vector<4x256xf32>
    %cst_68 = arith.constant 5.000000e-01 : f32
    %189 = vector.broadcast %cst_68 : f32 to vector<4x256xf32>
    %190 = arith.mulf %189, %188 : vector<4x256xf32>
    %cst_69 = arith.constant 0.707106769 : f32
    %191 = vector.broadcast %cst_69 : f32 to vector<4x256xf32>
    %192 = arith.mulf %188, %191 : vector<4x256xf32>
    %cst_70 = arith.constant 0.000000e+00 : f32
    %193 = vector.broadcast %cst_70 : f32 to vector<4x256xf32>
    %194 = arith.cmpf oge, %192, %193 : vector<4x256xf32>
    %cst_71 = arith.constant 1.000000e+00 : f32
    %cst_72 = arith.constant -1.000000e+00 : f32
    %195 = vector.broadcast %cst_71 : f32 to vector<4x256xf32>
    %196 = vector.broadcast %cst_72 : f32 to vector<4x256xf32>
    %197 = arith.select %194, %195, %196 : vector<4x256xi1>, vector<4x256xf32>
    %198 = math.absf %192 : vector<4x256xf32>
    %cst_73 = arith.constant 0.327591091 : f32
    %199 = vector.broadcast %cst_73 : f32 to vector<4x256xf32>
    %200 = arith.mulf %199, %198 : vector<4x256xf32>
    %cst_74 = arith.constant 1.000000e+00 : f32
    %201 = vector.broadcast %cst_74 : f32 to vector<4x256xf32>
    %202 = arith.addf %201, %200 : vector<4x256xf32>
    %203 = tpu.reciprocal %202 {approx = true} : vector<4x256xf32> -> vector<4x256xf32>
    %cst_75 = arith.constant 1.06140542 : f32
    %204 = vector.broadcast %cst_75 : f32 to vector<4x256xf32>
    %205 = arith.mulf %204, %203 : vector<4x256xf32>
    %cst_76 = arith.constant -1.45315206 : f32
    %206 = vector.broadcast %cst_76 : f32 to vector<4x256xf32>
    %207 = arith.addf %205, %206 : vector<4x256xf32>
    %208 = arith.mulf %207, %203 : vector<4x256xf32>
    %cst_77 = arith.constant 1.42141378 : f32
    %209 = vector.broadcast %cst_77 : f32 to vector<4x256xf32>
    %210 = arith.addf %208, %209 : vector<4x256xf32>
    %211 = arith.mulf %210, %203 : vector<4x256xf32>
    %cst_78 = arith.constant -0.284496725 : f32
    %212 = vector.broadcast %cst_78 : f32 to vector<4x256xf32>
    %213 = arith.addf %211, %212 : vector<4x256xf32>
    %214 = arith.mulf %213, %203 : vector<4x256xf32>
    %cst_79 = arith.constant 0.254829586 : f32
    %215 = vector.broadcast %cst_79 : f32 to vector<4x256xf32>
    %216 = arith.addf %214, %215 : vector<4x256xf32>
    %217 = arith.mulf %216, %203 : vector<4x256xf32>
    %cst_80 = arith.constant 0.000000e+00 : f32
    %218 = vector.broadcast %cst_80 : f32 to vector<4x256xf32>
    %219 = arith.subf %218, %198 : vector<4x256xf32>
    %220 = arith.mulf %219, %198 : vector<4x256xf32>
    %221 = math.exp %220 : vector<4x256xf32>
    %222 = arith.mulf %217, %221 : vector<4x256xf32>
    %cst_81 = arith.constant 1.000000e+00 : f32
    %223 = vector.broadcast %cst_81 : f32 to vector<4x256xf32>
    %224 = arith.subf %223, %222 : vector<4x256xf32>
    %225 = arith.mulf %197, %224 : vector<4x256xf32>
    %cst_82 = arith.constant 1.000000e+00 : f32
    %226 = vector.broadcast %cst_82 : f32 to vector<4x256xf32>
    %227 = arith.addf %226, %225 : vector<4x256xf32>
    %228 = arith.mulf %190, %227 : vector<4x256xf32>
    %cst_83 = arith.constant 0.000000e+00 : f32
    %229 = vector.broadcast %cst_83 : f32 to vector<4x256xf32>
    %230 = arith.subf %229, %228 : vector<4x256xf32>
    %cst_84 = arith.constant 0.177299112 : f32
    %231 = vector.broadcast %cst_84 : f32 to vector<4x256xf32>
    %232 = arith.mulf %231, %53 : vector<4x256xf32>
    %cst_85 = arith.constant 0.177299112 : f32
    %233 = vector.broadcast %cst_85 : f32 to vector<4x256xf32>
    %234 = arith.mulf %233, %101 : vector<4x256xf32>
    %cst_86 = arith.constant 0.177299112 : f32
    %235 = vector.broadcast %cst_86 : f32 to vector<4x256xf32>
    %236 = arith.mulf %235, %186 : vector<4x256xf32>
    %cst_87 = arith.constant 0.177299112 : f32
    %237 = vector.broadcast %cst_87 : f32 to vector<4x256xf32>
    %238 = arith.mulf %237, %230 : vector<4x256xf32>
    %239 = arith.addf %232, %234 : vector<4x256xf32>
    %240 = arith.addf %239, %236 : vector<4x256xf32>
    %241 = arith.addf %240, %238 : vector<4x256xf32>
    %242 = arith.subf %241, %232 : vector<4x256xf32>
    %cst_88 = arith.constant 0.333333343 : f32
    %243 = vector.broadcast %cst_88 : f32 to vector<4x256xf32>
    %244 = arith.mulf %243, %242 : vector<4x256xf32>
    %245 = arith.subf %241, %234 : vector<4x256xf32>
    %cst_89 = arith.constant 0.333333343 : f32
    %246 = vector.broadcast %cst_89 : f32 to vector<4x256xf32>
    %247 = arith.mulf %246, %245 : vector<4x256xf32>
    %248 = arith.subf %241, %236 : vector<4x256xf32>
    %cst_90 = arith.constant 0.333333343 : f32
    %249 = vector.broadcast %cst_90 : f32 to vector<4x256xf32>
    %250 = arith.mulf %249, %248 : vector<4x256xf32>
    %251 = arith.subf %241, %238 : vector<4x256xf32>
    %cst_91 = arith.constant 0.333333343 : f32
    %252 = vector.broadcast %cst_91 : f32 to vector<4x256xf32>
    %253 = arith.mulf %252, %251 : vector<4x256xf32>
    %254 = tpu.concatenate %232, %234, %236, %238, %244, %247, %250, %253 in 0 : vector<4x256xf32>, vector<4x256xf32>, vector<4x256xf32>, vector<4x256xf32>, vector<4x256xf32>, vector<4x256xf32>, vector<4x256xf32>, vector<4x256xf32> -> vector<32x256xf32>
    %cst_92 = arith.constant 0.000000e+00 : f32
    %255 = vector.broadcast %cst_92 : f32 to vector<32x17xf32>
    %256 = tpu.concatenate %255, %254, %255 in 1 : vector<32x17xf32>, vector<32x256xf32>, vector<32x17xf32> -> vector<32x290xf32>
    %257 = vector.extract_strided_slice %256 {offsets = [0, 0], sizes = [32, 256], strides = [1, 1]} : vector<32x290xf32> to vector<32x256xf32>
    %c0_93 = arith.constant 0 : index
    %c0_94 = arith.constant 0 : index
    %258 = vector.load %arg5[%c0_93, %c0_94] : memref<9x256xf32, #tpu.memory_space<vmem>>, vector<1x256xf32>
    %259 = vector.broadcast %258 : vector<1x256xf32> to vector<32x256xf32>
    %260 = arith.mulf %257, %259 : vector<32x256xf32>
    %261 = arith.truncf %260 : vector<32x256xf32> to vector<32x256xbf16>
    %c0_95 = arith.constant 0 : index
    %c0_96 = arith.constant 0 : index
    %262 = vector.load %arg8[%c0_95, %c0_96] : memref<288x256xbf16, #tpu.memory_space<vmem>>, vector<32x256xbf16>
    tpu.vector_store %arg8[%c0_95, %c0_96], %261 {strides = array<i32>} : memref<288x256xbf16, #tpu.memory_space<vmem>>, vector<32x256xbf16>,
    %263 = vector.extract_strided_slice %256 {offsets = [0, 1], sizes = [32, 256], strides = [1, 1]} : vector<32x290xf32> to vector<32x256xf32>
    %c1_97 = arith.constant 1 : index
    %c0_98 = arith.constant 0 : index
    %264 = vector.load %arg5[%c1_97, %c0_98] : memref<9x256xf32, #tpu.memory_space<vmem>>, vector<1x256xf32>
    %265 = vector.broadcast %264 : vector<1x256xf32> to vector<32x256xf32>
    %266 = arith.mulf %263, %265 : vector<32x256xf32>
    %267 = arith.truncf %266 : vector<32x256xf32> to vector<32x256xbf16>
    %c32 = arith.constant 32 : index
    %c0_99 = arith.constant 0 : index
    %268 = vector.load %arg8[%c32, %c0_99] : memref<288x256xbf16, #tpu.memory_space<vmem>>, vector<32x256xbf16>
    tpu.vector_store %arg8[%c32, %c0_99], %267 {strides = array<i32>} : memref<288x256xbf16, #tpu.memory_space<vmem>>, vector<32x256xbf16>,
    %269 = vector.extract_strided_slice %256 {offsets = [0, 2], sizes = [32, 256], strides = [1, 1]} : vector<32x290xf32> to vector<32x256xf32>
    %c2_100 = arith.constant 2 : index
    %c0_101 = arith.constant 0 : index
    %270 = vector.load %arg5[%c2_100, %c0_101] : memref<9x256xf32, #tpu.memory_space<vmem>>, vector<1x256xf32>
    %271 = vector.broadcast %270 : vector<1x256xf32> to vector<32x256xf32>
    %272 = arith.mulf %269, %271 : vector<32x256xf32>
    %273 = arith.truncf %272 : vector<32x256xf32> to vector<32x256xbf16>
    %c64 = arith.constant 64 : index
    %c0_102 = arith.constant 0 : index
    %274 = vector.load %arg8[%c64, %c0_102] : memref<288x256xbf16, #tpu.memory_space<vmem>>, vector<32x256xbf16>
    tpu.vector_store %arg8[%c64, %c0_102], %273 {strides = array<i32>} : memref<288x256xbf16, #tpu.memory_space<vmem>>, vector<32x256xbf16>,
    %275 = vector.extract_strided_slice %256 {offsets = [0, 16], sizes = [32, 256], strides = [1, 1]} : vector<32x290xf32> to vector<32x256xf32>
    %c3 = arith.constant 3 : index
    %c0_103 = arith.constant 0 : index
    %276 = vector.load %arg5[%c3, %c0_103] : memref<9x256xf32, #tpu.memory_space<vmem>>, vector<1x256xf32>
    %277 = vector.broadcast %276 : vector<1x256xf32> to vector<32x256xf32>
    %278 = arith.mulf %275, %277 : vector<32x256xf32>
    %279 = arith.truncf %278 : vector<32x256xf32> to vector<32x256xbf16>
    %c96 = arith.constant 96 : index
    %c0_104 = arith.constant 0 : index
    %280 = vector.load %arg8[%c96, %c0_104] : memref<288x256xbf16, #tpu.memory_space<vmem>>, vector<32x256xbf16>
    tpu.vector_store %arg8[%c96, %c0_104], %279 {strides = array<i32>} : memref<288x256xbf16, #tpu.memory_space<vmem>>, vector<32x256xbf16>,
    %281 = vector.extract_strided_slice %256 {offsets = [0, 17], sizes = [32, 256], strides = [1, 1]} : vector<32x290xf32> to vector<32x256xf32>
    %c4 = arith.constant 4 : index
    %c0_105 = arith.constant 0 : index
    %282 = vector.load %arg5[%c4, %c0_105] : memref<9x256xf32, #tpu.memory_space<vmem>>, vector<1x256xf32>
    %283 = vector.broadcast %282 : vector<1x256xf32> to vector<32x256xf32>
    %284 = arith.mulf %281, %283 : vector<32x256xf32>
    %285 = arith.truncf %284 : vector<32x256xf32> to vector<32x256xbf16>
    %c128 = arith.constant 128 : index
    %c0_106 = arith.constant 0 : index
    %286 = vector.load %arg8[%c128, %c0_106] : memref<288x256xbf16, #tpu.memory_space<vmem>>, vector<32x256xbf16>
    tpu.vector_store %arg8[%c128, %c0_106], %285 {strides = array<i32>} : memref<288x256xbf16, #tpu.memory_space<vmem>>, vector<32x256xbf16>,
    %287 = vector.extract_strided_slice %256 {offsets = [0, 18], sizes = [32, 256], strides = [1, 1]} : vector<32x290xf32> to vector<32x256xf32>
    %c5 = arith.constant 5 : index
    %c0_107 = arith.constant 0 : index
    %288 = vector.load %arg5[%c5, %c0_107] : memref<9x256xf32, #tpu.memory_space<vmem>>, vector<1x256xf32>
    %289 = vector.broadcast %288 : vector<1x256xf32> to vector<32x256xf32>
    %290 = arith.mulf %287, %289 : vector<32x256xf32>
    %291 = arith.truncf %290 : vector<32x256xf32> to vector<32x256xbf16>
    %c160 = arith.constant 160 : index
    %c0_108 = arith.constant 0 : index
    %292 = vector.load %arg8[%c160, %c0_108] : memref<288x256xbf16, #tpu.memory_space<vmem>>, vector<32x256xbf16>
    tpu.vector_store %arg8[%c160, %c0_108], %291 {strides = array<i32>} : memref<288x256xbf16, #tpu.memory_space<vmem>>, vector<32x256xbf16>,
    %293 = vector.extract_strided_slice %256 {offsets = [0, 32], sizes = [32, 256], strides = [1, 1]} : vector<32x290xf32> to vector<32x256xf32>
    %c6 = arith.constant 6 : index
    %c0_109 = arith.constant 0 : index
    %294 = vector.load %arg5[%c6, %c0_109] : memref<9x256xf32, #tpu.memory_space<vmem>>, vector<1x256xf32>
    %295 = vector.broadcast %294 : vector<1x256xf32> to vector<32x256xf32>
    %296 = arith.mulf %293, %295 : vector<32x256xf32>
    %297 = arith.truncf %296 : vector<32x256xf32> to vector<32x256xbf16>
    %c192 = arith.constant 192 : index
    %c0_110 = arith.constant 0 : index
    %298 = vector.load %arg8[%c192, %c0_110] : memref<288x256xbf16, #tpu.memory_space<vmem>>, vector<32x256xbf16>
    tpu.vector_store %arg8[%c192, %c0_110], %297 {strides = array<i32>} : memref<288x256xbf16, #tpu.memory_space<vmem>>, vector<32x256xbf16>,
    %299 = vector.extract_strided_slice %256 {offsets = [0, 33], sizes = [32, 256], strides = [1, 1]} : vector<32x290xf32> to vector<32x256xf32>
    %c7 = arith.constant 7 : index
    %c0_111 = arith.constant 0 : index
    %300 = vector.load %arg5[%c7, %c0_111] : memref<9x256xf32, #tpu.memory_space<vmem>>, vector<1x256xf32>
    %301 = vector.broadcast %300 : vector<1x256xf32> to vector<32x256xf32>
    %302 = arith.mulf %299, %301 : vector<32x256xf32>
    %303 = arith.truncf %302 : vector<32x256xf32> to vector<32x256xbf16>
    %c224 = arith.constant 224 : index
    %c0_112 = arith.constant 0 : index
    %304 = vector.load %arg8[%c224, %c0_112] : memref<288x256xbf16, #tpu.memory_space<vmem>>, vector<32x256xbf16>
    tpu.vector_store %arg8[%c224, %c0_112], %303 {strides = array<i32>} : memref<288x256xbf16, #tpu.memory_space<vmem>>, vector<32x256xbf16>,
    %305 = vector.extract_strided_slice %256 {offsets = [0, 34], sizes = [32, 256], strides = [1, 1]} : vector<32x290xf32> to vector<32x256xf32>
    %c8 = arith.constant 8 : index
    %c0_113 = arith.constant 0 : index
    %306 = vector.load %arg5[%c8, %c0_113] : memref<9x256xf32, #tpu.memory_space<vmem>>, vector<1x256xf32>
    %307 = vector.broadcast %306 : vector<1x256xf32> to vector<32x256xf32>
    %308 = arith.mulf %305, %307 : vector<32x256xf32>
    %309 = arith.truncf %308 : vector<32x256xf32> to vector<32x256xbf16>
    %c256 = arith.constant 256 : index
    %c0_114 = arith.constant 0 : index
    %310 = vector.load %arg8[%c256, %c0_114] : memref<288x256xbf16, #tpu.memory_space<vmem>>, vector<32x256xbf16>
    tpu.vector_store %arg8[%c256, %c0_114], %309 {strides = array<i32>} : memref<288x256xbf16, #tpu.memory_space<vmem>>, vector<32x256xbf16>,
    %c0_115 = arith.constant 0 : index
    %c0_116 = arith.constant 0 : index
    %311 = vector.load %arg3[%c0_115, %c0_116] : memref<64x288xbf16, #tpu.memory_space<vmem>>, vector<64x288xbf16>
    %c0_117 = arith.constant 0 : index
    %c0_118 = arith.constant 0 : index
    %312 = vector.load %arg8[%c0_117, %c0_118] : memref<288x256xbf16, #tpu.memory_space<vmem>>, vector<288x256xbf16>
    %cst_119 = arith.constant dense<0.000000e+00> : vector<64x256xf32>
    %313 = tpu.matmul %311, %312, %cst_119 {dimension_numbers = #tpu.dot_dimension_numbers<[1], [0], [0], [1], [0, 0, 1, 1], [], []>} : vector<64x288xbf16>, vector<288x256xbf16>, vector<64x256xf32> -> vector<64x256xf32>
    %c0_120 = arith.constant 0 : index
    %c0_121 = arith.constant 0 : index
    %314 = vector.load %arg4[%c0_120, %c0_121] : memref<64x1xf32, #tpu.memory_space<vmem>>, vector<64x1xf32>
    %315 = vector.broadcast %314 : vector<64x1xf32> to vector<64x256xf32>
    %316 = arith.addf %313, %315 : vector<64x256xf32>
    %317 = vector.extract_strided_slice %316 {offsets = [0, 0], sizes = [32, 256], strides = [1, 1]} : vector<64x256xf32> to vector<32x256xf32>
    %318 = vector.extract_strided_slice %316 {offsets = [32, 0], sizes = [32, 256], strides = [1, 1]} : vector<64x256xf32> to vector<32x256xf32>
    %319 = arith.mulf %317, %318 : vector<32x256xf32>
    %cst_122 = arith.constant dense<0.000000e+00> : vector<32xf32>
    %320 = vector.multi_reduction <add>, %319, %cst_122 [1] : vector<32x256xf32> to vector<32xf32>
    %321 = vector.shape_cast %320 : vector<32xf32> to vector<32x1xf32>
    %322 = arith.mulf %319, %319 : vector<32x256xf32>
    %cst_123 = arith.constant dense<0.000000e+00> : vector<32xf32>
    %323 = vector.multi_reduction <add>, %322, %cst_123 [1] : vector<32x256xf32> to vector<32xf32>
    %324 = vector.shape_cast %323 : vector<32xf32> to vector<32x1xf32>
    %cst_124 = arith.constant 0.000000e+00 : f32
    %325 = vector.broadcast %cst_124 : f32 to vector<4x256xf32>
    %326 = vector.extract_strided_slice %319 {offsets = [0, 0], sizes = [4, 256], strides = [1, 1]} : vector<32x256xf32> to vector<4x256xf32>
    %327 = vector.extract_strided_slice %321 {offsets = [0, 0], sizes = [4, 1], strides = [1, 1]} : vector<32x1xf32> to vector<4x1xf32>
    %328 = vector.shape_cast %327 : vector<4x1xf32> to vector<1x4x1xf32>
    %cst_125 = arith.constant dense<0.000000e+00> : vector<1xf32>
    %329 = vector.multi_reduction <add>, %328, %cst_125 [1, 2] : vector<1x4x1xf32> to vector<1xf32>
    %330 = vector.shape_cast %329 : vector<1xf32> to vector<1x1x1xf32>
    %331 = vector.extract %330[0, 0, 0] : f32 from vector<1x1x1xf32>
    %cst_126 = arith.constant 9.765625E-4 : f32
    %332 = arith.mulf %331, %cst_126 : f32
    %333 = vector.extract_strided_slice %324 {offsets = [0, 0], sizes = [4, 1], strides = [1, 1]} : vector<32x1xf32> to vector<4x1xf32>
    %334 = vector.shape_cast %333 : vector<4x1xf32> to vector<1x4x1xf32>
    %cst_127 = arith.constant dense<0.000000e+00> : vector<1xf32>
    %335 = vector.multi_reduction <add>, %334, %cst_127 [1, 2] : vector<1x4x1xf32> to vector<1xf32>
    %336 = vector.shape_cast %335 : vector<1xf32> to vector<1x1x1xf32>
    %337 = vector.extract %336[0, 0, 0] : f32 from vector<1x1x1xf32>
    %cst_128 = arith.constant 9.765625E-4 : f32
    %338 = arith.mulf %337, %cst_128 : f32
    %339 = arith.mulf %332, %332 : f32
    %340 = arith.subf %338, %339 : f32
    %cst_129 = arith.constant 0.000000e+00 : f32
    %341 = arith.maximumf %340, %cst_129 : f32
    %cst_130 = arith.constant 1.000000e+00 : f32
    %342 = vector.broadcast %cst_130 : f32 to vector<4x256xf32>
    %343 = arith.mulf %342, %326 : vector<4x256xf32>
    %344 = arith.addf %325, %343 : vector<4x256xf32>
    %cst_131 = arith.constant 9.99999974E-6 : f32
    %345 = arith.addf %341, %cst_131 : f32
    %346 = math.rsqrt %345 : f32
    %cst_132 = arith.constant 1.773000e-01 : f32
    %347 = arith.mulf %cst_132, %346 : f32
    %348 = vector.broadcast %332 : f32 to vector<4x256xf32>
    %349 = arith.subf %326, %348 : vector<4x256xf32>
    %350 = vector.broadcast %347 : f32 to vector<4x256xf32>
    %351 = arith.mulf %350, %349 : vector<4x256xf32>
    %352 = arith.addf %344, %351 : vector<4x256xf32>
    %353 = vector.extract_strided_slice %319 {offsets = [4, 0], sizes = [4, 256], strides = [1, 1]} : vector<32x256xf32> to vector<4x256xf32>
    %354 = vector.extract_strided_slice %321 {offsets = [4, 0], sizes = [4, 1], strides = [1, 1]} : vector<32x1xf32> to vector<4x1xf32>
    %355 = vector.shape_cast %354 : vector<4x1xf32> to vector<1x4x1xf32>
    %cst_133 = arith.constant dense<0.000000e+00> : vector<1xf32>
    %356 = vector.multi_reduction <add>, %355, %cst_133 [1, 2] : vector<1x4x1xf32> to vector<1xf32>
    %357 = vector.shape_cast %356 : vector<1xf32> to vector<1x1x1xf32>
    %358 = vector.extract %357[0, 0, 0] : f32 from vector<1x1x1xf32>
    %cst_134 = arith.constant 9.765625E-4 : f32
    %359 = arith.mulf %358, %cst_134 : f32
    %360 = vector.extract_strided_slice %324 {offsets = [4, 0], sizes = [4, 1], strides = [1, 1]} : vector<32x1xf32> to vector<4x1xf32>
    %361 = vector.shape_cast %360 : vector<4x1xf32> to vector<1x4x1xf32>
    %cst_135 = arith.constant dense<0.000000e+00> : vector<1xf32>
    %362 = vector.multi_reduction <add>, %361, %cst_135 [1, 2] : vector<1x4x1xf32> to vector<1xf32>
    %363 = vector.shape_cast %362 : vector<1xf32> to vector<1x1x1xf32>
    %364 = vector.extract %363[0, 0, 0] : f32 from vector<1x1x1xf32>
    %cst_136 = arith.constant 9.765625E-4 : f32
    %365 = arith.mulf %364, %cst_136 : f32
    %366 = arith.mulf %359, %359 : f32
    %367 = arith.subf %365, %366 : f32
    %cst_137 = arith.constant 0.000000e+00 : f32
    %368 = arith.maximumf %367, %cst_137 : f32
    %cst_138 = arith.constant 1.000000e+00 : f32
    %369 = vector.broadcast %cst_138 : f32 to vector<4x256xf32>
    %370 = arith.mulf %369, %353 : vector<4x256xf32>
    %371 = arith.addf %352, %370 : vector<4x256xf32>
    %cst_139 = arith.constant 9.99999974E-6 : f32
    %372 = arith.addf %368, %cst_139 : f32
    %373 = math.rsqrt %372 : f32
    %cst_140 = arith.constant 1.773000e-01 : f32
    %374 = arith.mulf %cst_140, %373 : f32
    %375 = vector.broadcast %359 : f32 to vector<4x256xf32>
    %376 = arith.subf %353, %375 : vector<4x256xf32>
    %377 = vector.broadcast %374 : f32 to vector<4x256xf32>
    %378 = arith.mulf %377, %376 : vector<4x256xf32>
    %379 = arith.addf %371, %378 : vector<4x256xf32>
    %380 = vector.extract_strided_slice %319 {offsets = [8, 0], sizes = [4, 256], strides = [1, 1]} : vector<32x256xf32> to vector<4x256xf32>
    %381 = vector.extract_strided_slice %321 {offsets = [8, 0], sizes = [4, 1], strides = [1, 1]} : vector<32x1xf32> to vector<4x1xf32>
    %382 = vector.shape_cast %381 : vector<4x1xf32> to vector<1x4x1xf32>
    %cst_141 = arith.constant dense<0.000000e+00> : vector<1xf32>
    %383 = vector.multi_reduction <add>, %382, %cst_141 [1, 2] : vector<1x4x1xf32> to vector<1xf32>
    %384 = vector.shape_cast %383 : vector<1xf32> to vector<1x1x1xf32>
    %385 = vector.extract %384[0, 0, 0] : f32 from vector<1x1x1xf32>
    %cst_142 = arith.constant 9.765625E-4 : f32
    %386 = arith.mulf %385, %cst_142 : f32
    %387 = vector.extract_strided_slice %324 {offsets = [8, 0], sizes = [4, 1], strides = [1, 1]} : vector<32x1xf32> to vector<4x1xf32>
    %388 = vector.shape_cast %387 : vector<4x1xf32> to vector<1x4x1xf32>
    %cst_143 = arith.constant dense<0.000000e+00> : vector<1xf32>
    %389 = vector.multi_reduction <add>, %388, %cst_143 [1, 2] : vector<1x4x1xf32> to vector<1xf32>
    %390 = vector.shape_cast %389 : vector<1xf32> to vector<1x1x1xf32>
    %391 = vector.extract %390[0, 0, 0] : f32 from vector<1x1x1xf32>
    %cst_144 = arith.constant 9.765625E-4 : f32
    %392 = arith.mulf %391, %cst_144 : f32
    %393 = arith.mulf %386, %386 : f32
    %394 = arith.subf %392, %393 : f32
    %cst_145 = arith.constant 0.000000e+00 : f32
    %395 = arith.maximumf %394, %cst_145 : f32
    %cst_146 = arith.constant 1.000000e+00 : f32
    %396 = vector.broadcast %cst_146 : f32 to vector<4x256xf32>
    %397 = arith.mulf %396, %380 : vector<4x256xf32>
    %398 = arith.addf %379, %397 : vector<4x256xf32>
    %cst_147 = arith.constant 9.99999974E-6 : f32
    %399 = arith.addf %395, %cst_147 : f32
    %400 = math.rsqrt %399 : f32
    %cst_148 = arith.constant 1.773000e-01 : f32
    %401 = arith.mulf %cst_148, %400 : f32
    %402 = vector.broadcast %386 : f32 to vector<4x256xf32>
    %403 = arith.subf %380, %402 : vector<4x256xf32>
    %404 = vector.broadcast %401 : f32 to vector<4x256xf32>
    %405 = arith.mulf %404, %403 : vector<4x256xf32>
    %406 = arith.addf %398, %405 : vector<4x256xf32>
    %407 = vector.extract_strided_slice %319 {offsets = [12, 0], sizes = [4, 256], strides = [1, 1]} : vector<32x256xf32> to vector<4x256xf32>
    %408 = vector.extract_strided_slice %321 {offsets = [12, 0], sizes = [4, 1], strides = [1, 1]} : vector<32x1xf32> to vector<4x1xf32>
    %409 = vector.shape_cast %408 : vector<4x1xf32> to vector<1x4x1xf32>
    %cst_149 = arith.constant dense<0.000000e+00> : vector<1xf32>
    %410 = vector.multi_reduction <add>, %409, %cst_149 [1, 2] : vector<1x4x1xf32> to vector<1xf32>
    %411 = vector.shape_cast %410 : vector<1xf32> to vector<1x1x1xf32>
    %412 = vector.extract %411[0, 0, 0] : f32 from vector<1x1x1xf32>
    %cst_150 = arith.constant 9.765625E-4 : f32
    %413 = arith.mulf %412, %cst_150 : f32
    %414 = vector.extract_strided_slice %324 {offsets = [12, 0], sizes = [4, 1], strides = [1, 1]} : vector<32x1xf32> to vector<4x1xf32>
    %415 = vector.shape_cast %414 : vector<4x1xf32> to vector<1x4x1xf32>
    %cst_151 = arith.constant dense<0.000000e+00> : vector<1xf32>
    %416 = vector.multi_reduction <add>, %415, %cst_151 [1, 2] : vector<1x4x1xf32> to vector<1xf32>
    %417 = vector.shape_cast %416 : vector<1xf32> to vector<1x1x1xf32>
    %418 = vector.extract %417[0, 0, 0] : f32 from vector<1x1x1xf32>
    %cst_152 = arith.constant 9.765625E-4 : f32
    %419 = arith.mulf %418, %cst_152 : f32
    %420 = arith.mulf %413, %413 : f32
    %421 = arith.subf %419, %420 : f32
    %cst_153 = arith.constant 0.000000e+00 : f32
    %422 = arith.maximumf %421, %cst_153 : f32
    %cst_154 = arith.constant 1.000000e+00 : f32
    %423 = vector.broadcast %cst_154 : f32 to vector<4x256xf32>
    %424 = arith.mulf %423, %407 : vector<4x256xf32>
    %425 = arith.addf %406, %424 : vector<4x256xf32>
    %cst_155 = arith.constant 9.99999974E-6 : f32
    %426 = arith.addf %422, %cst_155 : f32
    %427 = math.rsqrt %426 : f32
    %cst_156 = arith.constant 1.773000e-01 : f32
    %428 = arith.mulf %cst_156, %427 : f32
    %429 = vector.broadcast %413 : f32 to vector<4x256xf32>
    %430 = arith.subf %407, %429 : vector<4x256xf32>
    %431 = vector.broadcast %428 : f32 to vector<4x256xf32>
    %432 = arith.mulf %431, %430 : vector<4x256xf32>
    %433 = arith.addf %425, %432 : vector<4x256xf32>
    %434 = vector.extract_strided_slice %319 {offsets = [16, 0], sizes = [4, 256], strides = [1, 1]} : vector<32x256xf32> to vector<4x256xf32>
    %435 = vector.extract_strided_slice %321 {offsets = [16, 0], sizes = [4, 1], strides = [1, 1]} : vector<32x1xf32> to vector<4x1xf32>
    %436 = vector.shape_cast %435 : vector<4x1xf32> to vector<1x4x1xf32>
    %cst_157 = arith.constant dense<0.000000e+00> : vector<1xf32>
    %437 = vector.multi_reduction <add>, %436, %cst_157 [1, 2] : vector<1x4x1xf32> to vector<1xf32>
    %438 = vector.shape_cast %437 : vector<1xf32> to vector<1x1x1xf32>
    %439 = vector.extract %438[0, 0, 0] : f32 from vector<1x1x1xf32>
    %cst_158 = arith.constant 9.765625E-4 : f32
    %440 = arith.mulf %439, %cst_158 : f32
    %441 = vector.extract_strided_slice %324 {offsets = [16, 0], sizes = [4, 1], strides = [1, 1]} : vector<32x1xf32> to vector<4x1xf32>
    %442 = vector.shape_cast %441 : vector<4x1xf32> to vector<1x4x1xf32>
    %cst_159 = arith.constant dense<0.000000e+00> : vector<1xf32>
    %443 = vector.multi_reduction <add>, %442, %cst_159 [1, 2] : vector<1x4x1xf32> to vector<1xf32>
    %444 = vector.shape_cast %443 : vector<1xf32> to vector<1x1x1xf32>
    %445 = vector.extract %444[0, 0, 0] : f32 from vector<1x1x1xf32>
    %cst_160 = arith.constant 9.765625E-4 : f32
    %446 = arith.mulf %445, %cst_160 : f32
    %447 = arith.mulf %440, %440 : f32
    %448 = arith.subf %446, %447 : f32
    %cst_161 = arith.constant 0.000000e+00 : f32
    %449 = arith.maximumf %448, %cst_161 : f32
    %cst_162 = arith.constant 1.000000e+00 : f32
    %450 = vector.broadcast %cst_162 : f32 to vector<4x256xf32>
    %451 = arith.mulf %450, %434 : vector<4x256xf32>
    %452 = arith.addf %433, %451 : vector<4x256xf32>
    %cst_163 = arith.constant 9.99999974E-6 : f32
    %453 = arith.addf %449, %cst_163 : f32
    %454 = math.rsqrt %453 : f32
    %cst_164 = arith.constant 1.773000e-01 : f32
    %455 = arith.mulf %cst_164, %454 : f32
    %456 = vector.broadcast %440 : f32 to vector<4x256xf32>
    %457 = arith.subf %434, %456 : vector<4x256xf32>
    %458 = vector.broadcast %455 : f32 to vector<4x256xf32>
    %459 = arith.mulf %458, %457 : vector<4x256xf32>
    %460 = arith.addf %452, %459 : vector<4x256xf32>
    %461 = vector.extract_strided_slice %319 {offsets = [20, 0], sizes = [4, 256], strides = [1, 1]} : vector<32x256xf32> to vector<4x256xf32>
    %462 = vector.extract_strided_slice %321 {offsets = [20, 0], sizes = [4, 1], strides = [1, 1]} : vector<32x1xf32> to vector<4x1xf32>
    %463 = vector.shape_cast %462 : vector<4x1xf32> to vector<1x4x1xf32>
    %cst_165 = arith.constant dense<0.000000e+00> : vector<1xf32>
    %464 = vector.multi_reduction <add>, %463, %cst_165 [1, 2] : vector<1x4x1xf32> to vector<1xf32>
    %465 = vector.shape_cast %464 : vector<1xf32> to vector<1x1x1xf32>
    %466 = vector.extract %465[0, 0, 0] : f32 from vector<1x1x1xf32>
    %cst_166 = arith.constant 9.765625E-4 : f32
    %467 = arith.mulf %466, %cst_166 : f32
    %468 = vector.extract_strided_slice %324 {offsets = [20, 0], sizes = [4, 1], strides = [1, 1]} : vector<32x1xf32> to vector<4x1xf32>
    %469 = vector.shape_cast %468 : vector<4x1xf32> to vector<1x4x1xf32>
    %cst_167 = arith.constant dense<0.000000e+00> : vector<1xf32>
    %470 = vector.multi_reduction <add>, %469, %cst_167 [1, 2] : vector<1x4x1xf32> to vector<1xf32>
    %471 = vector.shape_cast %470 : vector<1xf32> to vector<1x1x1xf32>
    %472 = vector.extract %471[0, 0, 0] : f32 from vector<1x1x1xf32>
    %cst_168 = arith.constant 9.765625E-4 : f32
    %473 = arith.mulf %472, %cst_168 : f32
    %474 = arith.mulf %467, %467 : f32
    %475 = arith.subf %473, %474 : f32
    %cst_169 = arith.constant 0.000000e+00 : f32
    %476 = arith.maximumf %475, %cst_169 : f32
    %cst_170 = arith.constant 1.000000e+00 : f32
    %477 = vector.broadcast %cst_170 : f32 to vector<4x256xf32>
    %478 = arith.mulf %477, %461 : vector<4x256xf32>
    %479 = arith.addf %460, %478 : vector<4x256xf32>
    %cst_171 = arith.constant 9.99999974E-6 : f32
    %480 = arith.addf %476, %cst_171 : f32
    %481 = math.rsqrt %480 : f32
    %cst_172 = arith.constant 1.773000e-01 : f32
    %482 = arith.mulf %cst_172, %481 : f32
    %483 = vector.broadcast %467 : f32 to vector<4x256xf32>
    %484 = arith.subf %461, %483 : vector<4x256xf32>
    %485 = vector.broadcast %482 : f32 to vector<4x256xf32>
    %486 = arith.mulf %485, %484 : vector<4x256xf32>
    %487 = arith.addf %479, %486 : vector<4x256xf32>
    %488 = vector.extract_strided_slice %319 {offsets = [24, 0], sizes = [4, 256], strides = [1, 1]} : vector<32x256xf32> to vector<4x256xf32>
    %489 = vector.extract_strided_slice %321 {offsets = [24, 0], sizes = [4, 1], strides = [1, 1]} : vector<32x1xf32> to vector<4x1xf32>
    %490 = vector.shape_cast %489 : vector<4x1xf32> to vector<1x4x1xf32>
    %cst_173 = arith.constant dense<0.000000e+00> : vector<1xf32>
    %491 = vector.multi_reduction <add>, %490, %cst_173 [1, 2] : vector<1x4x1xf32> to vector<1xf32>
    %492 = vector.shape_cast %491 : vector<1xf32> to vector<1x1x1xf32>
    %493 = vector.extract %492[0, 0, 0] : f32 from vector<1x1x1xf32>
    %cst_174 = arith.constant 9.765625E-4 : f32
    %494 = arith.mulf %493, %cst_174 : f32
    %495 = vector.extract_strided_slice %324 {offsets = [24, 0], sizes = [4, 1], strides = [1, 1]} : vector<32x1xf32> to vector<4x1xf32>
    %496 = vector.shape_cast %495 : vector<4x1xf32> to vector<1x4x1xf32>
    %cst_175 = arith.constant dense<0.000000e+00> : vector<1xf32>
    %497 = vector.multi_reduction <add>, %496, %cst_175 [1, 2] : vector<1x4x1xf32> to vector<1xf32>
    %498 = vector.shape_cast %497 : vector<1xf32> to vector<1x1x1xf32>
    %499 = vector.extract %498[0, 0, 0] : f32 from vector<1x1x1xf32>
    %cst_176 = arith.constant 9.765625E-4 : f32
    %500 = arith.mulf %499, %cst_176 : f32
    %501 = arith.mulf %494, %494 : f32
    %502 = arith.subf %500, %501 : f32
    %cst_177 = arith.constant 0.000000e+00 : f32
    %503 = arith.maximumf %502, %cst_177 : f32
    %cst_178 = arith.constant 1.000000e+00 : f32
    %504 = vector.broadcast %cst_178 : f32 to vector<4x256xf32>
    %505 = arith.mulf %504, %488 : vector<4x256xf32>
    %506 = arith.addf %487, %505 : vector<4x256xf32>
    %cst_179 = arith.constant 9.99999974E-6 : f32
    %507 = arith.addf %503, %cst_179 : f32
    %508 = math.rsqrt %507 : f32
    %cst_180 = arith.constant 1.773000e-01 : f32
    %509 = arith.mulf %cst_180, %508 : f32
    %510 = vector.broadcast %494 : f32 to vector<4x256xf32>
    %511 = arith.subf %488, %510 : vector<4x256xf32>
    %512 = vector.broadcast %509 : f32 to vector<4x256xf32>
    %513 = arith.mulf %512, %511 : vector<4x256xf32>
    %514 = arith.addf %506, %513 : vector<4x256xf32>
    %515 = vector.extract_strided_slice %319 {offsets = [28, 0], sizes = [4, 256], strides = [1, 1]} : vector<32x256xf32> to vector<4x256xf32>
    %516 = vector.extract_strided_slice %321 {offsets = [28, 0], sizes = [4, 1], strides = [1, 1]} : vector<32x1xf32> to vector<4x1xf32>
    %517 = vector.shape_cast %516 : vector<4x1xf32> to vector<1x4x1xf32>
    %cst_181 = arith.constant dense<0.000000e+00> : vector<1xf32>
    %518 = vector.multi_reduction <add>, %517, %cst_181 [1, 2] : vector<1x4x1xf32> to vector<1xf32>
    %519 = vector.shape_cast %518 : vector<1xf32> to vector<1x1x1xf32>
    %520 = vector.extract %519[0, 0, 0] : f32 from vector<1x1x1xf32>
    %cst_182 = arith.constant 9.765625E-4 : f32
    %521 = arith.mulf %520, %cst_182 : f32
    %522 = vector.extract_strided_slice %324 {offsets = [28, 0], sizes = [4, 1], strides = [1, 1]} : vector<32x1xf32> to vector<4x1xf32>
    %523 = vector.shape_cast %522 : vector<4x1xf32> to vector<1x4x1xf32>
    %cst_183 = arith.constant dense<0.000000e+00> : vector<1xf32>
    %524 = vector.multi_reduction <add>, %523, %cst_183 [1, 2] : vector<1x4x1xf32> to vector<1xf32>
    %525 = vector.shape_cast %524 : vector<1xf32> to vector<1x1x1xf32>
    %526 = vector.extract %525[0, 0, 0] : f32 from vector<1x1x1xf32>
    %cst_184 = arith.constant 9.765625E-4 : f32
    %527 = arith.mulf %526, %cst_184 : f32
    %528 = arith.mulf %521, %521 : f32
    %529 = arith.subf %527, %528 : f32
    %cst_185 = arith.constant 0.000000e+00 : f32
    %530 = arith.maximumf %529, %cst_185 : f32
    %cst_186 = arith.constant 1.000000e+00 : f32
    %531 = vector.broadcast %cst_186 : f32 to vector<4x256xf32>
    %532 = arith.mulf %531, %515 : vector<4x256xf32>
    %533 = arith.addf %514, %532 : vector<4x256xf32>
    %cst_187 = arith.constant 9.99999974E-6 : f32
    %534 = arith.addf %530, %cst_187 : f32
    %535 = math.rsqrt %534 : f32
    %cst_188 = arith.constant 1.773000e-01 : f32
    %536 = arith.mulf %cst_188, %535 : f32
    %537 = vector.broadcast %521 : f32 to vector<4x256xf32>
    %538 = arith.subf %515, %537 : vector<4x256xf32>
    %539 = vector.broadcast %536 : f32 to vector<4x256xf32>
    %540 = arith.mulf %539, %538 : vector<4x256xf32>
    %541 = arith.addf %533, %540 : vector<4x256xf32>
    %cst_189 = arith.constant 1.000000e+00 : f32
    %542 = vector.broadcast %cst_189 : f32 to vector<4x256xf32>
    %543 = arith.mulf %542, %11 : vector<4x256xf32>
    %544 = arith.addf %543, %541 : vector<4x256xf32>
    %c0_190 = arith.constant 0 : index
    %c0_191 = arith.constant 0 : index
    %c0_192 = arith.constant 0 : index
    %545 = vector.load %arg6[%c0_190, %c0_191, %c0_192] : memref<1x4x256xf32, #tpu.memory_space<vmem>>, vector<1x4x256xf32>
    %546 = vector.shape_cast %545 : vector<1x4x256xf32> to vector<4x256xf32>
    %547 = vector.shape_cast %544 : vector<4x256xf32> to vector<1x4x256xf32>
    tpu.vector_store %arg6[%c0_190, %c0_191, %c0_192], %547 {strides = array<i32>} : memref<1x4x256xf32, #tpu.memory_space<vmem>>, vector<1x4x256xf32>,
    %548 = vector.shape_cast %544 : vector<4x256xf32> to vector<1x4x256xf32>
    %cst_193 = arith.constant dense<0.000000e+00> : vector<1xf32>
    %549 = vector.multi_reduction <add>, %548, %cst_193 [1, 2] : vector<1x4x256xf32> to vector<1xf32>
    %550 = vector.shape_cast %549 : vector<1xf32> to vector<1x1x1xf32>
    %551 = vector.extract %550[0, 0, 0] : f32 from vector<1x1x1xf32>
    %552 = vector.broadcast %551 : f32 to vector<1x1x128xf32>
    %c0_194 = arith.constant 0 : index
    %c0_195 = arith.constant 0 : index
    %c0_196 = arith.constant 0 : index
    %553 = vector.load %arg7[%c0_194, %c0_195, %c0_196] : memref<1x1x128xf32, #tpu.memory_space<vmem>>, vector<1x1x128xf32>
    tpu.vector_store %arg7[%c0_194, %c0_195, %c0_196], %552 {strides = array<i32>} : memref<1x1x128xf32, #tpu.memory_space<vmem>>, vector<1x1x128xf32>,
    return
  }
  func.func @transform_0(%arg0: i32) -> i32 {
    %c0_i32 = arith.constant 0 : i32
    %c0_i32_0 = arith.constant 0 : i32
    return %c0_i32 : i32
  }
  func.func @transform_1(%arg0: i32) -> (i32, i32, i32) {
    %c0_i32 = arith.constant 0 : i32
    %c0_i32_0 = arith.constant 0 : i32
    %c0_i32_1 = arith.constant 0 : i32
    return %arg0, %c0_i32, %c0_i32_0 : i32, i32, i32
  }
  func.func @transform_2(%arg0: i32) -> (i32, i32) {
    %c0_i32 = arith.constant 0 : i32
    %c0_i32_0 = arith.constant 0 : i32
    %c0_i32_1 = arith.constant 0 : i32
    return %c0_i32, %c0_i32_0 : i32, i32
  }
  func.func @transform_3(%arg0: i32) -> (i32, i32) {
    %c0_i32 = arith.constant 0 : i32
    %c0_i32_0 = arith.constant 0 : i32
    %c0_i32_1 = arith.constant 0 : i32
    return %c0_i32, %c0_i32_0 : i32, i32
  }
  func.func @transform_4(%arg0: i32) -> (i32, i32) {
    %c0_i32 = arith.constant 0 : i32
    %c0_i32_0 = arith.constant 0 : i32
    %c0_i32_1 = arith.constant 0 : i32
    return %c0_i32, %c0_i32_0 : i32, i32
  }
  func.func @transform_5(%arg0: i32) -> (i32, i32, i32) {
    %c0_i32 = arith.constant 0 : i32
    %c0_i32_0 = arith.constant 0 : i32
    %c0_i32_1 = arith.constant 0 : i32
    return %arg0, %c0_i32, %c0_i32_0 : i32, i32, i32
  }
  func.func @transform_6(%arg0: i32) -> (i32, i32, i32) {
    %c0_i32 = arith.constant 0 : i32
    %c0_i32_0 = arith.constant 0 : i32
    %c0_i32_1 = arith.constant 0 : i32
    return %arg0, %c0_i32, %c0_i32_0 : i32, i32, i32
  }
}

module attributes {stable_mosaic.version = 11 : i64} {
  func.func @_block_kernel(%arg0: i32, %arg1: memref<3xf32, #tpu.memory_space<smem>>, %arg2: memref<1x4x256xf32, #tpu.memory_space<vmem>>, %arg3: memref<64x288xbf16, #tpu.memory_space<vmem>>, %arg4: memref<64x1xf32, #tpu.memory_space<vmem>>, %arg5: memref<9x256xf32, #tpu.memory_space<vmem>>, %arg6: memref<256x64xbf16, #tpu.memory_space<vmem>>, %arg7: memref<1x4x64xf32, #tpu.memory_space<vmem>>, %arg8: memref<1x1x128xf32, #tpu.memory_space<vmem>>, %arg9: memref<288x256xbf16, #tpu.memory_space<vmem>>) attributes {dimension_semantics = [#tpu.dimension_semantics<parallel>], iteration_bounds = array<i64: 2>, scalar_prefetch = 0 : i64, scratch_operands = 1 : i64, tpu.core_type = #tpu.core_type<tc>, window_params = [{transform_indices = @transform_0, window_bounds = array<i64: 3>}, {transform_indices = @transform_1, window_bounds = array<i64: 1, 4, 256>}, {pipeline_mode = #tpu.pipeline_mode<synchronous>, transform_indices = @transform_2, window_bounds = array<i64: 64, 288>}, {pipeline_mode = #tpu.pipeline_mode<synchronous>, transform_indices = @transform_3, window_bounds = array<i64: 64, 1>}, {pipeline_mode = #tpu.pipeline_mode<synchronous>, transform_indices = @transform_4, window_bounds = array<i64: 9, 256>}, {pipeline_mode = #tpu.pipeline_mode<synchronous>, transform_indices = @transform_5, window_bounds = array<i64: 256, 64>}, {transform_indices = @transform_6, window_bounds = array<i64: 1, 4, 64>}, {transform_indices = @transform_7, window_bounds = array<i64: 1, 1, 128>}]} {
    %c0 = arith.constant 0 : index
    %0 = memref.load %arg1[%c0] : memref<3xf32, #tpu.memory_space<smem>>
    %c1 = arith.constant 1 : index
    %1 = memref.load %arg1[%c1] : memref<3xf32, #tpu.memory_space<smem>>
    %c2 = arith.constant 2 : index
    %2 = memref.load %arg1[%c2] : memref<3xf32, #tpu.memory_space<smem>>
    %cst = arith.constant 4.8828125E-4 : f32
    %3 = arith.mulf %0, %cst : f32
    %cst_0 = arith.constant 1.000000e+00 : f32
    %4 = arith.maximumf %2, %cst_0 : f32
    %5 = arith.divf %1, %4 : f32
    %6 = arith.subf %0, %1 : f32
    %cst_1 = arith.constant 2.048000e+03 : f32
    %7 = arith.subf %cst_1, %2 : f32
    %cst_2 = arith.constant 1.000000e+00 : f32
    %8 = arith.maximumf %7, %cst_2 : f32
    %9 = arith.divf %6, %8 : f32
    %c0_3 = arith.constant 0 : index
    %c0_4 = arith.constant 0 : index
    %c0_5 = arith.constant 0 : index
    %10 = vector.load %arg2[%c0_3, %c0_4, %c0_5] : memref<1x4x256xf32, #tpu.memory_space<vmem>>, vector<1x4x256xf32>
    %11 = vector.shape_cast %10 : vector<1x4x256xf32> to vector<4x256xf32>
    %12 = vector.broadcast %5 : f32 to vector<4x256xf32>
    %13 = arith.subf %11, %12 : vector<4x256xf32>
    %cst_6 = arith.constant 0.707106769 : f32
    %14 = vector.broadcast %cst_6 : f32 to vector<4x256xf32>
    %15 = arith.mulf %13, %14 : vector<4x256xf32>
    %cst_7 = arith.constant 0.000000e+00 : f32
    %16 = vector.broadcast %cst_7 : f32 to vector<4x256xf32>
    %17 = arith.cmpf oge, %15, %16 : vector<4x256xf32>
    %cst_8 = arith.constant 1.000000e+00 : f32
    %cst_9 = arith.constant -1.000000e+00 : f32
    %18 = vector.broadcast %cst_8 : f32 to vector<4x256xf32>
    %19 = vector.broadcast %cst_9 : f32 to vector<4x256xf32>
    %20 = arith.select %17, %18, %19 : vector<4x256xi1>, vector<4x256xf32>
    %21 = math.absf %15 : vector<4x256xf32>
    %cst_10 = arith.constant 0.327591091 : f32
    %22 = vector.broadcast %cst_10 : f32 to vector<4x256xf32>
    %23 = arith.mulf %22, %21 : vector<4x256xf32>
    %cst_11 = arith.constant 1.000000e+00 : f32
    %24 = vector.broadcast %cst_11 : f32 to vector<4x256xf32>
    %25 = arith.addf %24, %23 : vector<4x256xf32>
    %26 = tpu.reciprocal %25 {approx = true} : vector<4x256xf32> -> vector<4x256xf32>
    %cst_12 = arith.constant 1.06140542 : f32
    %27 = vector.broadcast %cst_12 : f32 to vector<4x256xf32>
    %28 = arith.mulf %27, %26 : vector<4x256xf32>
    %cst_13 = arith.constant -1.45315206 : f32
    %29 = vector.broadcast %cst_13 : f32 to vector<4x256xf32>
    %30 = arith.addf %28, %29 : vector<4x256xf32>
    %31 = arith.mulf %30, %26 : vector<4x256xf32>
    %cst_14 = arith.constant 1.42141378 : f32
    %32 = vector.broadcast %cst_14 : f32 to vector<4x256xf32>
    %33 = arith.addf %31, %32 : vector<4x256xf32>
    %34 = arith.mulf %33, %26 : vector<4x256xf32>
    %cst_15 = arith.constant -0.284496725 : f32
    %35 = vector.broadcast %cst_15 : f32 to vector<4x256xf32>
    %36 = arith.addf %34, %35 : vector<4x256xf32>
    %37 = arith.mulf %36, %26 : vector<4x256xf32>
    %cst_16 = arith.constant 0.254829586 : f32
    %38 = vector.broadcast %cst_16 : f32 to vector<4x256xf32>
    %39 = arith.addf %37, %38 : vector<4x256xf32>
    %40 = arith.mulf %39, %26 : vector<4x256xf32>
    %cst_17 = arith.constant 0.000000e+00 : f32
    %41 = vector.broadcast %cst_17 : f32 to vector<4x256xf32>
    %42 = arith.subf %41, %21 : vector<4x256xf32>
    %43 = arith.mulf %42, %21 : vector<4x256xf32>
    %44 = math.exp %43 : vector<4x256xf32>
    %45 = arith.mulf %40, %44 : vector<4x256xf32>
    %cst_18 = arith.constant 1.000000e+00 : f32
    %46 = vector.broadcast %cst_18 : f32 to vector<4x256xf32>
    %47 = arith.subf %46, %45 : vector<4x256xf32>
    %48 = arith.mulf %20, %47 : vector<4x256xf32>
    %cst_19 = arith.constant 5.000000e-01 : f32
    %49 = vector.broadcast %cst_19 : f32 to vector<4x256xf32>
    %50 = arith.mulf %49, %13 : vector<4x256xf32>
    %cst_20 = arith.constant 1.000000e+00 : f32
    %51 = vector.broadcast %cst_20 : f32 to vector<4x256xf32>
    %52 = arith.addf %51, %48 : vector<4x256xf32>
    %53 = arith.mulf %50, %52 : vector<4x256xf32>
    %cst_21 = arith.constant -5.000000e-01 : f32
    %54 = vector.broadcast %cst_21 : f32 to vector<4x256xf32>
    %55 = arith.mulf %54, %13 : vector<4x256xf32>
    %cst_22 = arith.constant 1.000000e+00 : f32
    %56 = vector.broadcast %cst_22 : f32 to vector<4x256xf32>
    %57 = arith.subf %56, %48 : vector<4x256xf32>
    %58 = arith.mulf %55, %57 : vector<4x256xf32>
    %59 = arith.subf %5, %3 : f32
    %60 = vector.broadcast %59 : f32 to vector<4x256xf32>
    %61 = arith.subf %60, %58 : vector<4x256xf32>
    %cst_23 = arith.constant 5.000000e-01 : f32
    %62 = vector.broadcast %cst_23 : f32 to vector<4x256xf32>
    %63 = arith.mulf %62, %61 : vector<4x256xf32>
    %cst_24 = arith.constant 0.707106769 : f32
    %64 = vector.broadcast %cst_24 : f32 to vector<4x256xf32>
    %65 = arith.mulf %61, %64 : vector<4x256xf32>
    %cst_25 = arith.constant 0.000000e+00 : f32
    %66 = vector.broadcast %cst_25 : f32 to vector<4x256xf32>
    %67 = arith.cmpf oge, %65, %66 : vector<4x256xf32>
    %cst_26 = arith.constant 1.000000e+00 : f32
    %cst_27 = arith.constant -1.000000e+00 : f32
    %68 = vector.broadcast %cst_26 : f32 to vector<4x256xf32>
    %69 = vector.broadcast %cst_27 : f32 to vector<4x256xf32>
    %70 = arith.select %67, %68, %69 : vector<4x256xi1>, vector<4x256xf32>
    %71 = math.absf %65 : vector<4x256xf32>
    %cst_28 = arith.constant 0.327591091 : f32
    %72 = vector.broadcast %cst_28 : f32 to vector<4x256xf32>
    %73 = arith.mulf %72, %71 : vector<4x256xf32>
    %cst_29 = arith.constant 1.000000e+00 : f32
    %74 = vector.broadcast %cst_29 : f32 to vector<4x256xf32>
    %75 = arith.addf %74, %73 : vector<4x256xf32>
    %76 = tpu.reciprocal %75 {approx = true} : vector<4x256xf32> -> vector<4x256xf32>
    %cst_30 = arith.constant 1.06140542 : f32
    %77 = vector.broadcast %cst_30 : f32 to vector<4x256xf32>
    %78 = arith.mulf %77, %76 : vector<4x256xf32>
    %cst_31 = arith.constant -1.45315206 : f32
    %79 = vector.broadcast %cst_31 : f32 to vector<4x256xf32>
    %80 = arith.addf %78, %79 : vector<4x256xf32>
    %81 = arith.mulf %80, %76 : vector<4x256xf32>
    %cst_32 = arith.constant 1.42141378 : f32
    %82 = vector.broadcast %cst_32 : f32 to vector<4x256xf32>
    %83 = arith.addf %81, %82 : vector<4x256xf32>
    %84 = arith.mulf %83, %76 : vector<4x256xf32>
    %cst_33 = arith.constant -0.284496725 : f32
    %85 = vector.broadcast %cst_33 : f32 to vector<4x256xf32>
    %86 = arith.addf %84, %85 : vector<4x256xf32>
    %87 = arith.mulf %86, %76 : vector<4x256xf32>
    %cst_34 = arith.constant 0.254829586 : f32
    %88 = vector.broadcast %cst_34 : f32 to vector<4x256xf32>
    %89 = arith.addf %87, %88 : vector<4x256xf32>
    %90 = arith.mulf %89, %76 : vector<4x256xf32>
    %cst_35 = arith.constant 0.000000e+00 : f32
    %91 = vector.broadcast %cst_35 : f32 to vector<4x256xf32>
    %92 = arith.subf %91, %71 : vector<4x256xf32>
    %93 = arith.mulf %92, %71 : vector<4x256xf32>
    %94 = math.exp %93 : vector<4x256xf32>
    %95 = arith.mulf %90, %94 : vector<4x256xf32>
    %cst_36 = arith.constant 1.000000e+00 : f32
    %96 = vector.broadcast %cst_36 : f32 to vector<4x256xf32>
    %97 = arith.subf %96, %95 : vector<4x256xf32>
    %98 = arith.mulf %70, %97 : vector<4x256xf32>
    %cst_37 = arith.constant 1.000000e+00 : f32
    %99 = vector.broadcast %cst_37 : f32 to vector<4x256xf32>
    %100 = arith.addf %99, %98 : vector<4x256xf32>
    %101 = arith.mulf %63, %100 : vector<4x256xf32>
    %102 = arith.subf %3, %9 : f32
    %103 = vector.broadcast %3 : f32 to vector<4x256xf32>
    %104 = arith.subf %103, %11 : vector<4x256xf32>
    %cst_38 = arith.constant 5.000000e-01 : f32
    %105 = vector.broadcast %cst_38 : f32 to vector<4x256xf32>
    %106 = arith.mulf %105, %104 : vector<4x256xf32>
    %cst_39 = arith.constant 0.707106769 : f32
    %107 = vector.broadcast %cst_39 : f32 to vector<4x256xf32>
    %108 = arith.mulf %104, %107 : vector<4x256xf32>
    %cst_40 = arith.constant 0.000000e+00 : f32
    %109 = vector.broadcast %cst_40 : f32 to vector<4x256xf32>
    %110 = arith.cmpf oge, %108, %109 : vector<4x256xf32>
    %cst_41 = arith.constant 1.000000e+00 : f32
    %cst_42 = arith.constant -1.000000e+00 : f32
    %111 = vector.broadcast %cst_41 : f32 to vector<4x256xf32>
    %112 = vector.broadcast %cst_42 : f32 to vector<4x256xf32>
    %113 = arith.select %110, %111, %112 : vector<4x256xi1>, vector<4x256xf32>
    %114 = math.absf %108 : vector<4x256xf32>
    %cst_43 = arith.constant 0.327591091 : f32
    %115 = vector.broadcast %cst_43 : f32 to vector<4x256xf32>
    %116 = arith.mulf %115, %114 : vector<4x256xf32>
    %cst_44 = arith.constant 1.000000e+00 : f32
    %117 = vector.broadcast %cst_44 : f32 to vector<4x256xf32>
    %118 = arith.addf %117, %116 : vector<4x256xf32>
    %119 = tpu.reciprocal %118 {approx = true} : vector<4x256xf32> -> vector<4x256xf32>
    %cst_45 = arith.constant 1.06140542 : f32
    %120 = vector.broadcast %cst_45 : f32 to vector<4x256xf32>
    %121 = arith.mulf %120, %119 : vector<4x256xf32>
    %cst_46 = arith.constant -1.45315206 : f32
    %122 = vector.broadcast %cst_46 : f32 to vector<4x256xf32>
    %123 = arith.addf %121, %122 : vector<4x256xf32>
    %124 = arith.mulf %123, %119 : vector<4x256xf32>
    %cst_47 = arith.constant 1.42141378 : f32
    %125 = vector.broadcast %cst_47 : f32 to vector<4x256xf32>
    %126 = arith.addf %124, %125 : vector<4x256xf32>
    %127 = arith.mulf %126, %119 : vector<4x256xf32>
    %cst_48 = arith.constant -0.284496725 : f32
    %128 = vector.broadcast %cst_48 : f32 to vector<4x256xf32>
    %129 = arith.addf %127, %128 : vector<4x256xf32>
    %130 = arith.mulf %129, %119 : vector<4x256xf32>
    %cst_49 = arith.constant 0.254829586 : f32
    %131 = vector.broadcast %cst_49 : f32 to vector<4x256xf32>
    %132 = arith.addf %130, %131 : vector<4x256xf32>
    %133 = arith.mulf %132, %119 : vector<4x256xf32>
    %cst_50 = arith.constant 0.000000e+00 : f32
    %134 = vector.broadcast %cst_50 : f32 to vector<4x256xf32>
    %135 = arith.subf %134, %114 : vector<4x256xf32>
    %136 = arith.mulf %135, %114 : vector<4x256xf32>
    %137 = math.exp %136 : vector<4x256xf32>
    %138 = arith.mulf %133, %137 : vector<4x256xf32>
    %cst_51 = arith.constant 1.000000e+00 : f32
    %139 = vector.broadcast %cst_51 : f32 to vector<4x256xf32>
    %140 = arith.subf %139, %138 : vector<4x256xf32>
    %141 = arith.mulf %113, %140 : vector<4x256xf32>
    %cst_52 = arith.constant 1.000000e+00 : f32
    %142 = vector.broadcast %cst_52 : f32 to vector<4x256xf32>
    %143 = arith.addf %142, %141 : vector<4x256xf32>
    %144 = arith.mulf %106, %143 : vector<4x256xf32>
    %145 = vector.broadcast %102 : f32 to vector<4x256xf32>
    %146 = arith.subf %145, %144 : vector<4x256xf32>
    %cst_53 = arith.constant 5.000000e-01 : f32
    %147 = vector.broadcast %cst_53 : f32 to vector<4x256xf32>
    %148 = arith.mulf %147, %146 : vector<4x256xf32>
    %cst_54 = arith.constant 0.707106769 : f32
    %149 = vector.broadcast %cst_54 : f32 to vector<4x256xf32>
    %150 = arith.mulf %146, %149 : vector<4x256xf32>
    %cst_55 = arith.constant 0.000000e+00 : f32
    %151 = vector.broadcast %cst_55 : f32 to vector<4x256xf32>
    %152 = arith.cmpf oge, %150, %151 : vector<4x256xf32>
    %cst_56 = arith.constant 1.000000e+00 : f32
    %cst_57 = arith.constant -1.000000e+00 : f32
    %153 = vector.broadcast %cst_56 : f32 to vector<4x256xf32>
    %154 = vector.broadcast %cst_57 : f32 to vector<4x256xf32>
    %155 = arith.select %152, %153, %154 : vector<4x256xi1>, vector<4x256xf32>
    %156 = math.absf %150 : vector<4x256xf32>
    %cst_58 = arith.constant 0.327591091 : f32
    %157 = vector.broadcast %cst_58 : f32 to vector<4x256xf32>
    %158 = arith.mulf %157, %156 : vector<4x256xf32>
    %cst_59 = arith.constant 1.000000e+00 : f32
    %159 = vector.broadcast %cst_59 : f32 to vector<4x256xf32>
    %160 = arith.addf %159, %158 : vector<4x256xf32>
    %161 = tpu.reciprocal %160 {approx = true} : vector<4x256xf32> -> vector<4x256xf32>
    %cst_60 = arith.constant 1.06140542 : f32
    %162 = vector.broadcast %cst_60 : f32 to vector<4x256xf32>
    %163 = arith.mulf %162, %161 : vector<4x256xf32>
    %cst_61 = arith.constant -1.45315206 : f32
    %164 = vector.broadcast %cst_61 : f32 to vector<4x256xf32>
    %165 = arith.addf %163, %164 : vector<4x256xf32>
    %166 = arith.mulf %165, %161 : vector<4x256xf32>
    %cst_62 = arith.constant 1.42141378 : f32
    %167 = vector.broadcast %cst_62 : f32 to vector<4x256xf32>
    %168 = arith.addf %166, %167 : vector<4x256xf32>
    %169 = arith.mulf %168, %161 : vector<4x256xf32>
    %cst_63 = arith.constant -0.284496725 : f32
    %170 = vector.broadcast %cst_63 : f32 to vector<4x256xf32>
    %171 = arith.addf %169, %170 : vector<4x256xf32>
    %172 = arith.mulf %171, %161 : vector<4x256xf32>
    %cst_64 = arith.constant 0.254829586 : f32
    %173 = vector.broadcast %cst_64 : f32 to vector<4x256xf32>
    %174 = arith.addf %172, %173 : vector<4x256xf32>
    %175 = arith.mulf %174, %161 : vector<4x256xf32>
    %cst_65 = arith.constant 0.000000e+00 : f32
    %176 = vector.broadcast %cst_65 : f32 to vector<4x256xf32>
    %177 = arith.subf %176, %156 : vector<4x256xf32>
    %178 = arith.mulf %177, %156 : vector<4x256xf32>
    %179 = math.exp %178 : vector<4x256xf32>
    %180 = arith.mulf %175, %179 : vector<4x256xf32>
    %cst_66 = arith.constant 1.000000e+00 : f32
    %181 = vector.broadcast %cst_66 : f32 to vector<4x256xf32>
    %182 = arith.subf %181, %180 : vector<4x256xf32>
    %183 = arith.mulf %155, %182 : vector<4x256xf32>
    %cst_67 = arith.constant 1.000000e+00 : f32
    %184 = vector.broadcast %cst_67 : f32 to vector<4x256xf32>
    %185 = arith.addf %184, %183 : vector<4x256xf32>
    %186 = arith.mulf %148, %185 : vector<4x256xf32>
    %187 = vector.broadcast %9 : f32 to vector<4x256xf32>
    %188 = arith.subf %187, %11 : vector<4x256xf32>
    %cst_68 = arith.constant 5.000000e-01 : f32
    %189 = vector.broadcast %cst_68 : f32 to vector<4x256xf32>
    %190 = arith.mulf %189, %188 : vector<4x256xf32>
    %cst_69 = arith.constant 0.707106769 : f32
    %191 = vector.broadcast %cst_69 : f32 to vector<4x256xf32>
    %192 = arith.mulf %188, %191 : vector<4x256xf32>
    %cst_70 = arith.constant 0.000000e+00 : f32
    %193 = vector.broadcast %cst_70 : f32 to vector<4x256xf32>
    %194 = arith.cmpf oge, %192, %193 : vector<4x256xf32>
    %cst_71 = arith.constant 1.000000e+00 : f32
    %cst_72 = arith.constant -1.000000e+00 : f32
    %195 = vector.broadcast %cst_71 : f32 to vector<4x256xf32>
    %196 = vector.broadcast %cst_72 : f32 to vector<4x256xf32>
    %197 = arith.select %194, %195, %196 : vector<4x256xi1>, vector<4x256xf32>
    %198 = math.absf %192 : vector<4x256xf32>
    %cst_73 = arith.constant 0.327591091 : f32
    %199 = vector.broadcast %cst_73 : f32 to vector<4x256xf32>
    %200 = arith.mulf %199, %198 : vector<4x256xf32>
    %cst_74 = arith.constant 1.000000e+00 : f32
    %201 = vector.broadcast %cst_74 : f32 to vector<4x256xf32>
    %202 = arith.addf %201, %200 : vector<4x256xf32>
    %203 = tpu.reciprocal %202 {approx = true} : vector<4x256xf32> -> vector<4x256xf32>
    %cst_75 = arith.constant 1.06140542 : f32
    %204 = vector.broadcast %cst_75 : f32 to vector<4x256xf32>
    %205 = arith.mulf %204, %203 : vector<4x256xf32>
    %cst_76 = arith.constant -1.45315206 : f32
    %206 = vector.broadcast %cst_76 : f32 to vector<4x256xf32>
    %207 = arith.addf %205, %206 : vector<4x256xf32>
    %208 = arith.mulf %207, %203 : vector<4x256xf32>
    %cst_77 = arith.constant 1.42141378 : f32
    %209 = vector.broadcast %cst_77 : f32 to vector<4x256xf32>
    %210 = arith.addf %208, %209 : vector<4x256xf32>
    %211 = arith.mulf %210, %203 : vector<4x256xf32>
    %cst_78 = arith.constant -0.284496725 : f32
    %212 = vector.broadcast %cst_78 : f32 to vector<4x256xf32>
    %213 = arith.addf %211, %212 : vector<4x256xf32>
    %214 = arith.mulf %213, %203 : vector<4x256xf32>
    %cst_79 = arith.constant 0.254829586 : f32
    %215 = vector.broadcast %cst_79 : f32 to vector<4x256xf32>
    %216 = arith.addf %214, %215 : vector<4x256xf32>
    %217 = arith.mulf %216, %203 : vector<4x256xf32>
    %cst_80 = arith.constant 0.000000e+00 : f32
    %218 = vector.broadcast %cst_80 : f32 to vector<4x256xf32>
    %219 = arith.subf %218, %198 : vector<4x256xf32>
    %220 = arith.mulf %219, %198 : vector<4x256xf32>
    %221 = math.exp %220 : vector<4x256xf32>
    %222 = arith.mulf %217, %221 : vector<4x256xf32>
    %cst_81 = arith.constant 1.000000e+00 : f32
    %223 = vector.broadcast %cst_81 : f32 to vector<4x256xf32>
    %224 = arith.subf %223, %222 : vector<4x256xf32>
    %225 = arith.mulf %197, %224 : vector<4x256xf32>
    %cst_82 = arith.constant 1.000000e+00 : f32
    %226 = vector.broadcast %cst_82 : f32 to vector<4x256xf32>
    %227 = arith.addf %226, %225 : vector<4x256xf32>
    %228 = arith.mulf %190, %227 : vector<4x256xf32>
    %cst_83 = arith.constant 0.000000e+00 : f32
    %229 = vector.broadcast %cst_83 : f32 to vector<4x256xf32>
    %230 = arith.subf %229, %228 : vector<4x256xf32>
    %cst_84 = arith.constant 0.177299112 : f32
    %231 = vector.broadcast %cst_84 : f32 to vector<4x256xf32>
    %232 = arith.mulf %231, %53 : vector<4x256xf32>
    %cst_85 = arith.constant 0.177299112 : f32
    %233 = vector.broadcast %cst_85 : f32 to vector<4x256xf32>
    %234 = arith.mulf %233, %101 : vector<4x256xf32>
    %cst_86 = arith.constant 0.177299112 : f32
    %235 = vector.broadcast %cst_86 : f32 to vector<4x256xf32>
    %236 = arith.mulf %235, %186 : vector<4x256xf32>
    %cst_87 = arith.constant 0.177299112 : f32
    %237 = vector.broadcast %cst_87 : f32 to vector<4x256xf32>
    %238 = arith.mulf %237, %230 : vector<4x256xf32>
    %239 = arith.addf %232, %234 : vector<4x256xf32>
    %240 = arith.addf %239, %236 : vector<4x256xf32>
    %241 = arith.addf %240, %238 : vector<4x256xf32>
    %242 = arith.subf %241, %232 : vector<4x256xf32>
    %cst_88 = arith.constant 0.333333343 : f32
    %243 = vector.broadcast %cst_88 : f32 to vector<4x256xf32>
    %244 = arith.mulf %243, %242 : vector<4x256xf32>
    %245 = arith.subf %241, %234 : vector<4x256xf32>
    %cst_89 = arith.constant 0.333333343 : f32
    %246 = vector.broadcast %cst_89 : f32 to vector<4x256xf32>
    %247 = arith.mulf %246, %245 : vector<4x256xf32>
    %248 = arith.subf %241, %236 : vector<4x256xf32>
    %cst_90 = arith.constant 0.333333343 : f32
    %249 = vector.broadcast %cst_90 : f32 to vector<4x256xf32>
    %250 = arith.mulf %249, %248 : vector<4x256xf32>
    %251 = arith.subf %241, %238 : vector<4x256xf32>
    %cst_91 = arith.constant 0.333333343 : f32
    %252 = vector.broadcast %cst_91 : f32 to vector<4x256xf32>
    %253 = arith.mulf %252, %251 : vector<4x256xf32>
    %254 = tpu.concatenate %232, %234, %236, %238, %244, %247, %250, %253 in 0 : vector<4x256xf32>, vector<4x256xf32>, vector<4x256xf32>, vector<4x256xf32>, vector<4x256xf32>, vector<4x256xf32>, vector<4x256xf32>, vector<4x256xf32> -> vector<32x256xf32>
    %cst_92 = arith.constant 0.000000e+00 : f32
    %255 = vector.broadcast %cst_92 : f32 to vector<32x17xf32>
    %256 = tpu.concatenate %255, %254, %255 in 1 : vector<32x17xf32>, vector<32x256xf32>, vector<32x17xf32> -> vector<32x290xf32>
    %257 = vector.extract_strided_slice %256 {offsets = [0, 0], sizes = [32, 256], strides = [1, 1]} : vector<32x290xf32> to vector<32x256xf32>
    %c0_93 = arith.constant 0 : index
    %c0_94 = arith.constant 0 : index
    %258 = vector.load %arg5[%c0_93, %c0_94] : memref<9x256xf32, #tpu.memory_space<vmem>>, vector<1x256xf32>
    %259 = vector.broadcast %258 : vector<1x256xf32> to vector<32x256xf32>
    %260 = arith.mulf %257, %259 : vector<32x256xf32>
    %261 = arith.truncf %260 : vector<32x256xf32> to vector<32x256xbf16>
    %c0_95 = arith.constant 0 : index
    %c0_96 = arith.constant 0 : index
    %262 = vector.load %arg9[%c0_95, %c0_96] : memref<288x256xbf16, #tpu.memory_space<vmem>>, vector<32x256xbf16>
    tpu.vector_store %arg9[%c0_95, %c0_96], %261 {strides = array<i32>} : memref<288x256xbf16, #tpu.memory_space<vmem>>, vector<32x256xbf16>,
    %263 = vector.extract_strided_slice %256 {offsets = [0, 1], sizes = [32, 256], strides = [1, 1]} : vector<32x290xf32> to vector<32x256xf32>
    %c1_97 = arith.constant 1 : index
    %c0_98 = arith.constant 0 : index
    %264 = vector.load %arg5[%c1_97, %c0_98] : memref<9x256xf32, #tpu.memory_space<vmem>>, vector<1x256xf32>
    %265 = vector.broadcast %264 : vector<1x256xf32> to vector<32x256xf32>
    %266 = arith.mulf %263, %265 : vector<32x256xf32>
    %267 = arith.truncf %266 : vector<32x256xf32> to vector<32x256xbf16>
    %c32 = arith.constant 32 : index
    %c0_99 = arith.constant 0 : index
    %268 = vector.load %arg9[%c32, %c0_99] : memref<288x256xbf16, #tpu.memory_space<vmem>>, vector<32x256xbf16>
    tpu.vector_store %arg9[%c32, %c0_99], %267 {strides = array<i32>} : memref<288x256xbf16, #tpu.memory_space<vmem>>, vector<32x256xbf16>,
    %269 = vector.extract_strided_slice %256 {offsets = [0, 2], sizes = [32, 256], strides = [1, 1]} : vector<32x290xf32> to vector<32x256xf32>
    %c2_100 = arith.constant 2 : index
    %c0_101 = arith.constant 0 : index
    %270 = vector.load %arg5[%c2_100, %c0_101] : memref<9x256xf32, #tpu.memory_space<vmem>>, vector<1x256xf32>
    %271 = vector.broadcast %270 : vector<1x256xf32> to vector<32x256xf32>
    %272 = arith.mulf %269, %271 : vector<32x256xf32>
    %273 = arith.truncf %272 : vector<32x256xf32> to vector<32x256xbf16>
    %c64 = arith.constant 64 : index
    %c0_102 = arith.constant 0 : index
    %274 = vector.load %arg9[%c64, %c0_102] : memref<288x256xbf16, #tpu.memory_space<vmem>>, vector<32x256xbf16>
    tpu.vector_store %arg9[%c64, %c0_102], %273 {strides = array<i32>} : memref<288x256xbf16, #tpu.memory_space<vmem>>, vector<32x256xbf16>,
    %275 = vector.extract_strided_slice %256 {offsets = [0, 16], sizes = [32, 256], strides = [1, 1]} : vector<32x290xf32> to vector<32x256xf32>
    %c3 = arith.constant 3 : index
    %c0_103 = arith.constant 0 : index
    %276 = vector.load %arg5[%c3, %c0_103] : memref<9x256xf32, #tpu.memory_space<vmem>>, vector<1x256xf32>
    %277 = vector.broadcast %276 : vector<1x256xf32> to vector<32x256xf32>
    %278 = arith.mulf %275, %277 : vector<32x256xf32>
    %279 = arith.truncf %278 : vector<32x256xf32> to vector<32x256xbf16>
    %c96 = arith.constant 96 : index
    %c0_104 = arith.constant 0 : index
    %280 = vector.load %arg9[%c96, %c0_104] : memref<288x256xbf16, #tpu.memory_space<vmem>>, vector<32x256xbf16>
    tpu.vector_store %arg9[%c96, %c0_104], %279 {strides = array<i32>} : memref<288x256xbf16, #tpu.memory_space<vmem>>, vector<32x256xbf16>,
    %281 = vector.extract_strided_slice %256 {offsets = [0, 17], sizes = [32, 256], strides = [1, 1]} : vector<32x290xf32> to vector<32x256xf32>
    %c4 = arith.constant 4 : index
    %c0_105 = arith.constant 0 : index
    %282 = vector.load %arg5[%c4, %c0_105] : memref<9x256xf32, #tpu.memory_space<vmem>>, vector<1x256xf32>
    %283 = vector.broadcast %282 : vector<1x256xf32> to vector<32x256xf32>
    %284 = arith.mulf %281, %283 : vector<32x256xf32>
    %285 = arith.truncf %284 : vector<32x256xf32> to vector<32x256xbf16>
    %c128 = arith.constant 128 : index
    %c0_106 = arith.constant 0 : index
    %286 = vector.load %arg9[%c128, %c0_106] : memref<288x256xbf16, #tpu.memory_space<vmem>>, vector<32x256xbf16>
    tpu.vector_store %arg9[%c128, %c0_106], %285 {strides = array<i32>} : memref<288x256xbf16, #tpu.memory_space<vmem>>, vector<32x256xbf16>,
    %287 = vector.extract_strided_slice %256 {offsets = [0, 18], sizes = [32, 256], strides = [1, 1]} : vector<32x290xf32> to vector<32x256xf32>
    %c5 = arith.constant 5 : index
    %c0_107 = arith.constant 0 : index
    %288 = vector.load %arg5[%c5, %c0_107] : memref<9x256xf32, #tpu.memory_space<vmem>>, vector<1x256xf32>
    %289 = vector.broadcast %288 : vector<1x256xf32> to vector<32x256xf32>
    %290 = arith.mulf %287, %289 : vector<32x256xf32>
    %291 = arith.truncf %290 : vector<32x256xf32> to vector<32x256xbf16>
    %c160 = arith.constant 160 : index
    %c0_108 = arith.constant 0 : index
    %292 = vector.load %arg9[%c160, %c0_108] : memref<288x256xbf16, #tpu.memory_space<vmem>>, vector<32x256xbf16>
    tpu.vector_store %arg9[%c160, %c0_108], %291 {strides = array<i32>} : memref<288x256xbf16, #tpu.memory_space<vmem>>, vector<32x256xbf16>,
    %293 = vector.extract_strided_slice %256 {offsets = [0, 32], sizes = [32, 256], strides = [1, 1]} : vector<32x290xf32> to vector<32x256xf32>
    %c6 = arith.constant 6 : index
    %c0_109 = arith.constant 0 : index
    %294 = vector.load %arg5[%c6, %c0_109] : memref<9x256xf32, #tpu.memory_space<vmem>>, vector<1x256xf32>
    %295 = vector.broadcast %294 : vector<1x256xf32> to vector<32x256xf32>
    %296 = arith.mulf %293, %295 : vector<32x256xf32>
    %297 = arith.truncf %296 : vector<32x256xf32> to vector<32x256xbf16>
    %c192 = arith.constant 192 : index
    %c0_110 = arith.constant 0 : index
    %298 = vector.load %arg9[%c192, %c0_110] : memref<288x256xbf16, #tpu.memory_space<vmem>>, vector<32x256xbf16>
    tpu.vector_store %arg9[%c192, %c0_110], %297 {strides = array<i32>} : memref<288x256xbf16, #tpu.memory_space<vmem>>, vector<32x256xbf16>,
    %299 = vector.extract_strided_slice %256 {offsets = [0, 33], sizes = [32, 256], strides = [1, 1]} : vector<32x290xf32> to vector<32x256xf32>
    %c7 = arith.constant 7 : index
    %c0_111 = arith.constant 0 : index
    %300 = vector.load %arg5[%c7, %c0_111] : memref<9x256xf32, #tpu.memory_space<vmem>>, vector<1x256xf32>
    %301 = vector.broadcast %300 : vector<1x256xf32> to vector<32x256xf32>
    %302 = arith.mulf %299, %301 : vector<32x256xf32>
    %303 = arith.truncf %302 : vector<32x256xf32> to vector<32x256xbf16>
    %c224 = arith.constant 224 : index
    %c0_112 = arith.constant 0 : index
    %304 = vector.load %arg9[%c224, %c0_112] : memref<288x256xbf16, #tpu.memory_space<vmem>>, vector<32x256xbf16>
    tpu.vector_store %arg9[%c224, %c0_112], %303 {strides = array<i32>} : memref<288x256xbf16, #tpu.memory_space<vmem>>, vector<32x256xbf16>,
    %305 = vector.extract_strided_slice %256 {offsets = [0, 34], sizes = [32, 256], strides = [1, 1]} : vector<32x290xf32> to vector<32x256xf32>
    %c8 = arith.constant 8 : index
    %c0_113 = arith.constant 0 : index
    %306 = vector.load %arg5[%c8, %c0_113] : memref<9x256xf32, #tpu.memory_space<vmem>>, vector<1x256xf32>
    %307 = vector.broadcast %306 : vector<1x256xf32> to vector<32x256xf32>
    %308 = arith.mulf %305, %307 : vector<32x256xf32>
    %309 = arith.truncf %308 : vector<32x256xf32> to vector<32x256xbf16>
    %c256 = arith.constant 256 : index
    %c0_114 = arith.constant 0 : index
    %310 = vector.load %arg9[%c256, %c0_114] : memref<288x256xbf16, #tpu.memory_space<vmem>>, vector<32x256xbf16>
    tpu.vector_store %arg9[%c256, %c0_114], %309 {strides = array<i32>} : memref<288x256xbf16, #tpu.memory_space<vmem>>, vector<32x256xbf16>,
    %c0_115 = arith.constant 0 : index
    %c0_116 = arith.constant 0 : index
    %311 = vector.load %arg3[%c0_115, %c0_116] : memref<64x288xbf16, #tpu.memory_space<vmem>>, vector<64x288xbf16>
    %c0_117 = arith.constant 0 : index
    %c0_118 = arith.constant 0 : index
    %312 = vector.load %arg9[%c0_117, %c0_118] : memref<288x256xbf16, #tpu.memory_space<vmem>>, vector<288x256xbf16>
    %cst_119 = arith.constant dense<0.000000e+00> : vector<64x256xf32>
    %313 = tpu.matmul %311, %312, %cst_119 {dimension_numbers = #tpu.dot_dimension_numbers<[1], [0], [0], [1], [0, 0, 1, 1], [], []>} : vector<64x288xbf16>, vector<288x256xbf16>, vector<64x256xf32> -> vector<64x256xf32>
    %c0_120 = arith.constant 0 : index
    %c0_121 = arith.constant 0 : index
    %314 = vector.load %arg4[%c0_120, %c0_121] : memref<64x1xf32, #tpu.memory_space<vmem>>, vector<64x1xf32>
    %315 = vector.broadcast %314 : vector<64x1xf32> to vector<64x256xf32>
    %316 = arith.addf %313, %315 : vector<64x256xf32>
    %317 = vector.extract_strided_slice %316 {offsets = [0, 0], sizes = [32, 256], strides = [1, 1]} : vector<64x256xf32> to vector<32x256xf32>
    %318 = vector.extract_strided_slice %316 {offsets = [32, 0], sizes = [32, 256], strides = [1, 1]} : vector<64x256xf32> to vector<32x256xf32>
    %319 = arith.mulf %317, %318 : vector<32x256xf32>
    %cst_122 = arith.constant dense<0.000000e+00> : vector<32xf32>
    %320 = vector.multi_reduction <add>, %319, %cst_122 [1] : vector<32x256xf32> to vector<32xf32>
    %321 = vector.shape_cast %320 : vector<32xf32> to vector<32x1xf32>
    %322 = arith.mulf %319, %319 : vector<32x256xf32>
    %cst_123 = arith.constant dense<0.000000e+00> : vector<32xf32>
    %323 = vector.multi_reduction <add>, %322, %cst_123 [1] : vector<32x256xf32> to vector<32xf32>
    %324 = vector.shape_cast %323 : vector<32xf32> to vector<32x1xf32>
    %cst_124 = arith.constant 0.000000e+00 : f32
    %325 = vector.broadcast %cst_124 : f32 to vector<4x256xf32>
    %326 = vector.extract_strided_slice %319 {offsets = [0, 0], sizes = [4, 256], strides = [1, 1]} : vector<32x256xf32> to vector<4x256xf32>
    %327 = vector.extract_strided_slice %321 {offsets = [0, 0], sizes = [4, 1], strides = [1, 1]} : vector<32x1xf32> to vector<4x1xf32>
    %328 = vector.shape_cast %327 : vector<4x1xf32> to vector<1x4x1xf32>
    %cst_125 = arith.constant dense<0.000000e+00> : vector<1xf32>
    %329 = vector.multi_reduction <add>, %328, %cst_125 [1, 2] : vector<1x4x1xf32> to vector<1xf32>
    %330 = vector.shape_cast %329 : vector<1xf32> to vector<1x1x1xf32>
    %331 = vector.extract %330[0, 0, 0] : f32 from vector<1x1x1xf32>
    %cst_126 = arith.constant 9.765625E-4 : f32
    %332 = arith.mulf %331, %cst_126 : f32
    %333 = vector.extract_strided_slice %324 {offsets = [0, 0], sizes = [4, 1], strides = [1, 1]} : vector<32x1xf32> to vector<4x1xf32>
    %334 = vector.shape_cast %333 : vector<4x1xf32> to vector<1x4x1xf32>
    %cst_127 = arith.constant dense<0.000000e+00> : vector<1xf32>
    %335 = vector.multi_reduction <add>, %334, %cst_127 [1, 2] : vector<1x4x1xf32> to vector<1xf32>
    %336 = vector.shape_cast %335 : vector<1xf32> to vector<1x1x1xf32>
    %337 = vector.extract %336[0, 0, 0] : f32 from vector<1x1x1xf32>
    %cst_128 = arith.constant 9.765625E-4 : f32
    %338 = arith.mulf %337, %cst_128 : f32
    %339 = arith.mulf %332, %332 : f32
    %340 = arith.subf %338, %339 : f32
    %cst_129 = arith.constant 0.000000e+00 : f32
    %341 = arith.maximumf %340, %cst_129 : f32
    %cst_130 = arith.constant 1.000000e+00 : f32
    %342 = vector.broadcast %cst_130 : f32 to vector<4x256xf32>
    %343 = arith.mulf %342, %326 : vector<4x256xf32>
    %344 = arith.addf %325, %343 : vector<4x256xf32>
    %cst_131 = arith.constant 9.99999974E-6 : f32
    %345 = arith.addf %341, %cst_131 : f32
    %346 = math.rsqrt %345 : f32
    %cst_132 = arith.constant 1.773000e-01 : f32
    %347 = arith.mulf %cst_132, %346 : f32
    %348 = vector.broadcast %332 : f32 to vector<4x256xf32>
    %349 = arith.subf %326, %348 : vector<4x256xf32>
    %350 = vector.broadcast %347 : f32 to vector<4x256xf32>
    %351 = arith.mulf %350, %349 : vector<4x256xf32>
    %352 = arith.addf %344, %351 : vector<4x256xf32>
    %353 = vector.extract_strided_slice %319 {offsets = [4, 0], sizes = [4, 256], strides = [1, 1]} : vector<32x256xf32> to vector<4x256xf32>
    %354 = vector.extract_strided_slice %321 {offsets = [4, 0], sizes = [4, 1], strides = [1, 1]} : vector<32x1xf32> to vector<4x1xf32>
    %355 = vector.shape_cast %354 : vector<4x1xf32> to vector<1x4x1xf32>
    %cst_133 = arith.constant dense<0.000000e+00> : vector<1xf32>
    %356 = vector.multi_reduction <add>, %355, %cst_133 [1, 2] : vector<1x4x1xf32> to vector<1xf32>
    %357 = vector.shape_cast %356 : vector<1xf32> to vector<1x1x1xf32>
    %358 = vector.extract %357[0, 0, 0] : f32 from vector<1x1x1xf32>
    %cst_134 = arith.constant 9.765625E-4 : f32
    %359 = arith.mulf %358, %cst_134 : f32
    %360 = vector.extract_strided_slice %324 {offsets = [4, 0], sizes = [4, 1], strides = [1, 1]} : vector<32x1xf32> to vector<4x1xf32>
    %361 = vector.shape_cast %360 : vector<4x1xf32> to vector<1x4x1xf32>
    %cst_135 = arith.constant dense<0.000000e+00> : vector<1xf32>
    %362 = vector.multi_reduction <add>, %361, %cst_135 [1, 2] : vector<1x4x1xf32> to vector<1xf32>
    %363 = vector.shape_cast %362 : vector<1xf32> to vector<1x1x1xf32>
    %364 = vector.extract %363[0, 0, 0] : f32 from vector<1x1x1xf32>
    %cst_136 = arith.constant 9.765625E-4 : f32
    %365 = arith.mulf %364, %cst_136 : f32
    %366 = arith.mulf %359, %359 : f32
    %367 = arith.subf %365, %366 : f32
    %cst_137 = arith.constant 0.000000e+00 : f32
    %368 = arith.maximumf %367, %cst_137 : f32
    %cst_138 = arith.constant 1.000000e+00 : f32
    %369 = vector.broadcast %cst_138 : f32 to vector<4x256xf32>
    %370 = arith.mulf %369, %353 : vector<4x256xf32>
    %371 = arith.addf %352, %370 : vector<4x256xf32>
    %cst_139 = arith.constant 9.99999974E-6 : f32
    %372 = arith.addf %368, %cst_139 : f32
    %373 = math.rsqrt %372 : f32
    %cst_140 = arith.constant 1.773000e-01 : f32
    %374 = arith.mulf %cst_140, %373 : f32
    %375 = vector.broadcast %359 : f32 to vector<4x256xf32>
    %376 = arith.subf %353, %375 : vector<4x256xf32>
    %377 = vector.broadcast %374 : f32 to vector<4x256xf32>
    %378 = arith.mulf %377, %376 : vector<4x256xf32>
    %379 = arith.addf %371, %378 : vector<4x256xf32>
    %380 = vector.extract_strided_slice %319 {offsets = [8, 0], sizes = [4, 256], strides = [1, 1]} : vector<32x256xf32> to vector<4x256xf32>
    %381 = vector.extract_strided_slice %321 {offsets = [8, 0], sizes = [4, 1], strides = [1, 1]} : vector<32x1xf32> to vector<4x1xf32>
    %382 = vector.shape_cast %381 : vector<4x1xf32> to vector<1x4x1xf32>
    %cst_141 = arith.constant dense<0.000000e+00> : vector<1xf32>
    %383 = vector.multi_reduction <add>, %382, %cst_141 [1, 2] : vector<1x4x1xf32> to vector<1xf32>
    %384 = vector.shape_cast %383 : vector<1xf32> to vector<1x1x1xf32>
    %385 = vector.extract %384[0, 0, 0] : f32 from vector<1x1x1xf32>
    %cst_142 = arith.constant 9.765625E-4 : f32
    %386 = arith.mulf %385, %cst_142 : f32
    %387 = vector.extract_strided_slice %324 {offsets = [8, 0], sizes = [4, 1], strides = [1, 1]} : vector<32x1xf32> to vector<4x1xf32>
    %388 = vector.shape_cast %387 : vector<4x1xf32> to vector<1x4x1xf32>
    %cst_143 = arith.constant dense<0.000000e+00> : vector<1xf32>
    %389 = vector.multi_reduction <add>, %388, %cst_143 [1, 2] : vector<1x4x1xf32> to vector<1xf32>
    %390 = vector.shape_cast %389 : vector<1xf32> to vector<1x1x1xf32>
    %391 = vector.extract %390[0, 0, 0] : f32 from vector<1x1x1xf32>
    %cst_144 = arith.constant 9.765625E-4 : f32
    %392 = arith.mulf %391, %cst_144 : f32
    %393 = arith.mulf %386, %386 : f32
    %394 = arith.subf %392, %393 : f32
    %cst_145 = arith.constant 0.000000e+00 : f32
    %395 = arith.maximumf %394, %cst_145 : f32
    %cst_146 = arith.constant 1.000000e+00 : f32
    %396 = vector.broadcast %cst_146 : f32 to vector<4x256xf32>
    %397 = arith.mulf %396, %380 : vector<4x256xf32>
    %398 = arith.addf %379, %397 : vector<4x256xf32>
    %cst_147 = arith.constant 9.99999974E-6 : f32
    %399 = arith.addf %395, %cst_147 : f32
    %400 = math.rsqrt %399 : f32
    %cst_148 = arith.constant 1.773000e-01 : f32
    %401 = arith.mulf %cst_148, %400 : f32
    %402 = vector.broadcast %386 : f32 to vector<4x256xf32>
    %403 = arith.subf %380, %402 : vector<4x256xf32>
    %404 = vector.broadcast %401 : f32 to vector<4x256xf32>
    %405 = arith.mulf %404, %403 : vector<4x256xf32>
    %406 = arith.addf %398, %405 : vector<4x256xf32>
    %407 = vector.extract_strided_slice %319 {offsets = [12, 0], sizes = [4, 256], strides = [1, 1]} : vector<32x256xf32> to vector<4x256xf32>
    %408 = vector.extract_strided_slice %321 {offsets = [12, 0], sizes = [4, 1], strides = [1, 1]} : vector<32x1xf32> to vector<4x1xf32>
    %409 = vector.shape_cast %408 : vector<4x1xf32> to vector<1x4x1xf32>
    %cst_149 = arith.constant dense<0.000000e+00> : vector<1xf32>
    %410 = vector.multi_reduction <add>, %409, %cst_149 [1, 2] : vector<1x4x1xf32> to vector<1xf32>
    %411 = vector.shape_cast %410 : vector<1xf32> to vector<1x1x1xf32>
    %412 = vector.extract %411[0, 0, 0] : f32 from vector<1x1x1xf32>
    %cst_150 = arith.constant 9.765625E-4 : f32
    %413 = arith.mulf %412, %cst_150 : f32
    %414 = vector.extract_strided_slice %324 {offsets = [12, 0], sizes = [4, 1], strides = [1, 1]} : vector<32x1xf32> to vector<4x1xf32>
    %415 = vector.shape_cast %414 : vector<4x1xf32> to vector<1x4x1xf32>
    %cst_151 = arith.constant dense<0.000000e+00> : vector<1xf32>
    %416 = vector.multi_reduction <add>, %415, %cst_151 [1, 2] : vector<1x4x1xf32> to vector<1xf32>
    %417 = vector.shape_cast %416 : vector<1xf32> to vector<1x1x1xf32>
    %418 = vector.extract %417[0, 0, 0] : f32 from vector<1x1x1xf32>
    %cst_152 = arith.constant 9.765625E-4 : f32
    %419 = arith.mulf %418, %cst_152 : f32
    %420 = arith.mulf %413, %413 : f32
    %421 = arith.subf %419, %420 : f32
    %cst_153 = arith.constant 0.000000e+00 : f32
    %422 = arith.maximumf %421, %cst_153 : f32
    %cst_154 = arith.constant 1.000000e+00 : f32
    %423 = vector.broadcast %cst_154 : f32 to vector<4x256xf32>
    %424 = arith.mulf %423, %407 : vector<4x256xf32>
    %425 = arith.addf %406, %424 : vector<4x256xf32>
    %cst_155 = arith.constant 9.99999974E-6 : f32
    %426 = arith.addf %422, %cst_155 : f32
    %427 = math.rsqrt %426 : f32
    %cst_156 = arith.constant 1.773000e-01 : f32
    %428 = arith.mulf %cst_156, %427 : f32
    %429 = vector.broadcast %413 : f32 to vector<4x256xf32>
    %430 = arith.subf %407, %429 : vector<4x256xf32>
    %431 = vector.broadcast %428 : f32 to vector<4x256xf32>
    %432 = arith.mulf %431, %430 : vector<4x256xf32>
    %433 = arith.addf %425, %432 : vector<4x256xf32>
    %434 = vector.extract_strided_slice %319 {offsets = [16, 0], sizes = [4, 256], strides = [1, 1]} : vector<32x256xf32> to vector<4x256xf32>
    %435 = vector.extract_strided_slice %321 {offsets = [16, 0], sizes = [4, 1], strides = [1, 1]} : vector<32x1xf32> to vector<4x1xf32>
    %436 = vector.shape_cast %435 : vector<4x1xf32> to vector<1x4x1xf32>
    %cst_157 = arith.constant dense<0.000000e+00> : vector<1xf32>
    %437 = vector.multi_reduction <add>, %436, %cst_157 [1, 2] : vector<1x4x1xf32> to vector<1xf32>
    %438 = vector.shape_cast %437 : vector<1xf32> to vector<1x1x1xf32>
    %439 = vector.extract %438[0, 0, 0] : f32 from vector<1x1x1xf32>
    %cst_158 = arith.constant 9.765625E-4 : f32
    %440 = arith.mulf %439, %cst_158 : f32
    %441 = vector.extract_strided_slice %324 {offsets = [16, 0], sizes = [4, 1], strides = [1, 1]} : vector<32x1xf32> to vector<4x1xf32>
    %442 = vector.shape_cast %441 : vector<4x1xf32> to vector<1x4x1xf32>
    %cst_159 = arith.constant dense<0.000000e+00> : vector<1xf32>
    %443 = vector.multi_reduction <add>, %442, %cst_159 [1, 2] : vector<1x4x1xf32> to vector<1xf32>
    %444 = vector.shape_cast %443 : vector<1xf32> to vector<1x1x1xf32>
    %445 = vector.extract %444[0, 0, 0] : f32 from vector<1x1x1xf32>
    %cst_160 = arith.constant 9.765625E-4 : f32
    %446 = arith.mulf %445, %cst_160 : f32
    %447 = arith.mulf %440, %440 : f32
    %448 = arith.subf %446, %447 : f32
    %cst_161 = arith.constant 0.000000e+00 : f32
    %449 = arith.maximumf %448, %cst_161 : f32
    %cst_162 = arith.constant 1.000000e+00 : f32
    %450 = vector.broadcast %cst_162 : f32 to vector<4x256xf32>
    %451 = arith.mulf %450, %434 : vector<4x256xf32>
    %452 = arith.addf %433, %451 : vector<4x256xf32>
    %cst_163 = arith.constant 9.99999974E-6 : f32
    %453 = arith.addf %449, %cst_163 : f32
    %454 = math.rsqrt %453 : f32
    %cst_164 = arith.constant 1.773000e-01 : f32
    %455 = arith.mulf %cst_164, %454 : f32
    %456 = vector.broadcast %440 : f32 to vector<4x256xf32>
    %457 = arith.subf %434, %456 : vector<4x256xf32>
    %458 = vector.broadcast %455 : f32 to vector<4x256xf32>
    %459 = arith.mulf %458, %457 : vector<4x256xf32>
    %460 = arith.addf %452, %459 : vector<4x256xf32>
    %461 = vector.extract_strided_slice %319 {offsets = [20, 0], sizes = [4, 256], strides = [1, 1]} : vector<32x256xf32> to vector<4x256xf32>
    %462 = vector.extract_strided_slice %321 {offsets = [20, 0], sizes = [4, 1], strides = [1, 1]} : vector<32x1xf32> to vector<4x1xf32>
    %463 = vector.shape_cast %462 : vector<4x1xf32> to vector<1x4x1xf32>
    %cst_165 = arith.constant dense<0.000000e+00> : vector<1xf32>
    %464 = vector.multi_reduction <add>, %463, %cst_165 [1, 2] : vector<1x4x1xf32> to vector<1xf32>
    %465 = vector.shape_cast %464 : vector<1xf32> to vector<1x1x1xf32>
    %466 = vector.extract %465[0, 0, 0] : f32 from vector<1x1x1xf32>
    %cst_166 = arith.constant 9.765625E-4 : f32
    %467 = arith.mulf %466, %cst_166 : f32
    %468 = vector.extract_strided_slice %324 {offsets = [20, 0], sizes = [4, 1], strides = [1, 1]} : vector<32x1xf32> to vector<4x1xf32>
    %469 = vector.shape_cast %468 : vector<4x1xf32> to vector<1x4x1xf32>
    %cst_167 = arith.constant dense<0.000000e+00> : vector<1xf32>
    %470 = vector.multi_reduction <add>, %469, %cst_167 [1, 2] : vector<1x4x1xf32> to vector<1xf32>
    %471 = vector.shape_cast %470 : vector<1xf32> to vector<1x1x1xf32>
    %472 = vector.extract %471[0, 0, 0] : f32 from vector<1x1x1xf32>
    %cst_168 = arith.constant 9.765625E-4 : f32
    %473 = arith.mulf %472, %cst_168 : f32
    %474 = arith.mulf %467, %467 : f32
    %475 = arith.subf %473, %474 : f32
    %cst_169 = arith.constant 0.000000e+00 : f32
    %476 = arith.maximumf %475, %cst_169 : f32
    %cst_170 = arith.constant 1.000000e+00 : f32
    %477 = vector.broadcast %cst_170 : f32 to vector<4x256xf32>
    %478 = arith.mulf %477, %461 : vector<4x256xf32>
    %479 = arith.addf %460, %478 : vector<4x256xf32>
    %cst_171 = arith.constant 9.99999974E-6 : f32
    %480 = arith.addf %476, %cst_171 : f32
    %481 = math.rsqrt %480 : f32
    %cst_172 = arith.constant 1.773000e-01 : f32
    %482 = arith.mulf %cst_172, %481 : f32
    %483 = vector.broadcast %467 : f32 to vector<4x256xf32>
    %484 = arith.subf %461, %483 : vector<4x256xf32>
    %485 = vector.broadcast %482 : f32 to vector<4x256xf32>
    %486 = arith.mulf %485, %484 : vector<4x256xf32>
    %487 = arith.addf %479, %486 : vector<4x256xf32>
    %488 = vector.extract_strided_slice %319 {offsets = [24, 0], sizes = [4, 256], strides = [1, 1]} : vector<32x256xf32> to vector<4x256xf32>
    %489 = vector.extract_strided_slice %321 {offsets = [24, 0], sizes = [4, 1], strides = [1, 1]} : vector<32x1xf32> to vector<4x1xf32>
    %490 = vector.shape_cast %489 : vector<4x1xf32> to vector<1x4x1xf32>
    %cst_173 = arith.constant dense<0.000000e+00> : vector<1xf32>
    %491 = vector.multi_reduction <add>, %490, %cst_173 [1, 2] : vector<1x4x1xf32> to vector<1xf32>
    %492 = vector.shape_cast %491 : vector<1xf32> to vector<1x1x1xf32>
    %493 = vector.extract %492[0, 0, 0] : f32 from vector<1x1x1xf32>
    %cst_174 = arith.constant 9.765625E-4 : f32
    %494 = arith.mulf %493, %cst_174 : f32
    %495 = vector.extract_strided_slice %324 {offsets = [24, 0], sizes = [4, 1], strides = [1, 1]} : vector<32x1xf32> to vector<4x1xf32>
    %496 = vector.shape_cast %495 : vector<4x1xf32> to vector<1x4x1xf32>
    %cst_175 = arith.constant dense<0.000000e+00> : vector<1xf32>
    %497 = vector.multi_reduction <add>, %496, %cst_175 [1, 2] : vector<1x4x1xf32> to vector<1xf32>
    %498 = vector.shape_cast %497 : vector<1xf32> to vector<1x1x1xf32>
    %499 = vector.extract %498[0, 0, 0] : f32 from vector<1x1x1xf32>
    %cst_176 = arith.constant 9.765625E-4 : f32
    %500 = arith.mulf %499, %cst_176 : f32
    %501 = arith.mulf %494, %494 : f32
    %502 = arith.subf %500, %501 : f32
    %cst_177 = arith.constant 0.000000e+00 : f32
    %503 = arith.maximumf %502, %cst_177 : f32
    %cst_178 = arith.constant 1.000000e+00 : f32
    %504 = vector.broadcast %cst_178 : f32 to vector<4x256xf32>
    %505 = arith.mulf %504, %488 : vector<4x256xf32>
    %506 = arith.addf %487, %505 : vector<4x256xf32>
    %cst_179 = arith.constant 9.99999974E-6 : f32
    %507 = arith.addf %503, %cst_179 : f32
    %508 = math.rsqrt %507 : f32
    %cst_180 = arith.constant 1.773000e-01 : f32
    %509 = arith.mulf %cst_180, %508 : f32
    %510 = vector.broadcast %494 : f32 to vector<4x256xf32>
    %511 = arith.subf %488, %510 : vector<4x256xf32>
    %512 = vector.broadcast %509 : f32 to vector<4x256xf32>
    %513 = arith.mulf %512, %511 : vector<4x256xf32>
    %514 = arith.addf %506, %513 : vector<4x256xf32>
    %515 = vector.extract_strided_slice %319 {offsets = [28, 0], sizes = [4, 256], strides = [1, 1]} : vector<32x256xf32> to vector<4x256xf32>
    %516 = vector.extract_strided_slice %321 {offsets = [28, 0], sizes = [4, 1], strides = [1, 1]} : vector<32x1xf32> to vector<4x1xf32>
    %517 = vector.shape_cast %516 : vector<4x1xf32> to vector<1x4x1xf32>
    %cst_181 = arith.constant dense<0.000000e+00> : vector<1xf32>
    %518 = vector.multi_reduction <add>, %517, %cst_181 [1, 2] : vector<1x4x1xf32> to vector<1xf32>
    %519 = vector.shape_cast %518 : vector<1xf32> to vector<1x1x1xf32>
    %520 = vector.extract %519[0, 0, 0] : f32 from vector<1x1x1xf32>
    %cst_182 = arith.constant 9.765625E-4 : f32
    %521 = arith.mulf %520, %cst_182 : f32
    %522 = vector.extract_strided_slice %324 {offsets = [28, 0], sizes = [4, 1], strides = [1, 1]} : vector<32x1xf32> to vector<4x1xf32>
    %523 = vector.shape_cast %522 : vector<4x1xf32> to vector<1x4x1xf32>
    %cst_183 = arith.constant dense<0.000000e+00> : vector<1xf32>
    %524 = vector.multi_reduction <add>, %523, %cst_183 [1, 2] : vector<1x4x1xf32> to vector<1xf32>
    %525 = vector.shape_cast %524 : vector<1xf32> to vector<1x1x1xf32>
    %526 = vector.extract %525[0, 0, 0] : f32 from vector<1x1x1xf32>
    %cst_184 = arith.constant 9.765625E-4 : f32
    %527 = arith.mulf %526, %cst_184 : f32
    %528 = arith.mulf %521, %521 : f32
    %529 = arith.subf %527, %528 : f32
    %cst_185 = arith.constant 0.000000e+00 : f32
    %530 = arith.maximumf %529, %cst_185 : f32
    %cst_186 = arith.constant 1.000000e+00 : f32
    %531 = vector.broadcast %cst_186 : f32 to vector<4x256xf32>
    %532 = arith.mulf %531, %515 : vector<4x256xf32>
    %533 = arith.addf %514, %532 : vector<4x256xf32>
    %cst_187 = arith.constant 9.99999974E-6 : f32
    %534 = arith.addf %530, %cst_187 : f32
    %535 = math.rsqrt %534 : f32
    %cst_188 = arith.constant 1.773000e-01 : f32
    %536 = arith.mulf %cst_188, %535 : f32
    %537 = vector.broadcast %521 : f32 to vector<4x256xf32>
    %538 = arith.subf %515, %537 : vector<4x256xf32>
    %539 = vector.broadcast %536 : f32 to vector<4x256xf32>
    %540 = arith.mulf %539, %538 : vector<4x256xf32>
    %541 = arith.addf %533, %540 : vector<4x256xf32>
    %cst_189 = arith.constant 1.000000e+00 : f32
    %542 = vector.broadcast %cst_189 : f32 to vector<4x256xf32>
    %543 = arith.mulf %542, %11 : vector<4x256xf32>
    %544 = arith.addf %543, %541 : vector<4x256xf32>
    %545 = arith.truncf %544 : vector<4x256xf32> to vector<4x256xbf16>
    %c0_190 = arith.constant 0 : index
    %c0_191 = arith.constant 0 : index
    %546 = vector.load %arg6[%c0_190, %c0_191] : memref<256x64xbf16, #tpu.memory_space<vmem>>, vector<256x64xbf16>
    %cst_192 = arith.constant dense<0.000000e+00> : vector<4x64xf32>
    %547 = tpu.matmul %545, %546, %cst_192 {dimension_numbers = #tpu.dot_dimension_numbers<[1], [0], [0], [1], [0, 0, 1, 1], [], []>} : vector<4x256xbf16>, vector<256x64xbf16>, vector<4x64xf32> -> vector<4x64xf32>
    %c0_193 = arith.constant 0 : index
    %c0_194 = arith.constant 0 : index
    %c0_195 = arith.constant 0 : index
    %548 = vector.load %arg7[%c0_193, %c0_194, %c0_195] : memref<1x4x64xf32, #tpu.memory_space<vmem>>, vector<1x4x64xf32>
    %549 = vector.shape_cast %548 : vector<1x4x64xf32> to vector<4x64xf32>
    %550 = vector.shape_cast %547 : vector<4x64xf32> to vector<1x4x64xf32>
    tpu.vector_store %arg7[%c0_193, %c0_194, %c0_195], %550 {strides = array<i32>} : memref<1x4x64xf32, #tpu.memory_space<vmem>>, vector<1x4x64xf32>,
    %551 = vector.shape_cast %547 : vector<4x64xf32> to vector<1x4x64xf32>
    %cst_196 = arith.constant dense<0.000000e+00> : vector<1xf32>
    %552 = vector.multi_reduction <add>, %551, %cst_196 [1, 2] : vector<1x4x64xf32> to vector<1xf32>
    %553 = vector.shape_cast %552 : vector<1xf32> to vector<1x1x1xf32>
    %554 = vector.extract %553[0, 0, 0] : f32 from vector<1x1x1xf32>
    %555 = vector.broadcast %554 : f32 to vector<1x1x128xf32>
    %c0_197 = arith.constant 0 : index
    %c0_198 = arith.constant 0 : index
    %c0_199 = arith.constant 0 : index
    %556 = vector.load %arg8[%c0_197, %c0_198, %c0_199] : memref<1x1x128xf32, #tpu.memory_space<vmem>>, vector<1x1x128xf32>
    tpu.vector_store %arg8[%c0_197, %c0_198, %c0_199], %555 {strides = array<i32>} : memref<1x1x128xf32, #tpu.memory_space<vmem>>, vector<1x1x128xf32>,
    return
  }
  func.func @transform_0(%arg0: i32) -> i32 {
    %c0_i32 = arith.constant 0 : i32
    %c0_i32_0 = arith.constant 0 : i32
    return %c0_i32 : i32
  }
  func.func @transform_1(%arg0: i32) -> (i32, i32, i32) {
    %c0_i32 = arith.constant 0 : i32
    %c0_i32_0 = arith.constant 0 : i32
    %c0_i32_1 = arith.constant 0 : i32
    return %arg0, %c0_i32, %c0_i32_0 : i32, i32, i32
  }
  func.func @transform_2(%arg0: i32) -> (i32, i32) {
    %c0_i32 = arith.constant 0 : i32
    %c0_i32_0 = arith.constant 0 : i32
    %c0_i32_1 = arith.constant 0 : i32
    return %c0_i32, %c0_i32_0 : i32, i32
  }
  func.func @transform_3(%arg0: i32) -> (i32, i32) {
    %c0_i32 = arith.constant 0 : i32
    %c0_i32_0 = arith.constant 0 : i32
    %c0_i32_1 = arith.constant 0 : i32
    return %c0_i32, %c0_i32_0 : i32, i32
  }
  func.func @transform_4(%arg0: i32) -> (i32, i32) {
    %c0_i32 = arith.constant 0 : i32
    %c0_i32_0 = arith.constant 0 : i32
    %c0_i32_1 = arith.constant 0 : i32
    return %c0_i32, %c0_i32_0 : i32, i32
  }
  func.func @transform_5(%arg0: i32) -> (i32, i32) {
    %c0_i32 = arith.constant 0 : i32
    %c0_i32_0 = arith.constant 0 : i32
    %c0_i32_1 = arith.constant 0 : i32
    return %c0_i32, %c0_i32_0 : i32, i32
  }
  func.func @transform_6(%arg0: i32) -> (i32, i32, i32) {
    %c0_i32 = arith.constant 0 : i32
    %c0_i32_0 = arith.constant 0 : i32
    %c0_i32_1 = arith.constant 0 : i32
    return %arg0, %c0_i32, %c0_i32_0 : i32, i32, i32
  }
  func.func @transform_7(%arg0: i32) -> (i32, i32, i32) {
    %c0_i32 = arith.constant 0 : i32
    %c0_i32_0 = arith.constant 0 : i32
    %c0_i32_1 = arith.constant 0 : i32
    return %arg0, %c0_i32, %c0_i32_0 : i32, i32, i32
  }
}

</mosaic_0001>

<llo_original>
// kernel: _lambda_.6
$region0: #{_lambda_.6}
  #allocation0 [shape = 'u32[]', space=smem, size = 0x4, offset = 0x4, fixed_abs, tag = 'smem constant byte address 0x4 - core index']
  #allocation1 [shape = 'u32[72,128]{1,0:T(1,128)}', space=vmem, size = 0x9000, scoped, tag = 'internal scratch']
  #allocation2 [shape = 'f32[2]{0:T(128)}', space=smem, size = 0x200, scoped, tag = 'scratch operand']
  #allocation3 [shape = 'f32[1]{0:T(128)S(6)}', space=smem, size = 0x200, scoped, tag = 'scoped memory for _lambda_.6']
  %s0 = inlined_call_operand.<no memory space> [shape: f32[1], index: 0, kind: input, shape index: {}]
  %s1 = inlined_call_operand.vmem [shape: f32[2,4,256], index: 1, kind: input, shape index: {}]
  %s2 = inlined_call_operand.vmem [shape: f32[3,128], index: 2, kind: output, shape index: {}]
  %s3 = sld [smem:[#allocation0]]
  $region49: #{_lambda_.6} parent=0
    _
  %s5 = ssub.s32 1, %s3
  %s6 = scalar_select 0, %s5, %s3
  %7 = sst [smem:[#allocation3]] %s0
  loop: start=0, step=1, limit=4
  $region2: #{_lambda_.6} parent=0 // loop_pre_header
    _
  $region3: #{_lambda_.6} parent=0 // loop_header
    %s9 = sphi 0, %s13
    %p10 = scmp.ge.s32.totalorder %s9, 4
    %s17 = sphi 0, %s17
    %s19 = sphi 0, %s17
    %s20 = sphi 0, %s19
    %s34 = sphi 0, %s20
    %s40 = sphi 0, %s42
    %s43 = sphi 0, %s40
    %s44 = sphi 0, %s43
    %s60 = sphi 0, %s44
    %s64 = sphi 0, %s64
    %s66 = sphi 0, %s64
    %s67 = sphi 0, %s66
    %s81 = sphi 0, %s67
  $region4: #{_lambda_.6} parent=0 // loop_header_branch
    %12 = sbr.rel (%p10) target = $region8
  $region5: #{_lambda_.6} parent=0 // loop_body
    %s14 = ssub.s32 %s9, 1
    %s15 = ssub.s32 %s9, 2
    %s16 = sadd.s32 %s9, 1
    %s18 = sadd.s32 %s17, 1
    %p21 = scmp.eq.s32.totalorder %s9, 1
    %p22 = scmp.ne.s32.totalorder %s17, %s19
    %p23 = scmp.eq.s32.totalorder %s9, 0
    %p24 = por %p22, %p23
    %p25 = scmp.ne.s32.totalorder %s17, %s19
    %p26 = scmp.eq.s32.totalorder %s14, 1
    %p27 = por %p25, %p26
    %p28 = scmp.ne.s32.totalorder %s19, %s20
    %p29 = scmp.eq.s32.totalorder %s14, 0
    %p30 = por %p28, %p29
    %p31 = scmp.ne.s32.totalorder %s19, %s20
    %p32 = scmp.eq.s32.totalorder %s15, 1
    %p33 = por %p31, %p32
    %p35 = scmp.ne.s32.totalorder %s20, %s34
    %p36 = scmp.eq.s32.totalorder %s15, 0
    %p37 = por %p35, %p36
    %s38 = ssub.s32 %s9, %s16
    %p39 = scmp.eq.s32.totalorder %s38, 0
    %s41 = sadd.s32 %s40, 1
    %s42 = scalar_select %p39, %s40, %s41
    %p45 = pneg %p39
    %p46 = scmp.eq.s32.totalorder %s9, 1
    %p47 = por %p45, %p46
    %p48 = scmp.ne.s32.totalorder %s40, %s43
    %p49 = scmp.eq.s32.totalorder %s9, 0
    %p50 = por %p48, %p49
    %p51 = scmp.ne.s32.totalorder %s40, %s43
    %p52 = scmp.eq.s32.totalorder %s14, 1
    %p53 = por %p51, %p52
    %p54 = scmp.ne.s32.totalorder %s43, %s44
    %p55 = scmp.eq.s32.totalorder %s14, 0
    %p56 = por %p54, %p55
    %p57 = scmp.ne.s32.totalorder %s43, %s44
    %p58 = scmp.eq.s32.totalorder %s15, 1
    %p59 = por %p57, %p58
    %p61 = scmp.ne.s32.totalorder %s44, %s60
    %p62 = scmp.eq.s32.totalorder %s15, 0
    %p63 = por %p61, %p62
    %s65 = sadd.s32 %s64, 1
    %p68 = scmp.eq.s32.totalorder %s9, 1
    %p69 = scmp.ne.s32.totalorder %s64, %s66
    %p70 = scmp.eq.s32.totalorder %s9, 0
    %p71 = por %p69, %p70
    %p72 = scmp.ne.s32.totalorder %s64, %s66
    %p73 = scmp.eq.s32.totalorder %s14, 1
    %p74 = por %p72, %p73
    %p75 = scmp.ne.s32.totalorder %s66, %s67
    %p76 = scmp.eq.s32.totalorder %s14, 0
    %p77 = por %p75, %p76
    %p78 = scmp.ne.s32.totalorder %s66, %s67
    %p79 = scmp.eq.s32.totalorder %s15, 1
    %p80 = por %p78, %p79
    %p82 = scmp.ne.s32.totalorder %s67, %s81
    %p83 = scmp.eq.s32.totalorder %s15, 0
    %p84 = por %p82, %p83
    %p85 = scmp.le.s32.totalorder 1, %s9
    %p86 = scmp.lt.s32.totalorder %s9, 3
    %p87 = pnand %p85, %p86
    %p88 = pneg %p87
    // Predicated region
    $region9: #{_lambda_.6} parent=5 // pred_check
      _
    $region10: #{_lambda_.6} parent=5 // pred_check_branch
      %90 = sbr.rel (%p87) target = $region12
    $region11: #{_lambda_.6} parent=5 // pred_region
      %s91 = ssub.s32 %s9, 1
      // Predicated region
      $region13: #{_lambda_.6} parent=11 // pred_check
        %p92 = pneg %p30
      $region14: #{_lambda_.6} parent=11 // pred_check_branch
        %94 = sbr.rel (%p92) target = $region16
      $region15: #{_lambda_.6} parent=11 // pred_region
        _
      $region16: #{_lambda_.6} parent=11 // pred_fallthru
        _
    $region12: #{_lambda_.6} parent=5 // pred_fallthru
      _
    %p95 = scmp.lt.s32.totalorder %s9, 2
    // Predicated region
    $region17: #{_lambda_.6} parent=5 // pred_check
      %p96 = pneg %p95
    $region18: #{_lambda_.6} parent=5 // pred_check_branch
      %98 = sbr.rel (%p96) target = $region20
    $region19: #{_lambda_.6} parent=5 // pred_region
      // Predicated region
      $region21: #{_lambda_.6} parent=19 // pred_check
        %p99 = pneg %p50
      $region22: #{_lambda_.6} parent=19 // pred_check_branch
        %101 = sbr.rel (%p99) target = $region24
      $region23: #{_lambda_.6} parent=19 // pred_region
        %p102 = scmp.lt.s32.totalorder %s9, 1
        %s103 = scalar_select %p102, %s9, 1
        %s104 = smul.addr %s103, 2
        %s105 = smul.addr %s104, 4
        %s106 = scalar_lea.vmem %s1, %s105
      $region24: #{_lambda_.6} parent=19 // pred_fallthru
        _
    $region20: #{_lambda_.6} parent=5 // pred_fallthru
      _
    %p107 = scmp.le.s32.totalorder 1, %s9
    %p108 = scmp.lt.s32.totalorder %s9, 3
    %p109 = pnand %p107, %p108
    %p110 = pneg %p109
    // Predicated region
    $region25: #{_lambda_.6} parent=5 // pred_check
      _
    $region26: #{_lambda_.6} parent=5 // pred_check_branch
      %112 = sbr.rel (%p109) target = $region28
    $region27: #{_lambda_.6} parent=5 // pred_region
      %s113 = ssub.s32 %s9, 1
      %p114 = pneg %p30
      %p115 = pneg %p27
      %p116 = scmp.lt.s32.totalorder %s14, 1
      %s117 = scalar_select %p116, %s14, 1
      %s118 = smul.addr %s117, 2
      %s119 = smul.addr %s118, 4
      %s120 = scalar_lea.vmem %s1, %s119
      %p121 = pneg %p56
      %p122 = pneg %p53
      %p123 = pneg %p77
      %p124 = pneg %p74
      %p125 = scmp.lt.s32.totalorder %s14, 1
      %s126 = scalar_select %p125, %s14, 1
      %s127 = smul.addr %s126, 2
      %s128 = smul.addr %s127, 4
      %s129 = scalar_lea.vmem %s1, %s128
      %p130 = scmp.eq.s32.totalorder %s14, 0
      // Predicated region
      $region29: #{_lambda_.6} parent=27 // pred_check
        %p131 = pneg %p130
      $region30: #{_lambda_.6} parent=27 // pred_check_branch
        %133 = sbr.rel (%p131) target = $region32
      $region31: #{_lambda_.6} parent=27 // pred_region
        %s134 = scalar_lea.smem [#allocation2], 0
        %135 = sst [smem:[%s134]] 0.0
        %s136 = scalar_lea.smem [#allocation2], 1
        %137 = sst [smem:[%s136]] 0.0
      $region32: #{_lambda_.6} parent=27 // pred_fallthru
        _
      %s138 = sld [smem:[#allocation3]]
      %s139 = smul.f32 %s138, 0.00048828125
      %v140 = vld [vmem:[%s129] sm:$0xff]
      %v141 = vstv %s139
      %vm142 = vcmp.gt.f32.partialorder %v140, %v141
      %v143 = vsel %vm142, 1, 0
      %v144 = vcvt.s32.f32 %v143
      %s145 = sld [smem:[#allocation2]]
      %v146 = vmul.f32 %v144, %v140
      %148 = vst [vmem:[#allocation1] ss:$2 sm:$0xff] %v146
      %v149 = vld.sshfl [vmem:[#allocation1] sm:$0xff pattern:$0x75316420]
      %v150 = vld.sshfl [vmem:[#allocation1 + $0x8] sm:$0xff pattern:$0x75316420]
      %vm153 = vcmask 1043456
      %v154 = vsel %vm153, %v149, 0.0
      %v155 = vsel %vm153, %v150, 0.0
      %v156 = vadd.f32 %v154, %v155
      %157 = vadd.xlane.f32.xlu0 %v156
      %v158 = vpop.xlane.xlu0 %157
      %v159 = vrot.slane %v158, 4
      %v160 = vadd.f32 %v158, %v159
      %v161 = vrot.slane %v160, 2
      %v162 = vadd.f32 %v160, %v161
      %v163 = vrot.slane %v162, 1
      %v164 = vadd.f32 %v162, %v163
      %s165 = vtos %v164
      %s166 = sadd.f32 %s145, %s165
      %s167 = scalar_lea.smem [#allocation2], 0
      %168 = sst [smem:[%s167]] %s166
      %s169 = sld [smem:[#allocation2 + $0x1]]
      %171 = vst [vmem:[#allocation1] ss:$2 sm:$0xff] %v144
      %v172 = vld.sshfl [vmem:[#allocation1] sm:$0xff pattern:$0x75316420]
      %v173 = vld.sshfl [vmem:[#allocation1 + $0x8] sm:$0xff pattern:$0x75316420]
      %v176 = vsel %vm153, %v172, 0.0
      %v177 = vsel %vm153, %v173, 0.0
      %v178 = vadd.f32 %v176, %v177
      %179 = vadd.xlane.f32.xlu0 %v178
      %v180 = vpop.xlane.xlu0 %179
      %v181 = vrot.slane %v180, 4
      %v182 = vadd.f32 %v180, %v181
      %v183 = vrot.slane %v182, 2
      %v184 = vadd.f32 %v182, %v183
      %v185 = vrot.slane %v184, 1
      %v186 = vadd.f32 %v184, %v185
      %s187 = vtos %v186
      %s188 = sadd.f32 %s169, %s187
      %s189 = scalar_lea.smem [#allocation2], 1
      %190 = sst [smem:[%s189]] %s188
      %p191 = scmp.eq.s32.totalorder %s14, 1
      // Predicated region
      $region33: #{_lambda_.6} parent=27 // pred_check
        %p192 = pneg %p191
      $region34: #{_lambda_.6} parent=27 // pred_check_branch
        %194 = sbr.rel (%p192) target = $region36
      $region35: #{_lambda_.6} parent=27 // pred_region
        %s195 = sld [smem:[#allocation3]]
        %v196 = vstv %s195
        %s197 = sld [smem:[#allocation2]]
        %v198 = vstv %s197
        %s199 = sld [smem:[#allocation2 + $0x1]]
        %v200 = vstv %s199
        %vm201 = vcmask 1040384
        %v202 = vsel %vm201, %v196, %v198
        %vm203 = vcmask 1041408
        %v204 = vsel %vm203, %v202, %v200
        %205 = vst [vmem:[%s2] sm:$0x7] %v204
      $region36: #{_lambda_.6} parent=27 // pred_fallthru
        _
      // Predicated region
      $region37: #{_lambda_.6} parent=27 // pred_check
        %p206 = pneg %p74
      $region38: #{_lambda_.6} parent=27 // pred_check_branch
        %208 = sbr.rel (%p206) target = $region40
      $region39: #{_lambda_.6} parent=27 // pred_region
        _
      $region40: #{_lambda_.6} parent=27 // pred_fallthru
        _
      // Predicated region
      $region41: #{_lambda_.6} parent=27 // pred_check
        %p209 = pneg %p74
      $region42: #{_lambda_.6} parent=27 // pred_check_branch
        %211 = sbr.rel (%p209) target = $region44
      $region43: #{_lambda_.6} parent=27 // pred_region
        _
      $region44: #{_lambda_.6} parent=27 // pred_fallthru
        _
    $region28: #{_lambda_.6} parent=5 // pred_fallthru
      _
    %p212 = scmp.le.s32.totalorder 2, %s9
    // Predicated region
    $region45: #{_lambda_.6} parent=5 // pred_check
      %p213 = pneg %p212
    $region46: #{_lambda_.6} parent=5 // pred_check_branch
      %215 = sbr.rel (%p213) target = $region48
    $region47: #{_lambda_.6} parent=5 // pred_region
      %s216 = ssub.s32 %s9, 2
    $region48: #{_lambda_.6} parent=5 // pred_fallthru
      _
  $region6: #{_lambda_.6} parent=0 // loop_footer
    %s13 = sadd.s32 1, %s9
  $region7: #{_lambda_.6} parent=0 // loop_footer_branch
    %8 = sbr.rel target = $region3
  $region8: #{_lambda_.6} parent=0 // loop_exit
    _

// kernel: _lambda_.5
$region0: #{_lambda_.5}
  #allocation0 [shape = 'u32[]', space=smem, size = 0x4, offset = 0x4, fixed_abs, tag = 'smem constant byte address 0x4 - core index']
  #allocation1 [shape = 'u32[72,128]{1,0:T(1,128)}', space=vmem, size = 0x9000, scoped, tag = 'internal scratch']
  #allocation2 [shape = 'f32[1]{0:T(128)}', space=smem, size = 0x200, scoped, tag = 'scratch operand']
  %s0 = inlined_call_operand.vmem [shape: f32[2,4,256], index: 0, kind: input, shape index: {}]
  %s1 = inlined_call_operand.vmem [shape: f32[1,128], index: 1, kind: output, shape index: {}]
  %s2 = sld [smem:[#allocation0]]
  $region45: #{_lambda_.5} parent=0
    _
  %s4 = ssub.s32 1, %s2
  %s5 = scalar_select 0, %s4, %s2
  loop: start=0, step=1, limit=4
  $region2: #{_lambda_.5} parent=0 // loop_pre_header
    _
  $region3: #{_lambda_.5} parent=0 // loop_header
    %s7 = sphi 0, %s11
    %p8 = scmp.ge.s32.totalorder %s7, 4
    %s17 = sphi 0, %s19
    %s20 = sphi 0, %s17
    %s21 = sphi 0, %s20
    %s37 = sphi 0, %s21
    %s41 = sphi 0, %s41
    %s43 = sphi 0, %s41
    %s44 = sphi 0, %s43
    %s58 = sphi 0, %s44
  $region4: #{_lambda_.5} parent=0 // loop_header_branch
    %10 = sbr.rel (%p8) target = $region8
  $region5: #{_lambda_.5} parent=0 // loop_body
    %s12 = ssub.s32 %s7, 1
    %s13 = ssub.s32 %s7, 2
    %s14 = sadd.s32 %s7, 1
    %s15 = ssub.s32 %s7, %s14
    %p16 = scmp.eq.s32.totalorder %s15, 0
    %s18 = sadd.s32 %s17, 1
    %s19 = scalar_select %p16, %s17, %s18
    %p22 = pneg %p16
    %p23 = scmp.eq.s32.totalorder %s7, 1
    %p24 = por %p22, %p23
    %p25 = scmp.ne.s32.totalorder %s17, %s20
    %p26 = scmp.eq.s32.totalorder %s7, 0
    %p27 = por %p25, %p26
    %p28 = scmp.ne.s32.totalorder %s17, %s20
    %p29 = scmp.eq.s32.totalorder %s12, 1
    %p30 = por %p28, %p29
    %p31 = scmp.ne.s32.totalorder %s20, %s21
    %p32 = scmp.eq.s32.totalorder %s12, 0
    %p33 = por %p31, %p32
    %p34 = scmp.ne.s32.totalorder %s20, %s21
    %p35 = scmp.eq.s32.totalorder %s13, 1
    %p36 = por %p34, %p35
    %p38 = scmp.ne.s32.totalorder %s21, %s37
    %p39 = scmp.eq.s32.totalorder %s13, 0
    %p40 = por %p38, %p39
    %s42 = sadd.s32 %s41, 1
    %p45 = scmp.eq.s32.totalorder %s7, 1
    %p46 = scmp.ne.s32.totalorder %s41, %s43
    %p47 = scmp.eq.s32.totalorder %s7, 0
    %p48 = por %p46, %p47
    %p49 = scmp.ne.s32.totalorder %s41, %s43
    %p50 = scmp.eq.s32.totalorder %s12, 1
    %p51 = por %p49, %p50
    %p52 = scmp.ne.s32.totalorder %s43, %s44
    %p53 = scmp.eq.s32.totalorder %s12, 0
    %p54 = por %p52, %p53
    %p55 = scmp.ne.s32.totalorder %s43, %s44
    %p56 = scmp.eq.s32.totalorder %s13, 1
    %p57 = por %p55, %p56
    %p59 = scmp.ne.s32.totalorder %s44, %s58
    %p60 = scmp.eq.s32.totalorder %s13, 0
    %p61 = por %p59, %p60
    %p62 = scmp.le.s32.totalorder 1, %s7
    %p63 = scmp.lt.s32.totalorder %s7, 3
    %p64 = pnand %p62, %p63
    %p65 = pneg %p64
    // Predicated region
    $region9: #{_lambda_.5} parent=5 // pred_check
      _
    $region10: #{_lambda_.5} parent=5 // pred_check_branch
      %67 = sbr.rel (%p64) target = $region12
    $region11: #{_lambda_.5} parent=5 // pred_region
      %s68 = ssub.s32 %s7, 1
    $region12: #{_lambda_.5} parent=5 // pred_fallthru
      _
    %p69 = scmp.lt.s32.totalorder %s7, 2
    // Predicated region
    $region13: #{_lambda_.5} parent=5 // pred_check
      %p70 = pneg %p69
    $region14: #{_lambda_.5} parent=5 // pred_check_branch
      %72 = sbr.rel (%p70) target = $region16
    $region15: #{_lambda_.5} parent=5 // pred_region
      // Predicated region
      $region17: #{_lambda_.5} parent=15 // pred_check
        %p73 = pneg %p27
      $region18: #{_lambda_.5} parent=15 // pred_check_branch
        %75 = sbr.rel (%p73) target = $region20
      $region19: #{_lambda_.5} parent=15 // pred_region
        %p76 = scmp.lt.s32.totalorder %s7, 1
        %s77 = scalar_select %p76, %s7, 1
        %s78 = smul.addr %s77, 2
        %s79 = smul.addr %s78, 4
        %s80 = scalar_lea.vmem %s0, %s79
      $region20: #{_lambda_.5} parent=15 // pred_fallthru
        _
    $region16: #{_lambda_.5} parent=5 // pred_fallthru
      _
    %p81 = scmp.le.s32.totalorder 1, %s7
    %p82 = scmp.lt.s32.totalorder %s7, 3
    %p83 = pnand %p81, %p82
    %p84 = pneg %p83
    // Predicated region
    $region21: #{_lambda_.5} parent=5 // pred_check
      _
    $region22: #{_lambda_.5} parent=5 // pred_check_branch
      %86 = sbr.rel (%p83) target = $region24
    $region23: #{_lambda_.5} parent=5 // pred_region
      %s87 = ssub.s32 %s7, 1
      %p88 = scmp.lt.s32.totalorder %s12, 1
      %s89 = scalar_select %p88, %s12, 1
      %s90 = smul.addr %s89, 2
      %s91 = smul.addr %s90, 4
      %s92 = scalar_lea.vmem %s0, %s91
      %p93 = pneg %p33
      %p94 = pneg %p30
      %p95 = pneg %p54
      %p96 = pneg %p51
      %p97 = scmp.lt.s32.totalorder %s12, 1
      %s98 = scalar_select %p97, %s12, 1
      %s99 = smul.addr %s98, 2
      %s100 = smul.addr %s99, 4
      %s101 = scalar_lea.vmem %s0, %s100
      %p102 = scmp.eq.s32.totalorder %s12, 0
      // Predicated region
      $region25: #{_lambda_.5} parent=23 // pred_check
        %p103 = pneg %p102
      $region26: #{_lambda_.5} parent=23 // pred_check_branch
        %105 = sbr.rel (%p103) target = $region28
      $region27: #{_lambda_.5} parent=23 // pred_region
        %s106 = scalar_lea.smem [#allocation2], 0
        %107 = sst [smem:[%s106]] 0.0
      $region28: #{_lambda_.5} parent=23 // pred_fallthru
        _
      %s108 = sld [smem:[#allocation2]]
      %v109 = vld [vmem:[%s101] sm:$0xff]
      %111 = vst [vmem:[#allocation1] ss:$2 sm:$0xff] %v109
      %v112 = vld.sshfl [vmem:[#allocation1] sm:$0xff pattern:$0x75316420]
      %v113 = vld.sshfl [vmem:[#allocation1 + $0x8] sm:$0xff pattern:$0x75316420]
      %vm116 = vcmask 1043456
      %v117 = vsel %vm116, %v112, 0.0
      %v118 = vsel %vm116, %v113, 0.0
      %v119 = vadd.f32 %v117, %v118
      %120 = vadd.xlane.f32.xlu0 %v119
      %v121 = vpop.xlane.xlu0 %120
      %v122 = vrot.slane %v121, 4
      %v123 = vadd.f32 %v121, %v122
      %v124 = vrot.slane %v123, 2
      %v125 = vadd.f32 %v123, %v124
      %v126 = vrot.slane %v125, 1
      %v127 = vadd.f32 %v125, %v126
      %s128 = vtos %v127
      %s129 = sadd.f32 %s108, %s128
      %s130 = scalar_lea.smem [#allocation2], 0
      %131 = sst [smem:[%s130]] %s129
      %p132 = scmp.eq.s32.totalorder %s12, 1
      // Predicated region
      $region29: #{_lambda_.5} parent=23 // pred_check
        %p133 = pneg %p132
      $region30: #{_lambda_.5} parent=23 // pred_check_branch
        %135 = sbr.rel (%p133) target = $region32
      $region31: #{_lambda_.5} parent=23 // pred_region
        %s136 = sld [smem:[#allocation2]]
        %v137 = vstv %s136
        %138 = vst [vmem:[%s1] sm:$0x1] %v137
      $region32: #{_lambda_.5} parent=23 // pred_fallthru
        _
      // Predicated region
      $region33: #{_lambda_.5} parent=23 // pred_check
        %p139 = pneg %p51
      $region34: #{_lambda_.5} parent=23 // pred_check_branch
        %141 = sbr.rel (%p139) target = $region36
      $region35: #{_lambda_.5} parent=23 // pred_region
        _
      $region36: #{_lambda_.5} parent=23 // pred_fallthru
        _
      // Predicated region
      $region37: #{_lambda_.5} parent=23 // pred_check
        %p142 = pneg %p51
      $region38: #{_lambda_.5} parent=23 // pred_check_branch
        %144 = sbr.rel (%p142) target = $region40
      $region39: #{_lambda_.5} parent=23 // pred_region
        _
      $region40: #{_lambda_.5} parent=23 // pred_fallthru
        _
    $region24: #{_lambda_.5} parent=5 // pred_fallthru
      _
    %p145 = scmp.le.s32.totalorder 2, %s7
    // Predicated region
    $region41: #{_lambda_.5} parent=5 // pred_check
      %p146 = pneg %p145
    $region42: #{_lambda_.5} parent=5 // pred_check_branch
      %148 = sbr.rel (%p146) target = $region44
    $region43: #{_lambda_.5} parent=5 // pred_region
      %s149 = ssub.s32 %s7, 2
    $region44: #{_lambda_.5} parent=5 // pred_fallthru
      _
  $region6: #{_lambda_.5} parent=0 // loop_footer
    %s11 = sadd.s32 1, %s7
  $region7: #{_lambda_.5} parent=0 // loop_footer_branch
    %6 = sbr.rel target = $region3
  $region8: #{_lambda_.5} parent=0 // loop_exit
    _

// kernel: _lambda_.8
$region0: #{_lambda_.8}
  #allocation0 [shape = 'u32[]', space=smem, size = 0x4, offset = 0x4, fixed_abs, tag = 'smem constant byte address 0x4 - core index']
  #allocation1 [shape = 'u32[72,128]{1,0:T(1,128)}', space=vmem, size = 0x9000, scoped, tag = 'internal scratch']
  #allocation2 [shape = 'f32[2]{0:T(128)}', space=smem, size = 0x200, scoped, tag = 'scratch operand']
  #allocation3 [shape = 'f32[1]{0:T(128)S(6)}', space=smem, size = 0x200, scoped, tag = 'scoped memory for _lambda_.8']
  %s0 = inlined_call_operand.<no memory space> [shape: f32[1], index: 0, kind: input, shape index: {}]
  %s1 = inlined_call_operand.vmem [shape: f32[2,4,256], index: 1, kind: input, shape index: {}]
  %s2 = inlined_call_operand.vmem [shape: f32[3,128], index: 2, kind: output, shape index: {}]
  %s3 = sld [smem:[#allocation0]]
  $region49: #{_lambda_.8} parent=0
    _
  %s5 = ssub.s32 1, %s3
  %s6 = scalar_select 0, %s5, %s3
  %7 = sst [smem:[#allocation3]] %s0
  loop: start=0, step=1, limit=4
  $region2: #{_lambda_.8} parent=0 // loop_pre_header
    _
  $region3: #{_lambda_.8} parent=0 // loop_header
    %s9 = sphi 0, %s13
    %p10 = scmp.ge.s32.totalorder %s9, 4
    %s17 = sphi 0, %s17
    %s19 = sphi 0, %s17
    %s20 = sphi 0, %s19
    %s34 = sphi 0, %s20
    %s40 = sphi 0, %s42
    %s43 = sphi 0, %s40
    %s44 = sphi 0, %s43
    %s60 = sphi 0, %s44
    %s64 = sphi 0, %s64
    %s66 = sphi 0, %s64
    %s67 = sphi 0, %s66
    %s81 = sphi 0, %s67
  $region4: #{_lambda_.8} parent=0 // loop_header_branch
    %12 = sbr.rel (%p10) target = $region8
  $region5: #{_lambda_.8} parent=0 // loop_body
    %s14 = ssub.s32 %s9, 1
    %s15 = ssub.s32 %s9, 2
    %s16 = sadd.s32 %s9, 1
    %s18 = sadd.s32 %s17, 1
    %p21 = scmp.eq.s32.totalorder %s9, 1
    %p22 = scmp.ne.s32.totalorder %s17, %s19
    %p23 = scmp.eq.s32.totalorder %s9, 0
    %p24 = por %p22, %p23
    %p25 = scmp.ne.s32.totalorder %s17, %s19
    %p26 = scmp.eq.s32.totalorder %s14, 1
    %p27 = por %p25, %p26
    %p28 = scmp.ne.s32.totalorder %s19, %s20
    %p29 = scmp.eq.s32.totalorder %s14, 0
    %p30 = por %p28, %p29
    %p31 = scmp.ne.s32.totalorder %s19, %s20
    %p32 = scmp.eq.s32.totalorder %s15, 1
    %p33 = por %p31, %p32
    %p35 = scmp.ne.s32.totalorder %s20, %s34
    %p36 = scmp.eq.s32.totalorder %s15, 0
    %p37 = por %p35, %p36
    %s38 = ssub.s32 %s9, %s16
    %p39 = scmp.eq.s32.totalorder %s38, 0
    %s41 = sadd.s32 %s40, 1
    %s42 = scalar_select %p39, %s40, %s41
    %p45 = pneg %p39
    %p46 = scmp.eq.s32.totalorder %s9, 1
    %p47 = por %p45, %p46
    %p48 = scmp.ne.s32.totalorder %s40, %s43
    %p49 = scmp.eq.s32.totalorder %s9, 0
    %p50 = por %p48, %p49
    %p51 = scmp.ne.s32.totalorder %s40, %s43
    %p52 = scmp.eq.s32.totalorder %s14, 1
    %p53 = por %p51, %p52
    %p54 = scmp.ne.s32.totalorder %s43, %s44
    %p55 = scmp.eq.s32.totalorder %s14, 0
    %p56 = por %p54, %p55
    %p57 = scmp.ne.s32.totalorder %s43, %s44
    %p58 = scmp.eq.s32.totalorder %s15, 1
    %p59 = por %p57, %p58
    %p61 = scmp.ne.s32.totalorder %s44, %s60
    %p62 = scmp.eq.s32.totalorder %s15, 0
    %p63 = por %p61, %p62
    %s65 = sadd.s32 %s64, 1
    %p68 = scmp.eq.s32.totalorder %s9, 1
    %p69 = scmp.ne.s32.totalorder %s64, %s66
    %p70 = scmp.eq.s32.totalorder %s9, 0
    %p71 = por %p69, %p70
    %p72 = scmp.ne.s32.totalorder %s64, %s66
    %p73 = scmp.eq.s32.totalorder %s14, 1
    %p74 = por %p72, %p73
    %p75 = scmp.ne.s32.totalorder %s66, %s67
    %p76 = scmp.eq.s32.totalorder %s14, 0
    %p77 = por %p75, %p76
    %p78 = scmp.ne.s32.totalorder %s66, %s67
    %p79 = scmp.eq.s32.totalorder %s15, 1
    %p80 = por %p78, %p79
    %p82 = scmp.ne.s32.totalorder %s67, %s81
    %p83 = scmp.eq.s32.totalorder %s15, 0
    %p84 = por %p82, %p83
    %p85 = scmp.le.s32.totalorder 1, %s9
    %p86 = scmp.lt.s32.totalorder %s9, 3
    %p87 = pnand %p85, %p86
    %p88 = pneg %p87
    // Predicated region
    $region9: #{_lambda_.8} parent=5 // pred_check
      _
    $region10: #{_lambda_.8} parent=5 // pred_check_branch
      %90 = sbr.rel (%p87) target = $region12
    $region11: #{_lambda_.8} parent=5 // pred_region
      %s91 = ssub.s32 %s9, 1
      // Predicated region
      $region13: #{_lambda_.8} parent=11 // pred_check
        %p92 = pneg %p30
      $region14: #{_lambda_.8} parent=11 // pred_check_branch
        %94 = sbr.rel (%p92) target = $region16
      $region15: #{_lambda_.8} parent=11 // pred_region
        _
      $region16: #{_lambda_.8} parent=11 // pred_fallthru
        _
    $region12: #{_lambda_.8} parent=5 // pred_fallthru
      _
    %p95 = scmp.lt.s32.totalorder %s9, 2
    // Predicated region
    $region17: #{_lambda_.8} parent=5 // pred_check
      %p96 = pneg %p95
    $region18: #{_lambda_.8} parent=5 // pred_check_branch
      %98 = sbr.rel (%p96) target = $region20
    $region19: #{_lambda_.8} parent=5 // pred_region
      // Predicated region
      $region21: #{_lambda_.8} parent=19 // pred_check
        %p99 = pneg %p50
      $region22: #{_lambda_.8} parent=19 // pred_check_branch
        %101 = sbr.rel (%p99) target = $region24
      $region23: #{_lambda_.8} parent=19 // pred_region
        %p102 = scmp.lt.s32.totalorder %s9, 1
        %s103 = scalar_select %p102, %s9, 1
        %s104 = smul.addr %s103, 2
        %s105 = smul.addr %s104, 4
        %s106 = scalar_lea.vmem %s1, %s105
      $region24: #{_lambda_.8} parent=19 // pred_fallthru
        _
    $region20: #{_lambda_.8} parent=5 // pred_fallthru
      _
    %p107 = scmp.le.s32.totalorder 1, %s9
    %p108 = scmp.lt.s32.totalorder %s9, 3
    %p109 = pnand %p107, %p108
    %p110 = pneg %p109
    // Predicated region
    $region25: #{_lambda_.8} parent=5 // pred_check
      _
    $region26: #{_lambda_.8} parent=5 // pred_check_branch
      %112 = sbr.rel (%p109) target = $region28
    $region27: #{_lambda_.8} parent=5 // pred_region
      %s113 = ssub.s32 %s9, 1
      %p114 = pneg %p30
      %p115 = pneg %p27
      %p116 = scmp.lt.s32.totalorder %s14, 1
      %s117 = scalar_select %p116, %s14, 1
      %s118 = smul.addr %s117, 2
      %s119 = smul.addr %s118, 4
      %s120 = scalar_lea.vmem %s1, %s119
      %p121 = pneg %p56
      %p122 = pneg %p53
      %p123 = pneg %p77
      %p124 = pneg %p74
      %p125 = scmp.lt.s32.totalorder %s14, 1
      %s126 = scalar_select %p125, %s14, 1
      %s127 = smul.addr %s126, 2
      %s128 = smul.addr %s127, 4
      %s129 = scalar_lea.vmem %s1, %s128
      %p130 = scmp.eq.s32.totalorder %s14, 0
      // Predicated region
      $region29: #{_lambda_.8} parent=27 // pred_check
        %p131 = pneg %p130
      $region30: #{_lambda_.8} parent=27 // pred_check_branch
        %133 = sbr.rel (%p131) target = $region32
      $region31: #{_lambda_.8} parent=27 // pred_region
        %s134 = scalar_lea.smem [#allocation2], 0
        %135 = sst [smem:[%s134]] 0.0
        %s136 = scalar_lea.smem [#allocation2], 1
        %137 = sst [smem:[%s136]] 0.0
      $region32: #{_lambda_.8} parent=27 // pred_fallthru
        _
      %s138 = sld [smem:[#allocation3]]
      %s139 = smul.f32 %s138, 0.00048828125
      %v140 = vld [vmem:[%s129] sm:$0xff]
      %v141 = vstv %s139
      %vm142 = vcmp.gt.f32.partialorder %v140, %v141
      %v143 = vsel %vm142, 1, 0
      %v144 = vcvt.s32.f32 %v143
      %s145 = sld [smem:[#allocation2]]
      %v146 = vmul.f32 %v144, %v140
      %148 = vst [vmem:[#allocation1] ss:$2 sm:$0xff] %v146
      %v149 = vld.sshfl [vmem:[#allocation1] sm:$0xff pattern:$0x75316420]
      %v150 = vld.sshfl [vmem:[#allocation1 + $0x8] sm:$0xff pattern:$0x75316420]
      %vm153 = vcmask 1043456
      %v154 = vsel %vm153, %v149, 0.0
      %v155 = vsel %vm153, %v150, 0.0
      %v156 = vadd.f32 %v154, %v155
      %157 = vadd.xlane.f32.xlu0 %v156
      %v158 = vpop.xlane.xlu0 %157
      %v159 = vrot.slane %v158, 4
      %v160 = vadd.f32 %v158, %v159
      %v161 = vrot.slane %v160, 2
      %v162 = vadd.f32 %v160, %v161
      %v163 = vrot.slane %v162, 1
      %v164 = vadd.f32 %v162, %v163
      %s165 = vtos %v164
      %s166 = sadd.f32 %s145, %s165
      %s167 = scalar_lea.smem [#allocation2], 0
      %168 = sst [smem:[%s167]] %s166
      %s169 = sld [smem:[#allocation2 + $0x1]]
      %171 = vst [vmem:[#allocation1] ss:$2 sm:$0xff] %v144
      %v172 = vld.sshfl [vmem:[#allocation1] sm:$0xff pattern:$0x75316420]
      %v173 = vld.sshfl [vmem:[#allocation1 + $0x8] sm:$0xff pattern:$0x75316420]
      %v176 = vsel %vm153, %v172, 0.0
      %v177 = vsel %vm153, %v173, 0.0
      %v178 = vadd.f32 %v176, %v177
      %179 = vadd.xlane.f32.xlu0 %v178
      %v180 = vpop.xlane.xlu0 %179
      %v181 = vrot.slane %v180, 4
      %v182 = vadd.f32 %v180, %v181
      %v183 = vrot.slane %v182, 2
      %v184 = vadd.f32 %v182, %v183
      %v185 = vrot.slane %v184, 1
      %v186 = vadd.f32 %v184, %v185
      %s187 = vtos %v186
      %s188 = sadd.f32 %s169, %s187
      %s189 = scalar_lea.smem [#allocation2], 1
      %190 = sst [smem:[%s189]] %s188
      %p191 = scmp.eq.s32.totalorder %s14, 1
      // Predicated region
      $region33: #{_lambda_.8} parent=27 // pred_check
        %p192 = pneg %p191
      $region34: #{_lambda_.8} parent=27 // pred_check_branch
        %194 = sbr.rel (%p192) target = $region36
      $region35: #{_lambda_.8} parent=27 // pred_region
        %s195 = sld [smem:[#allocation3]]
        %v196 = vstv %s195
        %s197 = sld [smem:[#allocation2]]
        %v198 = vstv %s197
        %s199 = sld [smem:[#allocation2 + $0x1]]
        %v200 = vstv %s199
        %vm201 = vcmask 1040384
        %v202 = vsel %vm201, %v196, %v198
        %vm203 = vcmask 1041408
        %v204 = vsel %vm203, %v202, %v200
        %205 = vst [vmem:[%s2] sm:$0x7] %v204
      $region36: #{_lambda_.8} parent=27 // pred_fallthru
        _
      // Predicated region
      $region37: #{_lambda_.8} parent=27 // pred_check
        %p206 = pneg %p74
      $region38: #{_lambda_.8} parent=27 // pred_check_branch
        %208 = sbr.rel (%p206) target = $region40
      $region39: #{_lambda_.8} parent=27 // pred_region
        _
      $region40: #{_lambda_.8} parent=27 // pred_fallthru
        _
      // Predicated region
      $region41: #{_lambda_.8} parent=27 // pred_check
        %p209 = pneg %p74
      $region42: #{_lambda_.8} parent=27 // pred_check_branch
        %211 = sbr.rel (%p209) target = $region44
      $region43: #{_lambda_.8} parent=27 // pred_region
        _
      $region44: #{_lambda_.8} parent=27 // pred_fallthru
        _
    $region28: #{_lambda_.8} parent=5 // pred_fallthru
      _
    %p212 = scmp.le.s32.totalorder 2, %s9
    // Predicated region
    $region45: #{_lambda_.8} parent=5 // pred_check
      %p213 = pneg %p212
    $region46: #{_lambda_.8} parent=5 // pred_check_branch
      %215 = sbr.rel (%p213) target = $region48
    $region47: #{_lambda_.8} parent=5 // pred_region
      %s216 = ssub.s32 %s9, 2
    $region48: #{_lambda_.8} parent=5 // pred_fallthru
      _
  $region6: #{_lambda_.8} parent=0 // loop_footer
    %s13 = sadd.s32 1, %s9
  $region7: #{_lambda_.8} parent=0 // loop_footer_branch
    %8 = sbr.rel target = $region3
  $region8: #{_lambda_.8} parent=0 // loop_exit
    _

// kernel: _lambda_.7
$region0: #{_lambda_.7}
  #allocation0 [shape = 'u32[]', space=smem, size = 0x4, offset = 0x4, fixed_abs, tag = 'smem constant byte address 0x4 - core index']
  #allocation1 [shape = 'u32[72,128]{1,0:T(1,128)}', space=vmem, size = 0x9000, scoped, tag = 'internal scratch']
  #allocation2 [shape = 'bf16[288,256]{1,0:T(8,128)(2,1)}', space=vmem, size = 0x24000, scoped, tag = 'scratch operand']
  %s0 = inlined_call_operand.vmem [shape: f32[3], index: 0, kind: input, shape index: {}]
  %s1 = inlined_call_operand.vmem [shape: f32[2,4,256], index: 1, kind: input, shape index: {}]
  %s2 = inlined_call_operand.hbm [shape: bf16[64,288], index: 2, kind: input, shape index: {}]
  %s3 = inlined_call_operand.vmem [shape: f32[64,1], index: 3, kind: input, shape index: {}]
  %s4 = inlined_call_operand.hbm [shape: f32[9,256], index: 4, kind: input, shape index: {}]
  %s5 = inlined_call_operand.vmem [shape: f32[2,4,256], index: 5, kind: output, shape index: {0}]
  %s6 = inlined_call_operand.vmem [shape: f32[2,1,128], index: 6, kind: output, shape index: {1}]
  %7 = xla_tuple %s5, %s6
  %s8 = sld [smem:[#allocation0]]
  $region73: #{_lambda_.7} parent=0
    _
  %s10 = ssub.s32 1, %s8
  %s11 = scalar_select 0, %s10, %s8
  $region1: #{_lambda_.7} parent=0
    #allocation3 [shape = 'u8[512]{0}', space=smem, size = 0x200, scoped, tag = 'input window, operand 0, single buffered']
    #allocation4 [shape = 's32[2]{0}', space=sflag, size = 0x8, scoped, tag = 'scoped memory for _lambda_.7']
    #allocation5 [shape = 's32[2]{0}', space=sflag, size = 0x8, scoped, tag = 'scoped memory for _lambda_.7']
    #allocation6 [shape = 'u8[49152]{0}', space=vmem, size = 0xc000, scoped, tag = 'input window, operand 2, single buffered']
    #allocation7 [shape = 'u8[16384]{0}', space=vmem, size = 0x4000, scoped, tag = 'input window, operand 4, single buffered']
    #allocation8 [shape = 's32[1]{0}', space=sflag, size = 0x4, scoped, tag = 'scoped memory for _lambda_.7']
    %12 = vsyncpa [#allocation5], 0
    %13 = vsyncpa [#allocation4], 0
    %14 = vsyncpa [#allocation8], 0
    loop: start=0, step=1, limit=4
    $region2: #{_lambda_.7} parent=1 // loop_pre_header
      _
    $region3: #{_lambda_.7} parent=1 // loop_header
      %s16 = sphi 0, %s20
      %p17 = scmp.ge.s32.totalorder %s16, 4
      %s24 = sphi 0, %s24
      %s26 = sphi 0, %s24
      %s27 = sphi 0, %s26
      %s41 = sphi 0, %s27
      %s47 = sphi 0, %s49
      %s50 = sphi 0, %s47
      %s51 = sphi 0, %s50
      %s67 = sphi 0, %s51
      %s71 = sphi 0, %s71
      %s73 = sphi 0, %s71
      %s74 = sphi 0, %s73
      %s88 = sphi 0, %s74
      %s92 = sphi 0, %s92
      %s94 = sphi 0, %s92
      %s95 = sphi 0, %s94
      %s109 = sphi 0, %s95
      %s113 = sphi 0, %s113
      %s115 = sphi 0, %s113
      %s116 = sphi 0, %s115
      %s130 = sphi 0, %s116
      %s136 = sphi 0, %s138
      %s139 = sphi 0, %s136
      %s140 = sphi 0, %s139
      %s156 = sphi 0, %s140
      %s162 = sphi 0, %s164
      %s165 = sphi 0, %s162
      %s166 = sphi 0, %s165
      %s182 = sphi 0, %s166
    $region4: #{_lambda_.7} parent=1 // loop_header_branch
      %19 = sbr.rel (%p17) target = $region8
    $region5: #{_lambda_.7} parent=1 // loop_body
      %s21 = ssub.s32 %s16, 1
      %s22 = ssub.s32 %s16, 2
      %s23 = sadd.s32 %s16, 1
      %s25 = sadd.s32 %s24, 1
      %p28 = scmp.eq.s32.totalorder %s16, 1
      %p29 = scmp.ne.s32.totalorder %s24, %s26
      %p30 = scmp.eq.s32.totalorder %s16, 0
      %p31 = por %p29, %p30
      %p32 = scmp.ne.s32.totalorder %s24, %s26
      %p33 = scmp.eq.s32.totalorder %s21, 1
      %p34 = por %p32, %p33
      %p35 = scmp.ne.s32.totalorder %s26, %s27
      %p36 = scmp.eq.s32.totalorder %s21, 0
      %p37 = por %p35, %p36
      %p38 = scmp.ne.s32.totalorder %s26, %s27
      %p39 = scmp.eq.s32.totalorder %s22, 1
      %p40 = por %p38, %p39
      %p42 = scmp.ne.s32.totalorder %s27, %s41
      %p43 = scmp.eq.s32.totalorder %s22, 0
      %p44 = por %p42, %p43
      %s45 = ssub.s32 %s16, %s23
      %p46 = scmp.eq.s32.totalorder %s45, 0
      %s48 = sadd.s32 %s47, 1
      %s49 = scalar_select %p46, %s47, %s48
      %p52 = pneg %p46
      %p53 = scmp.eq.s32.totalorder %s16, 1
      %p54 = por %p52, %p53
      %p55 = scmp.ne.s32.totalorder %s47, %s50
      %p56 = scmp.eq.s32.totalorder %s16, 0
      %p57 = por %p55, %p56
      %p58 = scmp.ne.s32.totalorder %s47, %s50
      %p59 = scmp.eq.s32.totalorder %s21, 1
      %p60 = por %p58, %p59
      %p61 = scmp.ne.s32.totalorder %s50, %s51
      %p62 = scmp.eq.s32.totalorder %s21, 0
      %p63 = por %p61, %p62
      %p64 = scmp.ne.s32.totalorder %s50, %s51
      %p65 = scmp.eq.s32.totalorder %s22, 1
      %p66 = por %p64, %p65
      %p68 = scmp.ne.s32.totalorder %s51, %s67
      %p69 = scmp.eq.s32.totalorder %s22, 0
      %p70 = por %p68, %p69
      %s72 = sadd.s32 %s71, 1
      %p75 = scmp.eq.s32.totalorder %s16, 1
      %p76 = scmp.ne.s32.totalorder %s71, %s73
      %p77 = scmp.eq.s32.totalorder %s16, 0
      %p78 = por %p76, %p77
      %p79 = scmp.ne.s32.totalorder %s71, %s73
      %p80 = scmp.eq.s32.totalorder %s21, 1
      %p81 = por %p79, %p80
      %p82 = scmp.ne.s32.totalorder %s73, %s74
      %p83 = scmp.eq.s32.totalorder %s21, 0
      %p84 = por %p82, %p83
      %p85 = scmp.ne.s32.totalorder %s73, %s74
      %p86 = scmp.eq.s32.totalorder %s22, 1
      %p87 = por %p85, %p86
      %p89 = scmp.ne.s32.totalorder %s74, %s88
      %p90 = scmp.eq.s32.totalorder %s22, 0
      %p91 = por %p89, %p90
      %s93 = sadd.s32 %s92, 1
      %p96 = scmp.eq.s32.totalorder %s16, 1
      %p97 = scmp.ne.s32.totalorder %s92, %s94
      %p98 = scmp.eq.s32.totalorder %s16, 0
      %p99 = por %p97, %p98
      %p100 = scmp.ne.s32.totalorder %s92, %s94
      %p101 = scmp.eq.s32.totalorder %s21, 1
      %p102 = por %p100, %p101
      %p103 = scmp.ne.s32.totalorder %s94, %s95
      %p104 = scmp.eq.s32.totalorder %s21, 0
      %p105 = por %p103, %p104
      %p106 = scmp.ne.s32.totalorder %s94, %s95
      %p107 = scmp.eq.s32.totalorder %s22, 1
      %p108 = por %p106, %p107
      %p110 = scmp.ne.s32.totalorder %s95, %s109
      %p111 = scmp.eq.s32.totalorder %s22, 0
      %p112 = por %p110, %p111
      %s114 = sadd.s32 %s113, 1
      %p117 = scmp.eq.s32.totalorder %s16, 1
      %p118 = scmp.ne.s32.totalorder %s113, %s115
      %p119 = scmp.eq.s32.totalorder %s16, 0
      %p120 = por %p118, %p119
      %p121 = scmp.ne.s32.totalorder %s113, %s115
      %p122 = scmp.eq.s32.totalorder %s21, 1
      %p123 = por %p121, %p122
      %p124 = scmp.ne.s32.totalorder %s115, %s116
      %p125 = scmp.eq.s32.totalorder %s21, 0
      %p126 = por %p124, %p125
      %p127 = scmp.ne.s32.totalorder %s115, %s116
      %p128 = scmp.eq.s32.totalorder %s22, 1
      %p129 = por %p127, %p128
      %p131 = scmp.ne.s32.totalorder %s116, %s130
      %p132 = scmp.eq.s32.totalorder %s22, 0
      %p133 = por %p131, %p132
      %s134 = ssub.s32 %s16, %s23
      %p135 = scmp.eq.s32.totalorder %s134, 0
      %s137 = sadd.s32 %s136, 1
      %s138 = scalar_select %p135, %s136, %s137
      %p141 = pneg %p135
      %p142 = scmp.eq.s32.totalorder %s16, 1
      %p143 = por %p141, %p142
      %p144 = scmp.ne.s32.totalorder %s136, %s139
      %p145 = scmp.eq.s32.totalorder %s16, 0
      %p146 = por %p144, %p145
      %p147 = scmp.ne.s32.totalorder %s136, %s139
      %p148 = scmp.eq.s32.totalorder %s21, 1
      %p149 = por %p147, %p148
      %p150 = scmp.ne.s32.totalorder %s139, %s140
      %p151 = scmp.eq.s32.totalorder %s21, 0
      %p152 = por %p150, %p151
      %p153 = scmp.ne.s32.totalorder %s139, %s140
      %p154 = scmp.eq.s32.totalorder %s22, 1
      %p155 = por %p153, %p154
      %p157 = scmp.ne.s32.totalorder %s140, %s156
      %p158 = scmp.eq.s32.totalorder %s22, 0
      %p159 = por %p157, %p158
      %s160 = ssub.s32 %s16, %s23
      %p161 = scmp.eq.s32.totalorder %s160, 0
      %s163 = sadd.s32 %s162, 1
      %s164 = scalar_select %p161, %s162, %s163
      %p167 = pneg %p161
      %p168 = scmp.eq.s32.totalorder %s16, 1
      %p169 = por %p167, %p168
      %p170 = scmp.ne.s32.totalorder %s162, %s165
      %p171 = scmp.eq.s32.totalorder %s16, 0
      %p172 = por %p170, %p171
      %p173 = scmp.ne.s32.totalorder %s162, %s165
      %p174 = scmp.eq.s32.totalorder %s21, 1
      %p175 = por %p173, %p174
      %p176 = scmp.ne.s32.totalorder %s165, %s166
      %p177 = scmp.eq.s32.totalorder %s21, 0
      %p178 = por %p176, %p177
      %p179 = scmp.ne.s32.totalorder %s165, %s166
      %p180 = scmp.eq.s32.totalorder %s22, 1
      %p181 = por %p179, %p180
      %p183 = scmp.ne.s32.totalorder %s166, %s182
      %p184 = scmp.eq.s32.totalorder %s22, 0
      %p185 = por %p183, %p184
      %p186 = scmp.le.s32.totalorder 1, %s16
      %p187 = scmp.lt.s32.totalorder %s16, 3
      %p188 = pnand %p186, %p187
      %p189 = pneg %p188
      // Predicated region
      $region9: #{_lambda_.7} parent=5 // pred_check
        _
      $region10: #{_lambda_.7} parent=5 // pred_check_branch
        %191 = sbr.rel (%p188) target = $region12
      $region11: #{_lambda_.7} parent=5 // pred_region
        %s192 = ssub.s32 %s16, 1
        // Predicated region
        $region13: #{_lambda_.7} parent=11 // pred_check
          %p193 = pneg %p37
        $region14: #{_lambda_.7} parent=11 // pred_check_branch
          %195 = sbr.rel (%p193) target = $region16
        $region15: #{_lambda_.7} parent=11 // pred_region
          %197 = vsyncadd [#allocation5], 0
          %s199 = sshll.u32 %s0, 4
          %s200 = int_to_ptr.vmem [resolvable:$true] %s199
          %202 = dma.vmem_to_smem %s200, 16, [#allocation3], [#allocation5]
        $region16: #{_lambda_.7} parent=11 // pred_fallthru
          _
        // Predicated region
        $region17: #{_lambda_.7} parent=11 // pred_check
          %p203 = pneg %p84
        $region18: #{_lambda_.7} parent=11 // pred_check_branch
          %205 = sbr.rel (%p203) target = $region20
        $region19: #{_lambda_.7} parent=11 // pred_region
          %207 = vsyncadd [#allocation4], 0
          %s208 = sshll.u32 %s2, 4
          %s209 = int_to_ptr.hbm [resolvable:$true] %s208
          %s210 = sshll.u32 [#allocation6], 4
          %s211 = int_to_ptr.vmem [resolvable:$true] %s210
          %216 = dma.hbm_to_vmem [thread:$0]  %s209, 1536, %s211, [#allocation4], 192, 192, 12
        $region20: #{_lambda_.7} parent=11 // pred_fallthru
          _
        // Predicated region
        $region21: #{_lambda_.7} parent=11 // pred_check
          %p217 = pneg %p105
        $region22: #{_lambda_.7} parent=11 // pred_check_branch
          %219 = sbr.rel (%p217) target = $region24
        $region23: #{_lambda_.7} parent=11 // pred_region
          _
        $region24: #{_lambda_.7} parent=11 // pred_fallthru
          _
        // Predicated region
        $region25: #{_lambda_.7} parent=11 // pred_check
          %p220 = pneg %p126
        $region26: #{_lambda_.7} parent=11 // pred_check_branch
          %222 = sbr.rel (%p220) target = $region28
        $region27: #{_lambda_.7} parent=11 // pred_region
          %224 = vsyncadd [#allocation8], 0
          %s225 = sshll.u32 %s4, 4
          %s226 = int_to_ptr.hbm [resolvable:$true] %s225
          %s227 = sshll.u32 [#allocation7], 4
          %s228 = int_to_ptr.vmem [resolvable:$true] %s227
          %233 = dma.hbm_to_vmem [thread:$0]  %s226, 512, %s228, [#allocation8], 256, 256, 16
        $region28: #{_lambda_.7} parent=11 // pred_fallthru
          _
      $region12: #{_lambda_.7} parent=5 // pred_fallthru
        _
      %p234 = scmp.lt.s32.totalorder %s16, 2
      // Predicated region
      $region29: #{_lambda_.7} parent=5 // pred_check
        %p235 = pneg %p234
      $region30: #{_lambda_.7} parent=5 // pred_check_branch
        %237 = sbr.rel (%p235) target = $region32
      $region31: #{_lambda_.7} parent=5 // pred_region
        // Predicated region
        $region33: #{_lambda_.7} parent=31 // pred_check
          %p238 = pneg %p57
        $region34: #{_lambda_.7} parent=31 // pred_check_branch
          %240 = sbr.rel (%p238) target = $region36
        $region35: #{_lambda_.7} parent=31 // pred_region
          %p241 = scmp.lt.s32.totalorder %s16, 1
          %s242 = scalar_select %p241, %s16, 1
          %s243 = smul.addr %s242, 2
          %s244 = smul.addr %s243, 4
          %s245 = scalar_lea.vmem %s1, %s244
        $region36: #{_lambda_.7} parent=31 // pred_fallthru
          _
      $region32: #{_lambda_.7} parent=5 // pred_fallthru
        _
      %p246 = scmp.le.s32.totalorder 1, %s16
      %p247 = scmp.lt.s32.totalorder %s16, 3
      %p248 = pnand %p246, %p247
      %p249 = pneg %p248
      // Predicated region
      $region37: #{_lambda_.7} parent=5 // pred_check
        _
      $region38: #{_lambda_.7} parent=5 // pred_check_branch
        %251 = sbr.rel (%p248) target = $region40
      $region39: #{_lambda_.7} parent=5 // pred_region
        %s252 = ssub.s32 %s16, 1
        // Predicated region
        $region41: #{_lambda_.7} parent=39 // pred_check
          %p253 = pneg %p37
        $region42: #{_lambda_.7} parent=39 // pred_check_branch
          %255 = sbr.rel (%p253) target = $region44
        $region43: #{_lambda_.7} parent=39 // pred_region
          %257 = dma.done [#allocation5], 16
        $region44: #{_lambda_.7} parent=39 // pred_fallthru
          _
        // Predicated region
        $region45: #{_lambda_.7} parent=39 // pred_check
          %p258 = pneg %p84
        $region46: #{_lambda_.7} parent=39 // pred_check_branch
          %260 = sbr.rel (%p258) target = $region48
        $region47: #{_lambda_.7} parent=39 // pred_region
          %262 = dma.done [#allocation4], 1536
        $region48: #{_lambda_.7} parent=39 // pred_fallthru
          _
        // Predicated region
        $region49: #{_lambda_.7} parent=39 // pred_check
          %p263 = pneg %p126
        $region50: #{_lambda_.7} parent=39 // pred_check_branch
          %265 = sbr.rel (%p263) target = $region52
        $region51: #{_lambda_.7} parent=39 // pred_region
          %267 = dma.done [#allocation8], 512
        $region52: #{_lambda_.7} parent=39 // pred_fallthru
          _
        %268 = sfence
        %p269 = pneg %p37
        %p270 = pneg %p34
        %p271 = scmp.lt.s32.totalorder %s21, 1
        %s272 = scalar_select %p271, %s21, 1
        %s273 = smul.addr %s272, 2
        %s274 = smul.addr %s273, 4
        %s275 = scalar_lea.vmem %s1, %s274
        %p276 = pneg %p63
        %p277 = pneg %p60
        %p278 = pneg %p84
        %p279 = pneg %p81
        %p280 = pneg %p105
        %p281 = pneg %p102
        %p282 = pneg %p126
        %p283 = pneg %p123
        %p284 = pneg %p152
        %p285 = pneg %p149
        %p286 = scmp.lt.s32.totalorder %s21, 1
        %s287 = scalar_select %p286, %s21, 1
        %s288 = smul.addr %s287, 2
        %s289 = smul.addr %s288, 4
        %s290 = scalar_lea.vmem %s5, %s289
        %p291 = pneg %p178
        %p292 = pneg %p175
        %p293 = scmp.lt.s32.totalorder %s21, 1
        %s294 = scalar_select %p293, %s21, 1
        %s295 = scalar_lea.vmem %s6, %s294
        %p296 = scmp.lt.s32.totalorder %s21, 1
        %s297 = scalar_select %p296, %s21, 1
        %s298 = smul.addr %s297, 2
        %s299 = smul.addr %s298, 4
        %s300 = scalar_lea.vmem %s1, %s299
        %p301 = scmp.lt.s32.totalorder %s21, 1
        %s302 = scalar_select %p301, %s21, 1
        %s303 = smul.addr %s302, 2
        %s304 = smul.addr %s303, 4
        %s305 = scalar_lea.vmem %s5, %s304
        %p306 = scmp.lt.s32.totalorder %s21, 1
        %s307 = scalar_select %p306, %s21, 1
        %s308 = scalar_lea.vmem %s6, %s307
        %s310 = sld [smem:[#allocation3]]
        %s311 = sld [smem:[#allocation3 + $0x1]]
        %s312 = sld [smem:[#allocation3 + $0x2]]
        %s313 = smul.f32 %s310, 0.00048828125
        %s314 = smax.f32 %s312, 1.0
        %v315 = vstv %s314
        %v316 = vrcp.pop %v315
        %v317 = vmul.f32 %v315, %v316
        %v318 = vsub.f32 1.0, %v317
        %v319 = vmul.f32 %v316, %v318
        %v320 = vadd.f32 %v316, %v319
        %vm321 = vweird.f32 %v315
        %vm322 = vweird.f32 %v316
        %vm323 = vmor %vm321, %vm322
        %v324 = vsel %vm323, %v316, %v320
        %v325 = vand.u32 2147483647, %v315
        %vm326 = vcmp.eq.f32.partialorder %v325, 8.507059e+37
        %v327 = vand.u32 %v315, 2147483648
        %v328 = vor.u32 1.1754944e-38, %v327
        %v329 = vsel %vm326, %v328, %v324
        %s330 = vtos %v329
        %s331 = smul.f32 %s311, %s330
        %s332 = ssub.f32 %s310, %s311
        %s333 = ssub.f32 2048.0, %s312
        %s334 = smax.f32 %s333, 1.0
        %v335 = vstv %s334
        %v336 = vrcp.pop %v335
        %v337 = vmul.f32 %v335, %v336
        %v338 = vsub.f32 1.0, %v337
        %v339 = vmul.f32 %v336, %v338
        %v340 = vadd.f32 %v336, %v339
        %vm341 = vweird.f32 %v335
        %vm342 = vweird.f32 %v336
        %vm343 = vmor %vm341, %vm342
        %v344 = vsel %vm343, %v336, %v340
        %v345 = vand.u32 2147483647, %v335
        %vm346 = vcmp.eq.f32.partialorder %v345, 8.507059e+37
        %v347 = vand.u32 %v335, 2147483648
        %v348 = vor.u32 1.1754944e-38, %v347
        %v349 = vsel %vm346, %v348, %v344
        %s350 = vtos %v349
        %s351 = smul.f32 %s332, %s350
        %v352 = vld [vmem:[%s300] sm:$0xff]
        %v353 = vstv %s331
        %v354 = vsub.f32 %v352, %v353
        %v355 = vmul.f32 %v354, 0.70710677
        %vm356 = vcmp.ge.f32.partialorder %v355, 0.0
        %v357 = vsel %vm356, 1.0, -1.0
        %v358 = vand.u32 2147483647, %v355
        %v359 = vmul.f32 %v358, 0.3275911
        %v360 = vadd.f32 %v359, 1.0
        %v361 = vrcp.pop %v360
        %v362 = vmul.f32 %v361, 1.0614054
        %v363 = vadd.f32 %v362, -1.4531521
        %v364 = vmul.f32 %v363, %v361
        %v365 = vadd.f32 %v364, 1.4214138
        %v366 = vmul.f32 %v365, %v361
        %v367 = vadd.f32 %v366, -0.28449672
        %v368 = vmul.f32 %v367, %v361
        %v369 = vadd.f32 %v368, 0.2548296
        %v370 = vmul.f32 %v369, %v361
        %v371 = vsub.f32 0.0, %v358
        %v372 = vmul.f32 %v371, %v358
        %v373 = vmul.f32 %v372, 1.442695
        %v374 = vpow.pop %v373
        %v375 = vmul.f32 %v370, %v374
        %v376 = vsub.f32 1.0, %v375
        %v377 = vmul.f32 %v357, %v376
        %v378 = vmul.f32 %v354, 0.5
        %v379 = vadd.f32 %v377, 1.0
        %v380 = vmul.f32 %v378, %v379
        %v381 = vmul.f32 %v354, -0.5
        %v382 = vsub.f32 1.0, %v377
        %v383 = vmul.f32 %v381, %v382
        %s384 = ssub.f32 %s331, %s313
        %v385 = vstv %s384
        %v386 = vsub.f32 %v385, %v383
        %v387 = vmul.f32 %v386, 0.5
        %v388 = vmul.f32 %v386, 0.70710677
        %vm389 = vcmp.ge.f32.partialorder %v388, 0.0
        %v390 = vsel %vm389, 1.0, -1.0
        %v391 = vand.u32 2147483647, %v388
        %v392 = vmul.f32 %v391, 0.3275911
        %v393 = vadd.f32 %v392, 1.0
        %v394 = vrcp.pop %v393
        %v395 = vmul.f32 %v394, 1.0614054
        %v396 = vadd.f32 %v395, -1.4531521
        %v397 = vmul.f32 %v396, %v394
        %v398 = vadd.f32 %v397, 1.4214138
        %v399 = vmul.f32 %v398, %v394
        %v400 = vadd.f32 %v399, -0.28449672
        %v401 = vmul.f32 %v400, %v394
        %v402 = vadd.f32 %v401, 0.2548296
        %v403 = vmul.f32 %v402, %v394
        %v404 = vsub.f32 0.0, %v391
        %v405 = vmul.f32 %v404, %v391
        %v406 = vmul.f32 %v405, 1.442695
        %v407 = vpow.pop %v406
        %v408 = vmul.f32 %v403, %v407
        %v409 = vsub.f32 1.0, %v408
        %v410 = vmul.f32 %v390, %v409
        %v411 = vadd.f32 %v410, 1.0
        %v412 = vmul.f32 %v387, %v411
        %s413 = ssub.f32 %s313, %s351
        %v414 = vstv %s313
        %v415 = vsub.f32 %v414, %v352
        %v416 = vmul.f32 %v415, 0.5
        %v417 = vmul.f32 %v415, 0.70710677
        %vm418 = vcmp.ge.f32.partialorder %v417, 0.0
        %v419 = vsel %vm418, 1.0, -1.0
        %v420 = vand.u32 2147483647, %v417
        %v421 = vmul.f32 %v420, 0.3275911
        %v422 = vadd.f32 %v421, 1.0
        %v423 = vrcp.pop %v422
        %v424 = vmul.f32 %v423, 1.0614054
        %v425 = vadd.f32 %v424, -1.4531521
        %v426 = vmul.f32 %v425, %v423
        %v427 = vadd.f32 %v426, 1.4214138
        %v428 = vmul.f32 %v427, %v423
        %v429 = vadd.f32 %v428, -0.28449672
        %v430 = vmul.f32 %v429, %v423
        %v431 = vadd.f32 %v430, 0.2548296
        %v432 = vmul.f32 %v431, %v423
        %v433 = vsub.f32 0.0, %v420
        %v434 = vmul.f32 %v433, %v420
        %v435 = vmul.f32 %v434, 1.442695
        %v436 = vpow.pop %v435
        %v437 = vmul.f32 %v432, %v436
        %v438 = vsub.f32 1.0, %v437
        %v439 = vmul.f32 %v419, %v438
        %v440 = vadd.f32 %v439, 1.0
        %v441 = vmul.f32 %v416, %v440
        %v442 = vstv %s413
        %v443 = vsub.f32 %v442, %v441
        %v444 = vmul.f32 %v443, 0.5
        %v445 = vmul.f32 %v443, 0.70710677
        %vm446 = vcmp.ge.f32.partialorder %v445, 0.0
        %v447 = vsel %vm446, 1.0, -1.0
        %v448 = vand.u32 2147483647, %v445
        %v449 = vmul.f32 %v448, 0.3275911
        %v450 = vadd.f32 %v449, 1.0
        %v451 = vrcp.pop %v450
        %v452 = vmul.f32 %v451, 1.0614054
        %v453 = vadd.f32 %v452, -1.4531521
        %v454 = vmul.f32 %v453, %v451
        %v455 = vadd.f32 %v454, 1.4214138
        %v456 = vmul.f32 %v455, %v451
        %v457 = vadd.f32 %v456, -0.28449672
        %v458 = vmul.f32 %v457, %v451
        %v459 = vadd.f32 %v458, 0.2548296
        %v460 = vmul.f32 %v459, %v451
        %v461 = vsub.f32 0.0, %v448
        %v462 = vmul.f32 %v461, %v448
        %v463 = vmul.f32 %v462, 1.442695
        %v464 = vpow.pop %v463
        %v465 = vmul.f32 %v460, %v464
        %v466 = vsub.f32 1.0, %v465
        %v467 = vmul.f32 %v447, %v466
        %v468 = vadd.f32 %v467, 1.0
        %v469 = vmul.f32 %v444, %v468
        %v470 = vstv %s351
        %v471 = vsub.f32 %v470, %v352
        %v472 = vmul.f32 %v471, 0.5
        %v473 = vmul.f32 %v471, 0.70710677
        %vm474 = vcmp.ge.f32.partialorder %v473, 0.0
        %v475 = vsel %vm474, 1.0, -1.0
        %v476 = vand.u32 2147483647, %v473
        %v477 = vmul.f32 %v476, 0.3275911
        %v478 = vadd.f32 %v477, 1.0
        %v479 = vrcp.pop %v478
        %v480 = vmul.f32 %v479, 1.0614054
        %v481 = vadd.f32 %v480, -1.4531521
        %v482 = vmul.f32 %v481, %v479
        %v483 = vadd.f32 %v482, 1.4214138
        %v484 = vmul.f32 %v483, %v479
        %v485 = vadd.f32 %v484, -0.28449672
        %v486 = vmul.f32 %v485, %v479
        %v487 = vadd.f32 %v486, 0.2548296
        %v488 = vmul.f32 %v487, %v479
        %v489 = vsub.f32 0.0, %v476
        %v490 = vmul.f32 %v489, %v476
        %v491 = vmul.f32 %v490, 1.442695
        %v492 = vpow.pop %v491
        %v493 = vmul.f32 %v488, %v492
        %v494 = vsub.f32 1.0, %v493
        %v495 = vmul.f32 %v475, %v494
        %v496 = vadd.f32 %v495, 1.0
        %v497 = vmul.f32 %v472, %v496
        %v498 = vsub.f32 0.0, %v497
        %v499 = vmul.f32 %v380, 0.17729911
        %v500 = vmul.f32 %v412, 0.17729911
        %v501 = vmul.f32 %v469, 0.17729911
        %v502 = vmul.f32 %v498, 0.17729911
        %v503 = vadd.f32 %v499, %v500
        %v504 = vadd.f32 %v503, %v501
        %v505 = vadd.f32 %v504, %v502
        %v506 = vsub.f32 %v505, %v499
        %v507 = vmul.f32 %v506, 0.33333334
        %v508 = vsub.f32 %v505, %v500
        %v509 = vmul.f32 %v508, 0.33333334
        %v510 = vsub.f32 %v505, %v501
        %v511 = vmul.f32 %v510, 0.33333334
        %v512 = vsub.f32 %v505, %v502
        %v513 = vmul.f32 %v512, 0.33333334
        %515 = vst [vmem:[#allocation1] ss:$2 sm:$0xff] %v499
        %v516 = vld.sshfl [vmem:[#allocation1] sm:$0xff pattern:$0x75316420]
        %v517 = vld.sshfl [vmem:[#allocation1 + $0x8] sm:$0xff pattern:$0x75316420]
        %s521 = scalar_lea.vmem [#allocation1], 1
        %522 = vst [vmem:[%s521] ss:$2 sm:$0xff] %v500
        %v523 = vld.sshfl [vmem:[#allocation1] sm:$0xff pattern:$0x75316420]
        %v524 = vld.sshfl [vmem:[#allocation1 + $0x8] sm:$0xff pattern:$0x75316420]
        %528 = vst [vmem:[#allocation1] ss:$2 sm:$0xff] %v501
        %v529 = vld.sshfl [vmem:[#allocation1] sm:$0xff pattern:$0x75316420]
        %v530 = vld.sshfl [vmem:[#allocation1 + $0x8] sm:$0xff pattern:$0x75316420]
        %s534 = scalar_lea.vmem [#allocation1], 1
        %535 = vst [vmem:[%s534] ss:$2 sm:$0xff] %v502
        %v536 = vld.sshfl [vmem:[#allocation1] sm:$0xff pattern:$0x75316420]
        %v537 = vld.sshfl [vmem:[#allocation1 + $0x8] sm:$0xff pattern:$0x75316420]
        %541 = vst [vmem:[#allocation1] ss:$2 sm:$0xff] %v507
        %v542 = vld.sshfl [vmem:[#allocation1] sm:$0xff pattern:$0x75316420]
        %v543 = vld.sshfl [vmem:[#allocation1 + $0x8] sm:$0xff pattern:$0x75316420]
        %s547 = scalar_lea.vmem [#allocation1], 1
        %548 = vst [vmem:[%s547] ss:$2 sm:$0xff] %v509
        %v549 = vld.sshfl [vmem:[#allocation1] sm:$0xff pattern:$0x75316420]
        %v550 = vld.sshfl [vmem:[#allocation1 + $0x8] sm:$0xff pattern:$0x75316420]
        %554 = vst [vmem:[#allocation1] ss:$2 sm:$0xff] %v511
        %v555 = vld.sshfl [vmem:[#allocation1] sm:$0xff pattern:$0x75316420]
        %v556 = vld.sshfl [vmem:[#allocation1 + $0x8] sm:$0xff pattern:$0x75316420]
        %s560 = scalar_lea.vmem [#allocation1], 1
        %561 = vst [vmem:[%s560] ss:$2 sm:$0xff] %v513
        %v562 = vld.sshfl [vmem:[#allocation1] sm:$0xff pattern:$0x75316420]
        %v563 = vld.sshfl [vmem:[#allocation1 + $0x8] sm:$0xff pattern:$0x75316420]
        %vm566 = vcmask 1043456
        %v567 = vsel %vm566, %v516, %v523
        %v568 = vsel %vm566, %v517, %v524
        %v569 = vsel %vm566, %v529, %v536
        %v570 = vsel %vm566, %v530, %v537
        %v571 = vsel %vm566, %v542, %v549
        %v572 = vsel %vm566, %v543, %v550
        %v573 = vsel %vm566, %v555, %v562
        %v574 = vsel %vm566, %v556, %v563
        %583 = vrot.lane.b32.xlu0 %v567, 17
        %v584 = vpop.permute.xlu0 %583
        %585 = vrot.lane.b32.xlu0 %v568, 17
        %v586 = vpop.permute.xlu0 %585
        %587 = vrot.lane.b32.xlu0 %v569, 17
        %v588 = vpop.permute.xlu0 %587
        %589 = vrot.lane.b32.xlu0 %v570, 17
        %v590 = vpop.permute.xlu0 %589
        %591 = vrot.lane.b32.xlu0 %v571, 17
        %v592 = vpop.permute.xlu0 %591
        %593 = vrot.lane.b32.xlu0 %v572, 17
        %v594 = vpop.permute.xlu0 %593
        %595 = vrot.lane.b32.xlu0 %v573, 17
        %v596 = vpop.permute.xlu0 %595
        %597 = vrot.lane.b32.xlu0 %v574, 17
        %v598 = vpop.permute.xlu0 %597
        %vm599 = vcmask 138240
        %v600 = vsel %vm599, %v584, %v586
        %v601 = vsel %vm599, %v588, %v590
        %v602 = vsel %vm599, %v592, %v594
        %v603 = vsel %vm599, %v596, %v598
        %v616 = vsel %vm599, 0.0, %v584
        %v617 = vsel %vm599, 0.0, %v588
        %v618 = vsel %vm599, 0.0, %v592
        %v619 = vsel %vm599, 0.0, %v596
        %v620 = vsel %vm599, %v586, 0.0
        %v621 = vsel %vm599, %v590, 0.0
        %v622 = vsel %vm599, %v594, 0.0
        %v623 = vsel %vm599, %v598, 0.0
        %v624 = vld [vmem:[#allocation7] ss:$8 sm:$0x3]
        %v626 = vperm.slane %v624, 0
        %v627 = vperm.slane %v624, 1
        %v630 = vmul.f32 %v616, %v626
        %v631 = vmul.f32 %v600, %v627
        %v632 = vmul.f32 %v617, %v626
        %v633 = vmul.f32 %v601, %v627
        %v634 = vmul.f32 %v618, %v626
        %v635 = vmul.f32 %v602, %v627
        %v636 = vmul.f32 %v619, %v626
        %v637 = vmul.f32 %v603, %v627
        %v638 = vpack.c.bf16 %v631, %v630
        %v639 = vpack.c.bf16 %v633, %v632
        %v640 = vpack.c.bf16 %v635, %v634
        %v641 = vpack.c.bf16 %v637, %v636
        %642 = vst [vmem:[#allocation2] sm:$0xff] %v638
        %643 = vst [vmem:[#allocation2 + $0x8] sm:$0xff] %v639
        %644 = vst [vmem:[#allocation2 + $0x10] sm:$0xff] %v640
        %645 = vst [vmem:[#allocation2 + $0x18] sm:$0xff] %v641
        %s646 = scalar_lea.vmem [#allocation7], 1
        %v647 = vld [vmem:[%s646] ss:$8 sm:$0x3]
        %v649 = vperm.slane %v647, 0
        %v650 = vperm.slane %v647, 1
        %651 = vrot.lane.b32.xlu0 %v649, 1
        %v652 = vpop.permute.xlu0 %651
        %653 = vrot.lane.b32.xlu0 %v650, 1
        %v654 = vpop.permute.xlu0 %653
        %vm655 = vcmask 7168
        %v656 = vsel %vm655, %v652, %v654
        %v660 = vmul.f32 %v616, %v652
        %v661 = vmul.f32 %v600, %v656
        %v662 = vmul.f32 %v620, %v654
        %v663 = vmul.f32 %v617, %v652
        %v664 = vmul.f32 %v601, %v656
        %v665 = vmul.f32 %v621, %v654
        %v666 = vmul.f32 %v618, %v652
        %v667 = vmul.f32 %v602, %v656
        %v668 = vmul.f32 %v622, %v654
        %v669 = vmul.f32 %v619, %v652
        %v670 = vmul.f32 %v603, %v656
        %v671 = vmul.f32 %v623, %v654
        %v672 = vpack.c.bf16 %v661, %v660
        %v673 = vpack.c.bf16 %v662, %v662
        %v674 = vpack.c.bf16 %v664, %v663
        %v675 = vpack.c.bf16 %v665, %v665
        %v676 = vpack.c.bf16 %v667, %v666
        %v677 = vpack.c.bf16 %v668, %v668
        %v678 = vpack.c.bf16 %v670, %v669
        %v679 = vpack.c.bf16 %v671, %v671
        %688 = vrot.lane.b32.xlu0 %v672, 127
        %v689 = vpop.permute.xlu0 %688
        %690 = vrot.lane.b32.xlu0 %v673, 127
        %v691 = vpop.permute.xlu0 %690
        %692 = vrot.lane.b32.xlu0 %v674, 127
        %v693 = vpop.permute.xlu0 %692
        %694 = vrot.lane.b32.xlu0 %v675, 127
        %v695 = vpop.permute.xlu0 %694
        %696 = vrot.lane.b32.xlu0 %v676, 127
        %v697 = vpop.permute.xlu0 %696
        %698 = vrot.lane.b32.xlu0 %v677, 127
        %v699 = vpop.permute.xlu0 %698
        %700 = vrot.lane.b32.xlu0 %v678, 127
        %v701 = vpop.permute.xlu0 %700
        %702 = vrot.lane.b32.xlu0 %v679, 127
        %v703 = vpop.permute.xlu0 %702
        %v704 = vrot.slane %v689, 4
        %v705 = vrot.slane %v691, 4
        %v706 = vrot.slane %v693, 4
        %v707 = vrot.slane %v695, 4
        %v708 = vrot.slane %v697, 4
        %v709 = vrot.slane %v699, 4
        %v710 = vrot.slane %v701, 4
        %v711 = vrot.slane %v703, 4
        %vm712 = vcmask 1043456
        %v713 = vsel %vm712, %v704, %v705
        %vm714 = vcmask 1039360
        %v715 = vsel %vm714, %v689, %v713
        %v716 = vsel %vm712, %v706, %v707
        %v717 = vsel %vm714, %v693, %v716
        %v718 = vsel %vm712, %v708, %v709
        %v719 = vsel %vm714, %v697, %v718
        %v720 = vsel %vm712, %v710, %v711
        %v721 = vsel %vm714, %v701, %v720
        %726 = vst [vmem:[#allocation2 + $0x20] sm:$0xff] %v715
        %727 = vst [vmem:[#allocation2 + $0x28] sm:$0xff] %v717
        %728 = vst [vmem:[#allocation2 + $0x30] sm:$0xff] %v719
        %729 = vst [vmem:[#allocation2 + $0x38] sm:$0xff] %v721
        %s730 = scalar_lea.vmem [#allocation7], 2
        %v731 = vld [vmem:[%s730] ss:$8 sm:$0x3]
        %v733 = vperm.slane %v731, 0
        %v734 = vperm.slane %v731, 1
        %735 = vrot.lane.b32.xlu0 %v733, 2
        %v736 = vpop.permute.xlu0 %735
        %737 = vrot.lane.b32.xlu0 %v734, 2
        %v738 = vpop.permute.xlu0 %737
        %vm739 = vcmask 15360
        %v740 = vsel %vm739, %v736, %v738
        %v744 = vmul.f32 %v616, %v736
        %v745 = vmul.f32 %v600, %v740
        %v746 = vmul.f32 %v620, %v738
        %v747 = vmul.f32 %v617, %v736
        %v748 = vmul.f32 %v601, %v740
        %v749 = vmul.f32 %v621, %v738
        %v750 = vmul.f32 %v618, %v736
        %v751 = vmul.f32 %v602, %v740
        %v752 = vmul.f32 %v622, %v738
        %v753 = vmul.f32 %v619, %v736
        %v754 = vmul.f32 %v603, %v740
        %v755 = vmul.f32 %v623, %v738
        %v756 = vpack.c.bf16 %v745, %v744
        %v757 = vpack.c.bf16 %v746, %v746
        %v758 = vpack.c.bf16 %v748, %v747
        %v759 = vpack.c.bf16 %v749, %v749
        %v760 = vpack.c.bf16 %v751, %v750
        %v761 = vpack.c.bf16 %v752, %v752
        %v762 = vpack.c.bf16 %v754, %v753
        %v763 = vpack.c.bf16 %v755, %v755
        %772 = vrot.lane.b32.xlu0 %v756, 126
        %v773 = vpop.permute.xlu0 %772
        %774 = vrot.lane.b32.xlu0 %v757, 126
        %v775 = vpop.permute.xlu0 %774
        %776 = vrot.lane.b32.xlu0 %v758, 126
        %v777 = vpop.permute.xlu0 %776
        %778 = vrot.lane.b32.xlu0 %v759, 126
        %v779 = vpop.permute.xlu0 %778
        %780 = vrot.lane.b32.xlu0 %v760, 126
        %v781 = vpop.permute.xlu0 %780
        %782 = vrot.lane.b32.xlu0 %v761, 126
        %v783 = vpop.permute.xlu0 %782
        %784 = vrot.lane.b32.xlu0 %v762, 126
        %v785 = vpop.permute.xlu0 %784
        %786 = vrot.lane.b32.xlu0 %v763, 126
        %v787 = vpop.permute.xlu0 %786
        %v788 = vrot.slane %v773, 4
        %v789 = vrot.slane %v775, 4
        %v790 = vrot.slane %v777, 4
        %v791 = vrot.slane %v779, 4
        %v792 = vrot.slane %v781, 4
        %v793 = vrot.slane %v783, 4
        %v794 = vrot.slane %v785, 4
        %v795 = vrot.slane %v787, 4
        %v796 = vsel %vm712, %v788, %v789
        %vm797 = vcmask 1031168
        %v798 = vsel %vm797, %v773, %v796
        %v799 = vsel %vm712, %v790, %v791
        %v800 = vsel %vm797, %v777, %v799
        %v801 = vsel %vm712, %v792, %v793
        %v802 = vsel %vm797, %v781, %v801
        %v803 = vsel %vm712, %v794, %v795
        %v804 = vsel %vm797, %v785, %v803
        %809 = vst [vmem:[#allocation2 + $0x40] sm:$0xff] %v798
        %810 = vst [vmem:[#allocation2 + $0x48] sm:$0xff] %v800
        %811 = vst [vmem:[#allocation2 + $0x50] sm:$0xff] %v802
        %812 = vst [vmem:[#allocation2 + $0x58] sm:$0xff] %v804
        %s813 = scalar_lea.vmem [#allocation7], 3
        %v814 = vld [vmem:[%s813] ss:$8 sm:$0x3]
        %v816 = vperm.slane %v814, 0
        %v817 = vperm.slane %v814, 1
        %818 = vrot.lane.b32.xlu0 %v816, 16
        %v819 = vpop.permute.xlu0 %818
        %820 = vrot.lane.b32.xlu0 %v817, 16
        %v821 = vpop.permute.xlu0 %820
        %vm822 = vcmask 130048
        %v823 = vsel %vm822, %v819, %v821
        %v827 = vmul.f32 %v616, %v819
        %v828 = vmul.f32 %v600, %v823
        %v829 = vmul.f32 %v620, %v821
        %v830 = vmul.f32 %v617, %v819
        %v831 = vmul.f32 %v601, %v823
        %v832 = vmul.f32 %v621, %v821
        %v833 = vmul.f32 %v618, %v819
        %v834 = vmul.f32 %v602, %v823
        %v835 = vmul.f32 %v622, %v821
        %v836 = vmul.f32 %v619, %v819
        %v837 = vmul.f32 %v603, %v823
        %v838 = vmul.f32 %v623, %v821
        %v839 = vpack.c.bf16 %v828, %v827
        %v840 = vpack.c.bf16 %v829, %v829
        %v841 = vpack.c.bf16 %v831, %v830
        %v842 = vpack.c.bf16 %v832, %v832
        %v843 = vpack.c.bf16 %v834, %v833
        %v844 = vpack.c.bf16 %v835, %v835
        %v845 = vpack.c.bf16 %v837, %v836
        %v846 = vpack.c.bf16 %v838, %v838
        %855 = vrot.lane.b32.xlu0 %v839, 112
        %v856 = vpop.permute.xlu0 %855
        %857 = vrot.lane.b32.xlu0 %v840, 112
        %v858 = vpop.permute.xlu0 %857
        %859 = vrot.lane.b32.xlu0 %v841, 112
        %v860 = vpop.permute.xlu0 %859
        %861 = vrot.lane.b32.xlu0 %v842, 112
        %v862 = vpop.permute.xlu0 %861
        %863 = vrot.lane.b32.xlu0 %v843, 112
        %v864 = vpop.permute.xlu0 %863
        %865 = vrot.lane.b32.xlu0 %v844, 112
        %v866 = vpop.permute.xlu0 %865
        %867 = vrot.lane.b32.xlu0 %v845, 112
        %v868 = vpop.permute.xlu0 %867
        %869 = vrot.lane.b32.xlu0 %v846, 112
        %v870 = vpop.permute.xlu0 %869
        %v871 = vrot.slane %v856, 4
        %v872 = vrot.slane %v858, 4
        %v873 = vrot.slane %v860, 4
        %v874 = vrot.slane %v862, 4
        %v875 = vrot.slane %v864, 4
        %v876 = vrot.slane %v866, 4
        %v877 = vrot.slane %v868, 4
        %v878 = vrot.slane %v870, 4
        %v879 = vsel %vm712, %v871, %v872
        %vm880 = vcmask 916480
        %v881 = vsel %vm880, %v856, %v879
        %v882 = vsel %vm712, %v873, %v874
        %v883 = vsel %vm880, %v860, %v882
        %v884 = vsel %vm712, %v875, %v876
        %v885 = vsel %vm880, %v864, %v884
        %v886 = vsel %vm712, %v877, %v878
        %v887 = vsel %vm880, %v868, %v886
        %892 = vst [vmem:[#allocation2 + $0x60] sm:$0xff] %v881
        %893 = vst [vmem:[#allocation2 + $0x68] sm:$0xff] %v883
        %894 = vst [vmem:[#allocation2 + $0x70] sm:$0xff] %v885
        %895 = vst [vmem:[#allocation2 + $0x78] sm:$0xff] %v887
        %s896 = scalar_lea.vmem [#allocation7], 4
        %v897 = vld [vmem:[%s896] ss:$8 sm:$0x3]
        %v899 = vperm.slane %v897, 0
        %v900 = vperm.slane %v897, 1
        %901 = vrot.lane.b32.xlu0 %v899, 17
        %v902 = vpop.permute.xlu0 %901
        %903 = vrot.lane.b32.xlu0 %v900, 17
        %v904 = vpop.permute.xlu0 %903
        %v905 = vsel %vm599, %v902, %v904
        %v909 = vmul.f32 %v616, %v902
        %v910 = vmul.f32 %v600, %v905
        %v911 = vmul.f32 %v620, %v904
        %v912 = vmul.f32 %v617, %v902
        %v913 = vmul.f32 %v601, %v905
        %v914 = vmul.f32 %v621, %v904
        %v915 = vmul.f32 %v618, %v902
        %v916 = vmul.f32 %v602, %v905
        %v917 = vmul.f32 %v622, %v904
        %v918 = vmul.f32 %v619, %v902
        %v919 = vmul.f32 %v603, %v905
        %v920 = vmul.f32 %v623, %v904
        %v921 = vpack.c.bf16 %v910, %v909
        %v922 = vpack.c.bf16 %v911, %v911
        %v923 = vpack.c.bf16 %v913, %v912
        %v924 = vpack.c.bf16 %v914, %v914
        %v925 = vpack.c.bf16 %v916, %v915
        %v926 = vpack.c.bf16 %v917, %v917
        %v927 = vpack.c.bf16 %v919, %v918
        %v928 = vpack.c.bf16 %v920, %v920
        %937 = vrot.lane.b32.xlu0 %v921, 111
        %v938 = vpop.permute.xlu0 %937
        %939 = vrot.lane.b32.xlu0 %v922, 111
        %v940 = vpop.permute.xlu0 %939
        %941 = vrot.lane.b32.xlu0 %v923, 111
        %v942 = vpop.permute.xlu0 %941
        %943 = vrot.lane.b32.xlu0 %v924, 111
        %v944 = vpop.permute.xlu0 %943
        %945 = vrot.lane.b32.xlu0 %v925, 111
        %v946 = vpop.permute.xlu0 %945
        %947 = vrot.lane.b32.xlu0 %v926, 111
        %v948 = vpop.permute.xlu0 %947
        %949 = vrot.lane.b32.xlu0 %v927, 111
        %v950 = vpop.permute.xlu0 %949
        %951 = vrot.lane.b32.xlu0 %v928, 111
        %v952 = vpop.permute.xlu0 %951
        %v953 = vrot.slane %v938, 4
        %v954 = vrot.slane %v940, 4
        %v955 = vrot.slane %v942, 4
        %v956 = vrot.slane %v944, 4
        %v957 = vrot.slane %v946, 4
        %v958 = vrot.slane %v948, 4
        %v959 = vrot.slane %v950, 4
        %v960 = vrot.slane %v952, 4
        %v961 = vsel %vm712, %v953, %v954
        %vm962 = vcmask 908288
        %v963 = vsel %vm962, %v938, %v961
        %v964 = vsel %vm712, %v955, %v956
        %v965 = vsel %vm962, %v942, %v964
        %v966 = vsel %vm712, %v957, %v958
        %v967 = vsel %vm962, %v946, %v966
        %v968 = vsel %vm712, %v959, %v960
        %v969 = vsel %vm962, %v950, %v968
        %974 = vst [vmem:[#allocation2 + $0x80] sm:$0xff] %v963
        %975 = vst [vmem:[#allocation2 + $0x88] sm:$0xff] %v965
        %976 = vst [vmem:[#allocation2 + $0x90] sm:$0xff] %v967
        %977 = vst [vmem:[#allocation2 + $0x98] sm:$0xff] %v969
        %s978 = scalar_lea.vmem [#allocation7], 5
        %v979 = vld [vmem:[%s978] ss:$8 sm:$0x3]
        %v981 = vperm.slane %v979, 0
        %v982 = vperm.slane %v979, 1
        %983 = vrot.lane.b32.xlu0 %v981, 18
        %v984 = vpop.permute.xlu0 %983
        %985 = vrot.lane.b32.xlu0 %v982, 18
        %v986 = vpop.permute.xlu0 %985
        %vm987 = vcmask 146432
        %v988 = vsel %vm987, %v984, %v986
        %v992 = vmul.f32 %v616, %v984
        %v993 = vmul.f32 %v600, %v988
        %v994 = vmul.f32 %v620, %v986
        %v995 = vmul.f32 %v617, %v984
        %v996 = vmul.f32 %v601, %v988
        %v997 = vmul.f32 %v621, %v986
        %v998 = vmul.f32 %v618, %v984
        %v999 = vmul.f32 %v602, %v988
        %v1000 = vmul.f32 %v622, %v986
        %v1001 = vmul.f32 %v619, %v984
        %v1002 = vmul.f32 %v603, %v988
        %v1003 = vmul.f32 %v623, %v986
        %v1004 = vpack.c.bf16 %v993, %v992
        %v1005 = vpack.c.bf16 %v994, %v994
        %v1006 = vpack.c.bf16 %v996, %v995
        %v1007 = vpack.c.bf16 %v997, %v997
        %v1008 = vpack.c.bf16 %v999, %v998
        %v1009 = vpack.c.bf16 %v1000, %v1000
        %v1010 = vpack.c.bf16 %v1002, %v1001
        %v1011 = vpack.c.bf16 %v1003, %v1003
        %1020 = vrot.lane.b32.xlu0 %v1004, 110
        %v1021 = vpop.permute.xlu0 %1020
        %1022 = vrot.lane.b32.xlu0 %v1005, 110
        %v1023 = vpop.permute.xlu0 %1022
        %1024 = vrot.lane.b32.xlu0 %v1006, 110
        %v1025 = vpop.permute.xlu0 %1024
        %1026 = vrot.lane.b32.xlu0 %v1007, 110
        %v1027 = vpop.permute.xlu0 %1026
        %1028 = vrot.lane.b32.xlu0 %v1008, 110
        %v1029 = vpop.permute.xlu0 %1028
        %1030 = vrot.lane.b32.xlu0 %v1009, 110
        %v1031 = vpop.permute.xlu0 %1030
        %1032 = vrot.lane.b32.xlu0 %v1010, 110
        %v1033 = vpop.permute.xlu0 %1032
        %1034 = vrot.lane.b32.xlu0 %v1011, 110
        %v1035 = vpop.permute.xlu0 %1034
        %v1036 = vrot.slane %v1021, 4
        %v1037 = vrot.slane %v1023, 4
        %v1038 = vrot.slane %v1025, 4
        %v1039 = vrot.slane %v1027, 4
        %v1040 = vrot.slane %v1029, 4
        %v1041 = vrot.slane %v1031, 4
        %v1042 = vrot.slane %v1033, 4
        %v1043 = vrot.slane %v1035, 4
        %v1044 = vsel %vm712, %v1036, %v1037
        %vm1045 = vcmask 900096
        %v1046 = vsel %vm1045, %v1021, %v1044
        %v1047 = vsel %vm712, %v1038, %v1039
        %v1048 = vsel %vm1045, %v1025, %v1047
        %v1049 = vsel %vm712, %v1040, %v1041
        %v1050 = vsel %vm1045, %v1029, %v1049
        %v1051 = vsel %vm712, %v1042, %v1043
        %v1052 = vsel %vm1045, %v1033, %v1051
        %1057 = vst [vmem:[#allocation2 + $0xa0] sm:$0xff] %v1046
        %1058 = vst [vmem:[#allocation2 + $0xa8] sm:$0xff] %v1048
        %1059 = vst [vmem:[#allocation2 + $0xb0] sm:$0xff] %v1050
        %1060 = vst [vmem:[#allocation2 + $0xb8] sm:$0xff] %v1052
        %s1061 = scalar_lea.vmem [#allocation7], 6
        %v1062 = vld [vmem:[%s1061] ss:$8 sm:$0x3]
        %v1064 = vperm.slane %v1062, 0
        %v1065 = vperm.slane %v1062, 1
        %1066 = vrot.lane.b32.xlu0 %v1064, 32
        %v1067 = vpop.permute.xlu0 %1066
        %1068 = vrot.lane.b32.xlu0 %v1065, 32
        %v1069 = vpop.permute.xlu0 %1068
        %vm1070 = vcmask 261120
        %v1071 = vsel %vm1070, %v1067, %v1069
        %v1075 = vmul.f32 %v616, %v1067
        %v1076 = vmul.f32 %v600, %v1071
        %v1077 = vmul.f32 %v620, %v1069
        %v1078 = vmul.f32 %v617, %v1067
        %v1079 = vmul.f32 %v601, %v1071
        %v1080 = vmul.f32 %v621, %v1069
        %v1081 = vmul.f32 %v618, %v1067
        %v1082 = vmul.f32 %v602, %v1071
        %v1083 = vmul.f32 %v622, %v1069
        %v1084 = vmul.f32 %v619, %v1067
        %v1085 = vmul.f32 %v603, %v1071
        %v1086 = vmul.f32 %v623, %v1069
        %v1087 = vpack.c.bf16 %v1076, %v1075
        %v1088 = vpack.c.bf16 %v1077, %v1077
        %v1089 = vpack.c.bf16 %v1079, %v1078
        %v1090 = vpack.c.bf16 %v1080, %v1080
        %v1091 = vpack.c.bf16 %v1082, %v1081
        %v1092 = vpack.c.bf16 %v1083, %v1083
        %v1093 = vpack.c.bf16 %v1085, %v1084
        %v1094 = vpack.c.bf16 %v1086, %v1086
        %1103 = vrot.lane.b32.xlu0 %v1087, 96
        %v1104 = vpop.permute.xlu0 %1103
        %1105 = vrot.lane.b32.xlu0 %v1088, 96
        %v1106 = vpop.permute.xlu0 %1105
        %1107 = vrot.lane.b32.xlu0 %v1089, 96
        %v1108 = vpop.permute.xlu0 %1107
        %1109 = vrot.lane.b32.xlu0 %v1090, 96
        %v1110 = vpop.permute.xlu0 %1109
        %1111 = vrot.lane.b32.xlu0 %v1091, 96
        %v1112 = vpop.permute.xlu0 %1111
        %1113 = vrot.lane.b32.xlu0 %v1092, 96
        %v1114 = vpop.permute.xlu0 %1113
        %1115 = vrot.lane.b32.xlu0 %v1093, 96
        %v1116 = vpop.permute.xlu0 %1115
        %1117 = vrot.lane.b32.xlu0 %v1094, 96
        %v1118 = vpop.permute.xlu0 %1117
        %v1119 = vrot.slane %v1104, 4
        %v1120 = vrot.slane %v1106, 4
        %v1121 = vrot.slane %v1108, 4
        %v1122 = vrot.slane %v1110, 4
        %v1123 = vrot.slane %v1112, 4
        %v1124 = vrot.slane %v1114, 4
        %v1125 = vrot.slane %v1116, 4
        %v1126 = vrot.slane %v1118, 4
        %v1127 = vsel %vm712, %v1119, %v1120
        %vm1128 = vcmask 785408
        %v1129 = vsel %vm1128, %v1104, %v1127
        %v1130 = vsel %vm712, %v1121, %v1122
        %v1131 = vsel %vm1128, %v1108, %v1130
        %v1132 = vsel %vm712, %v1123, %v1124
        %v1133 = vsel %vm1128, %v1112, %v1132
        %v1134 = vsel %vm712, %v1125, %v1126
        %v1135 = vsel %vm1128, %v1116, %v1134
        %1140 = vst [vmem:[#allocation2 + $0xc0] sm:$0xff] %v1129
        %1141 = vst [vmem:[#allocation2 + $0xc8] sm:$0xff] %v1131
        %1142 = vst [vmem:[#allocation2 + $0xd0] sm:$0xff] %v1133
        %1143 = vst [vmem:[#allocation2 + $0xd8] sm:$0xff] %v1135
        %s1144 = scalar_lea.vmem [#allocation7], 7
        %v1145 = vld [vmem:[%s1144] ss:$8 sm:$0x3]
        %v1147 = vperm.slane %v1145, 0
        %v1148 = vperm.slane %v1145, 1
        %1149 = vrot.lane.b32.xlu0 %v1147, 33
        %v1150 = vpop.permute.xlu0 %1149
        %1151 = vrot.lane.b32.xlu0 %v1148, 33
        %v1152 = vpop.permute.xlu0 %1151
        %vm1153 = vcmask 269312
        %v1154 = vsel %vm1153, %v1150, %v1152
        %v1158 = vmul.f32 %v616, %v1150
        %v1159 = vmul.f32 %v600, %v1154
        %v1160 = vmul.f32 %v620, %v1152
        %v1161 = vmul.f32 %v617, %v1150
        %v1162 = vmul.f32 %v601, %v1154
        %v1163 = vmul.f32 %v621, %v1152
        %v1164 = vmul.f32 %v618, %v1150
        %v1165 = vmul.f32 %v602, %v1154
        %v1166 = vmul.f32 %v622, %v1152
        %v1167 = vmul.f32 %v619, %v1150
        %v1168 = vmul.f32 %v603, %v1154
        %v1169 = vmul.f32 %v623, %v1152
        %v1170 = vpack.c.bf16 %v1159, %v1158
        %v1171 = vpack.c.bf16 %v1160, %v1160
        %v1172 = vpack.c.bf16 %v1162, %v1161
        %v1173 = vpack.c.bf16 %v1163, %v1163
        %v1174 = vpack.c.bf16 %v1165, %v1164
        %v1175 = vpack.c.bf16 %v1166, %v1166
        %v1176 = vpack.c.bf16 %v1168, %v1167
        %v1177 = vpack.c.bf16 %v1169, %v1169
        %1186 = vrot.lane.b32.xlu0 %v1170, 95
        %v1187 = vpop.permute.xlu0 %1186
        %1188 = vrot.lane.b32.xlu0 %v1171, 95
        %v1189 = vpop.permute.xlu0 %1188
        %1190 = vrot.lane.b32.xlu0 %v1172, 95
        %v1191 = vpop.permute.xlu0 %1190
        %1192 = vrot.lane.b32.xlu0 %v1173, 95
        %v1193 = vpop.permute.xlu0 %1192
        %1194 = vrot.lane.b32.xlu0 %v1174, 95
        %v1195 = vpop.permute.xlu0 %1194
        %1196 = vrot.lane.b32.xlu0 %v1175, 95
        %v1197 = vpop.permute.xlu0 %1196
        %1198 = vrot.lane.b32.xlu0 %v1176, 95
        %v1199 = vpop.permute.xlu0 %1198
        %1200 = vrot.lane.b32.xlu0 %v1177, 95
        %v1201 = vpop.permute.xlu0 %1200
        %v1202 = vrot.slane %v1187, 4
        %v1203 = vrot.slane %v1189, 4
        %v1204 = vrot.slane %v1191, 4
        %v1205 = vrot.slane %v1193, 4
        %v1206 = vrot.slane %v1195, 4
        %v1207 = vrot.slane %v1197, 4
        %v1208 = vrot.slane %v1199, 4
        %v1209 = vrot.slane %v1201, 4
        %v1210 = vsel %vm712, %v1202, %v1203
        %vm1211 = vcmask 777216
        %v1212 = vsel %vm1211, %v1187, %v1210
        %v1213 = vsel %vm712, %v1204, %v1205
        %v1214 = vsel %vm1211, %v1191, %v1213
        %v1215 = vsel %vm712, %v1206, %v1207
        %v1216 = vsel %vm1211, %v1195, %v1215
        %v1217 = vsel %vm712, %v1208, %v1209
        %v1218 = vsel %vm1211, %v1199, %v1217
        %1223 = vst [vmem:[#allocation2 + $0xe0] sm:$0xff] %v1212
        %1224 = vst [vmem:[#allocation2 + $0xe8] sm:$0xff] %v1214
        %1225 = vst [vmem:[#allocation2 + $0xf0] sm:$0xff] %v1216
        %1226 = vst [vmem:[#allocation2 + $0xf8] sm:$0xff] %v1218
        %s1227 = scalar_lea.vmem [#allocation7], 16
        %v1228 = vld [vmem:[%s1227] ss:$8 sm:$0x3]
        %v1230 = vperm.slane %v1228, 0
        %v1231 = vperm.slane %v1228, 1
        %1232 = vrot.lane.b32.xlu0 %v1230, 34
        %v1233 = vpop.permute.xlu0 %1232
        %1234 = vrot.lane.b32.xlu0 %v1231, 34
        %v1235 = vpop.permute.xlu0 %1234
        %vm1236 = vcmask 277504
        %v1237 = vsel %vm1236, %v1233, %v1235
        %v1241 = vmul.f32 %v616, %v1233
        %v1242 = vmul.f32 %v600, %v1237
        %v1243 = vmul.f32 %v620, %v1235
        %v1244 = vmul.f32 %v617, %v1233
        %v1245 = vmul.f32 %v601, %v1237
        %v1246 = vmul.f32 %v621, %v1235
        %v1247 = vmul.f32 %v618, %v1233
        %v1248 = vmul.f32 %v602, %v1237
        %v1249 = vmul.f32 %v622, %v1235
        %v1250 = vmul.f32 %v619, %v1233
        %v1251 = vmul.f32 %v603, %v1237
        %v1252 = vmul.f32 %v623, %v1235
        %v1253 = vpack.c.bf16 %v1242, %v1241
        %v1254 = vpack.c.bf16 %v1243, %v1243
        %v1255 = vpack.c.bf16 %v1245, %v1244
        %v1256 = vpack.c.bf16 %v1246, %v1246
        %v1257 = vpack.c.bf16 %v1248, %v1247
        %v1258 = vpack.c.bf16 %v1249, %v1249
        %v1259 = vpack.c.bf16 %v1251, %v1250
        %v1260 = vpack.c.bf16 %v1252, %v1252
        %1269 = vrot.lane.b32.xlu0 %v1253, 94
        %v1270 = vpop.permute.xlu0 %1269
        %1271 = vrot.lane.b32.xlu0 %v1254, 94
        %v1272 = vpop.permute.xlu0 %1271
        %1273 = vrot.lane.b32.xlu0 %v1255, 94
        %v1274 = vpop.permute.xlu0 %1273
        %1275 = vrot.lane.b32.xlu0 %v1256, 94
        %v1276 = vpop.permute.xlu0 %1275
        %1277 = vrot.lane.b32.xlu0 %v1257, 94
        %v1278 = vpop.permute.xlu0 %1277
        %1279 = vrot.lane.b32.xlu0 %v1258, 94
        %v1280 = vpop.permute.xlu0 %1279
        %1281 = vrot.lane.b32.xlu0 %v1259, 94
        %v1282 = vpop.permute.xlu0 %1281
        %1283 = vrot.lane.b32.xlu0 %v1260, 94
        %v1284 = vpop.permute.xlu0 %1283
        %v1285 = vrot.slane %v1270, 4
        %v1286 = vrot.slane %v1272, 4
        %v1287 = vrot.slane %v1274, 4
        %v1288 = vrot.slane %v1276, 4
        %v1289 = vrot.slane %v1278, 4
        %v1290 = vrot.slane %v1280, 4
        %v1291 = vrot.slane %v1282, 4
        %v1292 = vrot.slane %v1284, 4
        %v1293 = vsel %vm712, %v1285, %v1286
        %vm1294 = vcmask 769024
        %v1295 = vsel %vm1294, %v1270, %v1293
        %v1296 = vsel %vm712, %v1287, %v1288
        %v1297 = vsel %vm1294, %v1274, %v1296
        %v1298 = vsel %vm712, %v1289, %v1290
        %v1299 = vsel %vm1294, %v1278, %v1298
        %v1300 = vsel %vm712, %v1291, %v1292
        %v1301 = vsel %vm1294, %v1282, %v1300
        %1306 = vst [vmem:[#allocation2 + $0x100] sm:$0xff] %v1295
        %1307 = vst [vmem:[#allocation2 + $0x108] sm:$0xff] %v1297
        %1308 = vst [vmem:[#allocation2 + $0x110] sm:$0xff] %v1299
        %1309 = vst [vmem:[#allocation2 + $0x118] sm:$0xff] %v1301
        %v1310 = vld [vmem:[#allocation6] sm:$0xff]
        %v1311 = vld [vmem:[#allocation6 + $0x8] sm:$0xf]
        %v1312 = vld [vmem:[#allocation6 + $0xc] sm:$0xff]
        %v1313 = vld [vmem:[#allocation6 + $0x14] sm:$0xf]
        %v1314 = vld [vmem:[#allocation6 + $0x18] sm:$0xff]
        %v1315 = vld [vmem:[#allocation6 + $0x20] sm:$0xf]
        %v1316 = vld [vmem:[#allocation6 + $0x24] sm:$0xff]
        %v1317 = vld [vmem:[#allocation6 + $0x2c] sm:$0xf]
        %v1318 = vld [vmem:[#allocation6 + $0x30] sm:$0xff]
        %v1319 = vld [vmem:[#allocation6 + $0x38] sm:$0xf]
        %v1320 = vld [vmem:[#allocation6 + $0x3c] sm:$0xff]
        %v1321 = vld [vmem:[#allocation6 + $0x44] sm:$0xf]
        %v1322 = vld [vmem:[#allocation6 + $0x48] sm:$0xff]
        %v1323 = vld [vmem:[#allocation6 + $0x50] sm:$0xf]
        %v1324 = vld [vmem:[#allocation6 + $0x54] sm:$0xff]
        %v1325 = vld [vmem:[#allocation6 + $0x5c] sm:$0xf]
        %v1326 = vld [vmem:[#allocation2] sm:$0xff]
        %v1327 = vld [vmem:[#allocation2 + $0x8] sm:$0xff]
        %v1328 = vld [vmem:[#allocation2 + $0x10] sm:$0xff]
        %v1329 = vld [vmem:[#allocation2 + $0x18] sm:$0xff]
        %v1330 = vld [vmem:[#allocation2 + $0x20] sm:$0xff]
        %v1331 = vld [vmem:[#allocation2 + $0x28] sm:$0xff]
        %v1332 = vld [vmem:[#allocation2 + $0x30] sm:$0xff]
        %v1333 = vld [vmem:[#allocation2 + $0x38] sm:$0xff]
        %v1334 = vld [vmem:[#allocation2 + $0x40] sm:$0xff]
        %v1335 = vld [vmem:[#allocation2 + $0x48] sm:$0xff]
        %v1336 = vld [vmem:[#allocation2 + $0x50] sm:$0xff]
        %v1337 = vld [vmem:[#allocation2 + $0x58] sm:$0xff]
        %v1338 = vld [vmem:[#allocation2 + $0x60] sm:$0xff]
        %v1339 = vld [vmem:[#allocation2 + $0x68] sm:$0xff]
        %v1340 = vld [vmem:[#allocation2 + $0x70] sm:$0xff]
        %v1341 = vld [vmem:[#allocation2 + $0x78] sm:$0xff]
        %v1342 = vld [vmem:[#allocation2 + $0x80] sm:$0xff]
        %v1343 = vld [vmem:[#allocation2 + $0x88] sm:$0xff]
        %v1344 = vld [vmem:[#allocation2 + $0x90] sm:$0xff]
        %v1345 = vld [vmem:[#allocation2 + $0x98] sm:$0xff]
        %v1346 = vld [vmem:[#allocation2 + $0xa0] sm:$0xff]
        %v1347 = vld [vmem:[#allocation2 + $0xa8] sm:$0xff]
        %v1348 = vld [vmem:[#allocation2 + $0xb0] sm:$0xff]
        %v1349 = vld [vmem:[#allocation2 + $0xb8] sm:$0xff]
        %v1350 = vld [vmem:[#allocation2 + $0xc0] sm:$0xff]
        %v1351 = vld [vmem:[#allocation2 + $0xc8] sm:$0xff]
        %v1352 = vld [vmem:[#allocation2 + $0xd0] sm:$0xff]
        %v1353 = vld [vmem:[#allocation2 + $0xd8] sm:$0xff]
        %v1354 = vld [vmem:[#allocation2 + $0xe0] sm:$0xff]
        %v1355 = vld [vmem:[#allocation2 + $0xe8] sm:$0xff]
        %v1356 = vld [vmem:[#allocation2 + $0xf0] sm:$0xff]
        %v1357 = vld [vmem:[#allocation2 + $0xf8] sm:$0xff]
        %v1358 = vld [vmem:[#allocation2 + $0x100] sm:$0xff]
        %v1359 = vld [vmem:[#allocation2 + $0x108] sm:$0xff]
        %v1360 = vld [vmem:[#allocation2 + $0x110] sm:$0xff]
        %v1361 = vld [vmem:[#allocation2 + $0x118] sm:$0xff]
        %v1362 = vld [vmem:[%s3] sm:$0xff]
        %v1363 = vld [vmem:[%s3 + $0x8] sm:$0xff]
        %v1364 = vld [vmem:[%s3 + $0x10] sm:$0xff]
        %v1365 = vld [vmem:[%s3 + $0x18] sm:$0xff]
        %v1366 = vld [vmem:[%s3 + $0x20] sm:$0xff]
        %v1367 = vld [vmem:[%s3 + $0x28] sm:$0xff]
        %v1368 = vld [vmem:[%s3 + $0x30] sm:$0xff]
        %v1369 = vld [vmem:[%s3 + $0x38] sm:$0xff]
        %1371 = vset.pattern.permute.xlu0 0
        %1372 = vperm.xlu0 %1371, %v1362
        %v1373 = vpop.permute.xlu0 %1372
        %1376 = vset.pattern.permute.xlu0 0
        %1377 = vperm.xlu0 %1376, %v1363
        %v1378 = vpop.permute.xlu0 %1377
        %1381 = vset.pattern.permute.xlu0 0
        %1382 = vperm.xlu0 %1381, %v1364
        %v1383 = vpop.permute.xlu0 %1382
        %1386 = vset.pattern.permute.xlu0 0
        %1387 = vperm.xlu0 %1386, %v1365
        %v1388 = vpop.permute.xlu0 %1387
        %1391 = vset.pattern.permute.xlu0 0
        %1392 = vperm.xlu0 %1391, %v1366
        %v1393 = vpop.permute.xlu0 %1392
        %1396 = vset.pattern.permute.xlu0 0
        %1397 = vperm.xlu0 %1396, %v1367
        %v1398 = vpop.permute.xlu0 %1397
        %1401 = vset.pattern.permute.xlu0 0
        %1402 = vperm.xlu0 %1401, %v1368
        %v1403 = vpop.permute.xlu0 %1402
        %1406 = vset.pattern.permute.xlu0 0
        %1407 = vperm.xlu0 %1406, %v1369
        %v1408 = vpop.permute.xlu0 %1407
        %v1426 = vunpack.c.l.b16 %v1310
        %v1427 = vunpack.c.h.b16 %v1310
        %v1428 = vunpack.c.l.b16 %v1311
        %v1429 = vunpack.c.l.b16 %v1312
        %v1430 = vunpack.c.h.b16 %v1312
        %v1431 = vunpack.c.l.b16 %v1313
        %v1432 = vunpack.c.l.b16 %v1314
        %v1433 = vunpack.c.h.b16 %v1314
        %v1434 = vunpack.c.l.b16 %v1315
        %v1435 = vunpack.c.l.b16 %v1316
        %v1436 = vunpack.c.h.b16 %v1316
        %v1437 = vunpack.c.l.b16 %v1317
        %v1438 = vunpack.c.l.b16 %v1318
        %v1439 = vunpack.c.h.b16 %v1318
        %v1440 = vunpack.c.l.b16 %v1319
        %v1441 = vunpack.c.l.b16 %v1320
        %v1442 = vunpack.c.h.b16 %v1320
        %v1443 = vunpack.c.l.b16 %v1321
        %v1444 = vunpack.c.l.b16 %v1322
        %v1445 = vunpack.c.h.b16 %v1322
        %v1446 = vunpack.c.l.b16 %v1323
        %v1447 = vunpack.c.l.b16 %v1324
        %v1448 = vunpack.c.h.b16 %v1324
        %v1449 = vunpack.c.l.b16 %v1325
        %v1450 = vpack.c.b16 %v1429, %v1426
        %v1451 = vpack.c.b16 %v1430, %v1427
        %v1452 = vpack.c.b16 %v1431, %v1428
        %v1453 = vpack.c.b16 %v1435, %v1432
        %v1454 = vpack.c.b16 %v1436, %v1433
        %v1455 = vpack.c.b16 %v1437, %v1434
        %v1456 = vpack.c.b16 %v1441, %v1438
        %v1457 = vpack.c.b16 %v1442, %v1439
        %v1458 = vpack.c.b16 %v1443, %v1440
        %v1459 = vpack.c.b16 %v1447, %v1444
        %v1460 = vpack.c.b16 %v1448, %v1445
        %v1461 = vpack.c.b16 %v1449, %v1446
        %v1506 = vunpack.c.l.b16 %v1326
        %v1507 = vunpack.c.h.b16 %v1326
        %v1508 = vunpack.c.l.b16 %v1327
        %v1509 = vunpack.c.h.b16 %v1327
        %v1510 = vunpack.c.l.b16 %v1328
        %v1511 = vunpack.c.h.b16 %v1328
        %v1512 = vunpack.c.l.b16 %v1329
        %v1513 = vunpack.c.h.b16 %v1329
        %v1514 = vunpack.c.l.b16 %v1330
        %v1515 = vunpack.c.h.b16 %v1330
        %v1516 = vunpack.c.l.b16 %v1331
        %v1517 = vunpack.c.h.b16 %v1331
        %v1518 = vunpack.c.l.b16 %v1332
        %v1519 = vunpack.c.h.b16 %v1332
        %v1520 = vunpack.c.l.b16 %v1333
        %v1521 = vunpack.c.h.b16 %v1333
        %v1522 = vunpack.c.l.b16 %v1334
        %v1523 = vunpack.c.h.b16 %v1334
        %v1524 = vunpack.c.l.b16 %v1335
        %v1525 = vunpack.c.h.b16 %v1335
        %v1526 = vunpack.c.l.b16 %v1336
        %v1527 = vunpack.c.h.b16 %v1336
        %v1528 = vunpack.c.l.b16 %v1337
        %v1529 = vunpack.c.h.b16 %v1337
        %v1530 = vunpack.c.l.b16 %v1338
        %v1531 = vunpack.c.h.b16 %v1338
        %v1532 = vunpack.c.l.b16 %v1339
        %v1533 = vunpack.c.h.b16 %v1339
        %v1534 = vunpack.c.l.b16 %v1340
        %v1535 = vunpack.c.h.b16 %v1340
        %v1536 = vunpack.c.l.b16 %v1341
        %v1537 = vunpack.c.h.b16 %v1341
        %v1538 = vunpack.c.l.b16 %v1342
        %v1539 = vunpack.c.h.b16 %v1342
        %v1540 = vunpack.c.l.b16 %v1343
        %v1541 = vunpack.c.h.b16 %v1343
        %v1542 = vunpack.c.l.b16 %v1344
        %v1543 = vunpack.c.h.b16 %v1344
        %v1544 = vunpack.c.l.b16 %v1345
        %v1545 = vunpack.c.h.b16 %v1345
        %v1546 = vunpack.c.l.b16 %v1346
        %v1547 = vunpack.c.h.b16 %v1346
        %v1548 = vunpack.c.l.b16 %v1347
        %v1549 = vunpack.c.h.b16 %v1347
        %v1550 = vunpack.c.l.b16 %v1348
        %v1551 = vunpack.c.h.b16 %v1348
        %v1552 = vunpack.c.l.b16 %v1349
        %v1553 = vunpack.c.h.b16 %v1349
        %v1554 = vunpack.c.l.b16 %v1350
        %v1555 = vunpack.c.h.b16 %v1350
        %v1556 = vunpack.c.l.b16 %v1351
        %v1557 = vunpack.c.h.b16 %v1351
        %v1558 = vunpack.c.l.b16 %v1352
        %v1559 = vunpack.c.h.b16 %v1352
        %v1560 = vunpack.c.l.b16 %v1353
        %v1561 = vunpack.c.h.b16 %v1353
        %v1562 = vunpack.c.l.b16 %v1354
        %v1563 = vunpack.c.h.b16 %v1354
        %v1564 = vunpack.c.l.b16 %v1355
        %v1565 = vunpack.c.h.b16 %v1355
        %v1566 = vunpack.c.l.b16 %v1356
        %v1567 = vunpack.c.h.b16 %v1356
        %v1568 = vunpack.c.l.b16 %v1357
        %v1569 = vunpack.c.h.b16 %v1357
        %v1570 = vunpack.c.l.b16 %v1358
        %v1571 = vunpack.c.h.b16 %v1358
        %v1572 = vunpack.c.l.b16 %v1359
        %v1573 = vunpack.c.h.b16 %v1359
        %v1574 = vunpack.c.l.b16 %v1360
        %v1575 = vunpack.c.h.b16 %v1360
        %v1576 = vunpack.c.l.b16 %v1361
        %v1577 = vunpack.c.h.b16 %v1361
        %v1578 = vpack.c.b16 %v1508, %v1506
        %v1579 = vpack.c.b16 %v1509, %v1507
        %v1580 = vpack.c.b16 %v1512, %v1510
        %v1581 = vpack.c.b16 %v1513, %v1511
        %v1582 = vpack.c.b16 %v1516, %v1514
        %v1583 = vpack.c.b16 %v1517, %v1515
        %v1584 = vpack.c.b16 %v1520, %v1518
        %v1585 = vpack.c.b16 %v1521, %v1519
        %v1586 = vpack.c.b16 %v1524, %v1522
        %v1587 = vpack.c.b16 %v1525, %v1523
        %v1588 = vpack.c.b16 %v1528, %v1526
        %v1589 = vpack.c.b16 %v1529, %v1527
        %v1590 = vpack.c.b16 %v1532, %v1530
        %v1591 = vpack.c.b16 %v1533, %v1531
        %v1592 = vpack.c.b16 %v1536, %v1534
        %v1593 = vpack.c.b16 %v1537, %v1535
        %v1594 = vpack.c.b16 %v1540, %v1538
        %v1595 = vpack.c.b16 %v1541, %v1539
        %v1596 = vpack.c.b16 %v1544, %v1542
        %v1597 = vpack.c.b16 %v1545, %v1543
        %v1598 = vpack.c.b16 %v1548, %v1546
        %v1599 = vpack.c.b16 %v1549, %v1547
        %v1600 = vpack.c.b16 %v1552, %v1550
        %v1601 = vpack.c.b16 %v1553, %v1551
        %v1602 = vpack.c.b16 %v1556, %v1554
        %v1603 = vpack.c.b16 %v1557, %v1555
        %v1604 = vpack.c.b16 %v1560, %v1558
        %v1605 = vpack.c.b16 %v1561, %v1559
        %v1606 = vpack.c.b16 %v1564, %v1562
        %v1607 = vpack.c.b16 %v1565, %v1563
        %v1608 = vpack.c.b16 %v1568, %v1566
        %v1609 = vpack.c.b16 %v1569, %v1567
        %v1610 = vpack.c.b16 %v1572, %v1570
        %v1611 = vpack.c.b16 %v1573, %v1571
        %v1612 = vpack.c.b16 %v1576, %v1574
        %v1613 = vpack.c.b16 %v1577, %v1575
        %v1651 = vsel %vm1070, %v1452, 0
        %v1654 = vsel %vm1070, %v1455, 0
        %v1657 = vsel %vm1070, %v1458, 0
        %v1660 = vsel %vm1070, %v1461, 0
        %1662 = vmatpush.bf16.msra.mxu0 %v1592
        %1663 = vmatpush.bf16.msra.mxu0 %v1590
        %1664 = vmatpush.bf16.msra.mxu0 %v1588
        %1665 = vmatpush.bf16.msra.mxu0 %v1586
        %1666 = vmatpush.bf16.msra.mxu0 %v1584
        %1667 = vmatpush.bf16.msra.mxu0 %v1582
        %1668 = vmatpush.bf16.msra.mxu0 %v1580
        %1669 = vmatpush.bf16.msra.mxu0 %v1578
        %1670 = vmatmul.bf16.gmra.mxu0 %v1450
        %v1671 = vpop.f32.mrf.mxu0
        %v1672 = vadd.f32 %v1373, %v1671
        %v1673 = vpop.f32.mrf.mxu0
        %v1674 = vadd.f32 %v1378, %v1673
        %1675 = vmatmul.bf16.gmra.mxu0 %v1453
        %v1676 = vpop.f32.mrf.mxu0
        %v1677 = vadd.f32 %v1383, %v1676
        %v1678 = vpop.f32.mrf.mxu0
        %v1679 = vadd.f32 %v1388, %v1678
        %1680 = vmatmul.bf16.gmra.mxu0 %v1456
        %v1681 = vpop.f32.mrf.mxu0
        %v1682 = vadd.f32 %v1393, %v1681
        %v1683 = vpop.f32.mrf.mxu0
        %v1684 = vadd.f32 %v1398, %v1683
        %1685 = vmatmul.bf16.gmra.mxu0 %v1459
        %v1686 = vpop.f32.mrf.mxu0
        %v1687 = vadd.f32 %v1403, %v1686
        %v1688 = vpop.f32.mrf.mxu0
        %v1689 = vadd.f32 %v1408, %v1688
        %1690 = vdwg.mxu0
        %1691 = vmatpush.bf16.msra.mxu0 %v1608
        %1692 = vmatpush.bf16.msra.mxu0 %v1606
        %1693 = vmatpush.bf16.msra.mxu0 %v1604
        %1694 = vmatpush.bf16.msra.mxu0 %v1602
        %1695 = vmatpush.bf16.msra.mxu0 %v1600
        %1696 = vmatpush.bf16.msra.mxu0 %v1598
        %1697 = vmatpush.bf16.msra.mxu0 %v1596
        %1698 = vmatpush.bf16.msra.mxu0 %v1594
        %1699 = vmatmul.bf16.gmra.mxu0 %v1451
        %v1700 = vpop.f32.mrf.mxu0
        %v1701 = vadd.f32 %v1672, %v1700
        %v1702 = vpop.f32.mrf.mxu0
        %v1703 = vadd.f32 %v1674, %v1702
        %1704 = vmatmul.bf16.gmra.mxu0 %v1454
        %v1705 = vpop.f32.mrf.mxu0
        %v1706 = vadd.f32 %v1677, %v1705
        %v1707 = vpop.f32.mrf.mxu0
        %v1708 = vadd.f32 %v1679, %v1707
        %1709 = vmatmul.bf16.gmra.mxu0 %v1457
        %v1710 = vpop.f32.mrf.mxu0
        %v1711 = vadd.f32 %v1682, %v1710
        %v1712 = vpop.f32.mrf.mxu0
        %v1713 = vadd.f32 %v1684, %v1712
        %1714 = vmatmul.bf16.gmra.mxu0 %v1460
        %v1715 = vpop.f32.mrf.mxu0
        %v1716 = vadd.f32 %v1687, %v1715
        %v1717 = vpop.f32.mrf.mxu0
        %v1718 = vadd.f32 %v1689, %v1717
        %1719 = vdwg.mxu0
        %1720 = vmatpush.bf16.msra.mxu0 0
        %1721 = vmatpush.bf16.msra.mxu0 0
        %1722 = vmatpush.bf16.msra.mxu0 0
        %1723 = vmatpush.bf16.msra.mxu0 0
        %1724 = vmatpush.bf16.msra.mxu0 0
        %1725 = vmatpush.bf16.msra.mxu0 0
        %1726 = vmatpush.bf16.msra.mxu0 %v1612
        %1727 = vmatpush.bf16.msra.mxu0 %v1610
        %1728 = vmatmul.bf16.gmra.mxu0 %v1651
        %v1729 = vpop.f32.mrf.mxu0
        %v1730 = vadd.f32 %v1701, %v1729
        %v1731 = vpop.f32.mrf.mxu0
        %v1732 = vadd.f32 %v1703, %v1731
        %1733 = vmatmul.bf16.gmra.mxu0 %v1654
        %v1734 = vpop.f32.mrf.mxu0
        %v1735 = vadd.f32 %v1706, %v1734
        %v1736 = vpop.f32.mrf.mxu0
        %v1737 = vadd.f32 %v1708, %v1736
        %1738 = vmatmul.bf16.gmra.mxu0 %v1657
        %v1739 = vpop.f32.mrf.mxu0
        %v1740 = vadd.f32 %v1711, %v1739
        %v1741 = vpop.f32.mrf.mxu0
        %v1742 = vadd.f32 %v1713, %v1741
        %1743 = vmatmul.bf16.gmra.mxu0 %v1660
        %v1744 = vpop.f32.mrf.mxu0
        %v1745 = vadd.f32 %v1716, %v1744
        %v1746 = vpop.f32.mrf.mxu0
        %v1747 = vadd.f32 %v1718, %v1746
        %1748 = vdwg.mxu0
        %1749 = vmatpush.bf16.msra.mxu0 %v1593
        %1750 = vmatpush.bf16.msra.mxu0 %v1591
        %1751 = vmatpush.bf16.msra.mxu0 %v1589
        %1752 = vmatpush.bf16.msra.mxu0 %v1587
        %1753 = vmatpush.bf16.msra.mxu0 %v1585
        %1754 = vmatpush.bf16.msra.mxu0 %v1583
        %1755 = vmatpush.bf16.msra.mxu0 %v1581
        %1756 = vmatpush.bf16.msra.mxu0 %v1579
        %1757 = vmatmul.bf16.gmra.mxu0 %v1450
        %v1758 = vpop.f32.mrf.mxu0
        %v1759 = vadd.f32 %v1373, %v1758
        %v1760 = vpop.f32.mrf.mxu0
        %v1761 = vadd.f32 %v1378, %v1760
        %1762 = vmatmul.bf16.gmra.mxu0 %v1453
        %v1763 = vpop.f32.mrf.mxu0
        %v1764 = vadd.f32 %v1383, %v1763
        %v1765 = vpop.f32.mrf.mxu0
        %v1766 = vadd.f32 %v1388, %v1765
        %1767 = vmatmul.bf16.gmra.mxu0 %v1456
        %v1768 = vpop.f32.mrf.mxu0
        %v1769 = vadd.f32 %v1393, %v1768
        %v1770 = vpop.f32.mrf.mxu0
        %v1771 = vadd.f32 %v1398, %v1770
        %1772 = vmatmul.bf16.gmra.mxu0 %v1459
        %v1773 = vpop.f32.mrf.mxu0
        %v1774 = vadd.f32 %v1403, %v1773
        %v1775 = vpop.f32.mrf.mxu0
        %v1776 = vadd.f32 %v1408, %v1775
        %1777 = vdwg.mxu0
        %1778 = vmatpush.bf16.msra.mxu0 %v1609
        %1779 = vmatpush.bf16.msra.mxu0 %v1607
        %1780 = vmatpush.bf16.msra.mxu0 %v1605
        %1781 = vmatpush.bf16.msra.mxu0 %v1603
        %1782 = vmatpush.bf16.msra.mxu0 %v1601
        %1783 = vmatpush.bf16.msra.mxu0 %v1599
        %1784 = vmatpush.bf16.msra.mxu0 %v1597
        %1785 = vmatpush.bf16.msra.mxu0 %v1595
        %1786 = vmatmul.bf16.gmra.mxu0 %v1451
        %v1787 = vpop.f32.mrf.mxu0
        %v1788 = vadd.f32 %v1759, %v1787
        %v1789 = vpop.f32.mrf.mxu0
        %v1790 = vadd.f32 %v1761, %v1789
        %1791 = vmatmul.bf16.gmra.mxu0 %v1454
        %v1792 = vpop.f32.mrf.mxu0
        %v1793 = vadd.f32 %v1764, %v1792
        %v1794 = vpop.f32.mrf.mxu0
        %v1795 = vadd.f32 %v1766, %v1794
        %1796 = vmatmul.bf16.gmra.mxu0 %v1457
        %v1797 = vpop.f32.mrf.mxu0
        %v1798 = vadd.f32 %v1769, %v1797
        %v1799 = vpop.f32.mrf.mxu0
        %v1800 = vadd.f32 %v1771, %v1799
        %1801 = vmatmul.bf16.gmra.mxu0 %v1460
        %v1802 = vpop.f32.mrf.mxu0
        %v1803 = vadd.f32 %v1774, %v1802
        %v1804 = vpop.f32.mrf.mxu0
        %v1805 = vadd.f32 %v1776, %v1804
        %1806 = vdwg.mxu0
        %1807 = vmatpush.bf16.msra.mxu0 0
        %1808 = vmatpush.bf16.msra.mxu0 0
        %1809 = vmatpush.bf16.msra.mxu0 0
        %1810 = vmatpush.bf16.msra.mxu0 0
        %1811 = vmatpush.bf16.msra.mxu0 0
        %1812 = vmatpush.bf16.msra.mxu0 0
        %1813 = vmatpush.bf16.msra.mxu0 %v1613
        %1814 = vmatpush.bf16.msra.mxu0 %v1611
        %1815 = vmatmul.bf16.gmra.mxu0 %v1651
        %v1816 = vpop.f32.mrf.mxu0
        %v1817 = vadd.f32 %v1788, %v1816
        %v1818 = vpop.f32.mrf.mxu0
        %v1819 = vadd.f32 %v1790, %v1818
        %1820 = vmatmul.bf16.gmra.mxu0 %v1654
        %v1821 = vpop.f32.mrf.mxu0
        %v1822 = vadd.f32 %v1793, %v1821
        %v1823 = vpop.f32.mrf.mxu0
        %v1824 = vadd.f32 %v1795, %v1823
        %1825 = vmatmul.bf16.gmra.mxu0 %v1657
        %v1826 = vpop.f32.mrf.mxu0
        %v1827 = vadd.f32 %v1798, %v1826
        %v1828 = vpop.f32.mrf.mxu0
        %v1829 = vadd.f32 %v1800, %v1828
        %1830 = vmatmul.bf16.gmra.mxu0 %v1660
        %v1831 = vpop.f32.mrf.mxu0
        %v1832 = vadd.f32 %v1803, %v1831
        %v1833 = vpop.f32.mrf.mxu0
        %v1834 = vadd.f32 %v1805, %v1833
        %1835 = vdwg.mxu0
        %v1836 = vmul.f32 %v1730, %v1740
        %v1837 = vmul.f32 %v1817, %v1827
        %v1838 = vmul.f32 %v1732, %v1742
        %v1839 = vmul.f32 %v1819, %v1829
        %v1840 = vmul.f32 %v1735, %v1745
        %v1841 = vmul.f32 %v1822, %v1832
        %v1842 = vmul.f32 %v1737, %v1747
        %v1843 = vmul.f32 %v1824, %v1834
        %v1844 = vadd.f32 %v1836, %v1837
        %1845 = vadd.xlane.f32.xlu0 %v1844
        %v1846 = vpop.xlane.xlu0 %1845
        %v1847 = vadd.f32 %v1838, %v1839
        %1848 = vadd.xlane.f32.xlu0 %v1847
        %v1849 = vpop.xlane.xlu0 %1848
        %v1850 = vadd.f32 %v1840, %v1841
        %1851 = vadd.xlane.f32.xlu0 %v1850
        %v1852 = vpop.xlane.xlu0 %1851
        %v1853 = vadd.f32 %v1842, %v1843
        %1854 = vadd.xlane.f32.xlu0 %v1853
        %v1855 = vpop.xlane.xlu0 %1854
        %v1856 = vmul.f32 %v1836, %v1836
        %v1857 = vmul.f32 %v1837, %v1837
        %v1858 = vmul.f32 %v1838, %v1838
        %v1859 = vmul.f32 %v1839, %v1839
        %v1860 = vmul.f32 %v1840, %v1840
        %v1861 = vmul.f32 %v1841, %v1841
        %v1862 = vmul.f32 %v1842, %v1842
        %v1863 = vmul.f32 %v1843, %v1843
        %v1864 = vadd.f32 %v1856, %v1857
        %1865 = vadd.xlane.f32.xlu0 %v1864
        %v1866 = vpop.xlane.xlu0 %1865
        %v1867 = vadd.f32 %v1858, %v1859
        %1868 = vadd.xlane.f32.xlu0 %v1867
        %v1869 = vpop.xlane.xlu0 %1868
        %v1870 = vadd.f32 %v1860, %v1861
        %1871 = vadd.xlane.f32.xlu0 %v1870
        %v1872 = vpop.xlane.xlu0 %1871
        %v1873 = vadd.f32 %v1862, %v1863
        %1874 = vadd.xlane.f32.xlu0 %v1873
        %v1875 = vpop.xlane.xlu0 %1874
        %vm1876 = vcmask 3072
        %v1877 = vsel %vm1876, %v1846, 0.0
        %1878 = vadd.xlane.f32.xlu0 %v1877
        %v1879 = vpop.xlane.xlu0 %1878
        %v1880 = vrot.slane %v1879, 4
        %v1881 = vadd.f32 %v1879, %v1880
        %v1882 = vrot.slane %v1881, 2
        %v1883 = vadd.f32 %v1881, %v1882
        %v1884 = vrot.slane %v1883, 1
        %v1885 = vadd.f32 %v1883, %v1884
        %s1886 = vtos %v1885
        %s1887 = smul.f32 %s1886, 0.0009765625
        %v1888 = vsel %vm1876, %v1866, 0.0
        %1889 = vadd.xlane.f32.xlu0 %v1888
        %v1890 = vpop.xlane.xlu0 %1889
        %v1891 = vrot.slane %v1890, 4
        %v1892 = vadd.f32 %v1890, %v1891
        %v1893 = vrot.slane %v1892, 2
        %v1894 = vadd.f32 %v1892, %v1893
        %v1895 = vrot.slane %v1894, 1
        %v1896 = vadd.f32 %v1894, %v1895
        %s1897 = vtos %v1896
        %s1898 = smul.f32 %s1897, 0.0009765625
        %s1899 = smul.f32 %s1887, %s1887
        %s1900 = ssub.f32 %s1898, %s1899
        %s1901 = smax.f32 %s1900, 0.0
        %v1902 = vadd.f32 %v1836, 0.0
        %v1903 = vadd.f32 %v1837, 0.0
        %s1904 = sadd.f32 %s1901, 1e-05
        %v1905 = vstv %s1904
        %v1906 = vrsqrt.pop %v1905
        %v1907 = vmul.f32 %v1906, %v1905
        %v1908 = vmul.f32 %v1907, %v1906
        %v1909 = vmul.f32 0.5, %v1908
        %v1910 = vsub.f32 1.5, %v1909
        %v1911 = vmul.f32 %v1906, %v1910
        %vm1912 = vweird.f32 %v1905
        %vm1913 = vweird.f32 %v1906
        %vm1914 = vmor %vm1912, %vm1913
        %v1915 = vsel %vm1914, %v1906, %v1911
        %s1916 = vtos %v1915
        %s1917 = smul.f32 %s1916, 0.1773
        %v1918 = vstv %s1887
        %v1919 = vsub.f32 %v1836, %v1918
        %v1920 = vsub.f32 %v1837, %v1918
        %v1921 = vstv %s1917
        %v1922 = vmul.f32 %v1921, %v1919
        %v1923 = vmul.f32 %v1921, %v1920
        %v1924 = vadd.f32 %v1902, %v1922
        %v1925 = vadd.f32 %v1903, %v1923
        %v1927 = vrot.slane %v1846, 4
        %v1929 = vsel %vm1876, %v1927, 0.0
        %1930 = vadd.xlane.f32.xlu0 %v1929
        %v1931 = vpop.xlane.xlu0 %1930
        %v1932 = vrot.slane %v1931, 4
        %v1933 = vadd.f32 %v1931, %v1932
        %v1934 = vrot.slane %v1933, 2
        %v1935 = vadd.f32 %v1933, %v1934
        %v1936 = vrot.slane %v1935, 1
        %v1937 = vadd.f32 %v1935, %v1936
        %s1938 = vtos %v1937
        %s1939 = smul.f32 %s1938, 0.0009765625
        %v1941 = vrot.slane %v1866, 4
        %v1943 = vsel %vm1876, %v1941, 0.0
        %1944 = vadd.xlane.f32.xlu0 %v1943
        %v1945 = vpop.xlane.xlu0 %1944
        %v1946 = vrot.slane %v1945, 4
        %v1947 = vadd.f32 %v1945, %v1946
        %v1948 = vrot.slane %v1947, 2
        %v1949 = vadd.f32 %v1947, %v1948
        %v1950 = vrot.slane %v1949, 1
        %v1951 = vadd.f32 %v1949, %v1950
        %s1952 = vtos %v1951
        %s1953 = smul.f32 %s1952, 0.0009765625
        %s1954 = smul.f32 %s1939, %s1939
        %s1955 = ssub.f32 %s1953, %s1954
        %s1956 = smax.f32 %s1955, 0.0
        %v1959 = vrot.slane %v1836, 4
        %v1960 = vrot.slane %v1837, 4
        %v1963 = vadd.f32 %v1924, %v1959
        %v1964 = vadd.f32 %v1925, %v1960
        %s1965 = sadd.f32 %s1956, 1e-05
        %v1966 = vstv %s1965
        %v1967 = vrsqrt.pop %v1966
        %v1968 = vmul.f32 %v1967, %v1966
        %v1969 = vmul.f32 %v1968, %v1967
        %v1970 = vmul.f32 0.5, %v1969
        %v1971 = vsub.f32 1.5, %v1970
        %v1972 = vmul.f32 %v1967, %v1971
        %vm1973 = vweird.f32 %v1966
        %vm1974 = vweird.f32 %v1967
        %vm1975 = vmor %vm1973, %vm1974
        %v1976 = vsel %vm1975, %v1967, %v1972
        %s1977 = vtos %v1976
        %s1978 = smul.f32 %s1977, 0.1773
        %v1979 = vstv %s1939
        %v1980 = vsub.f32 %v1836, %v1979
        %v1981 = vsub.f32 %v1837, %v1979
        %v1982 = vstv %s1978
        %v1983 = vmul.f32 %v1982, %v1980
        %v1984 = vmul.f32 %v1982, %v1981
        %v1987 = vrot.slane %v1983, 4
        %v1988 = vrot.slane %v1984, 4
        %v1991 = vadd.f32 %v1963, %v1987
        %v1992 = vadd.f32 %v1964, %v1988
        %v1993 = vsel %vm1876, %v1849, 0.0
        %1994 = vadd.xlane.f32.xlu0 %v1993
        %v1995 = vpop.xlane.xlu0 %1994
        %v1996 = vrot.slane %v1995, 4
        %v1997 = vadd.f32 %v1995, %v1996
        %v1998 = vrot.slane %v1997, 2
        %v1999 = vadd.f32 %v1997, %v1998
        %v2000 = vrot.slane %v1999, 1
        %v2001 = vadd.f32 %v1999, %v2000
        %s2002 = vtos %v2001
        %s2003 = smul.f32 %s2002, 0.0009765625
        %v2004 = vsel %vm1876, %v1869, 0.0
        %2005 = vadd.xlane.f32.xlu0 %v2004
        %v2006 = vpop.xlane.xlu0 %2005
        %v2007 = vrot.slane %v2006, 4
        %v2008 = vadd.f32 %v2006, %v2007
        %v2009 = vrot.slane %v2008, 2
        %v2010 = vadd.f32 %v2008, %v2009
        %v2011 = vrot.slane %v2010, 1
        %v2012 = vadd.f32 %v2010, %v2011
        %s2013 = vtos %v2012
        %s2014 = smul.f32 %s2013, 0.0009765625
        %s2015 = smul.f32 %s2003, %s2003
        %s2016 = ssub.f32 %s2014, %s2015
        %s2017 = smax.f32 %s2016, 0.0
        %v2018 = vadd.f32 %v1991, %v1838
        %v2019 = vadd.f32 %v1992, %v1839
        %s2020 = sadd.f32 %s2017, 1e-05
        %v2021 = vstv %s2020
        %v2022 = vrsqrt.pop %v2021
        %v2023 = vmul.f32 %v2022, %v2021
        %v2024 = vmul.f32 %v2023, %v2022
        %v2025 = vmul.f32 0.5, %v2024
        %v2026 = vsub.f32 1.5, %v2025
        %v2027 = vmul.f32 %v2022, %v2026
        %vm2028 = vweird.f32 %v2021
        %vm2029 = vweird.f32 %v2022
        %vm2030 = vmor %vm2028, %vm2029
        %v2031 = vsel %vm2030, %v2022, %v2027
        %s2032 = vtos %v2031
        %s2033 = smul.f32 %s2032, 0.1773
        %v2034 = vstv %s2003
        %v2035 = vsub.f32 %v1838, %v2034
        %v2036 = vsub.f32 %v1839, %v2034
        %v2037 = vstv %s2033
        %v2038 = vmul.f32 %v2037, %v2035
        %v2039 = vmul.f32 %v2037, %v2036
        %v2040 = vadd.f32 %v2018, %v2038
        %v2041 = vadd.f32 %v2019, %v2039
        %v2043 = vrot.slane %v1849, 4
        %v2045 = vsel %vm1876, %v2043, 0.0
        %2046 = vadd.xlane.f32.xlu0 %v2045
        %v2047 = vpop.xlane.xlu0 %2046
        %v2048 = vrot.slane %v2047, 4
        %v2049 = vadd.f32 %v2047, %v2048
        %v2050 = vrot.slane %v2049, 2
        %v2051 = vadd.f32 %v2049, %v2050
        %v2052 = vrot.slane %v2051, 1
        %v2053 = vadd.f32 %v2051, %v2052
        %s2054 = vtos %v2053
        %s2055 = smul.f32 %s2054, 0.0009765625
        %v2057 = vrot.slane %v1869, 4
        %v2059 = vsel %vm1876, %v2057, 0.0
        %2060 = vadd.xlane.f32.xlu0 %v2059
        %v2061 = vpop.xlane.xlu0 %2060
        %v2062 = vrot.slane %v2061, 4
        %v2063 = vadd.f32 %v2061, %v2062
        %v2064 = vrot.slane %v2063, 2
        %v2065 = vadd.f32 %v2063, %v2064
        %v2066 = vrot.slane %v2065, 1
        %v2067 = vadd.f32 %v2065, %v2066
        %s2068 = vtos %v2067
        %s2069 = smul.f32 %s2068, 0.0009765625
        %s2070 = smul.f32 %s2055, %s2055
        %s2071 = ssub.f32 %s2069, %s2070
        %s2072 = smax.f32 %s2071, 0.0
        %v2075 = vrot.slane %v1838, 4
        %v2076 = vrot.slane %v1839, 4
        %v2079 = vadd.f32 %v2040, %v2075
        %v2080 = vadd.f32 %v2041, %v2076
        %s2081 = sadd.f32 %s2072, 1e-05
        %v2082 = vstv %s2081
        %v2083 = vrsqrt.pop %v2082
        %v2084 = vmul.f32 %v2083, %v2082
        %v2085 = vmul.f32 %v2084, %v2083
        %v2086 = vmul.f32 0.5, %v2085
        %v2087 = vsub.f32 1.5, %v2086
        %v2088 = vmul.f32 %v2083, %v2087
        %vm2089 = vweird.f32 %v2082
        %vm2090 = vweird.f32 %v2083
        %vm2091 = vmor %vm2089, %vm2090
        %v2092 = vsel %vm2091, %v2083, %v2088
        %s2093 = vtos %v2092
        %s2094 = smul.f32 %s2093, 0.1773
        %v2095 = vstv %s2055
        %v2096 = vsub.f32 %v1838, %v2095
        %v2097 = vsub.f32 %v1839, %v2095
        %v2098 = vstv %s2094
        %v2099 = vmul.f32 %v2098, %v2096
        %v2100 = vmul.f32 %v2098, %v2097
        %v2103 = vrot.slane %v2099, 4
        %v2104 = vrot.slane %v2100, 4
        %v2107 = vadd.f32 %v2079, %v2103
        %v2108 = vadd.f32 %v2080, %v2104
        %v2109 = vsel %vm1876, %v1852, 0.0
        %2110 = vadd.xlane.f32.xlu0 %v2109
        %v2111 = vpop.xlane.xlu0 %2110
        %v2112 = vrot.slane %v2111, 4
        %v2113 = vadd.f32 %v2111, %v2112
        %v2114 = vrot.slane %v2113, 2
        %v2115 = vadd.f32 %v2113, %v2114
        %v2116 = vrot.slane %v2115, 1
        %v2117 = vadd.f32 %v2115, %v2116
        %s2118 = vtos %v2117
        %s2119 = smul.f32 %s2118, 0.0009765625
        %v2120 = vsel %vm1876, %v1872, 0.0
        %2121 = vadd.xlane.f32.xlu0 %v2120
        %v2122 = vpop.xlane.xlu0 %2121
        %v2123 = vrot.slane %v2122, 4
        %v2124 = vadd.f32 %v2122, %v2123
        %v2125 = vrot.slane %v2124, 2
        %v2126 = vadd.f32 %v2124, %v2125
        %v2127 = vrot.slane %v2126, 1
        %v2128 = vadd.f32 %v2126, %v2127
        %s2129 = vtos %v2128
        %s2130 = smul.f32 %s2129, 0.0009765625
        %s2131 = smul.f32 %s2119, %s2119
        %s2132 = ssub.f32 %s2130, %s2131
        %s2133 = smax.f32 %s2132, 0.0
        %v2134 = vadd.f32 %v2107, %v1840
        %v2135 = vadd.f32 %v2108, %v1841
        %s2136 = sadd.f32 %s2133, 1e-05
        %v2137 = vstv %s2136
        %v2138 = vrsqrt.pop %v2137
        %v2139 = vmul.f32 %v2138, %v2137
        %v2140 = vmul.f32 %v2139, %v2138
        %v2141 = vmul.f32 0.5, %v2140
        %v2142 = vsub.f32 1.5, %v2141
        %v2143 = vmul.f32 %v2138, %v2142
        %vm2144 = vweird.f32 %v2137
        %vm2145 = vweird.f32 %v2138
        %vm2146 = vmor %vm2144, %vm2145
        %v2147 = vsel %vm2146, %v2138, %v2143
        %s2148 = vtos %v2147
        %s2149 = smul.f32 %s2148, 0.1773
        %v2150 = vstv %s2119
        %v2151 = vsub.f32 %v1840, %v2150
        %v2152 = vsub.f32 %v1841, %v2150
        %v2153 = vstv %s2149
        %v2154 = vmul.f32 %v2153, %v2151
        %v2155 = vmul.f32 %v2153, %v2152
        %v2156 = vadd.f32 %v2134, %v2154
        %v2157 = vadd.f32 %v2135, %v2155
        %v2159 = vrot.slane %v1852, 4
        %v2161 = vsel %vm1876, %v2159, 0.0
        %2162 = vadd.xlane.f32.xlu0 %v2161
        %v2163 = vpop.xlane.xlu0 %2162
        %v2164 = vrot.slane %v2163, 4
        %v2165 = vadd.f32 %v2163, %v2164
        %v2166 = vrot.slane %v2165, 2
        %v2167 = vadd.f32 %v2165, %v2166
        %v2168 = vrot.slane %v2167, 1
        %v2169 = vadd.f32 %v2167, %v2168
        %s2170 = vtos %v2169
        %s2171 = smul.f32 %s2170, 0.0009765625
        %v2173 = vrot.slane %v1872, 4
        %v2175 = vsel %vm1876, %v2173, 0.0
        %2176 = vadd.xlane.f32.xlu0 %v2175
        %v2177 = vpop.xlane.xlu0 %2176
        %v2178 = vrot.slane %v2177, 4
        %v2179 = vadd.f32 %v2177, %v2178
        %v2180 = vrot.slane %v2179, 2
        %v2181 = vadd.f32 %v2179, %v2180
        %v2182 = vrot.slane %v2181, 1
        %v2183 = vadd.f32 %v2181, %v2182
        %s2184 = vtos %v2183
        %s2185 = smul.f32 %s2184, 0.0009765625
        %s2186 = smul.f32 %s2171, %s2171
        %s2187 = ssub.f32 %s2185, %s2186
        %s2188 = smax.f32 %s2187, 0.0
        %v2191 = vrot.slane %v1840, 4
        %v2192 = vrot.slane %v1841, 4
        %v2195 = vadd.f32 %v2156, %v2191
        %v2196 = vadd.f32 %v2157, %v2192
        %s2197 = sadd.f32 %s2188, 1e-05
        %v2198 = vstv %s2197
        %v2199 = vrsqrt.pop %v2198
        %v2200 = vmul.f32 %v2199, %v2198
        %v2201 = vmul.f32 %v2200, %v2199
        %v2202 = vmul.f32 0.5, %v2201
        %v2203 = vsub.f32 1.5, %v2202
        %v2204 = vmul.f32 %v2199, %v2203
        %vm2205 = vweird.f32 %v2198
        %vm2206 = vweird.f32 %v2199
        %vm2207 = vmor %vm2205, %vm2206
        %v2208 = vsel %vm2207, %v2199, %v2204
        %s2209 = vtos %v2208
        %s2210 = smul.f32 %s2209, 0.1773
        %v2211 = vstv %s2171
        %v2212 = vsub.f32 %v1840, %v2211
        %v2213 = vsub.f32 %v1841, %v2211
        %v2214 = vstv %s2210
        %v2215 = vmul.f32 %v2214, %v2212
        %v2216 = vmul.f32 %v2214, %v2213
        %v2219 = vrot.slane %v2215, 4
        %v2220 = vrot.slane %v2216, 4
        %v2223 = vadd.f32 %v2195, %v2219
        %v2224 = vadd.f32 %v2196, %v2220
        %v2225 = vsel %vm1876, %v1855, 0.0
        %2226 = vadd.xlane.f32.xlu0 %v2225
        %v2227 = vpop.xlane.xlu0 %2226
        %v2228 = vrot.slane %v2227, 4
        %v2229 = vadd.f32 %v2227, %v2228
        %v2230 = vrot.slane %v2229, 2
        %v2231 = vadd.f32 %v2229, %v2230
        %v2232 = vrot.slane %v2231, 1
        %v2233 = vadd.f32 %v2231, %v2232
        %s2234 = vtos %v2233
        %s2235 = smul.f32 %s2234, 0.0009765625
        %v2236 = vsel %vm1876, %v1875, 0.0
        %2237 = vadd.xlane.f32.xlu0 %v2236
        %v2238 = vpop.xlane.xlu0 %2237
        %v2239 = vrot.slane %v2238, 4
        %v2240 = vadd.f32 %v2238, %v2239
        %v2241 = vrot.slane %v2240, 2
        %v2242 = vadd.f32 %v2240, %v2241
        %v2243 = vrot.slane %v2242, 1
        %v2244 = vadd.f32 %v2242, %v2243
        %s2245 = vtos %v2244
        %s2246 = smul.f32 %s2245, 0.0009765625
        %s2247 = smul.f32 %s2235, %s2235
        %s2248 = ssub.f32 %s2246, %s2247
        %s2249 = smax.f32 %s2248, 0.0
        %v2250 = vadd.f32 %v2223, %v1842
        %v2251 = vadd.f32 %v2224, %v1843
        %s2252 = sadd.f32 %s2249, 1e-05
        %v2253 = vstv %s2252
        %v2254 = vrsqrt.pop %v2253
        %v2255 = vmul.f32 %v2254, %v2253
        %v2256 = vmul.f32 %v2255, %v2254
        %v2257 = vmul.f32 0.5, %v2256
        %v2258 = vsub.f32 1.5, %v2257
        %v2259 = vmul.f32 %v2254, %v2258
        %vm2260 = vweird.f32 %v2253
        %vm2261 = vweird.f32 %v2254
        %vm2262 = vmor %vm2260, %vm2261
        %v2263 = vsel %vm2262, %v2254, %v2259
        %s2264 = vtos %v2263
        %s2265 = smul.f32 %s2264, 0.1773
        %v2266 = vstv %s2235
        %v2267 = vsub.f32 %v1842, %v2266
        %v2268 = vsub.f32 %v1843, %v2266
        %v2269 = vstv %s2265
        %v2270 = vmul.f32 %v2269, %v2267
        %v2271 = vmul.f32 %v2269, %v2268
        %v2272 = vadd.f32 %v2250, %v2270
        %v2273 = vadd.f32 %v2251, %v2271
        %v2275 = vrot.slane %v1855, 4
        %v2277 = vsel %vm1876, %v2275, 0.0
        %2278 = vadd.xlane.f32.xlu0 %v2277
        %v2279 = vpop.xlane.xlu0 %2278
        %v2280 = vrot.slane %v2279, 4
        %v2281 = vadd.f32 %v2279, %v2280
        %v2282 = vrot.slane %v2281, 2
        %v2283 = vadd.f32 %v2281, %v2282
        %v2284 = vrot.slane %v2283, 1
        %v2285 = vadd.f32 %v2283, %v2284
        %s2286 = vtos %v2285
        %s2287 = smul.f32 %s2286, 0.0009765625
        %v2289 = vrot.slane %v1875, 4
        %v2291 = vsel %vm1876, %v2289, 0.0
        %2292 = vadd.xlane.f32.xlu0 %v2291
        %v2293 = vpop.xlane.xlu0 %2292
        %v2294 = vrot.slane %v2293, 4
        %v2295 = vadd.f32 %v2293, %v2294
        %v2296 = vrot.slane %v2295, 2
        %v2297 = vadd.f32 %v2295, %v2296
        %v2298 = vrot.slane %v2297, 1
        %v2299 = vadd.f32 %v2297, %v2298
        %s2300 = vtos %v2299
        %s2301 = smul.f32 %s2300, 0.0009765625
        %s2302 = smul.f32 %s2287, %s2287
        %s2303 = ssub.f32 %s2301, %s2302
        %s2304 = smax.f32 %s2303, 0.0
        %v2307 = vrot.slane %v1842, 4
        %v2308 = vrot.slane %v1843, 4
        %v2311 = vadd.f32 %v2272, %v2307
        %v2312 = vadd.f32 %v2273, %v2308
        %s2313 = sadd.f32 %s2304, 1e-05
        %v2314 = vstv %s2313
        %v2315 = vrsqrt.pop %v2314
        %v2316 = vmul.f32 %v2315, %v2314
        %v2317 = vmul.f32 %v2316, %v2315
        %v2318 = vmul.f32 0.5, %v2317
        %v2319 = vsub.f32 1.5, %v2318
        %v2320 = vmul.f32 %v2315, %v2319
        %vm2321 = vweird.f32 %v2314
        %vm2322 = vweird.f32 %v2315
        %vm2323 = vmor %vm2321, %vm2322
        %v2324 = vsel %vm2323, %v2315, %v2320
        %s2325 = vtos %v2324
        %s2326 = smul.f32 %s2325, 0.1773
        %v2327 = vstv %s2287
        %v2328 = vsub.f32 %v1842, %v2327
        %v2329 = vsub.f32 %v1843, %v2327
        %v2330 = vstv %s2326
        %v2331 = vmul.f32 %v2330, %v2328
        %v2332 = vmul.f32 %v2330, %v2329
        %v2335 = vrot.slane %v2331, 4
        %v2336 = vrot.slane %v2332, 4
        %v2339 = vadd.f32 %v2311, %v2335
        %v2340 = vadd.f32 %v2312, %v2336
        %v2343 = vrot.slane %v2340, 4
        %v2344 = vsel %vm566, %v2339, %v2343
        %v2346 = vadd.f32 %v352, %v2344
        %2347 = vst [vmem:[%s305] sm:$0xff] %v2346
        %2349 = vst [vmem:[#allocation1] ss:$2 sm:$0xff] %v2346
        %v2350 = vld.sshfl [vmem:[#allocation1] sm:$0xff pattern:$0x75316420]
        %v2351 = vld.sshfl [vmem:[#allocation1 + $0x8] sm:$0xff pattern:$0x75316420]
        %v2354 = vsel %vm566, %v2350, 0.0
        %v2355 = vsel %vm566, %v2351, 0.0
        %v2356 = vadd.f32 %v2354, %v2355
        %2357 = vadd.xlane.f32.xlu0 %v2356
        %v2358 = vpop.xlane.xlu0 %2357
        %v2359 = vrot.slane %v2358, 4
        %v2360 = vadd.f32 %v2358, %v2359
        %v2361 = vrot.slane %v2360, 2
        %v2362 = vadd.f32 %v2360, %v2361
        %v2363 = vrot.slane %v2362, 1
        %v2364 = vadd.f32 %v2362, %v2363
        %s2365 = vtos %v2364
        %v2366 = vstv %s2365
        %2367 = vst [vmem:[%s308] sm:$0x1] %v2366
        %p2368 = scmp.lt.s32.totalorder %s21, 1
        %s2369 = scalar_select %p2368, %s21, 1
        %s2370 = smul.addr %s2369, 2
        %s2371 = smul.addr %s2370, 4
        %s2372 = scalar_lea.vmem %s5, %s2371
        %p2373 = scmp.lt.s32.totalorder %s21, 1
        %s2374 = scalar_select %p2373, %s21, 1
        %s2375 = scalar_lea.vmem %s6, %s2374
        // Predicated region
        $region53: #{_lambda_.7} parent=39 // pred_check
          %p2376 = pneg %p149
        $region54: #{_lambda_.7} parent=39 // pred_check_branch
          %2378 = sbr.rel (%p2376) target = $region56
        $region55: #{_lambda_.7} parent=39 // pred_region
          _
        $region56: #{_lambda_.7} parent=39 // pred_fallthru
          _
        // Predicated region
        $region57: #{_lambda_.7} parent=39 // pred_check
          %p2379 = pneg %p175
        $region58: #{_lambda_.7} parent=39 // pred_check_branch
          %2381 = sbr.rel (%p2379) target = $region60
        $region59: #{_lambda_.7} parent=39 // pred_region
          _
        $region60: #{_lambda_.7} parent=39 // pred_fallthru
          _
      $region40: #{_lambda_.7} parent=5 // pred_fallthru
        _
      %p2382 = scmp.le.s32.totalorder 2, %s16
      // Predicated region
      $region61: #{_lambda_.7} parent=5 // pred_check
        %p2383 = pneg %p2382
      $region62: #{_lambda_.7} parent=5 // pred_check_branch
        %2385 = sbr.rel (%p2383) target = $region64
      $region63: #{_lambda_.7} parent=5 // pred_region
        %s2386 = ssub.s32 %s16, 2
        // Predicated region
        $region65: #{_lambda_.7} parent=63 // pred_check
          %p2387 = pneg %p155
        $region66: #{_lambda_.7} parent=63 // pred_check_branch
          %2389 = sbr.rel (%p2387) target = $region68
        $region67: #{_lambda_.7} parent=63 // pred_region
          %p2390 = scmp.lt.s32.totalorder %s22, 1
          %s2391 = scalar_select %p2390, %s22, 1
          %s2392 = smul.addr %s2391, 2
          %s2393 = smul.addr %s2392, 4
          %s2394 = scalar_lea.vmem %s5, %s2393
        $region68: #{_lambda_.7} parent=63 // pred_fallthru
          _
        // Predicated region
        $region69: #{_lambda_.7} parent=63 // pred_check
          %p2395 = pneg %p181
        $region70: #{_lambda_.7} parent=63 // pred_check_branch
          %2397 = sbr.rel (%p2395) target = $region72
        $region71: #{_lambda_.7} parent=63 // pred_region
          %p2398 = scmp.lt.s32.totalorder %s22, 1
          %s2399 = scalar_select %p2398, %s22, 1
          %s2400 = scalar_lea.vmem %s6, %s2399
        $region72: #{_lambda_.7} parent=63 // pred_fallthru
          _
      $region64: #{_lambda_.7} parent=5 // pred_fallthru
        _
    $region6: #{_lambda_.7} parent=1 // loop_footer
      %s20 = sadd.s32 1, %s16
    $region7: #{_lambda_.7} parent=1 // loop_footer_branch
      %15 = sbr.rel target = $region3
    $region8: #{_lambda_.7} parent=1 // loop_exit
      _
    %2401 = vsyncpa [#allocation4], 1
    %s2402 = scalar_lea.sflag [#allocation4], 1
    %2403 = vsyncpa %s2402, 1
    %2404 = vsyncpa [#allocation8], 1
    %2405 = vsyncpa [#allocation5], 1
    %s2406 = scalar_lea.sflag [#allocation5], 1
    %2407 = vsyncpa %s2406, 1

// kernel: _lambda_.9
$region0: #{_lambda_.9}
  #allocation0 [shape = 'u32[]', space=smem, size = 0x4, offset = 0x4, fixed_abs, tag = 'smem constant byte address 0x4 - core index']
  #allocation1 [shape = 'u32[72,128]{1,0:T(1,128)}', space=vmem, size = 0x9000, scoped, tag = 'internal scratch']
  #allocation2 [shape = 'bf16[288,256]{1,0:T(8,128)(2,1)}', space=vmem, size = 0x24000, scoped, tag = 'scratch operand']
  %s0 = inlined_call_operand.vmem [shape: f32[3], index: 0, kind: input, shape index: {}]
  %s1 = inlined_call_operand.vmem [shape: f32[2,4,256], index: 1, kind: input, shape index: {}]
  %s2 = inlined_call_operand.vmem [shape: bf16[64,288], index: 2, kind: input, shape index: {}]
  %s3 = inlined_call_operand.vmem [shape: f32[64,1], index: 3, kind: input, shape index: {}]
  %s4 = inlined_call_operand.hbm [shape: f32[9,256], index: 4, kind: input, shape index: {}]
  %s5 = inlined_call_operand.vmem [shape: bf16[256,64], index: 5, kind: input, shape index: {}]
  %s6 = inlined_call_operand.vmem [shape: f32[2,4,64], index: 6, kind: output, shape index: {0}]
  %s7 = inlined_call_operand.hbm [shape: f32[2,1,128], index: 7, kind: output, shape index: {1}]
  %8 = xla_tuple %s6, %s7
  %s9 = sld [smem:[#allocation0]]
  $region73: #{_lambda_.9} parent=0
    _
  %s11 = ssub.s32 1, %s9
  %s12 = scalar_select 0, %s11, %s9
  $region1: #{_lambda_.9} parent=0
    #allocation3 [shape = 'u8[512]{0}', space=smem, size = 0x200, scoped, tag = 'input window, operand 0, single buffered']
    #allocation4 [shape = 's32[2]{0}', space=sflag, size = 0x8, scoped, tag = 'scoped memory for _lambda_.9']
    #allocation5 [shape = 's32[2]{0}', space=sflag, size = 0x8, scoped, tag = 'scoped memory for _lambda_.9']
    #allocation6 [shape = 's32[2]{0}', space=sflag, size = 0x8, scoped, tag = 'scoped memory for _lambda_.9']
    #allocation7 [shape = 'u8[16384]{0}', space=vmem, size = 0x4000, scoped, tag = 'input window, operand 4, single buffered']
    #allocation8 [shape = 'u8[1024]{0}', space=vmem, size = 0x400, scoped, tag = 'output window, operand 1']
    %13 = vsyncpa [#allocation6], 0
    %14 = vsyncpa [#allocation4], 0
    %15 = vsyncpa [#allocation5], 0
    %s16 = scalar_lea.sflag [#allocation5], 1
    %17 = vsyncpa %s16, 0
    loop: start=0, step=1, limit=4
    $region2: #{_lambda_.9} parent=1 // loop_pre_header
      _
    $region3: #{_lambda_.9} parent=1 // loop_header
      %s19 = sphi 0, %s23
      %p20 = scmp.ge.s32.totalorder %s19, 4
      %s27 = sphi 0, %s27
      %s29 = sphi 0, %s27
      %s30 = sphi 0, %s29
      %s44 = sphi 0, %s30
      %s50 = sphi 0, %s52
      %s53 = sphi 0, %s50
      %s54 = sphi 0, %s53
      %s70 = sphi 0, %s54
      %s74 = sphi 0, %s74
      %s76 = sphi 0, %s74
      %s77 = sphi 0, %s76
      %s91 = sphi 0, %s77
      %s95 = sphi 0, %s95
      %s97 = sphi 0, %s95
      %s98 = sphi 0, %s97
      %s112 = sphi 0, %s98
      %s116 = sphi 0, %s116
      %s118 = sphi 0, %s116
      %s119 = sphi 0, %s118
      %s133 = sphi 0, %s119
      %s137 = sphi 0, %s137
      %s139 = sphi 0, %s137
      %s140 = sphi 0, %s139
      %s154 = sphi 0, %s140
      %s160 = sphi 0, %s162
      %s163 = sphi 0, %s160
      %s164 = sphi 0, %s163
      %s180 = sphi 0, %s164
      %s186 = sphi 0, %s188
      %s189 = sphi 0, %s186
      %s190 = sphi 0, %s189
      %s206 = sphi 0, %s190
    $region4: #{_lambda_.9} parent=1 // loop_header_branch
      %22 = sbr.rel (%p20) target = $region8
    $region5: #{_lambda_.9} parent=1 // loop_body
      %s24 = ssub.s32 %s19, 1
      %s25 = ssub.s32 %s19, 2
      %s26 = sadd.s32 %s19, 1
      %s28 = sadd.s32 %s27, 1
      %p31 = scmp.eq.s32.totalorder %s19, 1
      %p32 = scmp.ne.s32.totalorder %s27, %s29
      %p33 = scmp.eq.s32.totalorder %s19, 0
      %p34 = por %p32, %p33
      %p35 = scmp.ne.s32.totalorder %s27, %s29
      %p36 = scmp.eq.s32.totalorder %s24, 1
      %p37 = por %p35, %p36
      %p38 = scmp.ne.s32.totalorder %s29, %s30
      %p39 = scmp.eq.s32.totalorder %s24, 0
      %p40 = por %p38, %p39
      %p41 = scmp.ne.s32.totalorder %s29, %s30
      %p42 = scmp.eq.s32.totalorder %s25, 1
      %p43 = por %p41, %p42
      %p45 = scmp.ne.s32.totalorder %s30, %s44
      %p46 = scmp.eq.s32.totalorder %s25, 0
      %p47 = por %p45, %p46
      %s48 = ssub.s32 %s19, %s26
      %p49 = scmp.eq.s32.totalorder %s48, 0
      %s51 = sadd.s32 %s50, 1
      %s52 = scalar_select %p49, %s50, %s51
      %p55 = pneg %p49
      %p56 = scmp.eq.s32.totalorder %s19, 1
      %p57 = por %p55, %p56
      %p58 = scmp.ne.s32.totalorder %s50, %s53
      %p59 = scmp.eq.s32.totalorder %s19, 0
      %p60 = por %p58, %p59
      %p61 = scmp.ne.s32.totalorder %s50, %s53
      %p62 = scmp.eq.s32.totalorder %s24, 1
      %p63 = por %p61, %p62
      %p64 = scmp.ne.s32.totalorder %s53, %s54
      %p65 = scmp.eq.s32.totalorder %s24, 0
      %p66 = por %p64, %p65
      %p67 = scmp.ne.s32.totalorder %s53, %s54
      %p68 = scmp.eq.s32.totalorder %s25, 1
      %p69 = por %p67, %p68
      %p71 = scmp.ne.s32.totalorder %s54, %s70
      %p72 = scmp.eq.s32.totalorder %s25, 0
      %p73 = por %p71, %p72
      %s75 = sadd.s32 %s74, 1
      %p78 = scmp.eq.s32.totalorder %s19, 1
      %p79 = scmp.ne.s32.totalorder %s74, %s76
      %p80 = scmp.eq.s32.totalorder %s19, 0
      %p81 = por %p79, %p80
      %p82 = scmp.ne.s32.totalorder %s74, %s76
      %p83 = scmp.eq.s32.totalorder %s24, 1
      %p84 = por %p82, %p83
      %p85 = scmp.ne.s32.totalorder %s76, %s77
      %p86 = scmp.eq.s32.totalorder %s24, 0
      %p87 = por %p85, %p86
      %p88 = scmp.ne.s32.totalorder %s76, %s77
      %p89 = scmp.eq.s32.totalorder %s25, 1
      %p90 = por %p88, %p89
      %p92 = scmp.ne.s32.totalorder %s77, %s91
      %p93 = scmp.eq.s32.totalorder %s25, 0
      %p94 = por %p92, %p93
      %s96 = sadd.s32 %s95, 1
      %p99 = scmp.eq.s32.totalorder %s19, 1
      %p100 = scmp.ne.s32.totalorder %s95, %s97
      %p101 = scmp.eq.s32.totalorder %s19, 0
      %p102 = por %p100, %p101
      %p103 = scmp.ne.s32.totalorder %s95, %s97
      %p104 = scmp.eq.s32.totalorder %s24, 1
      %p105 = por %p103, %p104
      %p106 = scmp.ne.s32.totalorder %s97, %s98
      %p107 = scmp.eq.s32.totalorder %s24, 0
      %p108 = por %p106, %p107
      %p109 = scmp.ne.s32.totalorder %s97, %s98
      %p110 = scmp.eq.s32.totalorder %s25, 1
      %p111 = por %p109, %p110
      %p113 = scmp.ne.s32.totalorder %s98, %s112
      %p114 = scmp.eq.s32.totalorder %s25, 0
      %p115 = por %p113, %p114
      %s117 = sadd.s32 %s116, 1
      %p120 = scmp.eq.s32.totalorder %s19, 1
      %p121 = scmp.ne.s32.totalorder %s116, %s118
      %p122 = scmp.eq.s32.totalorder %s19, 0
      %p123 = por %p121, %p122
      %p124 = scmp.ne.s32.totalorder %s116, %s118
      %p125 = scmp.eq.s32.totalorder %s24, 1
      %p126 = por %p124, %p125
      %p127 = scmp.ne.s32.totalorder %s118, %s119
      %p128 = scmp.eq.s32.totalorder %s24, 0
      %p129 = por %p127, %p128
      %p130 = scmp.ne.s32.totalorder %s118, %s119
      %p131 = scmp.eq.s32.totalorder %s25, 1
      %p132 = por %p130, %p131
      %p134 = scmp.ne.s32.totalorder %s119, %s133
      %p135 = scmp.eq.s32.totalorder %s25, 0
      %p136 = por %p134, %p135
      %s138 = sadd.s32 %s137, 1
      %p141 = scmp.eq.s32.totalorder %s19, 1
      %p142 = scmp.ne.s32.totalorder %s137, %s139
      %p143 = scmp.eq.s32.totalorder %s19, 0
      %p144 = por %p142, %p143
      %p145 = scmp.ne.s32.totalorder %s137, %s139
      %p146 = scmp.eq.s32.totalorder %s24, 1
      %p147 = por %p145, %p146
      %p148 = scmp.ne.s32.totalorder %s139, %s140
      %p149 = scmp.eq.s32.totalorder %s24, 0
      %p150 = por %p148, %p149
      %p151 = scmp.ne.s32.totalorder %s139, %s140
      %p152 = scmp.eq.s32.totalorder %s25, 1
      %p153 = por %p151, %p152
      %p155 = scmp.ne.s32.totalorder %s140, %s154
      %p156 = scmp.eq.s32.totalorder %s25, 0
      %p157 = por %p155, %p156
      %s158 = ssub.s32 %s19, %s26
      %p159 = scmp.eq.s32.totalorder %s158, 0
      %s161 = sadd.s32 %s160, 1
      %s162 = scalar_select %p159, %s160, %s161
      %p165 = pneg %p159
      %p166 = scmp.eq.s32.totalorder %s19, 1
      %p167 = por %p165, %p166
      %p168 = scmp.ne.s32.totalorder %s160, %s163
      %p169 = scmp.eq.s32.totalorder %s19, 0
      %p170 = por %p168, %p169
      %p171 = scmp.ne.s32.totalorder %s160, %s163
      %p172 = scmp.eq.s32.totalorder %s24, 1
      %p173 = por %p171, %p172
      %p174 = scmp.ne.s32.totalorder %s163, %s164
      %p175 = scmp.eq.s32.totalorder %s24, 0
      %p176 = por %p174, %p175
      %p177 = scmp.ne.s32.totalorder %s163, %s164
      %p178 = scmp.eq.s32.totalorder %s25, 1
      %p179 = por %p177, %p178
      %p181 = scmp.ne.s32.totalorder %s164, %s180
      %p182 = scmp.eq.s32.totalorder %s25, 0
      %p183 = por %p181, %p182
      %s184 = ssub.s32 %s19, %s26
      %p185 = scmp.eq.s32.totalorder %s184, 0
      %s187 = sadd.s32 %s186, 1
      %s188 = scalar_select %p185, %s186, %s187
      %p191 = pneg %p185
      %p192 = scmp.eq.s32.totalorder %s19, 1
      %p193 = por %p191, %p192
      %p194 = scmp.ne.s32.totalorder %s186, %s189
      %p195 = scmp.eq.s32.totalorder %s19, 0
      %p196 = por %p194, %p195
      %p197 = scmp.ne.s32.totalorder %s186, %s189
      %p198 = scmp.eq.s32.totalorder %s24, 1
      %p199 = por %p197, %p198
      %p200 = scmp.ne.s32.totalorder %s189, %s190
      %p201 = scmp.eq.s32.totalorder %s24, 0
      %p202 = por %p200, %p201
      %p203 = scmp.ne.s32.totalorder %s189, %s190
      %p204 = scmp.eq.s32.totalorder %s25, 1
      %p205 = por %p203, %p204
      %p207 = scmp.ne.s32.totalorder %s190, %s206
      %p208 = scmp.eq.s32.totalorder %s25, 0
      %p209 = por %p207, %p208
      %p210 = scmp.le.s32.totalorder 1, %s19
      %p211 = scmp.lt.s32.totalorder %s19, 3
      %p212 = pnand %p210, %p211
      %p213 = pneg %p212
      // Predicated region
      $region9: #{_lambda_.9} parent=5 // pred_check
        _
      $region10: #{_lambda_.9} parent=5 // pred_check_branch
        %215 = sbr.rel (%p212) target = $region12
      $region11: #{_lambda_.9} parent=5 // pred_region
        %s216 = ssub.s32 %s19, 1
        // Predicated region
        $region13: #{_lambda_.9} parent=11 // pred_check
          %p217 = pneg %p40
        $region14: #{_lambda_.9} parent=11 // pred_check_branch
          %219 = sbr.rel (%p217) target = $region16
        $region15: #{_lambda_.9} parent=11 // pred_region
          %221 = vsyncadd [#allocation6], 0
          %s223 = sshll.u32 %s0, 4
          %s224 = int_to_ptr.vmem [resolvable:$true] %s223
          %226 = dma.vmem_to_smem %s224, 16, [#allocation3], [#allocation6]
        $region16: #{_lambda_.9} parent=11 // pred_fallthru
          _
        // Predicated region
        $region17: #{_lambda_.9} parent=11 // pred_check
          %p227 = pneg %p87
        $region18: #{_lambda_.9} parent=11 // pred_check_branch
          %229 = sbr.rel (%p227) target = $region20
        $region19: #{_lambda_.9} parent=11 // pred_region
          _
        $region20: #{_lambda_.9} parent=11 // pred_fallthru
          _
        // Predicated region
        $region21: #{_lambda_.9} parent=11 // pred_check
          %p230 = pneg %p108
        $region22: #{_lambda_.9} parent=11 // pred_check_branch
          %232 = sbr.rel (%p230) target = $region24
        $region23: #{_lambda_.9} parent=11 // pred_region
          _
        $region24: #{_lambda_.9} parent=11 // pred_fallthru
          _
        // Predicated region
        $region25: #{_lambda_.9} parent=11 // pred_check
          %p233 = pneg %p129
        $region26: #{_lambda_.9} parent=11 // pred_check_branch
          %235 = sbr.rel (%p233) target = $region28
        $region27: #{_lambda_.9} parent=11 // pred_region
          %237 = vsyncadd [#allocation4], 0
          %s238 = sshll.u32 %s4, 4
          %s239 = int_to_ptr.hbm [resolvable:$true] %s238
          %s240 = sshll.u32 [#allocation7], 4
          %s241 = int_to_ptr.vmem [resolvable:$true] %s240
          %246 = dma.hbm_to_vmem [thread:$0]  %s239, 512, %s241, [#allocation4], 256, 256, 16
        $region28: #{_lambda_.9} parent=11 // pred_fallthru
          _
        // Predicated region
        $region29: #{_lambda_.9} parent=11 // pred_check
          %p247 = pneg %p150
        $region30: #{_lambda_.9} parent=11 // pred_check_branch
          %249 = sbr.rel (%p247) target = $region32
        $region31: #{_lambda_.9} parent=11 // pred_region
          _
        $region32: #{_lambda_.9} parent=11 // pred_fallthru
          _
      $region12: #{_lambda_.9} parent=5 // pred_fallthru
        _
      %p250 = scmp.lt.s32.totalorder %s19, 2
      // Predicated region
      $region33: #{_lambda_.9} parent=5 // pred_check
        %p251 = pneg %p250
      $region34: #{_lambda_.9} parent=5 // pred_check_branch
        %253 = sbr.rel (%p251) target = $region36
      $region35: #{_lambda_.9} parent=5 // pred_region
        // Predicated region
        $region37: #{_lambda_.9} parent=35 // pred_check
          %p254 = pneg %p60
        $region38: #{_lambda_.9} parent=35 // pred_check_branch
          %256 = sbr.rel (%p254) target = $region40
        $region39: #{_lambda_.9} parent=35 // pred_region
          %p257 = scmp.lt.s32.totalorder %s19, 1
          %s258 = scalar_select %p257, %s19, 1
          %s259 = smul.addr %s258, 2
          %s260 = smul.addr %s259, 4
          %s261 = scalar_lea.vmem %s1, %s260
        $region40: #{_lambda_.9} parent=35 // pred_fallthru
          _
      $region36: #{_lambda_.9} parent=5 // pred_fallthru
        _
      %p262 = scmp.le.s32.totalorder 1, %s19
      %p263 = scmp.lt.s32.totalorder %s19, 3
      %p264 = pnand %p262, %p263
      %p265 = pneg %p264
      // Predicated region
      $region41: #{_lambda_.9} parent=5 // pred_check
        _
      $region42: #{_lambda_.9} parent=5 // pred_check_branch
        %267 = sbr.rel (%p264) target = $region44
      $region43: #{_lambda_.9} parent=5 // pred_region
        %s268 = ssub.s32 %s19, 1
        // Predicated region
        $region45: #{_lambda_.9} parent=43 // pred_check
          %p269 = pneg %p40
        $region46: #{_lambda_.9} parent=43 // pred_check_branch
          %271 = sbr.rel (%p269) target = $region48
        $region47: #{_lambda_.9} parent=43 // pred_region
          %273 = dma.done [#allocation6], 16
        $region48: #{_lambda_.9} parent=43 // pred_fallthru
          _
        // Predicated region
        $region49: #{_lambda_.9} parent=43 // pred_check
          %p274 = pneg %p129
        $region50: #{_lambda_.9} parent=43 // pred_check_branch
          %276 = sbr.rel (%p274) target = $region52
        $region51: #{_lambda_.9} parent=43 // pred_region
          %278 = dma.done [#allocation4], 512
        $region52: #{_lambda_.9} parent=43 // pred_fallthru
          _
        %279 = sfence
        %p280 = pneg %p40
        %p281 = pneg %p37
        %p282 = scmp.lt.s32.totalorder %s24, 1
        %s283 = scalar_select %p282, %s24, 1
        %s284 = smul.addr %s283, 2
        %s285 = smul.addr %s284, 4
        %s286 = scalar_lea.vmem %s1, %s285
        %p287 = pneg %p66
        %p288 = pneg %p63
        %p289 = pneg %p87
        %p290 = pneg %p84
        %p291 = pneg %p108
        %p292 = pneg %p105
        %p293 = pneg %p129
        %p294 = pneg %p126
        %p295 = pneg %p150
        %p296 = pneg %p147
        %p297 = pneg %p176
        %p298 = pneg %p173
        %p299 = scmp.lt.s32.totalorder %s24, 1
        %s300 = scalar_select %p299, %s24, 1
        %s301 = smul.addr %s300, 4
        %s302 = scalar_lea.vmem %s6, %s301
        %p303 = pneg %p202
        %p304 = pneg %p199
        %s305 = sand.u32 %s189, 1
        %s306 = scalar_lea.sflag [#allocation5], %s305
        %s307 = sand.u32 %s189, 1
        %s308 = scalar_lea.vmem [#allocation8], %s307
        %p309 = scmp.lt.s32.totalorder %s24, 1
        %s310 = scalar_select %p309, %s24, 1
        %s311 = smul.addr %s310, 2
        %s312 = smul.addr %s311, 4
        %s313 = scalar_lea.vmem %s1, %s312
        %p314 = scmp.lt.s32.totalorder %s24, 1
        %s315 = scalar_select %p314, %s24, 1
        %s316 = smul.addr %s315, 4
        %s317 = scalar_lea.vmem %s6, %s316
        %s319 = sld [smem:[#allocation3]]
        %s320 = sld [smem:[#allocation3 + $0x1]]
        %s321 = sld [smem:[#allocation3 + $0x2]]
        %s322 = smul.f32 %s319, 0.00048828125
        %s323 = smax.f32 %s321, 1.0
        %v324 = vstv %s323
        %v325 = vrcp.pop %v324
        %v326 = vmul.f32 %v324, %v325
        %v327 = vsub.f32 1.0, %v326
        %v328 = vmul.f32 %v325, %v327
        %v329 = vadd.f32 %v325, %v328
        %vm330 = vweird.f32 %v324
        %vm331 = vweird.f32 %v325
        %vm332 = vmor %vm330, %vm331
        %v333 = vsel %vm332, %v325, %v329
        %v334 = vand.u32 2147483647, %v324
        %vm335 = vcmp.eq.f32.partialorder %v334, 8.507059e+37
        %v336 = vand.u32 %v324, 2147483648
        %v337 = vor.u32 1.1754944e-38, %v336
        %v338 = vsel %vm335, %v337, %v333
        %s339 = vtos %v338
        %s340 = smul.f32 %s320, %s339
        %s341 = ssub.f32 %s319, %s320
        %s342 = ssub.f32 2048.0, %s321
        %s343 = smax.f32 %s342, 1.0
        %v344 = vstv %s343
        %v345 = vrcp.pop %v344
        %v346 = vmul.f32 %v344, %v345
        %v347 = vsub.f32 1.0, %v346
        %v348 = vmul.f32 %v345, %v347
        %v349 = vadd.f32 %v345, %v348
        %vm350 = vweird.f32 %v344
        %vm351 = vweird.f32 %v345
        %vm352 = vmor %vm350, %vm351
        %v353 = vsel %vm352, %v345, %v349
        %v354 = vand.u32 2147483647, %v344
        %vm355 = vcmp.eq.f32.partialorder %v354, 8.507059e+37
        %v356 = vand.u32 %v344, 2147483648
        %v357 = vor.u32 1.1754944e-38, %v356
        %v358 = vsel %vm355, %v357, %v353
        %s359 = vtos %v358
        %s360 = smul.f32 %s341, %s359
        %v361 = vld [vmem:[%s313] sm:$0xff]
        %v362 = vstv %s340
        %v363 = vsub.f32 %v361, %v362
        %v364 = vmul.f32 %v363, 0.70710677
        %vm365 = vcmp.ge.f32.partialorder %v364, 0.0
        %v366 = vsel %vm365, 1.0, -1.0
        %v367 = vand.u32 2147483647, %v364
        %v368 = vmul.f32 %v367, 0.3275911
        %v369 = vadd.f32 %v368, 1.0
        %v370 = vrcp.pop %v369
        %v371 = vmul.f32 %v370, 1.0614054
        %v372 = vadd.f32 %v371, -1.4531521
        %v373 = vmul.f32 %v372, %v370
        %v374 = vadd.f32 %v373, 1.4214138
        %v375 = vmul.f32 %v374, %v370
        %v376 = vadd.f32 %v375, -0.28449672
        %v377 = vmul.f32 %v376, %v370
        %v378 = vadd.f32 %v377, 0.2548296
        %v379 = vmul.f32 %v378, %v370
        %v380 = vsub.f32 0.0, %v367
        %v381 = vmul.f32 %v380, %v367
        %v382 = vmul.f32 %v381, 1.442695
        %v383 = vpow.pop %v382
        %v384 = vmul.f32 %v379, %v383
        %v385 = vsub.f32 1.0, %v384
        %v386 = vmul.f32 %v366, %v385
        %v387 = vmul.f32 %v363, 0.5
        %v388 = vadd.f32 %v386, 1.0
        %v389 = vmul.f32 %v387, %v388
        %v390 = vmul.f32 %v363, -0.5
        %v391 = vsub.f32 1.0, %v386
        %v392 = vmul.f32 %v390, %v391
        %s393 = ssub.f32 %s340, %s322
        %v394 = vstv %s393
        %v395 = vsub.f32 %v394, %v392
        %v396 = vmul.f32 %v395, 0.5
        %v397 = vmul.f32 %v395, 0.70710677
        %vm398 = vcmp.ge.f32.partialorder %v397, 0.0
        %v399 = vsel %vm398, 1.0, -1.0
        %v400 = vand.u32 2147483647, %v397
        %v401 = vmul.f32 %v400, 0.3275911
        %v402 = vadd.f32 %v401, 1.0
        %v403 = vrcp.pop %v402
        %v404 = vmul.f32 %v403, 1.0614054
        %v405 = vadd.f32 %v404, -1.4531521
        %v406 = vmul.f32 %v405, %v403
        %v407 = vadd.f32 %v406, 1.4214138
        %v408 = vmul.f32 %v407, %v403
        %v409 = vadd.f32 %v408, -0.28449672
        %v410 = vmul.f32 %v409, %v403
        %v411 = vadd.f32 %v410, 0.2548296
        %v412 = vmul.f32 %v411, %v403
        %v413 = vsub.f32 0.0, %v400
        %v414 = vmul.f32 %v413, %v400
        %v415 = vmul.f32 %v414, 1.442695
        %v416 = vpow.pop %v415
        %v417 = vmul.f32 %v412, %v416
        %v418 = vsub.f32 1.0, %v417
        %v419 = vmul.f32 %v399, %v418
        %v420 = vadd.f32 %v419, 1.0
        %v421 = vmul.f32 %v396, %v420
        %s422 = ssub.f32 %s322, %s360
        %v423 = vstv %s322
        %v424 = vsub.f32 %v423, %v361
        %v425 = vmul.f32 %v424, 0.5
        %v426 = vmul.f32 %v424, 0.70710677
        %vm427 = vcmp.ge.f32.partialorder %v426, 0.0
        %v428 = vsel %vm427, 1.0, -1.0
        %v429 = vand.u32 2147483647, %v426
        %v430 = vmul.f32 %v429, 0.3275911
        %v431 = vadd.f32 %v430, 1.0
        %v432 = vrcp.pop %v431
        %v433 = vmul.f32 %v432, 1.0614054
        %v434 = vadd.f32 %v433, -1.4531521
        %v435 = vmul.f32 %v434, %v432
        %v436 = vadd.f32 %v435, 1.4214138
        %v437 = vmul.f32 %v436, %v432
        %v438 = vadd.f32 %v437, -0.28449672
        %v439 = vmul.f32 %v438, %v432
        %v440 = vadd.f32 %v439, 0.2548296
        %v441 = vmul.f32 %v440, %v432
        %v442 = vsub.f32 0.0, %v429
        %v443 = vmul.f32 %v442, %v429
        %v444 = vmul.f32 %v443, 1.442695
        %v445 = vpow.pop %v444
        %v446 = vmul.f32 %v441, %v445
        %v447 = vsub.f32 1.0, %v446
        %v448 = vmul.f32 %v428, %v447
        %v449 = vadd.f32 %v448, 1.0
        %v450 = vmul.f32 %v425, %v449
        %v451 = vstv %s422
        %v452 = vsub.f32 %v451, %v450
        %v453 = vmul.f32 %v452, 0.5
        %v454 = vmul.f32 %v452, 0.70710677
        %vm455 = vcmp.ge.f32.partialorder %v454, 0.0
        %v456 = vsel %vm455, 1.0, -1.0
        %v457 = vand.u32 2147483647, %v454
        %v458 = vmul.f32 %v457, 0.3275911
        %v459 = vadd.f32 %v458, 1.0
        %v460 = vrcp.pop %v459
        %v461 = vmul.f32 %v460, 1.0614054
        %v462 = vadd.f32 %v461, -1.4531521
        %v463 = vmul.f32 %v462, %v460
        %v464 = vadd.f32 %v463, 1.4214138
        %v465 = vmul.f32 %v464, %v460
        %v466 = vadd.f32 %v465, -0.28449672
        %v467 = vmul.f32 %v466, %v460
        %v468 = vadd.f32 %v467, 0.2548296
        %v469 = vmul.f32 %v468, %v460
        %v470 = vsub.f32 0.0, %v457
        %v471 = vmul.f32 %v470, %v457
        %v472 = vmul.f32 %v471, 1.442695
        %v473 = vpow.pop %v472
        %v474 = vmul.f32 %v469, %v473
        %v475 = vsub.f32 1.0, %v474
        %v476 = vmul.f32 %v456, %v475
        %v477 = vadd.f32 %v476, 1.0
        %v478 = vmul.f32 %v453, %v477
        %v479 = vstv %s360
        %v480 = vsub.f32 %v479, %v361
        %v481 = vmul.f32 %v480, 0.5
        %v482 = vmul.f32 %v480, 0.70710677
        %vm483 = vcmp.ge.f32.partialorder %v482, 0.0
        %v484 = vsel %vm483, 1.0, -1.0
        %v485 = vand.u32 2147483647, %v482
        %v486 = vmul.f32 %v485, 0.3275911
        %v487 = vadd.f32 %v486, 1.0
        %v488 = vrcp.pop %v487
        %v489 = vmul.f32 %v488, 1.0614054
        %v490 = vadd.f32 %v489, -1.4531521
        %v491 = vmul.f32 %v490, %v488
        %v492 = vadd.f32 %v491, 1.4214138
        %v493 = vmul.f32 %v492, %v488
        %v494 = vadd.f32 %v493, -0.28449672
        %v495 = vmul.f32 %v494, %v488
        %v496 = vadd.f32 %v495, 0.2548296
        %v497 = vmul.f32 %v496, %v488
        %v498 = vsub.f32 0.0, %v485
        %v499 = vmul.f32 %v498, %v485
        %v500 = vmul.f32 %v499, 1.442695
        %v501 = vpow.pop %v500
        %v502 = vmul.f32 %v497, %v501
        %v503 = vsub.f32 1.0, %v502
        %v504 = vmul.f32 %v484, %v503
        %v505 = vadd.f32 %v504, 1.0
        %v506 = vmul.f32 %v481, %v505
        %v507 = vsub.f32 0.0, %v506
        %v508 = vmul.f32 %v389, 0.17729911
        %v509 = vmul.f32 %v421, 0.17729911
        %v510 = vmul.f32 %v478, 0.17729911
        %v511 = vmul.f32 %v507, 0.17729911
        %v512 = vadd.f32 %v508, %v509
        %v513 = vadd.f32 %v512, %v510
        %v514 = vadd.f32 %v513, %v511
        %v515 = vsub.f32 %v514, %v508
        %v516 = vmul.f32 %v515, 0.33333334
        %v517 = vsub.f32 %v514, %v509
        %v518 = vmul.f32 %v517, 0.33333334
        %v519 = vsub.f32 %v514, %v510
        %v520 = vmul.f32 %v519, 0.33333334
        %v521 = vsub.f32 %v514, %v511
        %v522 = vmul.f32 %v521, 0.33333334
        %524 = vst [vmem:[#allocation1] ss:$2 sm:$0xff] %v508
        %v525 = vld.sshfl [vmem:[#allocation1] sm:$0xff pattern:$0x75316420]
        %v526 = vld.sshfl [vmem:[#allocation1 + $0x8] sm:$0xff pattern:$0x75316420]
        %s530 = scalar_lea.vmem [#allocation1], 1
        %531 = vst [vmem:[%s530] ss:$2 sm:$0xff] %v509
        %v532 = vld.sshfl [vmem:[#allocation1] sm:$0xff pattern:$0x75316420]
        %v533 = vld.sshfl [vmem:[#allocation1 + $0x8] sm:$0xff pattern:$0x75316420]
        %537 = vst [vmem:[#allocation1] ss:$2 sm:$0xff] %v510
        %v538 = vld.sshfl [vmem:[#allocation1] sm:$0xff pattern:$0x75316420]
        %v539 = vld.sshfl [vmem:[#allocation1 + $0x8] sm:$0xff pattern:$0x75316420]
        %s543 = scalar_lea.vmem [#allocation1], 1
        %544 = vst [vmem:[%s543] ss:$2 sm:$0xff] %v511
        %v545 = vld.sshfl [vmem:[#allocation1] sm:$0xff pattern:$0x75316420]
        %v546 = vld.sshfl [vmem:[#allocation1 + $0x8] sm:$0xff pattern:$0x75316420]
        %550 = vst [vmem:[#allocation1] ss:$2 sm:$0xff] %v516
        %v551 = vld.sshfl [vmem:[#allocation1] sm:$0xff pattern:$0x75316420]
        %v552 = vld.sshfl [vmem:[#allocation1 + $0x8] sm:$0xff pattern:$0x75316420]
        %s556 = scalar_lea.vmem [#allocation1], 1
        %557 = vst [vmem:[%s556] ss:$2 sm:$0xff] %v518
        %v558 = vld.sshfl [vmem:[#allocation1] sm:$0xff pattern:$0x75316420]
        %v559 = vld.sshfl [vmem:[#allocation1 + $0x8] sm:$0xff pattern:$0x75316420]
        %563 = vst [vmem:[#allocation1] ss:$2 sm:$0xff] %v520
        %v564 = vld.sshfl [vmem:[#allocation1] sm:$0xff pattern:$0x75316420]
        %v565 = vld.sshfl [vmem:[#allocation1 + $0x8] sm:$0xff pattern:$0x75316420]
        %s569 = scalar_lea.vmem [#allocation1], 1
        %570 = vst [vmem:[%s569] ss:$2 sm:$0xff] %v522
        %v571 = vld.sshfl [vmem:[#allocation1] sm:$0xff pattern:$0x75316420]
        %v572 = vld.sshfl [vmem:[#allocation1 + $0x8] sm:$0xff pattern:$0x75316420]
        %vm575 = vcmask 1043456
        %v576 = vsel %vm575, %v525, %v532
        %v577 = vsel %vm575, %v526, %v533
        %v578 = vsel %vm575, %v538, %v545
        %v579 = vsel %vm575, %v539, %v546
        %v580 = vsel %vm575, %v551, %v558
        %v581 = vsel %vm575, %v552, %v559
        %v582 = vsel %vm575, %v564, %v571
        %v583 = vsel %vm575, %v565, %v572
        %592 = vrot.lane.b32.xlu0 %v576, 17
        %v593 = vpop.permute.xlu0 %592
        %594 = vrot.lane.b32.xlu0 %v577, 17
        %v595 = vpop.permute.xlu0 %594
        %596 = vrot.lane.b32.xlu0 %v578, 17
        %v597 = vpop.permute.xlu0 %596
        %598 = vrot.lane.b32.xlu0 %v579, 17
        %v599 = vpop.permute.xlu0 %598
        %600 = vrot.lane.b32.xlu0 %v580, 17
        %v601 = vpop.permute.xlu0 %600
        %602 = vrot.lane.b32.xlu0 %v581, 17
        %v603 = vpop.permute.xlu0 %602
        %604 = vrot.lane.b32.xlu0 %v582, 17
        %v605 = vpop.permute.xlu0 %604
        %606 = vrot.lane.b32.xlu0 %v583, 17
        %v607 = vpop.permute.xlu0 %606
        %vm608 = vcmask 138240
        %v609 = vsel %vm608, %v593, %v595
        %v610 = vsel %vm608, %v597, %v599
        %v611 = vsel %vm608, %v601, %v603
        %v612 = vsel %vm608, %v605, %v607
        %v625 = vsel %vm608, 0.0, %v593
        %v626 = vsel %vm608, 0.0, %v597
        %v627 = vsel %vm608, 0.0, %v601
        %v628 = vsel %vm608, 0.0, %v605
        %v629 = vsel %vm608, %v595, 0.0
        %v630 = vsel %vm608, %v599, 0.0
        %v631 = vsel %vm608, %v603, 0.0
        %v632 = vsel %vm608, %v607, 0.0
        %v633 = vld [vmem:[#allocation7] ss:$8 sm:$0x3]
        %v635 = vperm.slane %v633, 0
        %v636 = vperm.slane %v633, 1
        %v639 = vmul.f32 %v625, %v635
        %v640 = vmul.f32 %v609, %v636
        %v641 = vmul.f32 %v626, %v635
        %v642 = vmul.f32 %v610, %v636
        %v643 = vmul.f32 %v627, %v635
        %v644 = vmul.f32 %v611, %v636
        %v645 = vmul.f32 %v628, %v635
        %v646 = vmul.f32 %v612, %v636
        %v647 = vpack.c.bf16 %v640, %v639
        %v648 = vpack.c.bf16 %v642, %v641
        %v649 = vpack.c.bf16 %v644, %v643
        %v650 = vpack.c.bf16 %v646, %v645
        %651 = vst [vmem:[#allocation2] sm:$0xff] %v647
        %652 = vst [vmem:[#allocation2 + $0x8] sm:$0xff] %v648
        %653 = vst [vmem:[#allocation2 + $0x10] sm:$0xff] %v649
        %654 = vst [vmem:[#allocation2 + $0x18] sm:$0xff] %v650
        %s655 = scalar_lea.vmem [#allocation7], 1
        %v656 = vld [vmem:[%s655] ss:$8 sm:$0x3]
        %v658 = vperm.slane %v656, 0
        %v659 = vperm.slane %v656, 1
        %660 = vrot.lane.b32.xlu0 %v658, 1
        %v661 = vpop.permute.xlu0 %660
        %662 = vrot.lane.b32.xlu0 %v659, 1
        %v663 = vpop.permute.xlu0 %662
        %vm664 = vcmask 7168
        %v665 = vsel %vm664, %v661, %v663
        %v669 = vmul.f32 %v625, %v661
        %v670 = vmul.f32 %v609, %v665
        %v671 = vmul.f32 %v629, %v663
        %v672 = vmul.f32 %v626, %v661
        %v673 = vmul.f32 %v610, %v665
        %v674 = vmul.f32 %v630, %v663
        %v675 = vmul.f32 %v627, %v661
        %v676 = vmul.f32 %v611, %v665
        %v677 = vmul.f32 %v631, %v663
        %v678 = vmul.f32 %v628, %v661
        %v679 = vmul.f32 %v612, %v665
        %v680 = vmul.f32 %v632, %v663
        %v681 = vpack.c.bf16 %v670, %v669
        %v682 = vpack.c.bf16 %v671, %v671
        %v683 = vpack.c.bf16 %v673, %v672
        %v684 = vpack.c.bf16 %v674, %v674
        %v685 = vpack.c.bf16 %v676, %v675
        %v686 = vpack.c.bf16 %v677, %v677
        %v687 = vpack.c.bf16 %v679, %v678
        %v688 = vpack.c.bf16 %v680, %v680
        %697 = vrot.lane.b32.xlu0 %v681, 127
        %v698 = vpop.permute.xlu0 %697
        %699 = vrot.lane.b32.xlu0 %v682, 127
        %v700 = vpop.permute.xlu0 %699
        %701 = vrot.lane.b32.xlu0 %v683, 127
        %v702 = vpop.permute.xlu0 %701
        %703 = vrot.lane.b32.xlu0 %v684, 127
        %v704 = vpop.permute.xlu0 %703
        %705 = vrot.lane.b32.xlu0 %v685, 127
        %v706 = vpop.permute.xlu0 %705
        %707 = vrot.lane.b32.xlu0 %v686, 127
        %v708 = vpop.permute.xlu0 %707
        %709 = vrot.lane.b32.xlu0 %v687, 127
        %v710 = vpop.permute.xlu0 %709
        %711 = vrot.lane.b32.xlu0 %v688, 127
        %v712 = vpop.permute.xlu0 %711
        %v713 = vrot.slane %v698, 4
        %v714 = vrot.slane %v700, 4
        %v715 = vrot.slane %v702, 4
        %v716 = vrot.slane %v704, 4
        %v717 = vrot.slane %v706, 4
        %v718 = vrot.slane %v708, 4
        %v719 = vrot.slane %v710, 4
        %v720 = vrot.slane %v712, 4
        %vm721 = vcmask 1043456
        %v722 = vsel %vm721, %v713, %v714
        %vm723 = vcmask 1039360
        %v724 = vsel %vm723, %v698, %v722
        %v725 = vsel %vm721, %v715, %v716
        %v726 = vsel %vm723, %v702, %v725
        %v727 = vsel %vm721, %v717, %v718
        %v728 = vsel %vm723, %v706, %v727
        %v729 = vsel %vm721, %v719, %v720
        %v730 = vsel %vm723, %v710, %v729
        %735 = vst [vmem:[#allocation2 + $0x20] sm:$0xff] %v724
        %736 = vst [vmem:[#allocation2 + $0x28] sm:$0xff] %v726
        %737 = vst [vmem:[#allocation2 + $0x30] sm:$0xff] %v728
        %738 = vst [vmem:[#allocation2 + $0x38] sm:$0xff] %v730
        %s739 = scalar_lea.vmem [#allocation7], 2
        %v740 = vld [vmem:[%s739] ss:$8 sm:$0x3]
        %v742 = vperm.slane %v740, 0
        %v743 = vperm.slane %v740, 1
        %744 = vrot.lane.b32.xlu0 %v742, 2
        %v745 = vpop.permute.xlu0 %744
        %746 = vrot.lane.b32.xlu0 %v743, 2
        %v747 = vpop.permute.xlu0 %746
        %vm748 = vcmask 15360
        %v749 = vsel %vm748, %v745, %v747
        %v753 = vmul.f32 %v625, %v745
        %v754 = vmul.f32 %v609, %v749
        %v755 = vmul.f32 %v629, %v747
        %v756 = vmul.f32 %v626, %v745
        %v757 = vmul.f32 %v610, %v749
        %v758 = vmul.f32 %v630, %v747
        %v759 = vmul.f32 %v627, %v745
        %v760 = vmul.f32 %v611, %v749
        %v761 = vmul.f32 %v631, %v747
        %v762 = vmul.f32 %v628, %v745
        %v763 = vmul.f32 %v612, %v749
        %v764 = vmul.f32 %v632, %v747
        %v765 = vpack.c.bf16 %v754, %v753
        %v766 = vpack.c.bf16 %v755, %v755
        %v767 = vpack.c.bf16 %v757, %v756
        %v768 = vpack.c.bf16 %v758, %v758
        %v769 = vpack.c.bf16 %v760, %v759
        %v770 = vpack.c.bf16 %v761, %v761
        %v771 = vpack.c.bf16 %v763, %v762
        %v772 = vpack.c.bf16 %v764, %v764
        %781 = vrot.lane.b32.xlu0 %v765, 126
        %v782 = vpop.permute.xlu0 %781
        %783 = vrot.lane.b32.xlu0 %v766, 126
        %v784 = vpop.permute.xlu0 %783
        %785 = vrot.lane.b32.xlu0 %v767, 126
        %v786 = vpop.permute.xlu0 %785
        %787 = vrot.lane.b32.xlu0 %v768, 126
        %v788 = vpop.permute.xlu0 %787
        %789 = vrot.lane.b32.xlu0 %v769, 126
        %v790 = vpop.permute.xlu0 %789
        %791 = vrot.lane.b32.xlu0 %v770, 126
        %v792 = vpop.permute.xlu0 %791
        %793 = vrot.lane.b32.xlu0 %v771, 126
        %v794 = vpop.permute.xlu0 %793
        %795 = vrot.lane.b32.xlu0 %v772, 126
        %v796 = vpop.permute.xlu0 %795
        %v797 = vrot.slane %v782, 4
        %v798 = vrot.slane %v784, 4
        %v799 = vrot.slane %v786, 4
        %v800 = vrot.slane %v788, 4
        %v801 = vrot.slane %v790, 4
        %v802 = vrot.slane %v792, 4
        %v803 = vrot.slane %v794, 4
        %v804 = vrot.slane %v796, 4
        %v805 = vsel %vm721, %v797, %v798
        %vm806 = vcmask 1031168
        %v807 = vsel %vm806, %v782, %v805
        %v808 = vsel %vm721, %v799, %v800
        %v809 = vsel %vm806, %v786, %v808
        %v810 = vsel %vm721, %v801, %v802
        %v811 = vsel %vm806, %v790, %v810
        %v812 = vsel %vm721, %v803, %v804
        %v813 = vsel %vm806, %v794, %v812
        %818 = vst [vmem:[#allocation2 + $0x40] sm:$0xff] %v807
        %819 = vst [vmem:[#allocation2 + $0x48] sm:$0xff] %v809
        %820 = vst [vmem:[#allocation2 + $0x50] sm:$0xff] %v811
        %821 = vst [vmem:[#allocation2 + $0x58] sm:$0xff] %v813
        %s822 = scalar_lea.vmem [#allocation7], 3
        %v823 = vld [vmem:[%s822] ss:$8 sm:$0x3]
        %v825 = vperm.slane %v823, 0
        %v826 = vperm.slane %v823, 1
        %827 = vrot.lane.b32.xlu0 %v825, 16
        %v828 = vpop.permute.xlu0 %827
        %829 = vrot.lane.b32.xlu0 %v826, 16
        %v830 = vpop.permute.xlu0 %829
        %vm831 = vcmask 130048
        %v832 = vsel %vm831, %v828, %v830
        %v836 = vmul.f32 %v625, %v828
        %v837 = vmul.f32 %v609, %v832
        %v838 = vmul.f32 %v629, %v830
        %v839 = vmul.f32 %v626, %v828
        %v840 = vmul.f32 %v610, %v832
        %v841 = vmul.f32 %v630, %v830
        %v842 = vmul.f32 %v627, %v828
        %v843 = vmul.f32 %v611, %v832
        %v844 = vmul.f32 %v631, %v830
        %v845 = vmul.f32 %v628, %v828
        %v846 = vmul.f32 %v612, %v832
        %v847 = vmul.f32 %v632, %v830
        %v848 = vpack.c.bf16 %v837, %v836
        %v849 = vpack.c.bf16 %v838, %v838
        %v850 = vpack.c.bf16 %v840, %v839
        %v851 = vpack.c.bf16 %v841, %v841
        %v852 = vpack.c.bf16 %v843, %v842
        %v853 = vpack.c.bf16 %v844, %v844
        %v854 = vpack.c.bf16 %v846, %v845
        %v855 = vpack.c.bf16 %v847, %v847
        %864 = vrot.lane.b32.xlu0 %v848, 112
        %v865 = vpop.permute.xlu0 %864
        %866 = vrot.lane.b32.xlu0 %v849, 112
        %v867 = vpop.permute.xlu0 %866
        %868 = vrot.lane.b32.xlu0 %v850, 112
        %v869 = vpop.permute.xlu0 %868
        %870 = vrot.lane.b32.xlu0 %v851, 112
        %v871 = vpop.permute.xlu0 %870
        %872 = vrot.lane.b32.xlu0 %v852, 112
        %v873 = vpop.permute.xlu0 %872
        %874 = vrot.lane.b32.xlu0 %v853, 112
        %v875 = vpop.permute.xlu0 %874
        %876 = vrot.lane.b32.xlu0 %v854, 112
        %v877 = vpop.permute.xlu0 %876
        %878 = vrot.lane.b32.xlu0 %v855, 112
        %v879 = vpop.permute.xlu0 %878
        %v880 = vrot.slane %v865, 4
        %v881 = vrot.slane %v867, 4
        %v882 = vrot.slane %v869, 4
        %v883 = vrot.slane %v871, 4
        %v884 = vrot.slane %v873, 4
        %v885 = vrot.slane %v875, 4
        %v886 = vrot.slane %v877, 4
        %v887 = vrot.slane %v879, 4
        %v888 = vsel %vm721, %v880, %v881
        %vm889 = vcmask 916480
        %v890 = vsel %vm889, %v865, %v888
        %v891 = vsel %vm721, %v882, %v883
        %v892 = vsel %vm889, %v869, %v891
        %v893 = vsel %vm721, %v884, %v885
        %v894 = vsel %vm889, %v873, %v893
        %v895 = vsel %vm721, %v886, %v887
        %v896 = vsel %vm889, %v877, %v895
        %901 = vst [vmem:[#allocation2 + $0x60] sm:$0xff] %v890
        %902 = vst [vmem:[#allocation2 + $0x68] sm:$0xff] %v892
        %903 = vst [vmem:[#allocation2 + $0x70] sm:$0xff] %v894
        %904 = vst [vmem:[#allocation2 + $0x78] sm:$0xff] %v896
        %s905 = scalar_lea.vmem [#allocation7], 4
        %v906 = vld [vmem:[%s905] ss:$8 sm:$0x3]
        %v908 = vperm.slane %v906, 0
        %v909 = vperm.slane %v906, 1
        %910 = vrot.lane.b32.xlu0 %v908, 17
        %v911 = vpop.permute.xlu0 %910
        %912 = vrot.lane.b32.xlu0 %v909, 17
        %v913 = vpop.permute.xlu0 %912
        %v914 = vsel %vm608, %v911, %v913
        %v918 = vmul.f32 %v625, %v911
        %v919 = vmul.f32 %v609, %v914
        %v920 = vmul.f32 %v629, %v913
        %v921 = vmul.f32 %v626, %v911
        %v922 = vmul.f32 %v610, %v914
        %v923 = vmul.f32 %v630, %v913
        %v924 = vmul.f32 %v627, %v911
        %v925 = vmul.f32 %v611, %v914
        %v926 = vmul.f32 %v631, %v913
        %v927 = vmul.f32 %v628, %v911
        %v928 = vmul.f32 %v612, %v914
        %v929 = vmul.f32 %v632, %v913
        %v930 = vpack.c.bf16 %v919, %v918
        %v931 = vpack.c.bf16 %v920, %v920
        %v932 = vpack.c.bf16 %v922, %v921
        %v933 = vpack.c.bf16 %v923, %v923
        %v934 = vpack.c.bf16 %v925, %v924
        %v935 = vpack.c.bf16 %v926, %v926
        %v936 = vpack.c.bf16 %v928, %v927
        %v937 = vpack.c.bf16 %v929, %v929
        %946 = vrot.lane.b32.xlu0 %v930, 111
        %v947 = vpop.permute.xlu0 %946
        %948 = vrot.lane.b32.xlu0 %v931, 111
        %v949 = vpop.permute.xlu0 %948
        %950 = vrot.lane.b32.xlu0 %v932, 111
        %v951 = vpop.permute.xlu0 %950
        %952 = vrot.lane.b32.xlu0 %v933, 111
        %v953 = vpop.permute.xlu0 %952
        %954 = vrot.lane.b32.xlu0 %v934, 111
        %v955 = vpop.permute.xlu0 %954
        %956 = vrot.lane.b32.xlu0 %v935, 111
        %v957 = vpop.permute.xlu0 %956
        %958 = vrot.lane.b32.xlu0 %v936, 111
        %v959 = vpop.permute.xlu0 %958
        %960 = vrot.lane.b32.xlu0 %v937, 111
        %v961 = vpop.permute.xlu0 %960
        %v962 = vrot.slane %v947, 4
        %v963 = vrot.slane %v949, 4
        %v964 = vrot.slane %v951, 4
        %v965 = vrot.slane %v953, 4
        %v966 = vrot.slane %v955, 4
        %v967 = vrot.slane %v957, 4
        %v968 = vrot.slane %v959, 4
        %v969 = vrot.slane %v961, 4
        %v970 = vsel %vm721, %v962, %v963
        %vm971 = vcmask 908288
        %v972 = vsel %vm971, %v947, %v970
        %v973 = vsel %vm721, %v964, %v965
        %v974 = vsel %vm971, %v951, %v973
        %v975 = vsel %vm721, %v966, %v967
        %v976 = vsel %vm971, %v955, %v975
        %v977 = vsel %vm721, %v968, %v969
        %v978 = vsel %vm971, %v959, %v977
        %983 = vst [vmem:[#allocation2 + $0x80] sm:$0xff] %v972
        %984 = vst [vmem:[#allocation2 + $0x88] sm:$0xff] %v974
        %985 = vst [vmem:[#allocation2 + $0x90] sm:$0xff] %v976
        %986 = vst [vmem:[#allocation2 + $0x98] sm:$0xff] %v978
        %s987 = scalar_lea.vmem [#allocation7], 5
        %v988 = vld [vmem:[%s987] ss:$8 sm:$0x3]
        %v990 = vperm.slane %v988, 0
        %v991 = vperm.slane %v988, 1
        %992 = vrot.lane.b32.xlu0 %v990, 18
        %v993 = vpop.permute.xlu0 %992
        %994 = vrot.lane.b32.xlu0 %v991, 18
        %v995 = vpop.permute.xlu0 %994
        %vm996 = vcmask 146432
        %v997 = vsel %vm996, %v993, %v995
        %v1001 = vmul.f32 %v625, %v993
        %v1002 = vmul.f32 %v609, %v997
        %v1003 = vmul.f32 %v629, %v995
        %v1004 = vmul.f32 %v626, %v993
        %v1005 = vmul.f32 %v610, %v997
        %v1006 = vmul.f32 %v630, %v995
        %v1007 = vmul.f32 %v627, %v993
        %v1008 = vmul.f32 %v611, %v997
        %v1009 = vmul.f32 %v631, %v995
        %v1010 = vmul.f32 %v628, %v993
        %v1011 = vmul.f32 %v612, %v997
        %v1012 = vmul.f32 %v632, %v995
        %v1013 = vpack.c.bf16 %v1002, %v1001
        %v1014 = vpack.c.bf16 %v1003, %v1003
        %v1015 = vpack.c.bf16 %v1005, %v1004
        %v1016 = vpack.c.bf16 %v1006, %v1006
        %v1017 = vpack.c.bf16 %v1008, %v1007
        %v1018 = vpack.c.bf16 %v1009, %v1009
        %v1019 = vpack.c.bf16 %v1011, %v1010
        %v1020 = vpack.c.bf16 %v1012, %v1012
        %1029 = vrot.lane.b32.xlu0 %v1013, 110
        %v1030 = vpop.permute.xlu0 %1029
        %1031 = vrot.lane.b32.xlu0 %v1014, 110
        %v1032 = vpop.permute.xlu0 %1031
        %1033 = vrot.lane.b32.xlu0 %v1015, 110
        %v1034 = vpop.permute.xlu0 %1033
        %1035 = vrot.lane.b32.xlu0 %v1016, 110
        %v1036 = vpop.permute.xlu0 %1035
        %1037 = vrot.lane.b32.xlu0 %v1017, 110
        %v1038 = vpop.permute.xlu0 %1037
        %1039 = vrot.lane.b32.xlu0 %v1018, 110
        %v1040 = vpop.permute.xlu0 %1039
        %1041 = vrot.lane.b32.xlu0 %v1019, 110
        %v1042 = vpop.permute.xlu0 %1041
        %1043 = vrot.lane.b32.xlu0 %v1020, 110
        %v1044 = vpop.permute.xlu0 %1043
        %v1045 = vrot.slane %v1030, 4
        %v1046 = vrot.slane %v1032, 4
        %v1047 = vrot.slane %v1034, 4
        %v1048 = vrot.slane %v1036, 4
        %v1049 = vrot.slane %v1038, 4
        %v1050 = vrot.slane %v1040, 4
        %v1051 = vrot.slane %v1042, 4
        %v1052 = vrot.slane %v1044, 4
        %v1053 = vsel %vm721, %v1045, %v1046
        %vm1054 = vcmask 900096
        %v1055 = vsel %vm1054, %v1030, %v1053
        %v1056 = vsel %vm721, %v1047, %v1048
        %v1057 = vsel %vm1054, %v1034, %v1056
        %v1058 = vsel %vm721, %v1049, %v1050
        %v1059 = vsel %vm1054, %v1038, %v1058
        %v1060 = vsel %vm721, %v1051, %v1052
        %v1061 = vsel %vm1054, %v1042, %v1060
        %1066 = vst [vmem:[#allocation2 + $0xa0] sm:$0xff] %v1055
        %1067 = vst [vmem:[#allocation2 + $0xa8] sm:$0xff] %v1057
        %1068 = vst [vmem:[#allocation2 + $0xb0] sm:$0xff] %v1059
        %1069 = vst [vmem:[#allocation2 + $0xb8] sm:$0xff] %v1061
        %s1070 = scalar_lea.vmem [#allocation7], 6
        %v1071 = vld [vmem:[%s1070] ss:$8 sm:$0x3]
        %v1073 = vperm.slane %v1071, 0
        %v1074 = vperm.slane %v1071, 1
        %1075 = vrot.lane.b32.xlu0 %v1073, 32
        %v1076 = vpop.permute.xlu0 %1075
        %1077 = vrot.lane.b32.xlu0 %v1074, 32
        %v1078 = vpop.permute.xlu0 %1077
        %vm1079 = vcmask 261120
        %v1080 = vsel %vm1079, %v1076, %v1078
        %v1084 = vmul.f32 %v625, %v1076
        %v1085 = vmul.f32 %v609, %v1080
        %v1086 = vmul.f32 %v629, %v1078
        %v1087 = vmul.f32 %v626, %v1076
        %v1088 = vmul.f32 %v610, %v1080
        %v1089 = vmul.f32 %v630, %v1078
        %v1090 = vmul.f32 %v627, %v1076
        %v1091 = vmul.f32 %v611, %v1080
        %v1092 = vmul.f32 %v631, %v1078
        %v1093 = vmul.f32 %v628, %v1076
        %v1094 = vmul.f32 %v612, %v1080
        %v1095 = vmul.f32 %v632, %v1078
        %v1096 = vpack.c.bf16 %v1085, %v1084
        %v1097 = vpack.c.bf16 %v1086, %v1086
        %v1098 = vpack.c.bf16 %v1088, %v1087
        %v1099 = vpack.c.bf16 %v1089, %v1089
        %v1100 = vpack.c.bf16 %v1091, %v1090
        %v1101 = vpack.c.bf16 %v1092, %v1092
        %v1102 = vpack.c.bf16 %v1094, %v1093
        %v1103 = vpack.c.bf16 %v1095, %v1095
        %1112 = vrot.lane.b32.xlu0 %v1096, 96
        %v1113 = vpop.permute.xlu0 %1112
        %1114 = vrot.lane.b32.xlu0 %v1097, 96
        %v1115 = vpop.permute.xlu0 %1114
        %1116 = vrot.lane.b32.xlu0 %v1098, 96
        %v1117 = vpop.permute.xlu0 %1116
        %1118 = vrot.lane.b32.xlu0 %v1099, 96
        %v1119 = vpop.permute.xlu0 %1118
        %1120 = vrot.lane.b32.xlu0 %v1100, 96
        %v1121 = vpop.permute.xlu0 %1120
        %1122 = vrot.lane.b32.xlu0 %v1101, 96
        %v1123 = vpop.permute.xlu0 %1122
        %1124 = vrot.lane.b32.xlu0 %v1102, 96
        %v1125 = vpop.permute.xlu0 %1124
        %1126 = vrot.lane.b32.xlu0 %v1103, 96
        %v1127 = vpop.permute.xlu0 %1126
        %v1128 = vrot.slane %v1113, 4
        %v1129 = vrot.slane %v1115, 4
        %v1130 = vrot.slane %v1117, 4
        %v1131 = vrot.slane %v1119, 4
        %v1132 = vrot.slane %v1121, 4
        %v1133 = vrot.slane %v1123, 4
        %v1134 = vrot.slane %v1125, 4
        %v1135 = vrot.slane %v1127, 4
        %v1136 = vsel %vm721, %v1128, %v1129
        %vm1137 = vcmask 785408
        %v1138 = vsel %vm1137, %v1113, %v1136
        %v1139 = vsel %vm721, %v1130, %v1131
        %v1140 = vsel %vm1137, %v1117, %v1139
        %v1141 = vsel %vm721, %v1132, %v1133
        %v1142 = vsel %vm1137, %v1121, %v1141
        %v1143 = vsel %vm721, %v1134, %v1135
        %v1144 = vsel %vm1137, %v1125, %v1143
        %1149 = vst [vmem:[#allocation2 + $0xc0] sm:$0xff] %v1138
        %1150 = vst [vmem:[#allocation2 + $0xc8] sm:$0xff] %v1140
        %1151 = vst [vmem:[#allocation2 + $0xd0] sm:$0xff] %v1142
        %1152 = vst [vmem:[#allocation2 + $0xd8] sm:$0xff] %v1144
        %s1153 = scalar_lea.vmem [#allocation7], 7
        %v1154 = vld [vmem:[%s1153] ss:$8 sm:$0x3]
        %v1156 = vperm.slane %v1154, 0
        %v1157 = vperm.slane %v1154, 1
        %1158 = vrot.lane.b32.xlu0 %v1156, 33
        %v1159 = vpop.permute.xlu0 %1158
        %1160 = vrot.lane.b32.xlu0 %v1157, 33
        %v1161 = vpop.permute.xlu0 %1160
        %vm1162 = vcmask 269312
        %v1163 = vsel %vm1162, %v1159, %v1161
        %v1167 = vmul.f32 %v625, %v1159
        %v1168 = vmul.f32 %v609, %v1163
        %v1169 = vmul.f32 %v629, %v1161
        %v1170 = vmul.f32 %v626, %v1159
        %v1171 = vmul.f32 %v610, %v1163
        %v1172 = vmul.f32 %v630, %v1161
        %v1173 = vmul.f32 %v627, %v1159
        %v1174 = vmul.f32 %v611, %v1163
        %v1175 = vmul.f32 %v631, %v1161
        %v1176 = vmul.f32 %v628, %v1159
        %v1177 = vmul.f32 %v612, %v1163
        %v1178 = vmul.f32 %v632, %v1161
        %v1179 = vpack.c.bf16 %v1168, %v1167
        %v1180 = vpack.c.bf16 %v1169, %v1169
        %v1181 = vpack.c.bf16 %v1171, %v1170
        %v1182 = vpack.c.bf16 %v1172, %v1172
        %v1183 = vpack.c.bf16 %v1174, %v1173
        %v1184 = vpack.c.bf16 %v1175, %v1175
        %v1185 = vpack.c.bf16 %v1177, %v1176
        %v1186 = vpack.c.bf16 %v1178, %v1178
        %1195 = vrot.lane.b32.xlu0 %v1179, 95
        %v1196 = vpop.permute.xlu0 %1195
        %1197 = vrot.lane.b32.xlu0 %v1180, 95
        %v1198 = vpop.permute.xlu0 %1197
        %1199 = vrot.lane.b32.xlu0 %v1181, 95
        %v1200 = vpop.permute.xlu0 %1199
        %1201 = vrot.lane.b32.xlu0 %v1182, 95
        %v1202 = vpop.permute.xlu0 %1201
        %1203 = vrot.lane.b32.xlu0 %v1183, 95
        %v1204 = vpop.permute.xlu0 %1203
        %1205 = vrot.lane.b32.xlu0 %v1184, 95
        %v1206 = vpop.permute.xlu0 %1205
        %1207 = vrot.lane.b32.xlu0 %v1185, 95
        %v1208 = vpop.permute.xlu0 %1207
        %1209 = vrot.lane.b32.xlu0 %v1186, 95
        %v1210 = vpop.permute.xlu0 %1209
        %v1211 = vrot.slane %v1196, 4
        %v1212 = vrot.slane %v1198, 4
        %v1213 = vrot.slane %v1200, 4
        %v1214 = vrot.slane %v1202, 4
        %v1215 = vrot.slane %v1204, 4
        %v1216 = vrot.slane %v1206, 4
        %v1217 = vrot.slane %v1208, 4
        %v1218 = vrot.slane %v1210, 4
        %v1219 = vsel %vm721, %v1211, %v1212
        %vm1220 = vcmask 777216
        %v1221 = vsel %vm1220, %v1196, %v1219
        %v1222 = vsel %vm721, %v1213, %v1214
        %v1223 = vsel %vm1220, %v1200, %v1222
        %v1224 = vsel %vm721, %v1215, %v1216
        %v1225 = vsel %vm1220, %v1204, %v1224
        %v1226 = vsel %vm721, %v1217, %v1218
        %v1227 = vsel %vm1220, %v1208, %v1226
        %1232 = vst [vmem:[#allocation2 + $0xe0] sm:$0xff] %v1221
        %1233 = vst [vmem:[#allocation2 + $0xe8] sm:$0xff] %v1223
        %1234 = vst [vmem:[#allocation2 + $0xf0] sm:$0xff] %v1225
        %1235 = vst [vmem:[#allocation2 + $0xf8] sm:$0xff] %v1227
        %s1236 = scalar_lea.vmem [#allocation7], 16
        %v1237 = vld [vmem:[%s1236] ss:$8 sm:$0x3]
        %v1239 = vperm.slane %v1237, 0
        %v1240 = vperm.slane %v1237, 1
        %1241 = vrot.lane.b32.xlu0 %v1239, 34
        %v1242 = vpop.permute.xlu0 %1241
        %1243 = vrot.lane.b32.xlu0 %v1240, 34
        %v1244 = vpop.permute.xlu0 %1243
        %vm1245 = vcmask 277504
        %v1246 = vsel %vm1245, %v1242, %v1244
        %v1250 = vmul.f32 %v625, %v1242
        %v1251 = vmul.f32 %v609, %v1246
        %v1252 = vmul.f32 %v629, %v1244
        %v1253 = vmul.f32 %v626, %v1242
        %v1254 = vmul.f32 %v610, %v1246
        %v1255 = vmul.f32 %v630, %v1244
        %v1256 = vmul.f32 %v627, %v1242
        %v1257 = vmul.f32 %v611, %v1246
        %v1258 = vmul.f32 %v631, %v1244
        %v1259 = vmul.f32 %v628, %v1242
        %v1260 = vmul.f32 %v612, %v1246
        %v1261 = vmul.f32 %v632, %v1244
        %v1262 = vpack.c.bf16 %v1251, %v1250
        %v1263 = vpack.c.bf16 %v1252, %v1252
        %v1264 = vpack.c.bf16 %v1254, %v1253
        %v1265 = vpack.c.bf16 %v1255, %v1255
        %v1266 = vpack.c.bf16 %v1257, %v1256
        %v1267 = vpack.c.bf16 %v1258, %v1258
        %v1268 = vpack.c.bf16 %v1260, %v1259
        %v1269 = vpack.c.bf16 %v1261, %v1261
        %1278 = vrot.lane.b32.xlu0 %v1262, 94
        %v1279 = vpop.permute.xlu0 %1278
        %1280 = vrot.lane.b32.xlu0 %v1263, 94
        %v1281 = vpop.permute.xlu0 %1280
        %1282 = vrot.lane.b32.xlu0 %v1264, 94
        %v1283 = vpop.permute.xlu0 %1282
        %1284 = vrot.lane.b32.xlu0 %v1265, 94
        %v1285 = vpop.permute.xlu0 %1284
        %1286 = vrot.lane.b32.xlu0 %v1266, 94
        %v1287 = vpop.permute.xlu0 %1286
        %1288 = vrot.lane.b32.xlu0 %v1267, 94
        %v1289 = vpop.permute.xlu0 %1288
        %1290 = vrot.lane.b32.xlu0 %v1268, 94
        %v1291 = vpop.permute.xlu0 %1290
        %1292 = vrot.lane.b32.xlu0 %v1269, 94
        %v1293 = vpop.permute.xlu0 %1292
        %v1294 = vrot.slane %v1279, 4
        %v1295 = vrot.slane %v1281, 4
        %v1296 = vrot.slane %v1283, 4
        %v1297 = vrot.slane %v1285, 4
        %v1298 = vrot.slane %v1287, 4
        %v1299 = vrot.slane %v1289, 4
        %v1300 = vrot.slane %v1291, 4
        %v1301 = vrot.slane %v1293, 4
        %v1302 = vsel %vm721, %v1294, %v1295
        %vm1303 = vcmask 769024
        %v1304 = vsel %vm1303, %v1279, %v1302
        %v1305 = vsel %vm721, %v1296, %v1297
        %v1306 = vsel %vm1303, %v1283, %v1305
        %v1307 = vsel %vm721, %v1298, %v1299
        %v1308 = vsel %vm1303, %v1287, %v1307
        %v1309 = vsel %vm721, %v1300, %v1301
        %v1310 = vsel %vm1303, %v1291, %v1309
        %1315 = vst [vmem:[#allocation2 + $0x100] sm:$0xff] %v1304
        %1316 = vst [vmem:[#allocation2 + $0x108] sm:$0xff] %v1306
        %1317 = vst [vmem:[#allocation2 + $0x110] sm:$0xff] %v1308
        %1318 = vst [vmem:[#allocation2 + $0x118] sm:$0xff] %v1310
        %v1319 = vld [vmem:[%s2] sm:$0xff]
        %v1320 = vld [vmem:[%s2 + $0x8] sm:$0xf]
        %v1321 = vld [vmem:[%s2 + $0xc] sm:$0xff]
        %v1322 = vld [vmem:[%s2 + $0x14] sm:$0xf]
        %v1323 = vld [vmem:[%s2 + $0x18] sm:$0xff]
        %v1324 = vld [vmem:[%s2 + $0x20] sm:$0xf]
        %v1325 = vld [vmem:[%s2 + $0x24] sm:$0xff]
        %v1326 = vld [vmem:[%s2 + $0x2c] sm:$0xf]
        %v1327 = vld [vmem:[%s2 + $0x30] sm:$0xff]
        %v1328 = vld [vmem:[%s2 + $0x38] sm:$0xf]
        %v1329 = vld [vmem:[%s2 + $0x3c] sm:$0xff]
        %v1330 = vld [vmem:[%s2 + $0x44] sm:$0xf]
        %v1331 = vld [vmem:[%s2 + $0x48] sm:$0xff]
        %v1332 = vld [vmem:[%s2 + $0x50] sm:$0xf]
        %v1333 = vld [vmem:[%s2 + $0x54] sm:$0xff]
        %v1334 = vld [vmem:[%s2 + $0x5c] sm:$0xf]
        %v1335 = vld [vmem:[#allocation2] sm:$0xff]
        %v1336 = vld [vmem:[#allocation2 + $0x8] sm:$0xff]
        %v1337 = vld [vmem:[#allocation2 + $0x10] sm:$0xff]
        %v1338 = vld [vmem:[#allocation2 + $0x18] sm:$0xff]
        %v1339 = vld [vmem:[#allocation2 + $0x20] sm:$0xff]
        %v1340 = vld [vmem:[#allocation2 + $0x28] sm:$0xff]
        %v1341 = vld [vmem:[#allocation2 + $0x30] sm:$0xff]
        %v1342 = vld [vmem:[#allocation2 + $0x38] sm:$0xff]
        %v1343 = vld [vmem:[#allocation2 + $0x40] sm:$0xff]
        %v1344 = vld [vmem:[#allocation2 + $0x48] sm:$0xff]
        %v1345 = vld [vmem:[#allocation2 + $0x50] sm:$0xff]
        %v1346 = vld [vmem:[#allocation2 + $0x58] sm:$0xff]
        %v1347 = vld [vmem:[#allocation2 + $0x60] sm:$0xff]
        %v1348 = vld [vmem:[#allocation2 + $0x68] sm:$0xff]
        %v1349 = vld [vmem:[#allocation2 + $0x70] sm:$0xff]
        %v1350 = vld [vmem:[#allocation2 + $0x78] sm:$0xff]
        %v1351 = vld [vmem:[#allocation2 + $0x80] sm:$0xff]
        %v1352 = vld [vmem:[#allocation2 + $0x88] sm:$0xff]
        %v1353 = vld [vmem:[#allocation2 + $0x90] sm:$0xff]
        %v1354 = vld [vmem:[#allocation2 + $0x98] sm:$0xff]
        %v1355 = vld [vmem:[#allocation2 + $0xa0] sm:$0xff]
        %v1356 = vld [vmem:[#allocation2 + $0xa8] sm:$0xff]
        %v1357 = vld [vmem:[#allocation2 + $0xb0] sm:$0xff]
        %v1358 = vld [vmem:[#allocation2 + $0xb8] sm:$0xff]
        %v1359 = vld [vmem:[#allocation2 + $0xc0] sm:$0xff]
        %v1360 = vld [vmem:[#allocation2 + $0xc8] sm:$0xff]
        %v1361 = vld [vmem:[#allocation2 + $0xd0] sm:$0xff]
        %v1362 = vld [vmem:[#allocation2 + $0xd8] sm:$0xff]
        %v1363 = vld [vmem:[#allocation2 + $0xe0] sm:$0xff]
        %v1364 = vld [vmem:[#allocation2 + $0xe8] sm:$0xff]
        %v1365 = vld [vmem:[#allocation2 + $0xf0] sm:$0xff]
        %v1366 = vld [vmem:[#allocation2 + $0xf8] sm:$0xff]
        %v1367 = vld [vmem:[#allocation2 + $0x100] sm:$0xff]
        %v1368 = vld [vmem:[#allocation2 + $0x108] sm:$0xff]
        %v1369 = vld [vmem:[#allocation2 + $0x110] sm:$0xff]
        %v1370 = vld [vmem:[#allocation2 + $0x118] sm:$0xff]
        %v1371 = vld [vmem:[%s3] sm:$0xff]
        %v1372 = vld [vmem:[%s3 + $0x8] sm:$0xff]
        %v1373 = vld [vmem:[%s3 + $0x10] sm:$0xff]
        %v1374 = vld [vmem:[%s3 + $0x18] sm:$0xff]
        %v1375 = vld [vmem:[%s3 + $0x20] sm:$0xff]
        %v1376 = vld [vmem:[%s3 + $0x28] sm:$0xff]
        %v1377 = vld [vmem:[%s3 + $0x30] sm:$0xff]
        %v1378 = vld [vmem:[%s3 + $0x38] sm:$0xff]
        %1380 = vset.pattern.permute.xlu0 0
        %1381 = vperm.xlu0 %1380, %v1371
        %v1382 = vpop.permute.xlu0 %1381
        %1385 = vset.pattern.permute.xlu0 0
        %1386 = vperm.xlu0 %1385, %v1372
        %v1387 = vpop.permute.xlu0 %1386
        %1390 = vset.pattern.permute.xlu0 0
        %1391 = vperm.xlu0 %1390, %v1373
        %v1392 = vpop.permute.xlu0 %1391
        %1395 = vset.pattern.permute.xlu0 0
        %1396 = vperm.xlu0 %1395, %v1374
        %v1397 = vpop.permute.xlu0 %1396
        %1400 = vset.pattern.permute.xlu0 0
        %1401 = vperm.xlu0 %1400, %v1375
        %v1402 = vpop.permute.xlu0 %1401
        %1405 = vset.pattern.permute.xlu0 0
        %1406 = vperm.xlu0 %1405, %v1376
        %v1407 = vpop.permute.xlu0 %1406
        %1410 = vset.pattern.permute.xlu0 0
        %1411 = vperm.xlu0 %1410, %v1377
        %v1412 = vpop.permute.xlu0 %1411
        %1415 = vset.pattern.permute.xlu0 0
        %1416 = vperm.xlu0 %1415, %v1378
        %v1417 = vpop.permute.xlu0 %1416
        %v1435 = vunpack.c.l.b16 %v1319
        %v1436 = vunpack.c.h.b16 %v1319
        %v1437 = vunpack.c.l.b16 %v1320
        %v1438 = vunpack.c.l.b16 %v1321
        %v1439 = vunpack.c.h.b16 %v1321
        %v1440 = vunpack.c.l.b16 %v1322
        %v1441 = vunpack.c.l.b16 %v1323
        %v1442 = vunpack.c.h.b16 %v1323
        %v1443 = vunpack.c.l.b16 %v1324
        %v1444 = vunpack.c.l.b16 %v1325
        %v1445 = vunpack.c.h.b16 %v1325
        %v1446 = vunpack.c.l.b16 %v1326
        %v1447 = vunpack.c.l.b16 %v1327
        %v1448 = vunpack.c.h.b16 %v1327
        %v1449 = vunpack.c.l.b16 %v1328
        %v1450 = vunpack.c.l.b16 %v1329
        %v1451 = vunpack.c.h.b16 %v1329
        %v1452 = vunpack.c.l.b16 %v1330
        %v1453 = vunpack.c.l.b16 %v1331
        %v1454 = vunpack.c.h.b16 %v1331
        %v1455 = vunpack.c.l.b16 %v1332
        %v1456 = vunpack.c.l.b16 %v1333
        %v1457 = vunpack.c.h.b16 %v1333
        %v1458 = vunpack.c.l.b16 %v1334
        %v1459 = vpack.c.b16 %v1438, %v1435
        %v1460 = vpack.c.b16 %v1439, %v1436
        %v1461 = vpack.c.b16 %v1440, %v1437
        %v1462 = vpack.c.b16 %v1444, %v1441
        %v1463 = vpack.c.b16 %v1445, %v1442
        %v1464 = vpack.c.b16 %v1446, %v1443
        %v1465 = vpack.c.b16 %v1450, %v1447
        %v1466 = vpack.c.b16 %v1451, %v1448
        %v1467 = vpack.c.b16 %v1452, %v1449
        %v1468 = vpack.c.b16 %v1456, %v1453
        %v1469 = vpack.c.b16 %v1457, %v1454
        %v1470 = vpack.c.b16 %v1458, %v1455
        %v1515 = vunpack.c.l.b16 %v1335
        %v1516 = vunpack.c.h.b16 %v1335
        %v1517 = vunpack.c.l.b16 %v1336
        %v1518 = vunpack.c.h.b16 %v1336
        %v1519 = vunpack.c.l.b16 %v1337
        %v1520 = vunpack.c.h.b16 %v1337
        %v1521 = vunpack.c.l.b16 %v1338
        %v1522 = vunpack.c.h.b16 %v1338
        %v1523 = vunpack.c.l.b16 %v1339
        %v1524 = vunpack.c.h.b16 %v1339
        %v1525 = vunpack.c.l.b16 %v1340
        %v1526 = vunpack.c.h.b16 %v1340
        %v1527 = vunpack.c.l.b16 %v1341
        %v1528 = vunpack.c.h.b16 %v1341
        %v1529 = vunpack.c.l.b16 %v1342
        %v1530 = vunpack.c.h.b16 %v1342
        %v1531 = vunpack.c.l.b16 %v1343
        %v1532 = vunpack.c.h.b16 %v1343
        %v1533 = vunpack.c.l.b16 %v1344
        %v1534 = vunpack.c.h.b16 %v1344
        %v1535 = vunpack.c.l.b16 %v1345
        %v1536 = vunpack.c.h.b16 %v1345
        %v1537 = vunpack.c.l.b16 %v1346
        %v1538 = vunpack.c.h.b16 %v1346
        %v1539 = vunpack.c.l.b16 %v1347
        %v1540 = vunpack.c.h.b16 %v1347
        %v1541 = vunpack.c.l.b16 %v1348
        %v1542 = vunpack.c.h.b16 %v1348
        %v1543 = vunpack.c.l.b16 %v1349
        %v1544 = vunpack.c.h.b16 %v1349
        %v1545 = vunpack.c.l.b16 %v1350
        %v1546 = vunpack.c.h.b16 %v1350
        %v1547 = vunpack.c.l.b16 %v1351
        %v1548 = vunpack.c.h.b16 %v1351
        %v1549 = vunpack.c.l.b16 %v1352
        %v1550 = vunpack.c.h.b16 %v1352
        %v1551 = vunpack.c.l.b16 %v1353
        %v1552 = vunpack.c.h.b16 %v1353
        %v1553 = vunpack.c.l.b16 %v1354
        %v1554 = vunpack.c.h.b16 %v1354
        %v1555 = vunpack.c.l.b16 %v1355
        %v1556 = vunpack.c.h.b16 %v1355
        %v1557 = vunpack.c.l.b16 %v1356
        %v1558 = vunpack.c.h.b16 %v1356
        %v1559 = vunpack.c.l.b16 %v1357
        %v1560 = vunpack.c.h.b16 %v1357
        %v1561 = vunpack.c.l.b16 %v1358
        %v1562 = vunpack.c.h.b16 %v1358
        %v1563 = vunpack.c.l.b16 %v1359
        %v1564 = vunpack.c.h.b16 %v1359
        %v1565 = vunpack.c.l.b16 %v1360
        %v1566 = vunpack.c.h.b16 %v1360
        %v1567 = vunpack.c.l.b16 %v1361
        %v1568 = vunpack.c.h.b16 %v1361
        %v1569 = vunpack.c.l.b16 %v1362
        %v1570 = vunpack.c.h.b16 %v1362
        %v1571 = vunpack.c.l.b16 %v1363
        %v1572 = vunpack.c.h.b16 %v1363
        %v1573 = vunpack.c.l.b16 %v1364
        %v1574 = vunpack.c.h.b16 %v1364
        %v1575 = vunpack.c.l.b16 %v1365
        %v1576 = vunpack.c.h.b16 %v1365
        %v1577 = vunpack.c.l.b16 %v1366
        %v1578 = vunpack.c.h.b16 %v1366
        %v1579 = vunpack.c.l.b16 %v1367
        %v1580 = vunpack.c.h.b16 %v1367
        %v1581 = vunpack.c.l.b16 %v1368
        %v1582 = vunpack.c.h.b16 %v1368
        %v1583 = vunpack.c.l.b16 %v1369
        %v1584 = vunpack.c.h.b16 %v1369
        %v1585 = vunpack.c.l.b16 %v1370
        %v1586 = vunpack.c.h.b16 %v1370
        %v1587 = vpack.c.b16 %v1517, %v1515
        %v1588 = vpack.c.b16 %v1518, %v1516
        %v1589 = vpack.c.b16 %v1521, %v1519
        %v1590 = vpack.c.b16 %v1522, %v1520
        %v1591 = vpack.c.b16 %v1525, %v1523
        %v1592 = vpack.c.b16 %v1526, %v1524
        %v1593 = vpack.c.b16 %v1529, %v1527
        %v1594 = vpack.c.b16 %v1530, %v1528
        %v1595 = vpack.c.b16 %v1533, %v1531
        %v1596 = vpack.c.b16 %v1534, %v1532
        %v1597 = vpack.c.b16 %v1537, %v1535
        %v1598 = vpack.c.b16 %v1538, %v1536
        %v1599 = vpack.c.b16 %v1541, %v1539
        %v1600 = vpack.c.b16 %v1542, %v1540
        %v1601 = vpack.c.b16 %v1545, %v1543
        %v1602 = vpack.c.b16 %v1546, %v1544
        %v1603 = vpack.c.b16 %v1549, %v1547
        %v1604 = vpack.c.b16 %v1550, %v1548
        %v1605 = vpack.c.b16 %v1553, %v1551
        %v1606 = vpack.c.b16 %v1554, %v1552
        %v1607 = vpack.c.b16 %v1557, %v1555
        %v1608 = vpack.c.b16 %v1558, %v1556
        %v1609 = vpack.c.b16 %v1561, %v1559
        %v1610 = vpack.c.b16 %v1562, %v1560
        %v1611 = vpack.c.b16 %v1565, %v1563
        %v1612 = vpack.c.b16 %v1566, %v1564
        %v1613 = vpack.c.b16 %v1569, %v1567
        %v1614 = vpack.c.b16 %v1570, %v1568
        %v1615 = vpack.c.b16 %v1573, %v1571
        %v1616 = vpack.c.b16 %v1574, %v1572
        %v1617 = vpack.c.b16 %v1577, %v1575
        %v1618 = vpack.c.b16 %v1578, %v1576
        %v1619 = vpack.c.b16 %v1581, %v1579
        %v1620 = vpack.c.b16 %v1582, %v1580
        %v1621 = vpack.c.b16 %v1585, %v1583
        %v1622 = vpack.c.b16 %v1586, %v1584
        %v1660 = vsel %vm1079, %v1461, 0
        %v1663 = vsel %vm1079, %v1464, 0
        %v1666 = vsel %vm1079, %v1467, 0
        %v1669 = vsel %vm1079, %v1470, 0
        %1671 = vmatpush.bf16.msra.mxu0 %v1601
        %1672 = vmatpush.bf16.msra.mxu0 %v1599
        %1673 = vmatpush.bf16.msra.mxu0 %v1597
        %1674 = vmatpush.bf16.msra.mxu0 %v1595
        %1675 = vmatpush.bf16.msra.mxu0 %v1593
        %1676 = vmatpush.bf16.msra.mxu0 %v1591
        %1677 = vmatpush.bf16.msra.mxu0 %v1589
        %1678 = vmatpush.bf16.msra.mxu0 %v1587
        %1679 = vmatmul.bf16.gmra.mxu0 %v1459
        %v1680 = vpop.f32.mrf.mxu0
        %v1681 = vadd.f32 %v1382, %v1680
        %v1682 = vpop.f32.mrf.mxu0
        %v1683 = vadd.f32 %v1387, %v1682
        %1684 = vmatmul.bf16.gmra.mxu0 %v1462
        %v1685 = vpop.f32.mrf.mxu0
        %v1686 = vadd.f32 %v1392, %v1685
        %v1687 = vpop.f32.mrf.mxu0
        %v1688 = vadd.f32 %v1397, %v1687
        %1689 = vmatmul.bf16.gmra.mxu0 %v1465
        %v1690 = vpop.f32.mrf.mxu0
        %v1691 = vadd.f32 %v1402, %v1690
        %v1692 = vpop.f32.mrf.mxu0
        %v1693 = vadd.f32 %v1407, %v1692
        %1694 = vmatmul.bf16.gmra.mxu0 %v1468
        %v1695 = vpop.f32.mrf.mxu0
        %v1696 = vadd.f32 %v1412, %v1695
        %v1697 = vpop.f32.mrf.mxu0
        %v1698 = vadd.f32 %v1417, %v1697
        %1699 = vdwg.mxu0
        %1700 = vmatpush.bf16.msra.mxu0 %v1617
        %1701 = vmatpush.bf16.msra.mxu0 %v1615
        %1702 = vmatpush.bf16.msra.mxu0 %v1613
        %1703 = vmatpush.bf16.msra.mxu0 %v1611
        %1704 = vmatpush.bf16.msra.mxu0 %v1609
        %1705 = vmatpush.bf16.msra.mxu0 %v1607
        %1706 = vmatpush.bf16.msra.mxu0 %v1605
        %1707 = vmatpush.bf16.msra.mxu0 %v1603
        %1708 = vmatmul.bf16.gmra.mxu0 %v1460
        %v1709 = vpop.f32.mrf.mxu0
        %v1710 = vadd.f32 %v1681, %v1709
        %v1711 = vpop.f32.mrf.mxu0
        %v1712 = vadd.f32 %v1683, %v1711
        %1713 = vmatmul.bf16.gmra.mxu0 %v1463
        %v1714 = vpop.f32.mrf.mxu0
        %v1715 = vadd.f32 %v1686, %v1714
        %v1716 = vpop.f32.mrf.mxu0
        %v1717 = vadd.f32 %v1688, %v1716
        %1718 = vmatmul.bf16.gmra.mxu0 %v1466
        %v1719 = vpop.f32.mrf.mxu0
        %v1720 = vadd.f32 %v1691, %v1719
        %v1721 = vpop.f32.mrf.mxu0
        %v1722 = vadd.f32 %v1693, %v1721
        %1723 = vmatmul.bf16.gmra.mxu0 %v1469
        %v1724 = vpop.f32.mrf.mxu0
        %v1725 = vadd.f32 %v1696, %v1724
        %v1726 = vpop.f32.mrf.mxu0
        %v1727 = vadd.f32 %v1698, %v1726
        %1728 = vdwg.mxu0
        %1729 = vmatpush.bf16.msra.mxu0 0
        %1730 = vmatpush.bf16.msra.mxu0 0
        %1731 = vmatpush.bf16.msra.mxu0 0
        %1732 = vmatpush.bf16.msra.mxu0 0
        %1733 = vmatpush.bf16.msra.mxu0 0
        %1734 = vmatpush.bf16.msra.mxu0 0
        %1735 = vmatpush.bf16.msra.mxu0 %v1621
        %1736 = vmatpush.bf16.msra.mxu0 %v1619
        %1737 = vmatmul.bf16.gmra.mxu0 %v1660
        %v1738 = vpop.f32.mrf.mxu0
        %v1739 = vadd.f32 %v1710, %v1738
        %v1740 = vpop.f32.mrf.mxu0
        %v1741 = vadd.f32 %v1712, %v1740
        %1742 = vmatmul.bf16.gmra.mxu0 %v1663
        %v1743 = vpop.f32.mrf.mxu0
        %v1744 = vadd.f32 %v1715, %v1743
        %v1745 = vpop.f32.mrf.mxu0
        %v1746 = vadd.f32 %v1717, %v1745
        %1747 = vmatmul.bf16.gmra.mxu0 %v1666
        %v1748 = vpop.f32.mrf.mxu0
        %v1749 = vadd.f32 %v1720, %v1748
        %v1750 = vpop.f32.mrf.mxu0
        %v1751 = vadd.f32 %v1722, %v1750
        %1752 = vmatmul.bf16.gmra.mxu0 %v1669
        %v1753 = vpop.f32.mrf.mxu0
        %v1754 = vadd.f32 %v1725, %v1753
        %v1755 = vpop.f32.mrf.mxu0
        %v1756 = vadd.f32 %v1727, %v1755
        %1757 = vdwg.mxu0
        %1758 = vmatpush.bf16.msra.mxu0 %v1602
        %1759 = vmatpush.bf16.msra.mxu0 %v1600
        %1760 = vmatpush.bf16.msra.mxu0 %v1598
        %1761 = vmatpush.bf16.msra.mxu0 %v1596
        %1762 = vmatpush.bf16.msra.mxu0 %v1594
        %1763 = vmatpush.bf16.msra.mxu0 %v1592
        %1764 = vmatpush.bf16.msra.mxu0 %v1590
        %1765 = vmatpush.bf16.msra.mxu0 %v1588
        %1766 = vmatmul.bf16.gmra.mxu0 %v1459
        %v1767 = vpop.f32.mrf.mxu0
        %v1768 = vadd.f32 %v1382, %v1767
        %v1769 = vpop.f32.mrf.mxu0
        %v1770 = vadd.f32 %v1387, %v1769
        %1771 = vmatmul.bf16.gmra.mxu0 %v1462
        %v1772 = vpop.f32.mrf.mxu0
        %v1773 = vadd.f32 %v1392, %v1772
        %v1774 = vpop.f32.mrf.mxu0
        %v1775 = vadd.f32 %v1397, %v1774
        %1776 = vmatmul.bf16.gmra.mxu0 %v1465
        %v1777 = vpop.f32.mrf.mxu0
        %v1778 = vadd.f32 %v1402, %v1777
        %v1779 = vpop.f32.mrf.mxu0
        %v1780 = vadd.f32 %v1407, %v1779
        %1781 = vmatmul.bf16.gmra.mxu0 %v1468
        %v1782 = vpop.f32.mrf.mxu0
        %v1783 = vadd.f32 %v1412, %v1782
        %v1784 = vpop.f32.mrf.mxu0
        %v1785 = vadd.f32 %v1417, %v1784
        %1786 = vdwg.mxu0
        %1787 = vmatpush.bf16.msra.mxu0 %v1618
        %1788 = vmatpush.bf16.msra.mxu0 %v1616
        %1789 = vmatpush.bf16.msra.mxu0 %v1614
        %1790 = vmatpush.bf16.msra.mxu0 %v1612
        %1791 = vmatpush.bf16.msra.mxu0 %v1610
        %1792 = vmatpush.bf16.msra.mxu0 %v1608
        %1793 = vmatpush.bf16.msra.mxu0 %v1606
        %1794 = vmatpush.bf16.msra.mxu0 %v1604
        %1795 = vmatmul.bf16.gmra.mxu0 %v1460
        %v1796 = vpop.f32.mrf.mxu0
        %v1797 = vadd.f32 %v1768, %v1796
        %v1798 = vpop.f32.mrf.mxu0
        %v1799 = vadd.f32 %v1770, %v1798
        %1800 = vmatmul.bf16.gmra.mxu0 %v1463
        %v1801 = vpop.f32.mrf.mxu0
        %v1802 = vadd.f32 %v1773, %v1801
        %v1803 = vpop.f32.mrf.mxu0
        %v1804 = vadd.f32 %v1775, %v1803
        %1805 = vmatmul.bf16.gmra.mxu0 %v1466
        %v1806 = vpop.f32.mrf.mxu0
        %v1807 = vadd.f32 %v1778, %v1806
        %v1808 = vpop.f32.mrf.mxu0
        %v1809 = vadd.f32 %v1780, %v1808
        %1810 = vmatmul.bf16.gmra.mxu0 %v1469
        %v1811 = vpop.f32.mrf.mxu0
        %v1812 = vadd.f32 %v1783, %v1811
        %v1813 = vpop.f32.mrf.mxu0
        %v1814 = vadd.f32 %v1785, %v1813
        %1815 = vdwg.mxu0
        %1816 = vmatpush.bf16.msra.mxu0 0
        %1817 = vmatpush.bf16.msra.mxu0 0
        %1818 = vmatpush.bf16.msra.mxu0 0
        %1819 = vmatpush.bf16.msra.mxu0 0
        %1820 = vmatpush.bf16.msra.mxu0 0
        %1821 = vmatpush.bf16.msra.mxu0 0
        %1822 = vmatpush.bf16.msra.mxu0 %v1622
        %1823 = vmatpush.bf16.msra.mxu0 %v1620
        %1824 = vmatmul.bf16.gmra.mxu0 %v1660
        %v1825 = vpop.f32.mrf.mxu0
        %v1826 = vadd.f32 %v1797, %v1825
        %v1827 = vpop.f32.mrf.mxu0
        %v1828 = vadd.f32 %v1799, %v1827
        %1829 = vmatmul.bf16.gmra.mxu0 %v1663
        %v1830 = vpop.f32.mrf.mxu0
        %v1831 = vadd.f32 %v1802, %v1830
        %v1832 = vpop.f32.mrf.mxu0
        %v1833 = vadd.f32 %v1804, %v1832
        %1834 = vmatmul.bf16.gmra.mxu0 %v1666
        %v1835 = vpop.f32.mrf.mxu0
        %v1836 = vadd.f32 %v1807, %v1835
        %v1837 = vpop.f32.mrf.mxu0
        %v1838 = vadd.f32 %v1809, %v1837
        %1839 = vmatmul.bf16.gmra.mxu0 %v1669
        %v1840 = vpop.f32.mrf.mxu0
        %v1841 = vadd.f32 %v1812, %v1840
        %v1842 = vpop.f32.mrf.mxu0
        %v1843 = vadd.f32 %v1814, %v1842
        %1844 = vdwg.mxu0
        %v1845 = vmul.f32 %v1739, %v1749
        %v1846 = vmul.f32 %v1826, %v1836
        %v1847 = vmul.f32 %v1741, %v1751
        %v1848 = vmul.f32 %v1828, %v1838
        %v1849 = vmul.f32 %v1744, %v1754
        %v1850 = vmul.f32 %v1831, %v1841
        %v1851 = vmul.f32 %v1746, %v1756
        %v1852 = vmul.f32 %v1833, %v1843
        %v1853 = vadd.f32 %v1845, %v1846
        %1854 = vadd.xlane.f32.xlu0 %v1853
        %v1855 = vpop.xlane.xlu0 %1854
        %v1856 = vadd.f32 %v1847, %v1848
        %1857 = vadd.xlane.f32.xlu0 %v1856
        %v1858 = vpop.xlane.xlu0 %1857
        %v1859 = vadd.f32 %v1849, %v1850
        %1860 = vadd.xlane.f32.xlu0 %v1859
        %v1861 = vpop.xlane.xlu0 %1860
        %v1862 = vadd.f32 %v1851, %v1852
        %1863 = vadd.xlane.f32.xlu0 %v1862
        %v1864 = vpop.xlane.xlu0 %1863
        %v1865 = vmul.f32 %v1845, %v1845
        %v1866 = vmul.f32 %v1846, %v1846
        %v1867 = vmul.f32 %v1847, %v1847
        %v1868 = vmul.f32 %v1848, %v1848
        %v1869 = vmul.f32 %v1849, %v1849
        %v1870 = vmul.f32 %v1850, %v1850
        %v1871 = vmul.f32 %v1851, %v1851
        %v1872 = vmul.f32 %v1852, %v1852
        %v1873 = vadd.f32 %v1865, %v1866
        %1874 = vadd.xlane.f32.xlu0 %v1873
        %v1875 = vpop.xlane.xlu0 %1874
        %v1876 = vadd.f32 %v1867, %v1868
        %1877 = vadd.xlane.f32.xlu0 %v1876
        %v1878 = vpop.xlane.xlu0 %1877
        %v1879 = vadd.f32 %v1869, %v1870
        %1880 = vadd.xlane.f32.xlu0 %v1879
        %v1881 = vpop.xlane.xlu0 %1880
        %v1882 = vadd.f32 %v1871, %v1872
        %1883 = vadd.xlane.f32.xlu0 %v1882
        %v1884 = vpop.xlane.xlu0 %1883
        %vm1885 = vcmask 3072
        %v1886 = vsel %vm1885, %v1855, 0.0
        %1887 = vadd.xlane.f32.xlu0 %v1886
        %v1888 = vpop.xlane.xlu0 %1887
        %v1889 = vrot.slane %v1888, 4
        %v1890 = vadd.f32 %v1888, %v1889
        %v1891 = vrot.slane %v1890, 2
        %v1892 = vadd.f32 %v1890, %v1891
        %v1893 = vrot.slane %v1892, 1
        %v1894 = vadd.f32 %v1892, %v1893
        %s1895 = vtos %v1894
        %s1896 = smul.f32 %s1895, 0.0009765625
        %v1897 = vsel %vm1885, %v1875, 0.0
        %1898 = vadd.xlane.f32.xlu0 %v1897
        %v1899 = vpop.xlane.xlu0 %1898
        %v1900 = vrot.slane %v1899, 4
        %v1901 = vadd.f32 %v1899, %v1900
        %v1902 = vrot.slane %v1901, 2
        %v1903 = vadd.f32 %v1901, %v1902
        %v1904 = vrot.slane %v1903, 1
        %v1905 = vadd.f32 %v1903, %v1904
        %s1906 = vtos %v1905
        %s1907 = smul.f32 %s1906, 0.0009765625
        %s1908 = smul.f32 %s1896, %s1896
        %s1909 = ssub.f32 %s1907, %s1908
        %s1910 = smax.f32 %s1909, 0.0
        %v1911 = vadd.f32 %v1845, 0.0
        %v1912 = vadd.f32 %v1846, 0.0
        %s1913 = sadd.f32 %s1910, 1e-05
        %v1914 = vstv %s1913
        %v1915 = vrsqrt.pop %v1914
        %v1916 = vmul.f32 %v1915, %v1914
        %v1917 = vmul.f32 %v1916, %v1915
        %v1918 = vmul.f32 0.5, %v1917
        %v1919 = vsub.f32 1.5, %v1918
        %v1920 = vmul.f32 %v1915, %v1919
        %vm1921 = vweird.f32 %v1914
        %vm1922 = vweird.f32 %v1915
        %vm1923 = vmor %vm1921, %vm1922
        %v1924 = vsel %vm1923, %v1915, %v1920
        %s1925 = vtos %v1924
        %s1926 = smul.f32 %s1925, 0.1773
        %v1927 = vstv %s1896
        %v1928 = vsub.f32 %v1845, %v1927
        %v1929 = vsub.f32 %v1846, %v1927
        %v1930 = vstv %s1926
        %v1931 = vmul.f32 %v1930, %v1928
        %v1932 = vmul.f32 %v1930, %v1929
        %v1933 = vadd.f32 %v1911, %v1931
        %v1934 = vadd.f32 %v1912, %v1932
        %v1936 = vrot.slane %v1855, 4
        %v1938 = vsel %vm1885, %v1936, 0.0
        %1939 = vadd.xlane.f32.xlu0 %v1938
        %v1940 = vpop.xlane.xlu0 %1939
        %v1941 = vrot.slane %v1940, 4
        %v1942 = vadd.f32 %v1940, %v1941
        %v1943 = vrot.slane %v1942, 2
        %v1944 = vadd.f32 %v1942, %v1943
        %v1945 = vrot.slane %v1944, 1
        %v1946 = vadd.f32 %v1944, %v1945
        %s1947 = vtos %v1946
        %s1948 = smul.f32 %s1947, 0.0009765625
        %v1950 = vrot.slane %v1875, 4
        %v1952 = vsel %vm1885, %v1950, 0.0
        %1953 = vadd.xlane.f32.xlu0 %v1952
        %v1954 = vpop.xlane.xlu0 %1953
        %v1955 = vrot.slane %v1954, 4
        %v1956 = vadd.f32 %v1954, %v1955
        %v1957 = vrot.slane %v1956, 2
        %v1958 = vadd.f32 %v1956, %v1957
        %v1959 = vrot.slane %v1958, 1
        %v1960 = vadd.f32 %v1958, %v1959
        %s1961 = vtos %v1960
        %s1962 = smul.f32 %s1961, 0.0009765625
        %s1963 = smul.f32 %s1948, %s1948
        %s1964 = ssub.f32 %s1962, %s1963
        %s1965 = smax.f32 %s1964, 0.0
        %v1968 = vrot.slane %v1845, 4
        %v1969 = vrot.slane %v1846, 4
        %v1972 = vadd.f32 %v1933, %v1968
        %v1973 = vadd.f32 %v1934, %v1969
        %s1974 = sadd.f32 %s1965, 1e-05
        %v1975 = vstv %s1974
        %v1976 = vrsqrt.pop %v1975
        %v1977 = vmul.f32 %v1976, %v1975
        %v1978 = vmul.f32 %v1977, %v1976
        %v1979 = vmul.f32 0.5, %v1978
        %v1980 = vsub.f32 1.5, %v1979
        %v1981 = vmul.f32 %v1976, %v1980
        %vm1982 = vweird.f32 %v1975
        %vm1983 = vweird.f32 %v1976
        %vm1984 = vmor %vm1982, %vm1983
        %v1985 = vsel %vm1984, %v1976, %v1981
        %s1986 = vtos %v1985
        %s1987 = smul.f32 %s1986, 0.1773
        %v1988 = vstv %s1948
        %v1989 = vsub.f32 %v1845, %v1988
        %v1990 = vsub.f32 %v1846, %v1988
        %v1991 = vstv %s1987
        %v1992 = vmul.f32 %v1991, %v1989
        %v1993 = vmul.f32 %v1991, %v1990
        %v1996 = vrot.slane %v1992, 4
        %v1997 = vrot.slane %v1993, 4
        %v2000 = vadd.f32 %v1972, %v1996
        %v2001 = vadd.f32 %v1973, %v1997
        %v2002 = vsel %vm1885, %v1858, 0.0
        %2003 = vadd.xlane.f32.xlu0 %v2002
        %v2004 = vpop.xlane.xlu0 %2003
        %v2005 = vrot.slane %v2004, 4
        %v2006 = vadd.f32 %v2004, %v2005
        %v2007 = vrot.slane %v2006, 2
        %v2008 = vadd.f32 %v2006, %v2007
        %v2009 = vrot.slane %v2008, 1
        %v2010 = vadd.f32 %v2008, %v2009
        %s2011 = vtos %v2010
        %s2012 = smul.f32 %s2011, 0.0009765625
        %v2013 = vsel %vm1885, %v1878, 0.0
        %2014 = vadd.xlane.f32.xlu0 %v2013
        %v2015 = vpop.xlane.xlu0 %2014
        %v2016 = vrot.slane %v2015, 4
        %v2017 = vadd.f32 %v2015, %v2016
        %v2018 = vrot.slane %v2017, 2
        %v2019 = vadd.f32 %v2017, %v2018
        %v2020 = vrot.slane %v2019, 1
        %v2021 = vadd.f32 %v2019, %v2020
        %s2022 = vtos %v2021
        %s2023 = smul.f32 %s2022, 0.0009765625
        %s2024 = smul.f32 %s2012, %s2012
        %s2025 = ssub.f32 %s2023, %s2024
        %s2026 = smax.f32 %s2025, 0.0
        %v2027 = vadd.f32 %v2000, %v1847
        %v2028 = vadd.f32 %v2001, %v1848
        %s2029 = sadd.f32 %s2026, 1e-05
        %v2030 = vstv %s2029
        %v2031 = vrsqrt.pop %v2030
        %v2032 = vmul.f32 %v2031, %v2030
        %v2033 = vmul.f32 %v2032, %v2031
        %v2034 = vmul.f32 0.5, %v2033
        %v2035 = vsub.f32 1.5, %v2034
        %v2036 = vmul.f32 %v2031, %v2035
        %vm2037 = vweird.f32 %v2030
        %vm2038 = vweird.f32 %v2031
        %vm2039 = vmor %vm2037, %vm2038
        %v2040 = vsel %vm2039, %v2031, %v2036
        %s2041 = vtos %v2040
        %s2042 = smul.f32 %s2041, 0.1773
        %v2043 = vstv %s2012
        %v2044 = vsub.f32 %v1847, %v2043
        %v2045 = vsub.f32 %v1848, %v2043
        %v2046 = vstv %s2042
        %v2047 = vmul.f32 %v2046, %v2044
        %v2048 = vmul.f32 %v2046, %v2045
        %v2049 = vadd.f32 %v2027, %v2047
        %v2050 = vadd.f32 %v2028, %v2048
        %v2052 = vrot.slane %v1858, 4
        %v2054 = vsel %vm1885, %v2052, 0.0
        %2055 = vadd.xlane.f32.xlu0 %v2054
        %v2056 = vpop.xlane.xlu0 %2055
        %v2057 = vrot.slane %v2056, 4
        %v2058 = vadd.f32 %v2056, %v2057
        %v2059 = vrot.slane %v2058, 2
        %v2060 = vadd.f32 %v2058, %v2059
        %v2061 = vrot.slane %v2060, 1
        %v2062 = vadd.f32 %v2060, %v2061
        %s2063 = vtos %v2062
        %s2064 = smul.f32 %s2063, 0.0009765625
        %v2066 = vrot.slane %v1878, 4
        %v2068 = vsel %vm1885, %v2066, 0.0
        %2069 = vadd.xlane.f32.xlu0 %v2068
        %v2070 = vpop.xlane.xlu0 %2069
        %v2071 = vrot.slane %v2070, 4
        %v2072 = vadd.f32 %v2070, %v2071
        %v2073 = vrot.slane %v2072, 2
        %v2074 = vadd.f32 %v2072, %v2073
        %v2075 = vrot.slane %v2074, 1
        %v2076 = vadd.f32 %v2074, %v2075
        %s2077 = vtos %v2076
        %s2078 = smul.f32 %s2077, 0.0009765625
        %s2079 = smul.f32 %s2064, %s2064
        %s2080 = ssub.f32 %s2078, %s2079
        %s2081 = smax.f32 %s2080, 0.0
        %v2084 = vrot.slane %v1847, 4
        %v2085 = vrot.slane %v1848, 4
        %v2088 = vadd.f32 %v2049, %v2084
        %v2089 = vadd.f32 %v2050, %v2085
        %s2090 = sadd.f32 %s2081, 1e-05
        %v2091 = vstv %s2090
        %v2092 = vrsqrt.pop %v2091
        %v2093 = vmul.f32 %v2092, %v2091
        %v2094 = vmul.f32 %v2093, %v2092
        %v2095 = vmul.f32 0.5, %v2094
        %v2096 = vsub.f32 1.5, %v2095
        %v2097 = vmul.f32 %v2092, %v2096
        %vm2098 = vweird.f32 %v2091
        %vm2099 = vweird.f32 %v2092
        %vm2100 = vmor %vm2098, %vm2099
        %v2101 = vsel %vm2100, %v2092, %v2097
        %s2102 = vtos %v2101
        %s2103 = smul.f32 %s2102, 0.1773
        %v2104 = vstv %s2064
        %v2105 = vsub.f32 %v1847, %v2104
        %v2106 = vsub.f32 %v1848, %v2104
        %v2107 = vstv %s2103
        %v2108 = vmul.f32 %v2107, %v2105
        %v2109 = vmul.f32 %v2107, %v2106
        %v2112 = vrot.slane %v2108, 4
        %v2113 = vrot.slane %v2109, 4
        %v2116 = vadd.f32 %v2088, %v2112
        %v2117 = vadd.f32 %v2089, %v2113
        %v2118 = vsel %vm1885, %v1861, 0.0
        %2119 = vadd.xlane.f32.xlu0 %v2118
        %v2120 = vpop.xlane.xlu0 %2119
        %v2121 = vrot.slane %v2120, 4
        %v2122 = vadd.f32 %v2120, %v2121
        %v2123 = vrot.slane %v2122, 2
        %v2124 = vadd.f32 %v2122, %v2123
        %v2125 = vrot.slane %v2124, 1
        %v2126 = vadd.f32 %v2124, %v2125
        %s2127 = vtos %v2126
        %s2128 = smul.f32 %s2127, 0.0009765625
        %v2129 = vsel %vm1885, %v1881, 0.0
        %2130 = vadd.xlane.f32.xlu0 %v2129
        %v2131 = vpop.xlane.xlu0 %2130
        %v2132 = vrot.slane %v2131, 4
        %v2133 = vadd.f32 %v2131, %v2132
        %v2134 = vrot.slane %v2133, 2
        %v2135 = vadd.f32 %v2133, %v2134
        %v2136 = vrot.slane %v2135, 1
        %v2137 = vadd.f32 %v2135, %v2136
        %s2138 = vtos %v2137
        %s2139 = smul.f32 %s2138, 0.0009765625
        %s2140 = smul.f32 %s2128, %s2128
        %s2141 = ssub.f32 %s2139, %s2140
        %s2142 = smax.f32 %s2141, 0.0
        %v2143 = vadd.f32 %v2116, %v1849
        %v2144 = vadd.f32 %v2117, %v1850
        %s2145 = sadd.f32 %s2142, 1e-05
        %v2146 = vstv %s2145
        %v2147 = vrsqrt.pop %v2146
        %v2148 = vmul.f32 %v2147, %v2146
        %v2149 = vmul.f32 %v2148, %v2147
        %v2150 = vmul.f32 0.5, %v2149
        %v2151 = vsub.f32 1.5, %v2150
        %v2152 = vmul.f32 %v2147, %v2151
        %vm2153 = vweird.f32 %v2146
        %vm2154 = vweird.f32 %v2147
        %vm2155 = vmor %vm2153, %vm2154
        %v2156 = vsel %vm2155, %v2147, %v2152
        %s2157 = vtos %v2156
        %s2158 = smul.f32 %s2157, 0.1773
        %v2159 = vstv %s2128
        %v2160 = vsub.f32 %v1849, %v2159
        %v2161 = vsub.f32 %v1850, %v2159
        %v2162 = vstv %s2158
        %v2163 = vmul.f32 %v2162, %v2160
        %v2164 = vmul.f32 %v2162, %v2161
        %v2165 = vadd.f32 %v2143, %v2163
        %v2166 = vadd.f32 %v2144, %v2164
        %v2168 = vrot.slane %v1861, 4
        %v2170 = vsel %vm1885, %v2168, 0.0
        %2171 = vadd.xlane.f32.xlu0 %v2170
        %v2172 = vpop.xlane.xlu0 %2171
        %v2173 = vrot.slane %v2172, 4
        %v2174 = vadd.f32 %v2172, %v2173
        %v2175 = vrot.slane %v2174, 2
        %v2176 = vadd.f32 %v2174, %v2175
        %v2177 = vrot.slane %v2176, 1
        %v2178 = vadd.f32 %v2176, %v2177
        %s2179 = vtos %v2178
        %s2180 = smul.f32 %s2179, 0.0009765625
        %v2182 = vrot.slane %v1881, 4
        %v2184 = vsel %vm1885, %v2182, 0.0
        %2185 = vadd.xlane.f32.xlu0 %v2184
        %v2186 = vpop.xlane.xlu0 %2185
        %v2187 = vrot.slane %v2186, 4
        %v2188 = vadd.f32 %v2186, %v2187
        %v2189 = vrot.slane %v2188, 2
        %v2190 = vadd.f32 %v2188, %v2189
        %v2191 = vrot.slane %v2190, 1
        %v2192 = vadd.f32 %v2190, %v2191
        %s2193 = vtos %v2192
        %s2194 = smul.f32 %s2193, 0.0009765625
        %s2195 = smul.f32 %s2180, %s2180
        %s2196 = ssub.f32 %s2194, %s2195
        %s2197 = smax.f32 %s2196, 0.0
        %v2200 = vrot.slane %v1849, 4
        %v2201 = vrot.slane %v1850, 4
        %v2204 = vadd.f32 %v2165, %v2200
        %v2205 = vadd.f32 %v2166, %v2201
        %s2206 = sadd.f32 %s2197, 1e-05
        %v2207 = vstv %s2206
        %v2208 = vrsqrt.pop %v2207
        %v2209 = vmul.f32 %v2208, %v2207
        %v2210 = vmul.f32 %v2209, %v2208
        %v2211 = vmul.f32 0.5, %v2210
        %v2212 = vsub.f32 1.5, %v2211
        %v2213 = vmul.f32 %v2208, %v2212
        %vm2214 = vweird.f32 %v2207
        %vm2215 = vweird.f32 %v2208
        %vm2216 = vmor %vm2214, %vm2215
        %v2217 = vsel %vm2216, %v2208, %v2213
        %s2218 = vtos %v2217
        %s2219 = smul.f32 %s2218, 0.1773
        %v2220 = vstv %s2180
        %v2221 = vsub.f32 %v1849, %v2220
        %v2222 = vsub.f32 %v1850, %v2220
        %v2223 = vstv %s2219
        %v2224 = vmul.f32 %v2223, %v2221
        %v2225 = vmul.f32 %v2223, %v2222
        %v2228 = vrot.slane %v2224, 4
        %v2229 = vrot.slane %v2225, 4
        %v2232 = vadd.f32 %v2204, %v2228
        %v2233 = vadd.f32 %v2205, %v2229
        %v2234 = vsel %vm1885, %v1864, 0.0
        %2235 = vadd.xlane.f32.xlu0 %v2234
        %v2236 = vpop.xlane.xlu0 %2235
        %v2237 = vrot.slane %v2236, 4
        %v2238 = vadd.f32 %v2236, %v2237
        %v2239 = vrot.slane %v2238, 2
        %v2240 = vadd.f32 %v2238, %v2239
        %v2241 = vrot.slane %v2240, 1
        %v2242 = vadd.f32 %v2240, %v2241
        %s2243 = vtos %v2242
        %s2244 = smul.f32 %s2243, 0.0009765625
        %v2245 = vsel %vm1885, %v1884, 0.0
        %2246 = vadd.xlane.f32.xlu0 %v2245
        %v2247 = vpop.xlane.xlu0 %2246
        %v2248 = vrot.slane %v2247, 4
        %v2249 = vadd.f32 %v2247, %v2248
        %v2250 = vrot.slane %v2249, 2
        %v2251 = vadd.f32 %v2249, %v2250
        %v2252 = vrot.slane %v2251, 1
        %v2253 = vadd.f32 %v2251, %v2252
        %s2254 = vtos %v2253
        %s2255 = smul.f32 %s2254, 0.0009765625
        %s2256 = smul.f32 %s2244, %s2244
        %s2257 = ssub.f32 %s2255, %s2256
        %s2258 = smax.f32 %s2257, 0.0
        %v2259 = vadd.f32 %v2232, %v1851
        %v2260 = vadd.f32 %v2233, %v1852
        %s2261 = sadd.f32 %s2258, 1e-05
        %v2262 = vstv %s2261
        %v2263 = vrsqrt.pop %v2262
        %v2264 = vmul.f32 %v2263, %v2262
        %v2265 = vmul.f32 %v2264, %v2263
        %v2266 = vmul.f32 0.5, %v2265
        %v2267 = vsub.f32 1.5, %v2266
        %v2268 = vmul.f32 %v2263, %v2267
        %vm2269 = vweird.f32 %v2262
        %vm2270 = vweird.f32 %v2263
        %vm2271 = vmor %vm2269, %vm2270
        %v2272 = vsel %vm2271, %v2263, %v2268
        %s2273 = vtos %v2272
        %s2274 = smul.f32 %s2273, 0.1773
        %v2275 = vstv %s2244
        %v2276 = vsub.f32 %v1851, %v2275
        %v2277 = vsub.f32 %v1852, %v2275
        %v2278 = vstv %s2274
        %v2279 = vmul.f32 %v2278, %v2276
        %v2280 = vmul.f32 %v2278, %v2277
        %v2281 = vadd.f32 %v2259, %v2279
        %v2282 = vadd.f32 %v2260, %v2280
        %v2284 = vrot.slane %v1864, 4
        %v2286 = vsel %vm1885, %v2284, 0.0
        %2287 = vadd.xlane.f32.xlu0 %v2286
        %v2288 = vpop.xlane.xlu0 %2287
        %v2289 = vrot.slane %v2288, 4
        %v2290 = vadd.f32 %v2288, %v2289
        %v2291 = vrot.slane %v2290, 2
        %v2292 = vadd.f32 %v2290, %v2291
        %v2293 = vrot.slane %v2292, 1
        %v2294 = vadd.f32 %v2292, %v2293
        %s2295 = vtos %v2294
        %s2296 = smul.f32 %s2295, 0.0009765625
        %v2298 = vrot.slane %v1884, 4
        %v2300 = vsel %vm1885, %v2298, 0.0
        %2301 = vadd.xlane.f32.xlu0 %v2300
        %v2302 = vpop.xlane.xlu0 %2301
        %v2303 = vrot.slane %v2302, 4
        %v2304 = vadd.f32 %v2302, %v2303
        %v2305 = vrot.slane %v2304, 2
        %v2306 = vadd.f32 %v2304, %v2305
        %v2307 = vrot.slane %v2306, 1
        %v2308 = vadd.f32 %v2306, %v2307
        %s2309 = vtos %v2308
        %s2310 = smul.f32 %s2309, 0.0009765625
        %s2311 = smul.f32 %s2296, %s2296
        %s2312 = ssub.f32 %s2310, %s2311
        %s2313 = smax.f32 %s2312, 0.0
        %v2316 = vrot.slane %v1851, 4
        %v2317 = vrot.slane %v1852, 4
        %v2320 = vadd.f32 %v2281, %v2316
        %v2321 = vadd.f32 %v2282, %v2317
        %s2322 = sadd.f32 %s2313, 1e-05
        %v2323 = vstv %s2322
        %v2324 = vrsqrt.pop %v2323
        %v2325 = vmul.f32 %v2324, %v2323
        %v2326 = vmul.f32 %v2325, %v2324
        %v2327 = vmul.f32 0.5, %v2326
        %v2328 = vsub.f32 1.5, %v2327
        %v2329 = vmul.f32 %v2324, %v2328
        %vm2330 = vweird.f32 %v2323
        %vm2331 = vweird.f32 %v2324
        %vm2332 = vmor %vm2330, %vm2331
        %v2333 = vsel %vm2332, %v2324, %v2329
        %s2334 = vtos %v2333
        %s2335 = smul.f32 %s2334, 0.1773
        %v2336 = vstv %s2296
        %v2337 = vsub.f32 %v1851, %v2336
        %v2338 = vsub.f32 %v1852, %v2336
        %v2339 = vstv %s2335
        %v2340 = vmul.f32 %v2339, %v2337
        %v2341 = vmul.f32 %v2339, %v2338
        %v2344 = vrot.slane %v2340, 4
        %v2345 = vrot.slane %v2341, 4
        %v2348 = vadd.f32 %v2320, %v2344
        %v2349 = vadd.f32 %v2321, %v2345
        %v2352 = vrot.slane %v2349, 4
        %v2353 = vsel %vm575, %v2348, %v2352
        %v2355 = vadd.f32 %v361, %v2353
        %2357 = vst [vmem:[#allocation1] ss:$2 sm:$0xff] %v2355
        %v2358 = vld.sshfl [vmem:[#allocation1] sm:$0xff pattern:$0x75316420]
        %v2359 = vld.sshfl [vmem:[#allocation1 + $0x8] sm:$0xff pattern:$0x75316420]
        %v2362 = vpack.c.bf16 %v2358, %v2358
        %v2363 = vpack.c.bf16 %v2359, %v2359
        %v2364 = vld [vmem:[%s5] sm:$0xf]
        %v2365 = vld [vmem:[%s5 + $0x4] sm:$0xf]
        %v2366 = vld [vmem:[%s5 + $0x8] sm:$0xf]
        %v2367 = vld [vmem:[%s5 + $0xc] sm:$0xf]
        %v2368 = vld [vmem:[%s5 + $0x10] sm:$0xf]
        %v2369 = vld [vmem:[%s5 + $0x14] sm:$0xf]
        %v2370 = vld [vmem:[%s5 + $0x18] sm:$0xf]
        %v2371 = vld [vmem:[%s5 + $0x1c] sm:$0xf]
        %v2372 = vld [vmem:[%s5 + $0x20] sm:$0xf]
        %v2373 = vld [vmem:[%s5 + $0x24] sm:$0xf]
        %v2374 = vld [vmem:[%s5 + $0x28] sm:$0xf]
        %v2375 = vld [vmem:[%s5 + $0x2c] sm:$0xf]
        %v2376 = vld [vmem:[%s5 + $0x30] sm:$0xf]
        %v2377 = vld [vmem:[%s5 + $0x34] sm:$0xf]
        %v2378 = vld [vmem:[%s5 + $0x38] sm:$0xf]
        %v2379 = vld [vmem:[%s5 + $0x3c] sm:$0xf]
        %v2380 = vld [vmem:[%s5 + $0x40] sm:$0xf]
        %v2381 = vld [vmem:[%s5 + $0x44] sm:$0xf]
        %v2382 = vld [vmem:[%s5 + $0x48] sm:$0xf]
        %v2383 = vld [vmem:[%s5 + $0x4c] sm:$0xf]
        %v2384 = vld [vmem:[%s5 + $0x50] sm:$0xf]
        %v2385 = vld [vmem:[%s5 + $0x54] sm:$0xf]
        %v2386 = vld [vmem:[%s5 + $0x58] sm:$0xf]
        %v2387 = vld [vmem:[%s5 + $0x5c] sm:$0xf]
        %v2388 = vld [vmem:[%s5 + $0x60] sm:$0xf]
        %v2389 = vld [vmem:[%s5 + $0x64] sm:$0xf]
        %v2390 = vld [vmem:[%s5 + $0x68] sm:$0xf]
        %v2391 = vld [vmem:[%s5 + $0x6c] sm:$0xf]
        %v2392 = vld [vmem:[%s5 + $0x70] sm:$0xf]
        %v2393 = vld [vmem:[%s5 + $0x74] sm:$0xf]
        %v2394 = vld [vmem:[%s5 + $0x78] sm:$0xf]
        %v2395 = vld [vmem:[%s5 + $0x7c] sm:$0xf]
        %v2428 = vunpack.c.l.b16 %v2364
        %v2429 = vunpack.c.l.b16 %v2365
        %v2430 = vunpack.c.l.b16 %v2366
        %v2431 = vunpack.c.l.b16 %v2367
        %v2432 = vunpack.c.l.b16 %v2368
        %v2433 = vunpack.c.l.b16 %v2369
        %v2434 = vunpack.c.l.b16 %v2370
        %v2435 = vunpack.c.l.b16 %v2371
        %v2436 = vunpack.c.l.b16 %v2372
        %v2437 = vunpack.c.l.b16 %v2373
        %v2438 = vunpack.c.l.b16 %v2374
        %v2439 = vunpack.c.l.b16 %v2375
        %v2440 = vunpack.c.l.b16 %v2376
        %v2441 = vunpack.c.l.b16 %v2377
        %v2442 = vunpack.c.l.b16 %v2378
        %v2443 = vunpack.c.l.b16 %v2379
        %v2444 = vunpack.c.l.b16 %v2380
        %v2445 = vunpack.c.l.b16 %v2381
        %v2446 = vunpack.c.l.b16 %v2382
        %v2447 = vunpack.c.l.b16 %v2383
        %v2448 = vunpack.c.l.b16 %v2384
        %v2449 = vunpack.c.l.b16 %v2385
        %v2450 = vunpack.c.l.b16 %v2386
        %v2451 = vunpack.c.l.b16 %v2387
        %v2452 = vunpack.c.l.b16 %v2388
        %v2453 = vunpack.c.l.b16 %v2389
        %v2454 = vunpack.c.l.b16 %v2390
        %v2455 = vunpack.c.l.b16 %v2391
        %v2456 = vunpack.c.l.b16 %v2392
        %v2457 = vunpack.c.l.b16 %v2393
        %v2458 = vunpack.c.l.b16 %v2394
        %v2459 = vunpack.c.l.b16 %v2395
        %v2460 = vpack.c.b16 %v2429, %v2428
        %v2461 = vpack.c.b16 %v2431, %v2430
        %v2462 = vpack.c.b16 %v2433, %v2432
        %v2463 = vpack.c.b16 %v2435, %v2434
        %v2464 = vpack.c.b16 %v2437, %v2436
        %v2465 = vpack.c.b16 %v2439, %v2438
        %v2466 = vpack.c.b16 %v2441, %v2440
        %v2467 = vpack.c.b16 %v2443, %v2442
        %v2468 = vpack.c.b16 %v2445, %v2444
        %v2469 = vpack.c.b16 %v2447, %v2446
        %v2470 = vpack.c.b16 %v2449, %v2448
        %v2471 = vpack.c.b16 %v2451, %v2450
        %v2472 = vpack.c.b16 %v2453, %v2452
        %v2473 = vpack.c.b16 %v2455, %v2454
        %v2474 = vpack.c.b16 %v2457, %v2456
        %v2475 = vpack.c.b16 %v2459, %v2458
        %2492 = vmatpush.bf16.msra.mxu0 %v2467
        %2493 = vmatpush.bf16.msra.mxu0 %v2466
        %2494 = vmatpush.bf16.msra.mxu0 %v2465
        %2495 = vmatpush.bf16.msra.mxu0 %v2464
        %2496 = vmatpush.bf16.msra.mxu0 %v2463
        %2497 = vmatpush.bf16.msra.mxu0 %v2462
        %2498 = vmatpush.bf16.msra.mxu0 %v2461
        %2499 = vmatpush.bf16.msra.mxu0 %v2460
        %2500 = vmatmul.bf16.gmra.mxu0 %v2362
        %v2501 = vpop.f32.mrf.mxu0
        %v2502 = vadd.f32 0.0, %v2501
        %v2503 = vpop.f32.mrf.mxu0
        %2504 = vdwg.mxu0
        %2505 = vmatpush.bf16.msra.mxu0 %v2475
        %2506 = vmatpush.bf16.msra.mxu0 %v2474
        %2507 = vmatpush.bf16.msra.mxu0 %v2473
        %2508 = vmatpush.bf16.msra.mxu0 %v2472
        %2509 = vmatpush.bf16.msra.mxu0 %v2471
        %2510 = vmatpush.bf16.msra.mxu0 %v2470
        %2511 = vmatpush.bf16.msra.mxu0 %v2469
        %2512 = vmatpush.bf16.msra.mxu0 %v2468
        %2513 = vmatmul.bf16.gmra.mxu0 %v2363
        %v2514 = vpop.f32.mrf.mxu0
        %v2515 = vadd.f32 %v2502, %v2514
        %v2516 = vpop.f32.mrf.mxu0
        %2517 = vdwg.mxu0
        %vm2518 = vcmask 519168
        %2519 = vst.msk [vmem:[%s317] sm:$0xf] %vm2518, %v2515
        %v2520 = vsel %vm2518, %v2515, 0.0
        %2521 = vadd.xlane.f32.xlu0 %v2520
        %v2522 = vpop.xlane.xlu0 %2521
        %v2523 = vrot.slane %v2522, 4
        %v2524 = vadd.f32 %v2522, %v2523
        %v2525 = vrot.slane %v2524, 2
        %v2526 = vadd.f32 %v2524, %v2525
        %v2527 = vrot.slane %v2526, 1
        %v2528 = vadd.f32 %v2526, %v2527
        %s2529 = vtos %v2528
        %v2530 = vstv %s2529
        %2531 = vst [vmem:[%s308] sm:$0x1] %v2530
        %p2532 = scmp.lt.s32.totalorder %s24, 1
        %s2533 = scalar_select %p2532, %s24, 1
        %s2534 = smul.addr %s2533, 4
        %s2535 = scalar_lea.vmem %s6, %s2534
        %s2536 = sand.u32 %s189, 1
        %s2537 = scalar_lea.sflag [#allocation5], %s2536
        %s2538 = sand.u32 %s189, 1
        %s2539 = scalar_lea.vmem [#allocation8], %s2538
        // Predicated region
        $region53: #{_lambda_.9} parent=43 // pred_check
          %p2540 = pneg %p173
        $region54: #{_lambda_.9} parent=43 // pred_check_branch
          %2542 = sbr.rel (%p2540) target = $region56
        $region55: #{_lambda_.9} parent=43 // pred_region
          _
        $region56: #{_lambda_.9} parent=43 // pred_fallthru
          _
        // Predicated region
        $region57: #{_lambda_.9} parent=43 // pred_check
          %p2543 = pneg %p199
        $region58: #{_lambda_.9} parent=43 // pred_check_branch
          %2545 = sbr.rel (%p2543) target = $region60
        $region59: #{_lambda_.9} parent=43 // pred_region
          %2547 = vsyncadd %s2537, 0
          %s2548 = scalar_lea.hbm %s7, %s24
          %s2550 = sshll.u32 %s2539, 4
          %s2551 = int_to_ptr.vmem [resolvable:$true] %s2550
          %s2552 = sshll.u32 %s2548, 4
          %s2553 = int_to_ptr.hbm [resolvable:$true] %s2552
          %2555 = dma.vmem_to_hbm [thread:$0]  %s2551, 16, %s2553, %s2537
        $region60: #{_lambda_.9} parent=43 // pred_fallthru
          _
      $region44: #{_lambda_.9} parent=5 // pred_fallthru
        _
      %p2556 = scmp.le.s32.totalorder 2, %s19
      // Predicated region
      $region61: #{_lambda_.9} parent=5 // pred_check
        %p2557 = pneg %p2556
      $region62: #{_lambda_.9} parent=5 // pred_check_branch
        %2559 = sbr.rel (%p2557) target = $region64
      $region63: #{_lambda_.9} parent=5 // pred_region
        %s2560 = ssub.s32 %s19, 2
        // Predicated region
        $region65: #{_lambda_.9} parent=63 // pred_check
          %p2561 = pneg %p179
        $region66: #{_lambda_.9} parent=63 // pred_check_branch
          %2563 = sbr.rel (%p2561) target = $region68
        $region67: #{_lambda_.9} parent=63 // pred_region
          %p2564 = scmp.lt.s32.totalorder %s25, 1
          %s2565 = scalar_select %p2564, %s25, 1
          %s2566 = smul.addr %s2565, 4
          %s2567 = scalar_lea.vmem %s6, %s2566
        $region68: #{_lambda_.9} parent=63 // pred_fallthru
          _
        // Predicated region
        $region69: #{_lambda_.9} parent=63 // pred_check
          %p2568 = pneg %p205
        $region70: #{_lambda_.9} parent=63 // pred_check_branch
          %2570 = sbr.rel (%p2568) target = $region72
        $region71: #{_lambda_.9} parent=63 // pred_region
          %s2571 = sand.u32 %s190, 1
          %s2572 = scalar_lea.sflag [#allocation5], %s2571
          %s2573 = sand.u32 %s190, 1
          %s2574 = scalar_lea.vmem [#allocation8], %s2573
          %2576 = dma.done %s2572, 16
        $region72: #{_lambda_.9} parent=63 // pred_fallthru
          _
      $region64: #{_lambda_.9} parent=5 // pred_fallthru
        _
    $region6: #{_lambda_.9} parent=1 // loop_footer
      %s23 = sadd.s32 1, %s19
    $region7: #{_lambda_.9} parent=1 // loop_footer_branch
      %18 = sbr.rel target = $region3
    $region8: #{_lambda_.9} parent=1 // loop_exit
      _
    %2577 = vsyncpa [#allocation4], 1
    %s2578 = scalar_lea.sflag [#allocation4], 1
    %2579 = vsyncpa %s2578, 1
    %2580 = vsyncpa [#allocation5], 1
    %s2581 = scalar_lea.sflag [#allocation5], 1
    %2582 = vsyncpa %s2581, 1
    %2583 = vsyncpa [#allocation6], 1
    %s2584 = scalar_lea.sflag [#allocation6], 1
    %2585 = vsyncpa %s2584, 1

</llo_original>
